<compile_context>
chip_gen: v7x
topology: tpu7x:2x2x1
jax: 0.10.0
libtpu: 0.0.40
codegen_flags: <defaults>
</compile_context>

<pallas_src>
import functools

import jax
import jax.numpy as jnp
import numpy as np
from jax import lax
from jax.experimental import pallas as pl
from jax.experimental.pallas import tpu as pltpu

BN_EPS = 1e-5
LANE = 128
TILE_M = 1024                      # review: large fixed row tile, pad M to it
VMEM_LIMIT = 48 * 1024 * 1024      # <= v7x 64 MiB physical


def _round_up(x, m):
    return (x + m - 1) // m * m


def _bn_fold(s, q, gamma, beta, rows):
    """Fold raw per-channel moments + affine params into scale/shift.

    Plain JAX on (1, C) arrays between pallas_calls -- negligible cost, and it
    halves the per-element VPU work inside the consuming kernels.
    NOTE: variance = E[y^2] - E[y]^2 over f32 sums (same formula as the
    reference); fine at these magnitudes, revisit for very large M.
    """
    mean = s / rows
    var = q / rows - mean * mean
    scale = gamma * lax.rsqrt(var + BN_EPS)
    shift = beta - mean * scale
    return scale, shift


# ----------------------------------------------------------------------------
# Kernel 1 / 3: (optional folded-BN+relu of the producer) -> 1x1 conv (matmul)
#               -> emit bf16 y and accumulate f32 per-channel sum / sumsq.
# ----------------------------------------------------------------------------
def _matmul_stats_kernel(pre_bn, mask_rows, tile_m, m_true):
    def kernel(*refs):
        if pre_bn:
            x_ref, scale_ref, shift_ref, w_ref, y_ref, sum_ref, sq_ref = refs
        else:
            x_ref, w_ref, y_ref, sum_ref, sq_ref = refs

        x = x_ref[...].astype(jnp.float32)
        if pre_bn:
            # Producer's BN folded to scale/shift, then ReLU.
            x = jnp.maximum(x * scale_ref[...] + shift_ref[...], 0.0)
            if mask_rows:
                # Rows beyond the true M (padding / unwritten producer rows)
                # must not feed the matmul or this stage's BN stats.
                r = (pl.program_id(0) * tile_m
                     + lax.broadcasted_iota(jnp.int32, (tile_m, 1), 0))
                x = jnp.where(r < m_true, x, 0.0)

        # bf16 MXU operands, f32 accumulation.
        y = jnp.dot(x.astype(jnp.bfloat16), w_ref[...],
                    preferred_element_type=jnp.float32)
        y_ref[...] = y.astype(y_ref.dtype)          # bf16 HBM intermediate

        @pl.when(pl.program_id(0) == 0)
        def _init():
            sum_ref[...] = jnp.zeros_like(sum_ref)
            sq_ref[...] = jnp.zeros_like(sq_ref)

        # Stats from the f32 accumulator (before the bf16 store rounding).
        sum_ref[...] += jnp.sum(y, axis=0, keepdims=True)
        sq_ref[...] += jnp.sum(y * y, axis=0, keepdims=True)

    return kernel


def _conv1x1_bn_stats(x2d, w_bf16, *, bn, tile_m, m_true):
    """bn = None (stage 1) or (scale, shift) of the producing stage's BN."""
    M, Cin = x2d.shape
    Cout = w_bf16.shape[1]
    grid = (M // tile_m,)

    x_spec = pl.BlockSpec((tile_m, Cin), lambda i: (i, 0))
    w_spec = pl.BlockSpec((Cin, Cout), lambda i: (0, 0))

    def vec(c):
        return pl.BlockSpec((1, c), lambda i: (0, 0))

    mask_rows = (bn is not None) and (M != m_true)
    if bn is None:
        args = [x2d, w_bf16]
        in_specs = [x_spec, w_spec]
    else:
        scale, shift = bn
        args = [x2d, scale, shift, w_bf16]
        in_specs = [x_spec, vec(Cin), vec(Cin), w_spec]

    kernel = _matmul_stats_kernel(bn is not None, mask_rows, tile_m, m_true)

    return pl.pallas_call(
        kernel,
        out_shape=(jax.ShapeDtypeStruct((M, Cout), jnp.bfloat16),
                   jax.ShapeDtypeStruct((1, Cout), jnp.float32),
                   jax.ShapeDtypeStruct((1, Cout), jnp.float32)),
        grid=grid,
        in_specs=in_specs,
        out_specs=(pl.BlockSpec((tile_m, Cout), lambda i: (i, 0)),
                   pl.BlockSpec((1, Cout), lambda i: (0, 0)),
                   pl.BlockSpec((1, Cout), lambda i: (0, 0))),
        compiler_params=pltpu.CompilerParams(
            dimension_semantics=("arbitrary",),     # stats accumulate across tiles
            vmem_limit_bytes=VMEM_LIMIT),
    )(*args)


# ----------------------------------------------------------------------------
# Kernel 2: folded BN1+relu (on load) -> 3x3 conv as ONE big-K matmul over 9
#           roll-generated taps (XLU rolls + hoisted boundary masks; no halo
#           scratch, no misaligned shifted copies) -> bf16 y2 + BN2 stats.
# Grid iterates over images; within an image the flattened (H*W, C) rows are
# circularly rolled by (1-dy)*W + (1-dx) and boundary positions are masked.
# ----------------------------------------------------------------------------
def _conv3x3_kernel(H, W):
    HW = H * W

    def kernel(y1_ref, scale_ref, shift_ref, w2_ref, y2_ref, sum_ref, sq_ref):
        # Normalize-on-load (folded BN1) + ReLU, in f32.
        x = jnp.maximum(
            y1_ref[...].astype(jnp.float32) * scale_ref[...] + shift_ref[...],
            0.0)

        # Hoisted boundary masks over the flattened (HW, 1) pixel index.
        ridx = lax.broadcasted_iota(jnp.int32, (HW, 1), 0)
        col = ridx % W
        not_top = ridx >= W              # source row-1 exists
        not_bot = ridx < (HW - W)        # source row+1 exists
        not_left = col != 0              # source col-1 exists
        not_right = col != (W - 1)       # source col+1 exists
        vmask = (not_top, None, not_bot)
        hmask = (not_left, None, not_right)

        # 9 taps via circular rolls (XLU slot, otherwise idle) + masks, then a
        # single K = 9*Cin_p matmul (fills v6e/v7x 256-wide MXUs, accumulator
        # written once).
        taps = []
        for dy in range(3):
            for dx in range(3):
                sh = ((1 - dy) * W + (1 - dx)) % HW
                xs = pltpu.roll(x, sh, 0) if sh else x
                m = vmask[dy]
                if hmask[dx] is not None:
                    m = hmask[dx] if m is None else jnp.logical_and(m, hmask[dx])
                if m is not None:
                    xs = jnp.where(m, xs, 0.0)
                taps.append(xs.astype(jnp.bfloat16))
        xcat = jnp.concatenate(taps, axis=-1)            # (HW, 9*Cin_p) bf16

        y = jnp.dot(xcat, w2_ref[...], preferred_element_type=jnp.float32)
        y2_ref[...] = y.astype(y2_ref.dtype)             # bf16 HBM intermediate

        @pl.when(pl.program_id(0) == 0)
        def _init():
            sum_ref[...] = jnp.zeros_like(sum_ref)
            sq_ref[...] = jnp.zeros_like(sq_ref)

        sum_ref[...] += jnp.sum(y, axis=0, keepdims=True)
        sq_ref[...] += jnp.sum(y * y, axis=0, keepdims=True)

    return kernel


def _conv3x3_bn_stats(y1, bn1, w2cat_bf16, N, H, W):
    HW = H * W
    m_rows, cin = y1.shape
    kcat, cout = w2cat_bf16.shape
    scale1, shift1 = bn1

    def vec(c):
        return pl.BlockSpec((1, c), lambda n: (0, 0))

    # Deeper input prefetch only pays off (and only makes sense) when there
    # are enough grid steps; at tiny batch the default double-buffering is fine.
    if N >= 3:
        y1_spec = pl.BlockSpec((HW, cin), lambda n: (n, 0),
                               pipeline_mode=pl.Buffered(3))
    else:
        y1_spec = pl.BlockSpec((HW, cin), lambda n: (n, 0))

    return pl.pallas_call(
        _conv3x3_kernel(H, W),
        out_shape=(jax.ShapeDtypeStruct((m_rows, cout), jnp.bfloat16),
                   jax.ShapeDtypeStruct((1, cout), jnp.float32),
                   jax.ShapeDtypeStruct((1, cout), jnp.float32)),
        grid=(N,),
        in_specs=[y1_spec, vec(cin), vec(cin),
                  pl.BlockSpec((kcat, cout), lambda n: (0, 0))],
        out_specs=(pl.BlockSpec((HW, cout), lambda n: (n, 0)),
                   pl.BlockSpec((1, cout), lambda n: (0, 0)),
                   pl.BlockSpec((1, cout), lambda n: (0, 0))),
        compiler_params=pltpu.CompilerParams(
            dimension_semantics=("arbitrary",),
            vmem_limit_bytes=VMEM_LIMIT),
    )(y1, scale1, shift1, w2cat_bf16)


# ----------------------------------------------------------------------------
# Kernel 4: folded BN3 + identity residual + relu (elementwise, M-tiled).
# ----------------------------------------------------------------------------
def _finalize_kernel(y_ref, scale_ref, shift_ref, res_ref, o_ref):
    y = y_ref[...].astype(jnp.float32) * scale_ref[...] + shift_ref[...]
    o_ref[...] = jnp.maximum(y + res_ref[...], 0.0)


def _finalize(y3, bn3, res, tile_m):
    M, C = y3.shape
    scale, shift = bn3

    def vec():
        return pl.BlockSpec((1, C), lambda i: (0, 0))

    return pl.pallas_call(
        _finalize_kernel,
        out_shape=jax.ShapeDtypeStruct((M, C), jnp.float32),
        grid=(M // tile_m,),
        in_specs=[pl.BlockSpec((tile_m, C), lambda i: (i, 0)),
                  vec(), vec(),
                  pl.BlockSpec((tile_m, C), lambda i: (i, 0))],
        out_specs=pl.BlockSpec((tile_m, C), lambda i: (i, 0)),
        compiler_params=pltpu.CompilerParams(
            dimension_semantics=("parallel",),       # independent tiles -> megacore
            vmem_limit_bytes=VMEM_LIMIT),
    )(y3, scale, shift, res)


# ----------------------------------------------------------------------------
# Top-level forward (NHWC core; NCHW wrapper below for module parity).
# ----------------------------------------------------------------------------
def bottleneck_forward_nhwc(x_nhwc, params):
    (w1, g1, b1), (w2, g2, b2), (w3, g3, b3) = params
    N, H, W, Cin = x_nhwc.shape
    width = w1.shape[1]
    cout = w3.shape[1]
    assert Cin == cout, "identity residual needs inplanes == planes*expansion"
    HW = H * W
    assert HW % 8 == 0, "per-image row block must be sublane aligned"

    M = N * HW
    cin_p = _round_up(Cin, LANE)
    wid_p = _round_up(width, LANE)
    cout_p = _round_up(cout, LANE)

    # Large fixed row tile; pad M up to a multiple of it (pad rows are exact
    # zeros and contribute nothing to the BN statistics).
    tile_m = TILE_M if M >= TILE_M else _round_up(M, 8)
    m_pad = _round_up(M, tile_m)

    def pad2(a, r, c):
        return jnp.pad(a, ((0, r - a.shape[0]), (0, c - a.shape[1])))

    x_p = pad2(x_nhwc.reshape(M, Cin), m_pad, cin_p)     # f32; also the residual
    w1_p = pad2(w1, cin_p, wid_p).astype(jnp.bfloat16)
    w2_p = jnp.pad(w2.reshape(9, width, width),
                   ((0, 0), (0, wid_p - width), (0, wid_p - width)))
    w2_p = w2_p.reshape(9 * wid_p, wid_p).astype(jnp.bfloat16)   # (9*Cin_p, Cout_p)
    w3_p = pad2(w3, wid_p, cout_p).astype(jnp.bfloat16)
    g1_p, b1_p = pad2(g1, 1, wid_p), pad2(b1, 1, wid_p)
    g2_p, b2_p = pad2(g2, 1, wid_p), pad2(b2, 1, wid_p)
    g3_p, b3_p = pad2(g3, 1, cout_p), pad2(b3, 1, cout_p)

    # Stage 1: conv1 (1x1) -> bf16 y1 + BN1 raw moments.
    y1, s1, q1 = _conv1x1_bn_stats(x_p, w1_p, bn=None, tile_m=tile_m, m_true=M)
    bn1 = _bn_fold(s1, q1, g1_p, b1_p, M)
    # Stage 2: BN1+relu on load -> fused 3x3 conv (one K=9*Cin matmul) -> y2.
    y2, s2, q2 = _conv3x3_bn_stats(y1, bn1, w2_p, N, H, W)
    bn2 = _bn_fold(s2, q2, g2_p, b2_p, M)
    # Stage 3: BN2+relu on load -> conv3 (1x1) -> y3 (+ row mask if M padded).
    y3, s3, q3 = _conv1x1_bn_stats(y2, w3_p, bn=bn2, tile_m=tile_m, m_true=M)
    bn3 = _bn_fold(s3, q3, g3_p, b3_p, M)
    # Stage 4: BN3 + identity residual + relu.
    out = _finalize(y3, bn3, x_p, tile_m)

    return out[:M, :cout].reshape(N, H, W, cout)


def bottleneck_forward(x_nchw, params):
    """NCHW entry point matching the PyTorch module's layout.

    The NHWC core is transpose-free; callers that can feed NHWC directly
    should use `bottleneck_forward_nhwc` to avoid these two full-tensor
    HBM transposes.
    """
    out = bottleneck_forward_nhwc(jnp.transpose(x_nchw, (0, 2, 3, 1)), params)
    return jnp.transpose(out, (0, 3, 1, 2))


# ----------------------------------------------------------------------------
# Pure-JAX reference.  Same training-mode BatchNorm math as the PyTorch
# module; matmul operands are rounded to bf16 and the inter-stage activations
# are rounded to bf16 exactly like the kernels' HBM intermediates, so the
# comparison isolates the kernel / tiling / roll-halo logic.  Versus pure-f32
# PyTorch math the deviation is at bf16 precision by design.
# ----------------------------------------------------------------------------
def _reference_forward(x_nchw, params):
    (w1, g1, b1), (w2, g2, b2), (w3, g3, b3) = params
    N, Cin, H, W = x_nchw.shape
    x = jnp.transpose(x_nchw, (0, 2, 3, 1))

    def mm(a, b):
        return jnp.einsum("nhwc,cd->nhwd", a.astype(jnp.bfloat16),
                          b.astype(jnp.bfloat16),
                          preferred_element_type=jnp.float32)

    def fold(y, g, b):
        m = jnp.mean(y, axis=(0, 1, 2))
        v = jnp.mean(y * y, axis=(0, 1, 2)) - m * m
        scale = g.reshape(-1) / jnp.sqrt(v + BN_EPS)
        shift = b.reshape(-1) - m * scale
        return scale, shift

    def bn_relu(y, g, b):
        scale, shift = fold(y, g, b)
        y16 = y.astype(jnp.bfloat16).astype(jnp.float32)   # mirrors bf16 HBM store
        return jnp.maximum(y16 * scale + shift, 0.0)

    o1 = bn_relu(mm(x, w1), g1, b1)
    xp = jnp.pad(o1, ((0, 0), (1, 1), (1, 1), (0, 0)))
    acc = jnp.zeros((N, H, W, w2.shape[-1]), jnp.float32)
    for dy in range(3):
        for dx in range(3):
            acc = acc + mm(xp[:, dy:dy + H, dx:dx + W, :], w2[dy, dx])
    o2 = bn_relu(acc, g2, b2)
    y3 = mm(o2, w3)
    scale3, shift3 = fold(y3, g3, b3)
    o3 = y3.astype(jnp.bfloat16).astype(jnp.float32) * scale3 + shift3 + x
    return jnp.transpose(jnp.maximum(o3, 0.0), (0, 3, 1, 2))


if __name__ == "__main__":
    # Small shapes consistent with the module: inplanes = planes*expansion so
    # the identity residual path is valid.
    N, H, W = 2, 16, 16
    planes, expansion = 4, 4
    inplanes = planes * expansion          # 16
    width = int(planes * (64 / 64.0))      # 4

    key = jax.random.PRNGKey(0)
    kx, k1, k2, k3 = jax.random.split(key, 4)

    x = jax.random.normal(kx, (N, inplanes, H, W), dtype=jnp.float32)

    # Weights in matmul form (conv1x1 -> (cin,cout), conv3x3 -> (3,3,cin,cout)).
    w1 = 0.1 * jax.random.normal(k1, (inplanes, width), dtype=jnp.float32)
    w2 = 0.1 * jax.random.normal(k2, (3, 3, width, width), dtype=jnp.float32)
    w3 = 0.1 * jax.random.normal(k3, (width, inplanes), dtype=jnp.float32)

    def bn_params(c):                      # PyTorch BatchNorm2d default init
        return jnp.ones((1, c), jnp.float32), jnp.zeros((1, c), jnp.float32)

    g1, b1 = bn_params(width)
    g2, b2 = bn_params(width)
    g3, b3 = bn_params(inplanes)
    params = ((w1, g1, b1), (w2, g2, b2), (w3, g3, b3))

    fwd = jax.jit(functools.partial(bottleneck_forward, params=params))
    out = jax.block_until_ready(fwd(x))

    ref = jax.block_until_ready(_reference_forward(x, params))
    assert out.shape == (N, inplanes, H, W)
    np.testing.assert_allclose(np.asarray(out), np.asarray(ref),
                               atol=2e-2, rtol=2e-2)
    print("KERNEL_OK")
</pallas_src>

<mosaic_0001>
module attributes {stable_mosaic.version = 11 : i64} {
  func.func @kernel(%arg0: i32, %arg1: memref<512x128xf32, #tpu.memory_space<vmem>>, %arg2: memref<128x128xbf16, #tpu.memory_space<vmem>>, %arg3: memref<512x128xbf16, #tpu.memory_space<vmem>>, %arg4: memref<1x128xf32, #tpu.memory_space<vmem>>, %arg5: memref<1x128xf32, #tpu.memory_space<vmem>>) attributes {dimension_semantics = [#tpu.dimension_semantics<arbitrary>], iteration_bounds = array<i64: 1>, scalar_prefetch = 0 : i64, scratch_operands = 0 : i64, tpu.core_type = #tpu.core_type<tc>, window_params = [{transform_indices = @transform_0, window_bounds = array<i64: 512, 128>}, {pipeline_mode = #tpu.pipeline_mode<synchronous>, transform_indices = @transform_1, window_bounds = array<i64: 128, 128>}, {transform_indices = @transform_2, window_bounds = array<i64: 512, 128>}, {pipeline_mode = #tpu.pipeline_mode<synchronous>, transform_indices = @transform_3, window_bounds = array<i64: 1, 128>}, {pipeline_mode = #tpu.pipeline_mode<synchronous>, transform_indices = @transform_4, window_bounds = array<i64: 1, 128>}]} {
    %c0 = arith.constant 0 : index
    %c0_0 = arith.constant 0 : index
    %0 = vector.load %arg1[%c0, %c0_0] : memref<512x128xf32, #tpu.memory_space<vmem>>, vector<512x128xf32>
    %1 = arith.truncf %0 : vector<512x128xf32> to vector<512x128xbf16>
    %c0_1 = arith.constant 0 : index
    %c0_2 = arith.constant 0 : index
    %2 = vector.load %arg2[%c0_1, %c0_2] : memref<128x128xbf16, #tpu.memory_space<vmem>>, vector<128x128xbf16>
    %cst = arith.constant dense<0.000000e+00> : vector<512x128xf32>
    %3 = tpu.matmul %1, %2, %cst {dimension_numbers = #tpu.dot_dimension_numbers<[1], [0], [0], [1], [0, 0, 1, 1], [], []>} : vector<512x128xbf16>, vector<128x128xbf16>, vector<512x128xf32> -> vector<512x128xf32>
    %4 = arith.truncf %3 : vector<512x128xf32> to vector<512x128xbf16>
    %c0_3 = arith.constant 0 : index
    %c0_4 = arith.constant 0 : index
    %5 = vector.load %arg3[%c0_3, %c0_4] : memref<512x128xbf16, #tpu.memory_space<vmem>>, vector<512x128xbf16>
    tpu.vector_store %arg3[%c0_3, %c0_4], %4 {strides = array<i32>} : memref<512x128xbf16, #tpu.memory_space<vmem>>, vector<512x128xbf16>,
    %c0_i32 = arith.constant 0 : i32
    %6 = arith.cmpi eq, %arg0, %c0_i32 : i32
    %7 = arith.extui %6 : i1 to i32
    %c0_i32_5 = arith.constant 0 : i32
    %8 = arith.cmpi ne, %7, %c0_i32_5 : i32
    scf.if %8 {
      %cst_16 = arith.constant 0.000000e+00 : f32
      %20 = vector.broadcast %cst_16 : f32 to vector<1x128xf32>
      %c0_17 = arith.constant 0 : index
      %c0_18 = arith.constant 0 : index
      %21 = vector.load %arg4[%c0_17, %c0_18] : memref<1x128xf32, #tpu.memory_space<vmem>>, vector<1x128xf32>
      tpu.vector_store %arg4[%c0_17, %c0_18], %20 {strides = array<i32>} : memref<1x128xf32, #tpu.memory_space<vmem>>, vector<1x128xf32>,
      %cst_19 = arith.constant 0.000000e+00 : f32
      %22 = vector.broadcast %cst_19 : f32 to vector<1x128xf32>
      %c0_20 = arith.constant 0 : index
      %c0_21 = arith.constant 0 : index
      %23 = vector.load %arg5[%c0_20, %c0_21] : memref<1x128xf32, #tpu.memory_space<vmem>>, vector<1x128xf32>
      tpu.vector_store %arg5[%c0_20, %c0_21], %22 {strides = array<i32>} : memref<1x128xf32, #tpu.memory_space<vmem>>, vector<1x128xf32>,
    } else {
    }
    %c0_6 = arith.constant 0 : index
    %c0_7 = arith.constant 0 : index
    %9 = vector.load %arg4[%c0_6, %c0_7] : memref<1x128xf32, #tpu.memory_space<vmem>>, vector<1x128xf32>
    %cst_8 = arith.constant dense<0.000000e+00> : vector<128xf32>
    %10 = vector.multi_reduction <add>, %3, %cst_8 [0] : vector<512x128xf32> to vector<128xf32>
    %11 = vector.shape_cast %10 : vector<128xf32> to vector<1x128xf32>
    %12 = arith.addf %9, %11 : vector<1x128xf32>
    %c0_9 = arith.constant 0 : index
    %c0_10 = arith.constant 0 : index
    %13 = vector.load %arg4[%c0_9, %c0_10] : memref<1x128xf32, #tpu.memory_space<vmem>>, vector<1x128xf32>
    tpu.vector_store %arg4[%c0_9, %c0_10], %12 {strides = array<i32>} : memref<1x128xf32, #tpu.memory_space<vmem>>, vector<1x128xf32>,
    %c0_11 = arith.constant 0 : index
    %c0_12 = arith.constant 0 : index
    %14 = vector.load %arg5[%c0_11, %c0_12] : memref<1x128xf32, #tpu.memory_space<vmem>>, vector<1x128xf32>
    %15 = arith.mulf %3, %3 : vector<512x128xf32>
    %cst_13 = arith.constant dense<0.000000e+00> : vector<128xf32>
    %16 = vector.multi_reduction <add>, %15, %cst_13 [0] : vector<512x128xf32> to vector<128xf32>
    %17 = vector.shape_cast %16 : vector<128xf32> to vector<1x128xf32>
    %18 = arith.addf %14, %17 : vector<1x128xf32>
    %c0_14 = arith.constant 0 : index
    %c0_15 = arith.constant 0 : index
    %19 = vector.load %arg5[%c0_14, %c0_15] : memref<1x128xf32, #tpu.memory_space<vmem>>, vector<1x128xf32>
    tpu.vector_store %arg5[%c0_14, %c0_15], %18 {strides = array<i32>} : memref<1x128xf32, #tpu.memory_space<vmem>>, vector<1x128xf32>,
    return
  }
  func.func @transform_0(%arg0: i32) -> (i32, i32) {
    %c0_i32 = arith.constant 0 : i32
    %c0_i32_0 = arith.constant 0 : i32
    return %arg0, %c0_i32 : i32, i32
  }
  func.func @transform_1(%arg0: i32) -> (i32, i32) {
    %c0_i32 = arith.constant 0 : i32
    %c0_i32_0 = arith.constant 0 : i32
    %c0_i32_1 = arith.constant 0 : i32
    return %c0_i32, %c0_i32_0 : i32, i32
  }
  func.func @transform_2(%arg0: i32) -> (i32, i32) {
    %c0_i32 = arith.constant 0 : i32
    %c0_i32_0 = arith.constant 0 : i32
    return %arg0, %c0_i32 : i32, i32
  }
  func.func @transform_3(%arg0: i32) -> (i32, i32) {
    %c0_i32 = arith.constant 0 : i32
    %c0_i32_0 = arith.constant 0 : i32
    %c0_i32_1 = arith.constant 0 : i32
    return %c0_i32, %c0_i32_0 : i32, i32
  }
  func.func @transform_4(%arg0: i32) -> (i32, i32) {
    %c0_i32 = arith.constant 0 : i32
    %c0_i32_0 = arith.constant 0 : i32
    %c0_i32_1 = arith.constant 0 : i32
    return %c0_i32, %c0_i32_0 : i32, i32
  }
}

module attributes {stable_mosaic.version = 11 : i64} {
  func.func @kernel(%arg0: i32, %arg1: memref<256x128xbf16, #tpu.memory_space<vmem>>, %arg2: memref<1x128xf32, #tpu.memory_space<vmem>>, %arg3: memref<1x128xf32, #tpu.memory_space<vmem>>, %arg4: memref<1152x128xbf16, #tpu.memory_space<vmem>>, %arg5: memref<256x128xbf16, #tpu.memory_space<vmem>>, %arg6: memref<1x128xf32, #tpu.memory_space<vmem>>, %arg7: memref<1x128xf32, #tpu.memory_space<vmem>>) attributes {dimension_semantics = [#tpu.dimension_semantics<arbitrary>], iteration_bounds = array<i64: 2>, scalar_prefetch = 0 : i64, scratch_operands = 0 : i64, tpu.core_type = #tpu.core_type<tc>, window_params = [{transform_indices = @transform_0, window_bounds = array<i64: 256, 128>}, {pipeline_mode = #tpu.pipeline_mode<synchronous>, transform_indices = @transform_1, window_bounds = array<i64: 1, 128>}, {pipeline_mode = #tpu.pipeline_mode<synchronous>, transform_indices = @transform_2, window_bounds = array<i64: 1, 128>}, {pipeline_mode = #tpu.pipeline_mode<synchronous>, transform_indices = @transform_3, window_bounds = array<i64: 1152, 128>}, {transform_indices = @transform_4, window_bounds = array<i64: 256, 128>}, {pipeline_mode = #tpu.pipeline_mode<synchronous>, transform_indices = @transform_5, window_bounds = array<i64: 1, 128>}, {pipeline_mode = #tpu.pipeline_mode<synchronous>, transform_indices = @transform_6, window_bounds = array<i64: 1, 128>}]} {
    %c0 = arith.constant 0 : index
    %c0_0 = arith.constant 0 : index
    %0 = vector.load %arg1[%c0, %c0_0] : memref<256x128xbf16, #tpu.memory_space<vmem>>, vector<256x128xbf16>
    %1 = arith.extf %0 : vector<256x128xbf16> to vector<256x128xf32>
    %c0_1 = arith.constant 0 : index
    %c0_2 = arith.constant 0 : index
    %2 = vector.load %arg2[%c0_1, %c0_2] : memref<1x128xf32, #tpu.memory_space<vmem>>, vector<1x128xf32>
    %3 = vector.broadcast %2 : vector<1x128xf32> to vector<256x128xf32>
    %4 = arith.mulf %1, %3 : vector<256x128xf32>
    %c0_3 = arith.constant 0 : index
    %c0_4 = arith.constant 0 : index
    %5 = vector.load %arg3[%c0_3, %c0_4] : memref<1x128xf32, #tpu.memory_space<vmem>>, vector<1x128xf32>
    %6 = vector.broadcast %5 : vector<1x128xf32> to vector<256x128xf32>
    %7 = arith.addf %4, %6 : vector<256x128xf32>
    %cst = arith.constant 0.000000e+00 : f32
    %8 = vector.broadcast %cst : f32 to vector<256x128xf32>
    %9 = arith.maximumf %7, %8 : vector<256x128xf32>
    %10 = tpu.iota {dimensions = array<i32: 0>} : vector<256x1xi32>
    %c16_i32 = arith.constant 16 : i32
    %c0_i32 = arith.constant 0 : i32
    %11 = arith.cmpi eq, %c16_i32, %c0_i32 : i32
    %c1_i32 = arith.constant 1 : i32
    %12 = arith.select %11, %c1_i32, %c16_i32 : i32
    %13 = vector.broadcast %12 : i32 to vector<256x1xi32>
    %14 = arith.remsi %10, %13 : vector<256x1xi32>
    %c0_i32_5 = arith.constant 0 : i32
    %15 = vector.broadcast %c0_i32_5 : i32 to vector<256x1xi32>
    %16 = arith.cmpi ne, %14, %15 : vector<256x1xi32>
    %c0_i32_6 = arith.constant 0 : i32
    %17 = vector.broadcast %c0_i32_6 : i32 to vector<256x1xi32>
    %18 = arith.cmpi slt, %14, %17 : vector<256x1xi32>
    %c0_i32_7 = arith.constant 0 : i32
    %19 = arith.cmpi slt, %12, %c0_i32_7 : i32
    %20 = vector.broadcast %19 : i1 to vector<256x1xi1>
    %21 = vector.broadcast %20 : vector<256x1xi1> to vector<256x1xi1>
    %22 = arith.xori %18, %21 : vector<256x1xi1>
    %23 = arith.andi %22, %16 : vector<256x1xi1>
    %24 = vector.broadcast %12 : i32 to vector<256x1xi32>
    %25 = arith.addi %14, %24 : vector<256x1xi32>
    %26 = arith.select %23, %25, %14 : vector<256x1xi1>, vector<256x1xi32>
    %c16_i32_8 = arith.constant 16 : i32
    %27 = vector.broadcast %c16_i32_8 : i32 to vector<256x1xi32>
    %28 = arith.cmpi sge, %10, %27 : vector<256x1xi32>
    %c240_i32 = arith.constant 240 : i32
    %29 = vector.broadcast %c240_i32 : i32 to vector<256x1xi32>
    %30 = arith.cmpi slt, %10, %29 : vector<256x1xi32>
    %c0_i32_9 = arith.constant 0 : i32
    %31 = vector.broadcast %c0_i32_9 : i32 to vector<256x1xi32>
    %32 = arith.cmpi ne, %26, %31 : vector<256x1xi32>
    %c15_i32 = arith.constant 15 : i32
    %33 = vector.broadcast %c15_i32 : i32 to vector<256x1xi32>
    %34 = arith.cmpi ne, %26, %33 : vector<256x1xi32>
    %c17_i32 = arith.constant 17 : i32
    %35 = tpu.dynamic_rotate %9 by %c17_i32 dim 0 : vector<256x128xf32>, i32 -> vector<256x128xf32>
    %36 = arith.andi %28, %32 : vector<256x1xi1>
    %cst_10 = arith.constant 0.000000e+00 : f32
    %37 = vector.shape_cast %36 : vector<256x1xi1> to vector<256x1xi1>
    %38 = vector.broadcast %37 : vector<256x1xi1> to vector<256x128xi1>
    %39 = vector.broadcast %cst_10 : f32 to vector<256x128xf32>
    %40 = arith.select %38, %35, %39 : vector<256x128xi1>, vector<256x128xf32>
    %41 = arith.truncf %40 : vector<256x128xf32> to vector<256x128xbf16>
    %c16_i32_11 = arith.constant 16 : i32
    %42 = tpu.dynamic_rotate %9 by %c16_i32_11 dim 0 : vector<256x128xf32>, i32 -> vector<256x128xf32>
    %cst_12 = arith.constant 0.000000e+00 : f32
    %43 = vector.shape_cast %28 : vector<256x1xi1> to vector<256x1xi1>
    %44 = vector.broadcast %43 : vector<256x1xi1> to vector<256x128xi1>
    %45 = vector.broadcast %cst_12 : f32 to vector<256x128xf32>
    %46 = arith.select %44, %42, %45 : vector<256x128xi1>, vector<256x128xf32>
    %47 = arith.truncf %46 : vector<256x128xf32> to vector<256x128xbf16>
    %c15_i32_13 = arith.constant 15 : i32
    %48 = tpu.dynamic_rotate %9 by %c15_i32_13 dim 0 : vector<256x128xf32>, i32 -> vector<256x128xf32>
    %49 = arith.andi %28, %34 : vector<256x1xi1>
    %cst_14 = arith.constant 0.000000e+00 : f32
    %50 = vector.shape_cast %49 : vector<256x1xi1> to vector<256x1xi1>
    %51 = vector.broadcast %50 : vector<256x1xi1> to vector<256x128xi1>
    %52 = vector.broadcast %cst_14 : f32 to vector<256x128xf32>
    %53 = arith.select %51, %48, %52 : vector<256x128xi1>, vector<256x128xf32>
    %54 = arith.truncf %53 : vector<256x128xf32> to vector<256x128xbf16>
    %c1_i32_15 = arith.constant 1 : i32
    %55 = tpu.dynamic_rotate %9 by %c1_i32_15 dim 0 : vector<256x128xf32>, i32 -> vector<256x128xf32>
    %cst_16 = arith.constant 0.000000e+00 : f32
    %56 = vector.shape_cast %32 : vector<256x1xi1> to vector<256x1xi1>
    %57 = vector.broadcast %56 : vector<256x1xi1> to vector<256x128xi1>
    %58 = vector.broadcast %cst_16 : f32 to vector<256x128xf32>
    %59 = arith.select %57, %55, %58 : vector<256x128xi1>, vector<256x128xf32>
    %60 = arith.truncf %59 : vector<256x128xf32> to vector<256x128xbf16>
    %61 = arith.truncf %9 : vector<256x128xf32> to vector<256x128xbf16>
    %c255_i32 = arith.constant 255 : i32
    %62 = tpu.dynamic_rotate %9 by %c255_i32 dim 0 : vector<256x128xf32>, i32 -> vector<256x128xf32>
    %cst_17 = arith.constant 0.000000e+00 : f32
    %63 = vector.shape_cast %34 : vector<256x1xi1> to vector<256x1xi1>
    %64 = vector.broadcast %63 : vector<256x1xi1> to vector<256x128xi1>
    %65 = vector.broadcast %cst_17 : f32 to vector<256x128xf32>
    %66 = arith.select %64, %62, %65 : vector<256x128xi1>, vector<256x128xf32>
    %67 = arith.truncf %66 : vector<256x128xf32> to vector<256x128xbf16>
    %c241_i32 = arith.constant 241 : i32
    %68 = tpu.dynamic_rotate %9 by %c241_i32 dim 0 : vector<256x128xf32>, i32 -> vector<256x128xf32>
    %69 = arith.andi %30, %32 : vector<256x1xi1>
    %cst_18 = arith.constant 0.000000e+00 : f32
    %70 = vector.shape_cast %69 : vector<256x1xi1> to vector<256x1xi1>
    %71 = vector.broadcast %70 : vector<256x1xi1> to vector<256x128xi1>
    %72 = vector.broadcast %cst_18 : f32 to vector<256x128xf32>
    %73 = arith.select %71, %68, %72 : vector<256x128xi1>, vector<256x128xf32>
    %74 = arith.truncf %73 : vector<256x128xf32> to vector<256x128xbf16>
    %c240_i32_19 = arith.constant 240 : i32
    %75 = tpu.dynamic_rotate %9 by %c240_i32_19 dim 0 : vector<256x128xf32>, i32 -> vector<256x128xf32>
    %cst_20 = arith.constant 0.000000e+00 : f32
    %76 = vector.shape_cast %30 : vector<256x1xi1> to vector<256x1xi1>
    %77 = vector.broadcast %76 : vector<256x1xi1> to vector<256x128xi1>
    %78 = vector.broadcast %cst_20 : f32 to vector<256x128xf32>
    %79 = arith.select %77, %75, %78 : vector<256x128xi1>, vector<256x128xf32>
    %80 = arith.truncf %79 : vector<256x128xf32> to vector<256x128xbf16>
    %c239_i32 = arith.constant 239 : i32
    %81 = tpu.dynamic_rotate %9 by %c239_i32 dim 0 : vector<256x128xf32>, i32 -> vector<256x128xf32>
    %82 = arith.andi %30, %34 : vector<256x1xi1>
    %cst_21 = arith.constant 0.000000e+00 : f32
    %83 = vector.shape_cast %82 : vector<256x1xi1> to vector<256x1xi1>
    %84 = vector.broadcast %83 : vector<256x1xi1> to vector<256x128xi1>
    %85 = vector.broadcast %cst_21 : f32 to vector<256x128xf32>
    %86 = arith.select %84, %81, %85 : vector<256x128xi1>, vector<256x128xf32>
    %87 = arith.truncf %86 : vector<256x128xf32> to vector<256x128xbf16>
    %88 = tpu.concatenate %41, %47, %54, %60, %61, %67, %74, %80, %87 in 1 : vector<256x128xbf16>, vector<256x128xbf16>, vector<256x128xbf16>, vector<256x128xbf16>, vector<256x128xbf16>, vector<256x128xbf16>, vector<256x128xbf16>, vector<256x128xbf16>, vector<256x128xbf16> -> vector<256x1152xbf16>
    %c0_22 = arith.constant 0 : index
    %c0_23 = arith.constant 0 : index
    %89 = vector.load %arg4[%c0_22, %c0_23] : memref<1152x128xbf16, #tpu.memory_space<vmem>>, vector<1152x128xbf16>
    %cst_24 = arith.constant dense<0.000000e+00> : vector<256x128xf32>
    %90 = tpu.matmul %88, %89, %cst_24 {dimension_numbers = #tpu.dot_dimension_numbers<[1], [0], [0], [1], [0, 0, 1, 1], [], []>} : vector<256x1152xbf16>, vector<1152x128xbf16>, vector<256x128xf32> -> vector<256x128xf32>
    %91 = arith.truncf %90 : vector<256x128xf32> to vector<256x128xbf16>
    %c0_25 = arith.constant 0 : index
    %c0_26 = arith.constant 0 : index
    %92 = vector.load %arg5[%c0_25, %c0_26] : memref<256x128xbf16, #tpu.memory_space<vmem>>, vector<256x128xbf16>
    tpu.vector_store %arg5[%c0_25, %c0_26], %91 {strides = array<i32>} : memref<256x128xbf16, #tpu.memory_space<vmem>>, vector<256x128xbf16>,
    %c0_i32_27 = arith.constant 0 : i32
    %93 = arith.cmpi eq, %arg0, %c0_i32_27 : i32
    %94 = arith.extui %93 : i1 to i32
    %c0_i32_28 = arith.constant 0 : i32
    %95 = arith.cmpi ne, %94, %c0_i32_28 : i32
    scf.if %95 {
      %cst_39 = arith.constant 0.000000e+00 : f32
      %107 = vector.broadcast %cst_39 : f32 to vector<1x128xf32>
      %c0_40 = arith.constant 0 : index
      %c0_41 = arith.constant 0 : index
      %108 = vector.load %arg6[%c0_40, %c0_41] : memref<1x128xf32, #tpu.memory_space<vmem>>, vector<1x128xf32>
      tpu.vector_store %arg6[%c0_40, %c0_41], %107 {strides = array<i32>} : memref<1x128xf32, #tpu.memory_space<vmem>>, vector<1x128xf32>,
      %cst_42 = arith.constant 0.000000e+00 : f32
      %109 = vector.broadcast %cst_42 : f32 to vector<1x128xf32>
      %c0_43 = arith.constant 0 : index
      %c0_44 = arith.constant 0 : index
      %110 = vector.load %arg7[%c0_43, %c0_44] : memref<1x128xf32, #tpu.memory_space<vmem>>, vector<1x128xf32>
      tpu.vector_store %arg7[%c0_43, %c0_44], %109 {strides = array<i32>} : memref<1x128xf32, #tpu.memory_space<vmem>>, vector<1x128xf32>,
    } else {
    }
    %c0_29 = arith.constant 0 : index
    %c0_30 = arith.constant 0 : index
    %96 = vector.load %arg6[%c0_29, %c0_30] : memref<1x128xf32, #tpu.memory_space<vmem>>, vector<1x128xf32>
    %cst_31 = arith.constant dense<0.000000e+00> : vector<128xf32>
    %97 = vector.multi_reduction <add>, %90, %cst_31 [0] : vector<256x128xf32> to vector<128xf32>
    %98 = vector.shape_cast %97 : vector<128xf32> to vector<1x128xf32>
    %99 = arith.addf %96, %98 : vector<1x128xf32>
    %c0_32 = arith.constant 0 : index
    %c0_33 = arith.constant 0 : index
    %100 = vector.load %arg6[%c0_32, %c0_33] : memref<1x128xf32, #tpu.memory_space<vmem>>, vector<1x128xf32>
    tpu.vector_store %arg6[%c0_32, %c0_33], %99 {strides = array<i32>} : memref<1x128xf32, #tpu.memory_space<vmem>>, vector<1x128xf32>,
    %c0_34 = arith.constant 0 : index
    %c0_35 = arith.constant 0 : index
    %101 = vector.load %arg7[%c0_34, %c0_35] : memref<1x128xf32, #tpu.memory_space<vmem>>, vector<1x128xf32>
    %102 = arith.mulf %90, %90 : vector<256x128xf32>
    %cst_36 = arith.constant dense<0.000000e+00> : vector<128xf32>
    %103 = vector.multi_reduction <add>, %102, %cst_36 [0] : vector<256x128xf32> to vector<128xf32>
    %104 = vector.shape_cast %103 : vector<128xf32> to vector<1x128xf32>
    %105 = arith.addf %101, %104 : vector<1x128xf32>
    %c0_37 = arith.constant 0 : index
    %c0_38 = arith.constant 0 : index
    %106 = vector.load %arg7[%c0_37, %c0_38] : memref<1x128xf32, #tpu.memory_space<vmem>>, vector<1x128xf32>
    tpu.vector_store %arg7[%c0_37, %c0_38], %105 {strides = array<i32>} : memref<1x128xf32, #tpu.memory_space<vmem>>, vector<1x128xf32>,
    return
  }
  func.func @transform_0(%arg0: i32) -> (i32, i32) {
    %c0_i32 = arith.constant 0 : i32
    %c0_i32_0 = arith.constant 0 : i32
    return %arg0, %c0_i32 : i32, i32
  }
  func.func @transform_1(%arg0: i32) -> (i32, i32) {
    %c0_i32 = arith.constant 0 : i32
    %c0_i32_0 = arith.constant 0 : i32
    %c0_i32_1 = arith.constant 0 : i32
    return %c0_i32, %c0_i32_0 : i32, i32
  }
  func.func @transform_2(%arg0: i32) -> (i32, i32) {
    %c0_i32 = arith.constant 0 : i32
    %c0_i32_0 = arith.constant 0 : i32
    %c0_i32_1 = arith.constant 0 : i32
    return %c0_i32, %c0_i32_0 : i32, i32
  }
  func.func @transform_3(%arg0: i32) -> (i32, i32) {
    %c0_i32 = arith.constant 0 : i32
    %c0_i32_0 = arith.constant 0 : i32
    %c0_i32_1 = arith.constant 0 : i32
    return %c0_i32, %c0_i32_0 : i32, i32
  }
  func.func @transform_4(%arg0: i32) -> (i32, i32) {
    %c0_i32 = arith.constant 0 : i32
    %c0_i32_0 = arith.constant 0 : i32
    return %arg0, %c0_i32 : i32, i32
  }
  func.func @transform_5(%arg0: i32) -> (i32, i32) {
    %c0_i32 = arith.constant 0 : i32
    %c0_i32_0 = arith.constant 0 : i32
    %c0_i32_1 = arith.constant 0 : i32
    return %c0_i32, %c0_i32_0 : i32, i32
  }
  func.func @transform_6(%arg0: i32) -> (i32, i32) {
    %c0_i32 = arith.constant 0 : i32
    %c0_i32_0 = arith.constant 0 : i32
    %c0_i32_1 = arith.constant 0 : i32
    return %c0_i32, %c0_i32_0 : i32, i32
  }
}

module attributes {stable_mosaic.version = 11 : i64} {
  func.func @kernel(%arg0: i32, %arg1: memref<512x128xbf16, #tpu.memory_space<vmem>>, %arg2: memref<1x128xf32, #tpu.memory_space<vmem>>, %arg3: memref<1x128xf32, #tpu.memory_space<vmem>>, %arg4: memref<128x128xbf16, #tpu.memory_space<vmem>>, %arg5: memref<512x128xbf16, #tpu.memory_space<vmem>>, %arg6: memref<1x128xf32, #tpu.memory_space<vmem>>, %arg7: memref<1x128xf32, #tpu.memory_space<vmem>>) attributes {dimension_semantics = [#tpu.dimension_semantics<arbitrary>], iteration_bounds = array<i64: 1>, scalar_prefetch = 0 : i64, scratch_operands = 0 : i64, tpu.core_type = #tpu.core_type<tc>, window_params = [{transform_indices = @transform_0, window_bounds = array<i64: 512, 128>}, {pipeline_mode = #tpu.pipeline_mode<synchronous>, transform_indices = @transform_1, window_bounds = array<i64: 1, 128>}, {pipeline_mode = #tpu.pipeline_mode<synchronous>, transform_indices = @transform_2, window_bounds = array<i64: 1, 128>}, {pipeline_mode = #tpu.pipeline_mode<synchronous>, transform_indices = @transform_3, window_bounds = array<i64: 128, 128>}, {transform_indices = @transform_4, window_bounds = array<i64: 512, 128>}, {pipeline_mode = #tpu.pipeline_mode<synchronous>, transform_indices = @transform_5, window_bounds = array<i64: 1, 128>}, {pipeline_mode = #tpu.pipeline_mode<synchronous>, transform_indices = @transform_6, window_bounds = array<i64: 1, 128>}]} {
    %c0 = arith.constant 0 : index
    %c0_0 = arith.constant 0 : index
    %0 = vector.load %arg1[%c0, %c0_0] : memref<512x128xbf16, #tpu.memory_space<vmem>>, vector<512x128xbf16>
    %1 = arith.extf %0 : vector<512x128xbf16> to vector<512x128xf32>
    %c0_1 = arith.constant 0 : index
    %c0_2 = arith.constant 0 : index
    %2 = vector.load %arg2[%c0_1, %c0_2] : memref<1x128xf32, #tpu.memory_space<vmem>>, vector<1x128xf32>
    %3 = vector.broadcast %2 : vector<1x128xf32> to vector<512x128xf32>
    %4 = arith.mulf %1, %3 : vector<512x128xf32>
    %c0_3 = arith.constant 0 : index
    %c0_4 = arith.constant 0 : index
    %5 = vector.load %arg3[%c0_3, %c0_4] : memref<1x128xf32, #tpu.memory_space<vmem>>, vector<1x128xf32>
    %6 = vector.broadcast %5 : vector<1x128xf32> to vector<512x128xf32>
    %7 = arith.addf %4, %6 : vector<512x128xf32>
    %cst = arith.constant 0.000000e+00 : f32
    %8 = vector.broadcast %cst : f32 to vector<512x128xf32>
    %9 = arith.maximumf %7, %8 : vector<512x128xf32>
    %10 = arith.truncf %9 : vector<512x128xf32> to vector<512x128xbf16>
    %c0_5 = arith.constant 0 : index
    %c0_6 = arith.constant 0 : index
    %11 = vector.load %arg4[%c0_5, %c0_6] : memref<128x128xbf16, #tpu.memory_space<vmem>>, vector<128x128xbf16>
    %cst_7 = arith.constant dense<0.000000e+00> : vector<512x128xf32>
    %12 = tpu.matmul %10, %11, %cst_7 {dimension_numbers = #tpu.dot_dimension_numbers<[1], [0], [0], [1], [0, 0, 1, 1], [], []>} : vector<512x128xbf16>, vector<128x128xbf16>, vector<512x128xf32> -> vector<512x128xf32>
    %13 = arith.truncf %12 : vector<512x128xf32> to vector<512x128xbf16>
    %c0_8 = arith.constant 0 : index
    %c0_9 = arith.constant 0 : index
    %14 = vector.load %arg5[%c0_8, %c0_9] : memref<512x128xbf16, #tpu.memory_space<vmem>>, vector<512x128xbf16>
    tpu.vector_store %arg5[%c0_8, %c0_9], %13 {strides = array<i32>} : memref<512x128xbf16, #tpu.memory_space<vmem>>, vector<512x128xbf16>,
    %c0_i32 = arith.constant 0 : i32
    %15 = arith.cmpi eq, %arg0, %c0_i32 : i32
    %16 = arith.extui %15 : i1 to i32
    %c0_i32_10 = arith.constant 0 : i32
    %17 = arith.cmpi ne, %16, %c0_i32_10 : i32
    scf.if %17 {
      %cst_21 = arith.constant 0.000000e+00 : f32
      %29 = vector.broadcast %cst_21 : f32 to vector<1x128xf32>
      %c0_22 = arith.constant 0 : index
      %c0_23 = arith.constant 0 : index
      %30 = vector.load %arg6[%c0_22, %c0_23] : memref<1x128xf32, #tpu.memory_space<vmem>>, vector<1x128xf32>
      tpu.vector_store %arg6[%c0_22, %c0_23], %29 {strides = array<i32>} : memref<1x128xf32, #tpu.memory_space<vmem>>, vector<1x128xf32>,
      %cst_24 = arith.constant 0.000000e+00 : f32
      %31 = vector.broadcast %cst_24 : f32 to vector<1x128xf32>
      %c0_25 = arith.constant 0 : index
      %c0_26 = arith.constant 0 : index
      %32 = vector.load %arg7[%c0_25, %c0_26] : memref<1x128xf32, #tpu.memory_space<vmem>>, vector<1x128xf32>
      tpu.vector_store %arg7[%c0_25, %c0_26], %31 {strides = array<i32>} : memref<1x128xf32, #tpu.memory_space<vmem>>, vector<1x128xf32>,
    } else {
    }
    %c0_11 = arith.constant 0 : index
    %c0_12 = arith.constant 0 : index
    %18 = vector.load %arg6[%c0_11, %c0_12] : memref<1x128xf32, #tpu.memory_space<vmem>>, vector<1x128xf32>
    %cst_13 = arith.constant dense<0.000000e+00> : vector<128xf32>
    %19 = vector.multi_reduction <add>, %12, %cst_13 [0] : vector<512x128xf32> to vector<128xf32>
    %20 = vector.shape_cast %19 : vector<128xf32> to vector<1x128xf32>
    %21 = arith.addf %18, %20 : vector<1x128xf32>
    %c0_14 = arith.constant 0 : index
    %c0_15 = arith.constant 0 : index
    %22 = vector.load %arg6[%c0_14, %c0_15] : memref<1x128xf32, #tpu.memory_space<vmem>>, vector<1x128xf32>
    tpu.vector_store %arg6[%c0_14, %c0_15], %21 {strides = array<i32>} : memref<1x128xf32, #tpu.memory_space<vmem>>, vector<1x128xf32>,
    %c0_16 = arith.constant 0 : index
    %c0_17 = arith.constant 0 : index
    %23 = vector.load %arg7[%c0_16, %c0_17] : memref<1x128xf32, #tpu.memory_space<vmem>>, vector<1x128xf32>
    %24 = arith.mulf %12, %12 : vector<512x128xf32>
    %cst_18 = arith.constant dense<0.000000e+00> : vector<128xf32>
    %25 = vector.multi_reduction <add>, %24, %cst_18 [0] : vector<512x128xf32> to vector<128xf32>
    %26 = vector.shape_cast %25 : vector<128xf32> to vector<1x128xf32>
    %27 = arith.addf %23, %26 : vector<1x128xf32>
    %c0_19 = arith.constant 0 : index
    %c0_20 = arith.constant 0 : index
    %28 = vector.load %arg7[%c0_19, %c0_20] : memref<1x128xf32, #tpu.memory_space<vmem>>, vector<1x128xf32>
    tpu.vector_store %arg7[%c0_19, %c0_20], %27 {strides = array<i32>} : memref<1x128xf32, #tpu.memory_space<vmem>>, vector<1x128xf32>,
    return
  }
  func.func @transform_0(%arg0: i32) -> (i32, i32) {
    %c0_i32 = arith.constant 0 : i32
    %c0_i32_0 = arith.constant 0 : i32
    return %arg0, %c0_i32 : i32, i32
  }
  func.func @transform_1(%arg0: i32) -> (i32, i32) {
    %c0_i32 = arith.constant 0 : i32
    %c0_i32_0 = arith.constant 0 : i32
    %c0_i32_1 = arith.constant 0 : i32
    return %c0_i32, %c0_i32_0 : i32, i32
  }
  func.func @transform_2(%arg0: i32) -> (i32, i32) {
    %c0_i32 = arith.constant 0 : i32
    %c0_i32_0 = arith.constant 0 : i32
    %c0_i32_1 = arith.constant 0 : i32
    return %c0_i32, %c0_i32_0 : i32, i32
  }
  func.func @transform_3(%arg0: i32) -> (i32, i32) {
    %c0_i32 = arith.constant 0 : i32
    %c0_i32_0 = arith.constant 0 : i32
    %c0_i32_1 = arith.constant 0 : i32
    return %c0_i32, %c0_i32_0 : i32, i32
  }
  func.func @transform_4(%arg0: i32) -> (i32, i32) {
    %c0_i32 = arith.constant 0 : i32
    %c0_i32_0 = arith.constant 0 : i32
    return %arg0, %c0_i32 : i32, i32
  }
  func.func @transform_5(%arg0: i32) -> (i32, i32) {
    %c0_i32 = arith.constant 0 : i32
    %c0_i32_0 = arith.constant 0 : i32
    %c0_i32_1 = arith.constant 0 : i32
    return %c0_i32, %c0_i32_0 : i32, i32
  }
  func.func @transform_6(%arg0: i32) -> (i32, i32) {
    %c0_i32 = arith.constant 0 : i32
    %c0_i32_0 = arith.constant 0 : i32
    %c0_i32_1 = arith.constant 0 : i32
    return %c0_i32, %c0_i32_0 : i32, i32
  }
}

module attributes {stable_mosaic.version = 11 : i64} {
  func.func @_finalize_kernel(%arg0: i32, %arg1: memref<512x128xbf16, #tpu.memory_space<vmem>>, %arg2: memref<1x128xf32, #tpu.memory_space<vmem>>, %arg3: memref<1x128xf32, #tpu.memory_space<vmem>>, %arg4: memref<512x128xf32, #tpu.memory_space<vmem>>, %arg5: memref<512x128xf32, #tpu.memory_space<vmem>>) attributes {dimension_semantics = [#tpu.dimension_semantics<parallel>], iteration_bounds = array<i64: 1>, scalar_prefetch = 0 : i64, scratch_operands = 0 : i64, tpu.core_type = #tpu.core_type<tc>, window_params = [{transform_indices = @transform_0, window_bounds = array<i64: 512, 128>}, {pipeline_mode = #tpu.pipeline_mode<synchronous>, transform_indices = @transform_1, window_bounds = array<i64: 1, 128>}, {pipeline_mode = #tpu.pipeline_mode<synchronous>, transform_indices = @transform_2, window_bounds = array<i64: 1, 128>}, {transform_indices = @transform_3, window_bounds = array<i64: 512, 128>}, {transform_indices = @transform_4, window_bounds = array<i64: 512, 128>}]} {
    %c0 = arith.constant 0 : index
    %c0_0 = arith.constant 0 : index
    %0 = vector.load %arg1[%c0, %c0_0] : memref<512x128xbf16, #tpu.memory_space<vmem>>, vector<512x128xbf16>
    %1 = arith.extf %0 : vector<512x128xbf16> to vector<512x128xf32>
    %c0_1 = arith.constant 0 : index
    %c0_2 = arith.constant 0 : index
    %2 = vector.load %arg2[%c0_1, %c0_2] : memref<1x128xf32, #tpu.memory_space<vmem>>, vector<1x128xf32>
    %3 = vector.broadcast %2 : vector<1x128xf32> to vector<512x128xf32>
    %4 = arith.mulf %1, %3 : vector<512x128xf32>
    %c0_3 = arith.constant 0 : index
    %c0_4 = arith.constant 0 : index
    %5 = vector.load %arg3[%c0_3, %c0_4] : memref<1x128xf32, #tpu.memory_space<vmem>>, vector<1x128xf32>
    %6 = vector.broadcast %5 : vector<1x128xf32> to vector<512x128xf32>
    %7 = arith.addf %4, %6 : vector<512x128xf32>
    %c0_5 = arith.constant 0 : index
    %c0_6 = arith.constant 0 : index
    %8 = vector.load %arg4[%c0_5, %c0_6] : memref<512x128xf32, #tpu.memory_space<vmem>>, vector<512x128xf32>
    %9 = arith.addf %7, %8 : vector<512x128xf32>
    %cst = arith.constant 0.000000e+00 : f32
    %10 = vector.broadcast %cst : f32 to vector<512x128xf32>
    %11 = arith.maximumf %9, %10 : vector<512x128xf32>
    %c0_7 = arith.constant 0 : index
    %c0_8 = arith.constant 0 : index
    %12 = vector.load %arg5[%c0_7, %c0_8] : memref<512x128xf32, #tpu.memory_space<vmem>>, vector<512x128xf32>
    tpu.vector_store %arg5[%c0_7, %c0_8], %11 {strides = array<i32>} : memref<512x128xf32, #tpu.memory_space<vmem>>, vector<512x128xf32>,
    return
  }
  func.func @transform_0(%arg0: i32) -> (i32, i32) {
    %c0_i32 = arith.constant 0 : i32
    %c0_i32_0 = arith.constant 0 : i32
    return %arg0, %c0_i32 : i32, i32
  }
  func.func @transform_1(%arg0: i32) -> (i32, i32) {
    %c0_i32 = arith.constant 0 : i32
    %c0_i32_0 = arith.constant 0 : i32
    %c0_i32_1 = arith.constant 0 : i32
    return %c0_i32, %c0_i32_0 : i32, i32
  }
  func.func @transform_2(%arg0: i32) -> (i32, i32) {
    %c0_i32 = arith.constant 0 : i32
    %c0_i32_0 = arith.constant 0 : i32
    %c0_i32_1 = arith.constant 0 : i32
    return %c0_i32, %c0_i32_0 : i32, i32
  }
  func.func @transform_3(%arg0: i32) -> (i32, i32) {
    %c0_i32 = arith.constant 0 : i32
    %c0_i32_0 = arith.constant 0 : i32
    return %arg0, %c0_i32 : i32, i32
  }
  func.func @transform_4(%arg0: i32) -> (i32, i32) {
    %c0_i32 = arith.constant 0 : i32
    %c0_i32_0 = arith.constant 0 : i32
    return %arg0, %c0_i32 : i32, i32
  }
}

</mosaic_0001>

<llo_original>
// kernel: bottleneck_forward.4
$region0: #{bottleneck_forward.4}
  #allocation0 [shape = 'u32[]', space=smem, size = 0x4, offset = 0x4, fixed_abs, tag = 'smem constant byte address 0x4 - core index']
  #allocation1 [shape = 'u32[144,128]{1,0:T(1,128)}', space=vmem, size = 0x12000, scoped, tag = 'internal scratch']
  %s0 = inlined_call_operand.vmem [shape: f32[512,128], index: 0, kind: input, shape index: {}]
  %s1 = inlined_call_operand.vmem [shape: bf16[128,128], index: 1, kind: input, shape index: {}]
  %s2 = inlined_call_operand.vmem [shape: bf16[512,128], index: 2, kind: output, shape index: {0}]
  %s3 = inlined_call_operand.vmem [shape: f32[1,128], index: 3, kind: output, shape index: {1}]
  %s4 = inlined_call_operand.vmem [shape: f32[1,128], index: 4, kind: output, shape index: {2}]
  %5 = xla_tuple %s2, %s3, %s4
  %s6 = sld [smem:[#allocation0]]
  $region38: #{bottleneck_forward.4} parent=0
    _
  %s8 = ssub.s32 1, %s6
  %s9 = scalar_select 0, %s8, %s6
  // Predicated region
  $region2: #{bottleneck_forward.4} parent=0 // pred_check
    _
  $region3: #{bottleneck_forward.4} parent=0 // pred_check_branch
    %11 = sbr.rel (0) target = $region5
  $region4: #{bottleneck_forward.4} parent=0 // pred_region
    _
  $region5: #{bottleneck_forward.4} parent=0 // pred_fallthru
    _
  // Predicated region
  $region6: #{bottleneck_forward.4} parent=0 // pred_check
    _
  $region7: #{bottleneck_forward.4} parent=0 // pred_check_branch
    %13 = sbr.rel (0) target = $region9
  $region8: #{bottleneck_forward.4} parent=0 // pred_region
    _
  $region9: #{bottleneck_forward.4} parent=0 // pred_fallthru
    _
  %v15 = vld [vmem:[%s0] sm:$0xff]
  %v16 = vld [vmem:[%s0 + $0x8] sm:$0xff]
  %v17 = vld [vmem:[%s0 + $0x10] sm:$0xff]
  %v18 = vld [vmem:[%s0 + $0x18] sm:$0xff]
  %v19 = vld [vmem:[%s0 + $0x20] sm:$0xff]
  %v20 = vld [vmem:[%s0 + $0x28] sm:$0xff]
  %v21 = vld [vmem:[%s0 + $0x30] sm:$0xff]
  %v22 = vld [vmem:[%s0 + $0x38] sm:$0xff]
  %v23 = vld [vmem:[%s0 + $0x40] sm:$0xff]
  %v24 = vld [vmem:[%s0 + $0x48] sm:$0xff]
  %v25 = vld [vmem:[%s0 + $0x50] sm:$0xff]
  %v26 = vld [vmem:[%s0 + $0x58] sm:$0xff]
  %v27 = vld [vmem:[%s0 + $0x60] sm:$0xff]
  %v28 = vld [vmem:[%s0 + $0x68] sm:$0xff]
  %v29 = vld [vmem:[%s0 + $0x70] sm:$0xff]
  %v30 = vld [vmem:[%s0 + $0x78] sm:$0xff]
  %v31 = vld [vmem:[%s0 + $0x80] sm:$0xff]
  %v32 = vld [vmem:[%s0 + $0x88] sm:$0xff]
  %v33 = vld [vmem:[%s0 + $0x90] sm:$0xff]
  %v34 = vld [vmem:[%s0 + $0x98] sm:$0xff]
  %v35 = vld [vmem:[%s0 + $0xa0] sm:$0xff]
  %v36 = vld [vmem:[%s0 + $0xa8] sm:$0xff]
  %v37 = vld [vmem:[%s0 + $0xb0] sm:$0xff]
  %v38 = vld [vmem:[%s0 + $0xb8] sm:$0xff]
  %v39 = vld [vmem:[%s0 + $0xc0] sm:$0xff]
  %v40 = vld [vmem:[%s0 + $0xc8] sm:$0xff]
  %v41 = vld [vmem:[%s0 + $0xd0] sm:$0xff]
  %v42 = vld [vmem:[%s0 + $0xd8] sm:$0xff]
  %v43 = vld [vmem:[%s0 + $0xe0] sm:$0xff]
  %v44 = vld [vmem:[%s0 + $0xe8] sm:$0xff]
  %v45 = vld [vmem:[%s0 + $0xf0] sm:$0xff]
  %v46 = vld [vmem:[%s0 + $0xf8] sm:$0xff]
  %v47 = vld [vmem:[%s0 + $0x100] sm:$0xff]
  %v48 = vld [vmem:[%s0 + $0x108] sm:$0xff]
  %v49 = vld [vmem:[%s0 + $0x110] sm:$0xff]
  %v50 = vld [vmem:[%s0 + $0x118] sm:$0xff]
  %v51 = vld [vmem:[%s0 + $0x120] sm:$0xff]
  %v52 = vld [vmem:[%s0 + $0x128] sm:$0xff]
  %v53 = vld [vmem:[%s0 + $0x130] sm:$0xff]
  %v54 = vld [vmem:[%s0 + $0x138] sm:$0xff]
  %v55 = vld [vmem:[%s0 + $0x140] sm:$0xff]
  %v56 = vld [vmem:[%s0 + $0x148] sm:$0xff]
  %v57 = vld [vmem:[%s0 + $0x150] sm:$0xff]
  %v58 = vld [vmem:[%s0 + $0x158] sm:$0xff]
  %v59 = vld [vmem:[%s0 + $0x160] sm:$0xff]
  %v60 = vld [vmem:[%s0 + $0x168] sm:$0xff]
  %v61 = vld [vmem:[%s0 + $0x170] sm:$0xff]
  %v62 = vld [vmem:[%s0 + $0x178] sm:$0xff]
  %v63 = vld [vmem:[%s0 + $0x180] sm:$0xff]
  %v64 = vld [vmem:[%s0 + $0x188] sm:$0xff]
  %v65 = vld [vmem:[%s0 + $0x190] sm:$0xff]
  %v66 = vld [vmem:[%s0 + $0x198] sm:$0xff]
  %v67 = vld [vmem:[%s0 + $0x1a0] sm:$0xff]
  %v68 = vld [vmem:[%s0 + $0x1a8] sm:$0xff]
  %v69 = vld [vmem:[%s0 + $0x1b0] sm:$0xff]
  %v70 = vld [vmem:[%s0 + $0x1b8] sm:$0xff]
  %v71 = vld [vmem:[%s0 + $0x1c0] sm:$0xff]
  %v72 = vld [vmem:[%s0 + $0x1c8] sm:$0xff]
  %v73 = vld [vmem:[%s0 + $0x1d0] sm:$0xff]
  %v74 = vld [vmem:[%s0 + $0x1d8] sm:$0xff]
  %v75 = vld [vmem:[%s0 + $0x1e0] sm:$0xff]
  %v76 = vld [vmem:[%s0 + $0x1e8] sm:$0xff]
  %v77 = vld [vmem:[%s0 + $0x1f0] sm:$0xff]
  %v78 = vld [vmem:[%s0 + $0x1f8] sm:$0xff]
  %v79 = vpack.c.bf16 %v16, %v15
  %v80 = vpack.c.bf16 %v18, %v17
  %v81 = vpack.c.bf16 %v20, %v19
  %v82 = vpack.c.bf16 %v22, %v21
  %v83 = vpack.c.bf16 %v24, %v23
  %v84 = vpack.c.bf16 %v26, %v25
  %v85 = vpack.c.bf16 %v28, %v27
  %v86 = vpack.c.bf16 %v30, %v29
  %v87 = vpack.c.bf16 %v32, %v31
  %v88 = vpack.c.bf16 %v34, %v33
  %v89 = vpack.c.bf16 %v36, %v35
  %v90 = vpack.c.bf16 %v38, %v37
  %v91 = vpack.c.bf16 %v40, %v39
  %v92 = vpack.c.bf16 %v42, %v41
  %v93 = vpack.c.bf16 %v44, %v43
  %v94 = vpack.c.bf16 %v46, %v45
  %v95 = vpack.c.bf16 %v48, %v47
  %v96 = vpack.c.bf16 %v50, %v49
  %v97 = vpack.c.bf16 %v52, %v51
  %v98 = vpack.c.bf16 %v54, %v53
  %v99 = vpack.c.bf16 %v56, %v55
  %v100 = vpack.c.bf16 %v58, %v57
  %v101 = vpack.c.bf16 %v60, %v59
  %v102 = vpack.c.bf16 %v62, %v61
  %v103 = vpack.c.bf16 %v64, %v63
  %v104 = vpack.c.bf16 %v66, %v65
  %v105 = vpack.c.bf16 %v68, %v67
  %v106 = vpack.c.bf16 %v70, %v69
  %v107 = vpack.c.bf16 %v72, %v71
  %v108 = vpack.c.bf16 %v74, %v73
  %v109 = vpack.c.bf16 %v76, %v75
  %v110 = vpack.c.bf16 %v78, %v77
  %v111 = vld [vmem:[%s1] sm:$0xf]
  %v112 = vld [vmem:[%s1 + $0x4] sm:$0xf]
  %v113 = vld [vmem:[%s1 + $0x8] sm:$0xf]
  %v114 = vld [vmem:[%s1 + $0xc] sm:$0xf]
  %v115 = vld [vmem:[%s1 + $0x10] sm:$0xf]
  %v116 = vld [vmem:[%s1 + $0x14] sm:$0xf]
  %v117 = vld [vmem:[%s1 + $0x18] sm:$0xf]
  %v118 = vld [vmem:[%s1 + $0x1c] sm:$0xf]
  %v119 = vld [vmem:[%s1 + $0x20] sm:$0xf]
  %v120 = vld [vmem:[%s1 + $0x24] sm:$0xf]
  %v121 = vld [vmem:[%s1 + $0x28] sm:$0xf]
  %v122 = vld [vmem:[%s1 + $0x2c] sm:$0xf]
  %v123 = vld [vmem:[%s1 + $0x30] sm:$0xf]
  %v124 = vld [vmem:[%s1 + $0x34] sm:$0xf]
  %v125 = vld [vmem:[%s1 + $0x38] sm:$0xf]
  %v126 = vld [vmem:[%s1 + $0x3c] sm:$0xf]
  %v143 = vunpack.c.l.b16 %v111
  %v144 = vunpack.c.l.b16 %v112
  %v145 = vunpack.c.l.b16 %v113
  %v146 = vunpack.c.l.b16 %v114
  %v147 = vunpack.c.l.b16 %v115
  %v148 = vunpack.c.l.b16 %v116
  %v149 = vunpack.c.l.b16 %v117
  %v150 = vunpack.c.l.b16 %v118
  %v151 = vunpack.c.l.b16 %v119
  %v152 = vunpack.c.l.b16 %v120
  %v153 = vunpack.c.l.b16 %v121
  %v154 = vunpack.c.l.b16 %v122
  %v155 = vunpack.c.l.b16 %v123
  %v156 = vunpack.c.l.b16 %v124
  %v157 = vunpack.c.l.b16 %v125
  %v158 = vunpack.c.l.b16 %v126
  %v159 = vpack.c.b16 %v144, %v143
  %v160 = vpack.c.b16 %v146, %v145
  %v161 = vpack.c.b16 %v148, %v147
  %v162 = vpack.c.b16 %v150, %v149
  %v163 = vpack.c.b16 %v152, %v151
  %v164 = vpack.c.b16 %v154, %v153
  %v165 = vpack.c.b16 %v156, %v155
  %v166 = vpack.c.b16 %v158, %v157
  %175 = vmatprep.subr.bf16.mxu0 0
  %176 = vmatpush1.bf16.msra.mxu0 %v159
  %177 = vmatprep.subr.bf16.mxu0 0
  %178 = vmatpush1.bf16.msra.mxu0 %v160
  %179 = vmatprep.subr.bf16.mxu0 0
  %180 = vmatpush1.bf16.msra.mxu0 %v161
  %181 = vmatprep.subr.bf16.mxu0 0
  %182 = vmatpush1.bf16.msra.mxu0 %v162
  %183 = vmatprep.subr.bf16.mxu0 0
  %184 = vmatpush1.bf16.msra.mxu0 %v163
  %185 = vmatprep.subr.bf16.mxu0 0
  %186 = vmatpush1.bf16.msra.mxu0 %v164
  %187 = vmatprep.subr.bf16.mxu0 0
  %188 = vmatpush1.bf16.msra.mxu0 %v165
  %189 = vmatprep.subr.bf16.mxu0 0
  %190 = vmatpush1.bf16.msra.mxu0 %v166
  %191 = vmatprep.subr.bf16.mxu0 0
  %192 = vmatpush1.bf16.msra.mxu0 0
  %193 = vmatprep.subr.bf16.mxu0 0
  %194 = vmatpush1.bf16.msra.mxu0 0
  %195 = vmatprep.subr.bf16.mxu0 0
  %196 = vmatpush1.bf16.msra.mxu0 0
  %197 = vmatprep.subr.bf16.mxu0 0
  %198 = vmatpush1.bf16.msra.mxu0 0
  %199 = vmatprep.subr.bf16.mxu0 0
  %200 = vmatpush1.bf16.msra.mxu0 0
  %201 = vmatprep.subr.bf16.mxu0 0
  %202 = vmatpush1.bf16.msra.mxu0 0
  %203 = vmatprep.subr.bf16.mxu0 0
  %204 = vmatpush1.bf16.msra.mxu0 0
  %205 = vmatprep.subr.bf16.mxu0 0
  %206 = vmatpush1.bf16.msra.mxu0 0
  %207 = vmatprep.mubr.bf16.mxu0 0
  %208 = vmatmul.mubr.bf16.gmra.mrb[0].mxu0 %v79
  %v209 = vpop.f32.mrb[0].mxu0
  %v210 = vadd.f32 0.0, %v209
  %v211 = vpop.f32.mrb[0].mxu0
  %v212 = vpop.f32.mrb[0].mxu0
  %v213 = vadd.f32 0.0, %v212
  %v214 = vpop.f32.mrb[0].mxu0
  %215 = vmatprep.mubr.bf16.mxu0 0
  %216 = vmatmul.mubr.bf16.gmra.mrb[0].mxu0 %v80
  %v217 = vpop.f32.mrb[0].mxu0
  %v218 = vadd.f32 0.0, %v217
  %v219 = vpop.f32.mrb[0].mxu0
  %v220 = vpop.f32.mrb[0].mxu0
  %v221 = vadd.f32 0.0, %v220
  %v222 = vpop.f32.mrb[0].mxu0
  %223 = vmatprep.mubr.bf16.mxu0 0
  %224 = vmatmul.mubr.bf16.gmra.mrb[0].mxu0 %v81
  %v225 = vpop.f32.mrb[0].mxu0
  %v226 = vadd.f32 0.0, %v225
  %v227 = vpop.f32.mrb[0].mxu0
  %v228 = vpop.f32.mrb[0].mxu0
  %v229 = vadd.f32 0.0, %v228
  %v230 = vpop.f32.mrb[0].mxu0
  %231 = vmatprep.mubr.bf16.mxu0 0
  %232 = vmatmul.mubr.bf16.gmra.mrb[0].mxu0 %v82
  %v233 = vpop.f32.mrb[0].mxu0
  %v234 = vadd.f32 0.0, %v233
  %v235 = vpop.f32.mrb[0].mxu0
  %v236 = vpop.f32.mrb[0].mxu0
  %v237 = vadd.f32 0.0, %v236
  %v238 = vpop.f32.mrb[0].mxu0
  %239 = vmatprep.mubr.bf16.mxu0 0
  %240 = vmatmul.mubr.bf16.gmra.mrb[0].mxu0 %v83
  %v241 = vpop.f32.mrb[0].mxu0
  %v242 = vadd.f32 0.0, %v241
  %v243 = vpop.f32.mrb[0].mxu0
  %v244 = vpop.f32.mrb[0].mxu0
  %v245 = vadd.f32 0.0, %v244
  %v246 = vpop.f32.mrb[0].mxu0
  %247 = vmatprep.mubr.bf16.mxu0 0
  %248 = vmatmul.mubr.bf16.gmra.mrb[0].mxu0 %v84
  %v249 = vpop.f32.mrb[0].mxu0
  %v250 = vadd.f32 0.0, %v249
  %v251 = vpop.f32.mrb[0].mxu0
  %v252 = vpop.f32.mrb[0].mxu0
  %v253 = vadd.f32 0.0, %v252
  %v254 = vpop.f32.mrb[0].mxu0
  %255 = vmatprep.mubr.bf16.mxu0 0
  %256 = vmatmul.mubr.bf16.gmra.mrb[0].mxu0 %v85
  %v257 = vpop.f32.mrb[0].mxu0
  %v258 = vadd.f32 0.0, %v257
  %v259 = vpop.f32.mrb[0].mxu0
  %v260 = vpop.f32.mrb[0].mxu0
  %v261 = vadd.f32 0.0, %v260
  %v262 = vpop.f32.mrb[0].mxu0
  %263 = vmatprep.mubr.bf16.mxu0 0
  %264 = vmatmul.mubr.bf16.gmra.mrb[0].mxu0 %v86
  %v265 = vpop.f32.mrb[0].mxu0
  %v266 = vadd.f32 0.0, %v265
  %v267 = vpop.f32.mrb[0].mxu0
  %v268 = vpop.f32.mrb[0].mxu0
  %v269 = vadd.f32 0.0, %v268
  %v270 = vpop.f32.mrb[0].mxu0
  %271 = vmatprep.mubr.bf16.mxu0 0
  %272 = vmatmul.mubr.bf16.gmra.mrb[0].mxu0 %v87
  %v273 = vpop.f32.mrb[0].mxu0
  %v274 = vadd.f32 0.0, %v273
  %v275 = vpop.f32.mrb[0].mxu0
  %v276 = vpop.f32.mrb[0].mxu0
  %v277 = vadd.f32 0.0, %v276
  %v278 = vpop.f32.mrb[0].mxu0
  %279 = vmatprep.mubr.bf16.mxu0 0
  %280 = vmatmul.mubr.bf16.gmra.mrb[0].mxu0 %v88
  %v281 = vpop.f32.mrb[0].mxu0
  %v282 = vadd.f32 0.0, %v281
  %v283 = vpop.f32.mrb[0].mxu0
  %v284 = vpop.f32.mrb[0].mxu0
  %v285 = vadd.f32 0.0, %v284
  %v286 = vpop.f32.mrb[0].mxu0
  %287 = vmatprep.mubr.bf16.mxu0 0
  %288 = vmatmul.mubr.bf16.gmra.mrb[0].mxu0 %v89
  %v289 = vpop.f32.mrb[0].mxu0
  %v290 = vadd.f32 0.0, %v289
  %v291 = vpop.f32.mrb[0].mxu0
  %v292 = vpop.f32.mrb[0].mxu0
  %v293 = vadd.f32 0.0, %v292
  %v294 = vpop.f32.mrb[0].mxu0
  %295 = vmatprep.mubr.bf16.mxu0 0
  %296 = vmatmul.mubr.bf16.gmra.mrb[0].mxu0 %v90
  %v297 = vpop.f32.mrb[0].mxu0
  %v298 = vadd.f32 0.0, %v297
  %v299 = vpop.f32.mrb[0].mxu0
  %v300 = vpop.f32.mrb[0].mxu0
  %v301 = vadd.f32 0.0, %v300
  %v302 = vpop.f32.mrb[0].mxu0
  %303 = vmatprep.mubr.bf16.mxu0 0
  %304 = vmatmul.mubr.bf16.gmra.mrb[0].mxu0 %v91
  %v305 = vpop.f32.mrb[0].mxu0
  %v306 = vadd.f32 0.0, %v305
  %v307 = vpop.f32.mrb[0].mxu0
  %v308 = vpop.f32.mrb[0].mxu0
  %v309 = vadd.f32 0.0, %v308
  %v310 = vpop.f32.mrb[0].mxu0
  %311 = vmatprep.mubr.bf16.mxu0 0
  %312 = vmatmul.mubr.bf16.gmra.mrb[0].mxu0 %v92
  %v313 = vpop.f32.mrb[0].mxu0
  %v314 = vadd.f32 0.0, %v313
  %v315 = vpop.f32.mrb[0].mxu0
  %v316 = vpop.f32.mrb[0].mxu0
  %v317 = vadd.f32 0.0, %v316
  %v318 = vpop.f32.mrb[0].mxu0
  %319 = vmatprep.mubr.bf16.mxu0 0
  %320 = vmatmul.mubr.bf16.gmra.mrb[0].mxu0 %v93
  %v321 = vpop.f32.mrb[0].mxu0
  %v322 = vadd.f32 0.0, %v321
  %v323 = vpop.f32.mrb[0].mxu0
  %v324 = vpop.f32.mrb[0].mxu0
  %v325 = vadd.f32 0.0, %v324
  %v326 = vpop.f32.mrb[0].mxu0
  %327 = vmatprep.mubr.bf16.mxu0 0
  %328 = vmatmul.mubr.bf16.gmra.mrb[0].mxu0 %v94
  %v329 = vpop.f32.mrb[0].mxu0
  %v330 = vadd.f32 0.0, %v329
  %v331 = vpop.f32.mrb[0].mxu0
  %v332 = vpop.f32.mrb[0].mxu0
  %v333 = vadd.f32 0.0, %v332
  %v334 = vpop.f32.mrb[0].mxu0
  %335 = vmatprep.mubr.bf16.mxu0 0
  %336 = vmatmul.mubr.bf16.gmra.mrb[0].mxu0 %v95
  %v337 = vpop.f32.mrb[0].mxu0
  %v338 = vadd.f32 0.0, %v337
  %v339 = vpop.f32.mrb[0].mxu0
  %v340 = vpop.f32.mrb[0].mxu0
  %v341 = vadd.f32 0.0, %v340
  %v342 = vpop.f32.mrb[0].mxu0
  %343 = vmatprep.mubr.bf16.mxu0 0
  %344 = vmatmul.mubr.bf16.gmra.mrb[0].mxu0 %v96
  %v345 = vpop.f32.mrb[0].mxu0
  %v346 = vadd.f32 0.0, %v345
  %v347 = vpop.f32.mrb[0].mxu0
  %v348 = vpop.f32.mrb[0].mxu0
  %v349 = vadd.f32 0.0, %v348
  %v350 = vpop.f32.mrb[0].mxu0
  %351 = vmatprep.mubr.bf16.mxu0 0
  %352 = vmatmul.mubr.bf16.gmra.mrb[0].mxu0 %v97
  %v353 = vpop.f32.mrb[0].mxu0
  %v354 = vadd.f32 0.0, %v353
  %v355 = vpop.f32.mrb[0].mxu0
  %v356 = vpop.f32.mrb[0].mxu0
  %v357 = vadd.f32 0.0, %v356
  %v358 = vpop.f32.mrb[0].mxu0
  %359 = vmatprep.mubr.bf16.mxu0 0
  %360 = vmatmul.mubr.bf16.gmra.mrb[0].mxu0 %v98
  %v361 = vpop.f32.mrb[0].mxu0
  %v362 = vadd.f32 0.0, %v361
  %v363 = vpop.f32.mrb[0].mxu0
  %v364 = vpop.f32.mrb[0].mxu0
  %v365 = vadd.f32 0.0, %v364
  %v366 = vpop.f32.mrb[0].mxu0
  %367 = vmatprep.mubr.bf16.mxu0 0
  %368 = vmatmul.mubr.bf16.gmra.mrb[0].mxu0 %v99
  %v369 = vpop.f32.mrb[0].mxu0
  %v370 = vadd.f32 0.0, %v369
  %v371 = vpop.f32.mrb[0].mxu0
  %v372 = vpop.f32.mrb[0].mxu0
  %v373 = vadd.f32 0.0, %v372
  %v374 = vpop.f32.mrb[0].mxu0
  %375 = vmatprep.mubr.bf16.mxu0 0
  %376 = vmatmul.mubr.bf16.gmra.mrb[0].mxu0 %v100
  %v377 = vpop.f32.mrb[0].mxu0
  %v378 = vadd.f32 0.0, %v377
  %v379 = vpop.f32.mrb[0].mxu0
  %v380 = vpop.f32.mrb[0].mxu0
  %v381 = vadd.f32 0.0, %v380
  %v382 = vpop.f32.mrb[0].mxu0
  %383 = vmatprep.mubr.bf16.mxu0 0
  %384 = vmatmul.mubr.bf16.gmra.mrb[0].mxu0 %v101
  %v385 = vpop.f32.mrb[0].mxu0
  %v386 = vadd.f32 0.0, %v385
  %v387 = vpop.f32.mrb[0].mxu0
  %v388 = vpop.f32.mrb[0].mxu0
  %v389 = vadd.f32 0.0, %v388
  %v390 = vpop.f32.mrb[0].mxu0
  %391 = vmatprep.mubr.bf16.mxu0 0
  %392 = vmatmul.mubr.bf16.gmra.mrb[0].mxu0 %v102
  %v393 = vpop.f32.mrb[0].mxu0
  %v394 = vadd.f32 0.0, %v393
  %v395 = vpop.f32.mrb[0].mxu0
  %v396 = vpop.f32.mrb[0].mxu0
  %v397 = vadd.f32 0.0, %v396
  %v398 = vpop.f32.mrb[0].mxu0
  %399 = vmatprep.mubr.bf16.mxu0 0
  %400 = vmatmul.mubr.bf16.gmra.mrb[0].mxu0 %v103
  %v401 = vpop.f32.mrb[0].mxu0
  %v402 = vadd.f32 0.0, %v401
  %v403 = vpop.f32.mrb[0].mxu0
  %v404 = vpop.f32.mrb[0].mxu0
  %v405 = vadd.f32 0.0, %v404
  %v406 = vpop.f32.mrb[0].mxu0
  %407 = vmatprep.mubr.bf16.mxu0 0
  %408 = vmatmul.mubr.bf16.gmra.mrb[0].mxu0 %v104
  %v409 = vpop.f32.mrb[0].mxu0
  %v410 = vadd.f32 0.0, %v409
  %v411 = vpop.f32.mrb[0].mxu0
  %v412 = vpop.f32.mrb[0].mxu0
  %v413 = vadd.f32 0.0, %v412
  %v414 = vpop.f32.mrb[0].mxu0
  %415 = vmatprep.mubr.bf16.mxu0 0
  %416 = vmatmul.mubr.bf16.gmra.mrb[0].mxu0 %v105
  %v417 = vpop.f32.mrb[0].mxu0
  %v418 = vadd.f32 0.0, %v417
  %v419 = vpop.f32.mrb[0].mxu0
  %v420 = vpop.f32.mrb[0].mxu0
  %v421 = vadd.f32 0.0, %v420
  %v422 = vpop.f32.mrb[0].mxu0
  %423 = vmatprep.mubr.bf16.mxu0 0
  %424 = vmatmul.mubr.bf16.gmra.mrb[0].mxu0 %v106
  %v425 = vpop.f32.mrb[0].mxu0
  %v426 = vadd.f32 0.0, %v425
  %v427 = vpop.f32.mrb[0].mxu0
  %v428 = vpop.f32.mrb[0].mxu0
  %v429 = vadd.f32 0.0, %v428
  %v430 = vpop.f32.mrb[0].mxu0
  %431 = vmatprep.mubr.bf16.mxu0 0
  %432 = vmatmul.mubr.bf16.gmra.mrb[0].mxu0 %v107
  %v433 = vpop.f32.mrb[0].mxu0
  %v434 = vadd.f32 0.0, %v433
  %v435 = vpop.f32.mrb[0].mxu0
  %v436 = vpop.f32.mrb[0].mxu0
  %v437 = vadd.f32 0.0, %v436
  %v438 = vpop.f32.mrb[0].mxu0
  %439 = vmatprep.mubr.bf16.mxu0 0
  %440 = vmatmul.mubr.bf16.gmra.mrb[0].mxu0 %v108
  %v441 = vpop.f32.mrb[0].mxu0
  %v442 = vadd.f32 0.0, %v441
  %v443 = vpop.f32.mrb[0].mxu0
  %v444 = vpop.f32.mrb[0].mxu0
  %v445 = vadd.f32 0.0, %v444
  %v446 = vpop.f32.mrb[0].mxu0
  %447 = vmatprep.mubr.bf16.mxu0 0
  %448 = vmatmul.mubr.bf16.gmra.mrb[0].mxu0 %v109
  %v449 = vpop.f32.mrb[0].mxu0
  %v450 = vadd.f32 0.0, %v449
  %v451 = vpop.f32.mrb[0].mxu0
  %v452 = vpop.f32.mrb[0].mxu0
  %v453 = vadd.f32 0.0, %v452
  %v454 = vpop.f32.mrb[0].mxu0
  %455 = vmatprep.mubr.bf16.mxu0 0
  %456 = vmatmul.mubr.bf16.gmra.mrb[0].mxu0 %v110
  %v457 = vpop.f32.mrb[0].mxu0
  %v458 = vadd.f32 0.0, %v457
  %v459 = vpop.f32.mrb[0].mxu0
  %v460 = vpop.f32.mrb[0].mxu0
  %v461 = vadd.f32 0.0, %v460
  %v462 = vpop.f32.mrb[0].mxu0
  %463 = vdwg.mxu0
  %v464 = vpack.c.bf16 %v213, %v210
  %v465 = vpack.c.bf16 %v221, %v218
  %v466 = vpack.c.bf16 %v229, %v226
  %v467 = vpack.c.bf16 %v237, %v234
  %v468 = vpack.c.bf16 %v245, %v242
  %v469 = vpack.c.bf16 %v253, %v250
  %v470 = vpack.c.bf16 %v261, %v258
  %v471 = vpack.c.bf16 %v269, %v266
  %v472 = vpack.c.bf16 %v277, %v274
  %v473 = vpack.c.bf16 %v285, %v282
  %v474 = vpack.c.bf16 %v293, %v290
  %v475 = vpack.c.bf16 %v301, %v298
  %v476 = vpack.c.bf16 %v309, %v306
  %v477 = vpack.c.bf16 %v317, %v314
  %v478 = vpack.c.bf16 %v325, %v322
  %v479 = vpack.c.bf16 %v333, %v330
  %v480 = vpack.c.bf16 %v341, %v338
  %v481 = vpack.c.bf16 %v349, %v346
  %v482 = vpack.c.bf16 %v357, %v354
  %v483 = vpack.c.bf16 %v365, %v362
  %v484 = vpack.c.bf16 %v373, %v370
  %v485 = vpack.c.bf16 %v381, %v378
  %v486 = vpack.c.bf16 %v389, %v386
  %v487 = vpack.c.bf16 %v397, %v394
  %v488 = vpack.c.bf16 %v405, %v402
  %v489 = vpack.c.bf16 %v413, %v410
  %v490 = vpack.c.bf16 %v421, %v418
  %v491 = vpack.c.bf16 %v429, %v426
  %v492 = vpack.c.bf16 %v437, %v434
  %v493 = vpack.c.bf16 %v445, %v442
  %v494 = vpack.c.bf16 %v453, %v450
  %v495 = vpack.c.bf16 %v461, %v458
  %v528 = vunpack.c.l.b16 %v464
  %v529 = vunpack.c.h.b16 %v464
  %v530 = vunpack.c.l.b16 %v465
  %v531 = vunpack.c.h.b16 %v465
  %v532 = vunpack.c.l.b16 %v466
  %v533 = vunpack.c.h.b16 %v466
  %v534 = vunpack.c.l.b16 %v467
  %v535 = vunpack.c.h.b16 %v467
  %v536 = vunpack.c.l.b16 %v468
  %v537 = vunpack.c.h.b16 %v468
  %v538 = vunpack.c.l.b16 %v469
  %v539 = vunpack.c.h.b16 %v469
  %v540 = vunpack.c.l.b16 %v470
  %v541 = vunpack.c.h.b16 %v470
  %v542 = vunpack.c.l.b16 %v471
  %v543 = vunpack.c.h.b16 %v471
  %v544 = vunpack.c.l.b16 %v472
  %v545 = vunpack.c.h.b16 %v472
  %v546 = vunpack.c.l.b16 %v473
  %v547 = vunpack.c.h.b16 %v473
  %v548 = vunpack.c.l.b16 %v474
  %v549 = vunpack.c.h.b16 %v474
  %v550 = vunpack.c.l.b16 %v475
  %v551 = vunpack.c.h.b16 %v475
  %v552 = vunpack.c.l.b16 %v476
  %v553 = vunpack.c.h.b16 %v476
  %v554 = vunpack.c.l.b16 %v477
  %v555 = vunpack.c.h.b16 %v477
  %v556 = vunpack.c.l.b16 %v478
  %v557 = vunpack.c.h.b16 %v478
  %v558 = vunpack.c.l.b16 %v479
  %v559 = vunpack.c.h.b16 %v479
  %v560 = vunpack.c.l.b16 %v480
  %v561 = vunpack.c.h.b16 %v480
  %v562 = vunpack.c.l.b16 %v481
  %v563 = vunpack.c.h.b16 %v481
  %v564 = vunpack.c.l.b16 %v482
  %v565 = vunpack.c.h.b16 %v482
  %v566 = vunpack.c.l.b16 %v483
  %v567 = vunpack.c.h.b16 %v483
  %v568 = vunpack.c.l.b16 %v484
  %v569 = vunpack.c.h.b16 %v484
  %v570 = vunpack.c.l.b16 %v485
  %v571 = vunpack.c.h.b16 %v485
  %v572 = vunpack.c.l.b16 %v486
  %v573 = vunpack.c.h.b16 %v486
  %v574 = vunpack.c.l.b16 %v487
  %v575 = vunpack.c.h.b16 %v487
  %v576 = vunpack.c.l.b16 %v488
  %v577 = vunpack.c.h.b16 %v488
  %v578 = vunpack.c.l.b16 %v489
  %v579 = vunpack.c.h.b16 %v489
  %v580 = vunpack.c.l.b16 %v490
  %v581 = vunpack.c.h.b16 %v490
  %v582 = vunpack.c.l.b16 %v491
  %v583 = vunpack.c.h.b16 %v491
  %v584 = vunpack.c.l.b16 %v492
  %v585 = vunpack.c.h.b16 %v492
  %v586 = vunpack.c.l.b16 %v493
  %v587 = vunpack.c.h.b16 %v493
  %v588 = vunpack.c.l.b16 %v494
  %v589 = vunpack.c.h.b16 %v494
  %v590 = vunpack.c.l.b16 %v495
  %v591 = vunpack.c.h.b16 %v495
  %v592 = vpack.c.b16 %v528, %v528
  %v593 = vpack.c.b16 %v529, %v529
  %v594 = vpack.c.b16 %v530, %v530
  %v595 = vpack.c.b16 %v531, %v531
  %v596 = vpack.c.b16 %v532, %v532
  %v597 = vpack.c.b16 %v533, %v533
  %v598 = vpack.c.b16 %v534, %v534
  %v599 = vpack.c.b16 %v535, %v535
  %v600 = vpack.c.b16 %v536, %v536
  %v601 = vpack.c.b16 %v537, %v537
  %v602 = vpack.c.b16 %v538, %v538
  %v603 = vpack.c.b16 %v539, %v539
  %v604 = vpack.c.b16 %v540, %v540
  %v605 = vpack.c.b16 %v541, %v541
  %v606 = vpack.c.b16 %v542, %v542
  %v607 = vpack.c.b16 %v543, %v543
  %v608 = vpack.c.b16 %v544, %v544
  %v609 = vpack.c.b16 %v545, %v545
  %v610 = vpack.c.b16 %v546, %v546
  %v611 = vpack.c.b16 %v547, %v547
  %v612 = vpack.c.b16 %v548, %v548
  %v613 = vpack.c.b16 %v549, %v549
  %v614 = vpack.c.b16 %v550, %v550
  %v615 = vpack.c.b16 %v551, %v551
  %v616 = vpack.c.b16 %v552, %v552
  %v617 = vpack.c.b16 %v553, %v553
  %v618 = vpack.c.b16 %v554, %v554
  %v619 = vpack.c.b16 %v555, %v555
  %v620 = vpack.c.b16 %v556, %v556
  %v621 = vpack.c.b16 %v557, %v557
  %v622 = vpack.c.b16 %v558, %v558
  %v623 = vpack.c.b16 %v559, %v559
  %v624 = vpack.c.b16 %v560, %v560
  %v625 = vpack.c.b16 %v561, %v561
  %v626 = vpack.c.b16 %v562, %v562
  %v627 = vpack.c.b16 %v563, %v563
  %v628 = vpack.c.b16 %v564, %v564
  %v629 = vpack.c.b16 %v565, %v565
  %v630 = vpack.c.b16 %v566, %v566
  %v631 = vpack.c.b16 %v567, %v567
  %v632 = vpack.c.b16 %v568, %v568
  %v633 = vpack.c.b16 %v569, %v569
  %v634 = vpack.c.b16 %v570, %v570
  %v635 = vpack.c.b16 %v571, %v571
  %v636 = vpack.c.b16 %v572, %v572
  %v637 = vpack.c.b16 %v573, %v573
  %v638 = vpack.c.b16 %v574, %v574
  %v639 = vpack.c.b16 %v575, %v575
  %v640 = vpack.c.b16 %v576, %v576
  %v641 = vpack.c.b16 %v577, %v577
  %v642 = vpack.c.b16 %v578, %v578
  %v643 = vpack.c.b16 %v579, %v579
  %v644 = vpack.c.b16 %v580, %v580
  %v645 = vpack.c.b16 %v581, %v581
  %v646 = vpack.c.b16 %v582, %v582
  %v647 = vpack.c.b16 %v583, %v583
  %v648 = vpack.c.b16 %v584, %v584
  %v649 = vpack.c.b16 %v585, %v585
  %v650 = vpack.c.b16 %v586, %v586
  %v651 = vpack.c.b16 %v587, %v587
  %v652 = vpack.c.b16 %v588, %v588
  %v653 = vpack.c.b16 %v589, %v589
  %v654 = vpack.c.b16 %v590, %v590
  %v655 = vpack.c.b16 %v591, %v591
  %720 = vst [vmem:[%s2] sm:$0xf] %v592
  %721 = vst [vmem:[%s2 + $0x4] sm:$0xf] %v593
  %722 = vst [vmem:[%s2 + $0x8] sm:$0xf] %v594
  %723 = vst [vmem:[%s2 + $0xc] sm:$0xf] %v595
  %724 = vst [vmem:[%s2 + $0x10] sm:$0xf] %v596
  %725 = vst [vmem:[%s2 + $0x14] sm:$0xf] %v597
  %726 = vst [vmem:[%s2 + $0x18] sm:$0xf] %v598
  %727 = vst [vmem:[%s2 + $0x1c] sm:$0xf] %v599
  %728 = vst [vmem:[%s2 + $0x20] sm:$0xf] %v600
  %729 = vst [vmem:[%s2 + $0x24] sm:$0xf] %v601
  %730 = vst [vmem:[%s2 + $0x28] sm:$0xf] %v602
  %731 = vst [vmem:[%s2 + $0x2c] sm:$0xf] %v603
  %732 = vst [vmem:[%s2 + $0x30] sm:$0xf] %v604
  %733 = vst [vmem:[%s2 + $0x34] sm:$0xf] %v605
  %734 = vst [vmem:[%s2 + $0x38] sm:$0xf] %v606
  %735 = vst [vmem:[%s2 + $0x3c] sm:$0xf] %v607
  %736 = vst [vmem:[%s2 + $0x40] sm:$0xf] %v608
  %737 = vst [vmem:[%s2 + $0x44] sm:$0xf] %v609
  %738 = vst [vmem:[%s2 + $0x48] sm:$0xf] %v610
  %739 = vst [vmem:[%s2 + $0x4c] sm:$0xf] %v611
  %740 = vst [vmem:[%s2 + $0x50] sm:$0xf] %v612
  %741 = vst [vmem:[%s2 + $0x54] sm:$0xf] %v613
  %742 = vst [vmem:[%s2 + $0x58] sm:$0xf] %v614
  %743 = vst [vmem:[%s2 + $0x5c] sm:$0xf] %v615
  %744 = vst [vmem:[%s2 + $0x60] sm:$0xf] %v616
  %745 = vst [vmem:[%s2 + $0x64] sm:$0xf] %v617
  %746 = vst [vmem:[%s2 + $0x68] sm:$0xf] %v618
  %747 = vst [vmem:[%s2 + $0x6c] sm:$0xf] %v619
  %748 = vst [vmem:[%s2 + $0x70] sm:$0xf] %v620
  %749 = vst [vmem:[%s2 + $0x74] sm:$0xf] %v621
  %750 = vst [vmem:[%s2 + $0x78] sm:$0xf] %v622
  %751 = vst [vmem:[%s2 + $0x7c] sm:$0xf] %v623
  %752 = vst [vmem:[%s2 + $0x80] sm:$0xf] %v624
  %753 = vst [vmem:[%s2 + $0x84] sm:$0xf] %v625
  %754 = vst [vmem:[%s2 + $0x88] sm:$0xf] %v626
  %755 = vst [vmem:[%s2 + $0x8c] sm:$0xf] %v627
  %756 = vst [vmem:[%s2 + $0x90] sm:$0xf] %v628
  %757 = vst [vmem:[%s2 + $0x94] sm:$0xf] %v629
  %758 = vst [vmem:[%s2 + $0x98] sm:$0xf] %v630
  %759 = vst [vmem:[%s2 + $0x9c] sm:$0xf] %v631
  %760 = vst [vmem:[%s2 + $0xa0] sm:$0xf] %v632
  %761 = vst [vmem:[%s2 + $0xa4] sm:$0xf] %v633
  %762 = vst [vmem:[%s2 + $0xa8] sm:$0xf] %v634
  %763 = vst [vmem:[%s2 + $0xac] sm:$0xf] %v635
  %764 = vst [vmem:[%s2 + $0xb0] sm:$0xf] %v636
  %765 = vst [vmem:[%s2 + $0xb4] sm:$0xf] %v637
  %766 = vst [vmem:[%s2 + $0xb8] sm:$0xf] %v638
  %767 = vst [vmem:[%s2 + $0xbc] sm:$0xf] %v639
  %768 = vst [vmem:[%s2 + $0xc0] sm:$0xf] %v640
  %769 = vst [vmem:[%s2 + $0xc4] sm:$0xf] %v641
  %770 = vst [vmem:[%s2 + $0xc8] sm:$0xf] %v642
  %771 = vst [vmem:[%s2 + $0xcc] sm:$0xf] %v643
  %772 = vst [vmem:[%s2 + $0xd0] sm:$0xf] %v644
  %773 = vst [vmem:[%s2 + $0xd4] sm:$0xf] %v645
  %774 = vst [vmem:[%s2 + $0xd8] sm:$0xf] %v646
  %775 = vst [vmem:[%s2 + $0xdc] sm:$0xf] %v647
  %776 = vst [vmem:[%s2 + $0xe0] sm:$0xf] %v648
  %777 = vst [vmem:[%s2 + $0xe4] sm:$0xf] %v649
  %778 = vst [vmem:[%s2 + $0xe8] sm:$0xf] %v650
  %779 = vst [vmem:[%s2 + $0xec] sm:$0xf] %v651
  %780 = vst [vmem:[%s2 + $0xf0] sm:$0xf] %v652
  %781 = vst [vmem:[%s2 + $0xf4] sm:$0xf] %v653
  %782 = vst [vmem:[%s2 + $0xf8] sm:$0xf] %v654
  %783 = vst [vmem:[%s2 + $0xfc] sm:$0xf] %v655
  %p784 = scmp.eq.s32.totalorder 0, 0
  // Predicated region
  $region10: #{bottleneck_forward.4} parent=0 // pred_check
    %p785 = pneg %p784
  $region11: #{bottleneck_forward.4} parent=0 // pred_check_branch
    %787 = sbr.rel (%p785) target = $region13
  $region12: #{bottleneck_forward.4} parent=0 // pred_region
    %788 = vst [vmem:[%s3] sm:$0x1] 0.0
    %789 = vst [vmem:[%s4] sm:$0x1] 0.0
  $region13: #{bottleneck_forward.4} parent=0 // pred_fallthru
    _
  %v790 = vld [vmem:[%s3] sm:$0x1]
  %v791 = vadd.f32 %v210, %v213
  %v792 = vadd.f32 %v791, %v218
  %v793 = vadd.f32 %v792, %v221
  %v794 = vadd.f32 %v793, %v226
  %v795 = vadd.f32 %v794, %v229
  %v796 = vadd.f32 %v795, %v234
  %v797 = vadd.f32 %v796, %v237
  %v798 = vadd.f32 %v797, %v242
  %v799 = vadd.f32 %v798, %v245
  %v800 = vadd.f32 %v799, %v250
  %v801 = vadd.f32 %v800, %v253
  %v802 = vadd.f32 %v801, %v258
  %v803 = vadd.f32 %v802, %v261
  %v804 = vadd.f32 %v803, %v266
  %v805 = vadd.f32 %v804, %v269
  %v806 = vadd.f32 %v805, %v274
  %v807 = vadd.f32 %v806, %v277
  %v808 = vadd.f32 %v807, %v282
  %v809 = vadd.f32 %v808, %v285
  %v810 = vadd.f32 %v809, %v290
  %v811 = vadd.f32 %v810, %v293
  %v812 = vadd.f32 %v811, %v298
  %v813 = vadd.f32 %v812, %v301
  %v814 = vadd.f32 %v813, %v306
  %v815 = vadd.f32 %v814, %v309
  %v816 = vadd.f32 %v815, %v314
  %v817 = vadd.f32 %v816, %v317
  %v818 = vadd.f32 %v817, %v322
  %v819 = vadd.f32 %v818, %v325
  %v820 = vadd.f32 %v819, %v330
  %v821 = vadd.f32 %v820, %v333
  %v822 = vadd.f32 %v821, %v338
  %v823 = vadd.f32 %v822, %v341
  %v824 = vadd.f32 %v823, %v346
  %v825 = vadd.f32 %v824, %v349
  %v826 = vadd.f32 %v825, %v354
  %v827 = vadd.f32 %v826, %v357
  %v828 = vadd.f32 %v827, %v362
  %v829 = vadd.f32 %v828, %v365
  %v830 = vadd.f32 %v829, %v370
  %v831 = vadd.f32 %v830, %v373
  %v832 = vadd.f32 %v831, %v378
  %v833 = vadd.f32 %v832, %v381
  %v834 = vadd.f32 %v833, %v386
  %v835 = vadd.f32 %v834, %v389
  %v836 = vadd.f32 %v835, %v394
  %v837 = vadd.f32 %v836, %v397
  %v838 = vadd.f32 %v837, %v402
  %v839 = vadd.f32 %v838, %v405
  %v840 = vadd.f32 %v839, %v410
  %v841 = vadd.f32 %v840, %v413
  %v842 = vadd.f32 %v841, %v418
  %v843 = vadd.f32 %v842, %v421
  %v844 = vadd.f32 %v843, %v426
  %v845 = vadd.f32 %v844, %v429
  %v846 = vadd.f32 %v845, %v434
  %v847 = vadd.f32 %v846, %v437
  %v848 = vadd.f32 %v847, %v442
  %v849 = vadd.f32 %v848, %v445
  %v850 = vadd.f32 %v849, %v450
  %v851 = vadd.f32 %v850, %v453
  %v852 = vadd.f32 %v851, %v458
  %v853 = vadd.f32 %v852, %v461
  %v854 = vrot.slane %v853, 4
  %v855 = vadd.f32 %v853, %v854
  %v856 = vrot.slane %v855, 2
  %v857 = vadd.f32 %v855, %v856
  %v858 = vrot.slane %v857, 1
  %v859 = vadd.f32 %v857, %v858
  %v860 = vadd.f32 %v790, %v859
  %861 = vst [vmem:[%s3] sm:$0x1] %v860
  %v862 = vld [vmem:[%s4] sm:$0x1]
  %v863 = vmul.f32 %v210, %v210
  %v864 = vmul.f32 %v213, %v213
  %v865 = vmul.f32 %v218, %v218
  %v866 = vmul.f32 %v221, %v221
  %v867 = vmul.f32 %v226, %v226
  %v868 = vmul.f32 %v229, %v229
  %v869 = vmul.f32 %v234, %v234
  %v870 = vmul.f32 %v237, %v237
  %v871 = vmul.f32 %v242, %v242
  %v872 = vmul.f32 %v245, %v245
  %v873 = vmul.f32 %v250, %v250
  %v874 = vmul.f32 %v253, %v253
  %v875 = vmul.f32 %v258, %v258
  %v876 = vmul.f32 %v261, %v261
  %v877 = vmul.f32 %v266, %v266
  %v878 = vmul.f32 %v269, %v269
  %v879 = vmul.f32 %v274, %v274
  %v880 = vmul.f32 %v277, %v277
  %v881 = vmul.f32 %v282, %v282
  %v882 = vmul.f32 %v285, %v285
  %v883 = vmul.f32 %v290, %v290
  %v884 = vmul.f32 %v293, %v293
  %v885 = vmul.f32 %v298, %v298
  %v886 = vmul.f32 %v301, %v301
  %v887 = vmul.f32 %v306, %v306
  %v888 = vmul.f32 %v309, %v309
  %v889 = vmul.f32 %v314, %v314
  %v890 = vmul.f32 %v317, %v317
  %v891 = vmul.f32 %v322, %v322
  %v892 = vmul.f32 %v325, %v325
  %v893 = vmul.f32 %v330, %v330
  %v894 = vmul.f32 %v333, %v333
  %v895 = vmul.f32 %v338, %v338
  %v896 = vmul.f32 %v341, %v341
  %v897 = vmul.f32 %v346, %v346
  %v898 = vmul.f32 %v349, %v349
  %v899 = vmul.f32 %v354, %v354
  %v900 = vmul.f32 %v357, %v357
  %v901 = vmul.f32 %v362, %v362
  %v902 = vmul.f32 %v365, %v365
  %v903 = vmul.f32 %v370, %v370
  %v904 = vmul.f32 %v373, %v373
  %v905 = vmul.f32 %v378, %v378
  %v906 = vmul.f32 %v381, %v381
  %v907 = vmul.f32 %v386, %v386
  %v908 = vmul.f32 %v389, %v389
  %v909 = vmul.f32 %v394, %v394
  %v910 = vmul.f32 %v397, %v397
  %v911 = vmul.f32 %v402, %v402
  %v912 = vmul.f32 %v405, %v405
  %v913 = vmul.f32 %v410, %v410
  %v914 = vmul.f32 %v413, %v413
  %v915 = vmul.f32 %v418, %v418
  %v916 = vmul.f32 %v421, %v421
  %v917 = vmul.f32 %v426, %v426
  %v918 = vmul.f32 %v429, %v429
  %v919 = vmul.f32 %v434, %v434
  %v920 = vmul.f32 %v437, %v437
  %v921 = vmul.f32 %v442, %v442
  %v922 = vmul.f32 %v445, %v445
  %v923 = vmul.f32 %v450, %v450
  %v924 = vmul.f32 %v453, %v453
  %v925 = vmul.f32 %v458, %v458
  %v926 = vmul.f32 %v461, %v461
  %v927 = vadd.f32 %v863, %v864
  %v928 = vadd.f32 %v927, %v865
  %v929 = vadd.f32 %v928, %v866
  %v930 = vadd.f32 %v929, %v867
  %v931 = vadd.f32 %v930, %v868
  %v932 = vadd.f32 %v931, %v869
  %v933 = vadd.f32 %v932, %v870
  %v934 = vadd.f32 %v933, %v871
  %v935 = vadd.f32 %v934, %v872
  %v936 = vadd.f32 %v935, %v873
  %v937 = vadd.f32 %v936, %v874
  %v938 = vadd.f32 %v937, %v875
  %v939 = vadd.f32 %v938, %v876
  %v940 = vadd.f32 %v939, %v877
  %v941 = vadd.f32 %v940, %v878
  %v942 = vadd.f32 %v941, %v879
  %v943 = vadd.f32 %v942, %v880
  %v944 = vadd.f32 %v943, %v881
  %v945 = vadd.f32 %v944, %v882
  %v946 = vadd.f32 %v945, %v883
  %v947 = vadd.f32 %v946, %v884
  %v948 = vadd.f32 %v947, %v885
  %v949 = vadd.f32 %v948, %v886
  %v950 = vadd.f32 %v949, %v887
  %v951 = vadd.f32 %v950, %v888
  %v952 = vadd.f32 %v951, %v889
  %v953 = vadd.f32 %v952, %v890
  %v954 = vadd.f32 %v953, %v891
  %v955 = vadd.f32 %v954, %v892
  %v956 = vadd.f32 %v955, %v893
  %v957 = vadd.f32 %v956, %v894
  %v958 = vadd.f32 %v957, %v895
  %v959 = vadd.f32 %v958, %v896
  %v960 = vadd.f32 %v959, %v897
  %v961 = vadd.f32 %v960, %v898
  %v962 = vadd.f32 %v961, %v899
  %v963 = vadd.f32 %v962, %v900
  %v964 = vadd.f32 %v963, %v901
  %v965 = vadd.f32 %v964, %v902
  %v966 = vadd.f32 %v965, %v903
  %v967 = vadd.f32 %v966, %v904
  %v968 = vadd.f32 %v967, %v905
  %v969 = vadd.f32 %v968, %v906
  %v970 = vadd.f32 %v969, %v907
  %v971 = vadd.f32 %v970, %v908
  %v972 = vadd.f32 %v971, %v909
  %v973 = vadd.f32 %v972, %v910
  %v974 = vadd.f32 %v973, %v911
  %v975 = vadd.f32 %v974, %v912
  %v976 = vadd.f32 %v975, %v913
  %v977 = vadd.f32 %v976, %v914
  %v978 = vadd.f32 %v977, %v915
  %v979 = vadd.f32 %v978, %v916
  %v980 = vadd.f32 %v979, %v917
  %v981 = vadd.f32 %v980, %v918
  %v982 = vadd.f32 %v981, %v919
  %v983 = vadd.f32 %v982, %v920
  %v984 = vadd.f32 %v983, %v921
  %v985 = vadd.f32 %v984, %v922
  %v986 = vadd.f32 %v985, %v923
  %v987 = vadd.f32 %v986, %v924
  %v988 = vadd.f32 %v987, %v925
  %v989 = vadd.f32 %v988, %v926
  %v990 = vrot.slane %v989, 4
  %v991 = vadd.f32 %v989, %v990
  %v992 = vrot.slane %v991, 2
  %v993 = vadd.f32 %v991, %v992
  %v994 = vrot.slane %v993, 1
  %v995 = vadd.f32 %v993, %v994
  %v996 = vadd.f32 %v862, %v995
  %997 = vst [vmem:[%s4] sm:$0x1] %v996
  // Predicated region
  $region14: #{bottleneck_forward.4} parent=0 // pred_check
    _
  $region15: #{bottleneck_forward.4} parent=0 // pred_check_branch
    %999 = sbr.rel (0) target = $region17
  $region16: #{bottleneck_forward.4} parent=0 // pred_region
    _
  $region17: #{bottleneck_forward.4} parent=0 // pred_fallthru
    _
  // Predicated region
  $region18: #{bottleneck_forward.4} parent=0 // pred_check
    _
  $region19: #{bottleneck_forward.4} parent=0 // pred_check_branch
    %1001 = sbr.rel (0) target = $region21
  $region20: #{bottleneck_forward.4} parent=0 // pred_region
    _
  $region21: #{bottleneck_forward.4} parent=0 // pred_fallthru
    _
  // Predicated region
  $region22: #{bottleneck_forward.4} parent=0 // pred_check
    _
  $region23: #{bottleneck_forward.4} parent=0 // pred_check_branch
    %1003 = sbr.rel (0) target = $region25
  $region24: #{bottleneck_forward.4} parent=0 // pred_region
    _
  $region25: #{bottleneck_forward.4} parent=0 // pred_fallthru
    _
  // Predicated region
  $region26: #{bottleneck_forward.4} parent=0 // pred_check
    _
  $region27: #{bottleneck_forward.4} parent=0 // pred_check_branch
    %1005 = sbr.rel (0) target = $region29
  $region28: #{bottleneck_forward.4} parent=0 // pred_region
    _
  $region29: #{bottleneck_forward.4} parent=0 // pred_fallthru
    _
  // Predicated region
  $region30: #{bottleneck_forward.4} parent=0 // pred_check
    _
  $region31: #{bottleneck_forward.4} parent=0 // pred_check_branch
    %1007 = sbr.rel (0) target = $region33
  $region32: #{bottleneck_forward.4} parent=0 // pred_region
    _
  $region33: #{bottleneck_forward.4} parent=0 // pred_fallthru
    _
  // Predicated region
  $region34: #{bottleneck_forward.4} parent=0 // pred_check
    _
  $region35: #{bottleneck_forward.4} parent=0 // pred_check_branch
    %1009 = sbr.rel (0) target = $region37
  $region36: #{bottleneck_forward.4} parent=0 // pred_region
    _
  $region37: #{bottleneck_forward.4} parent=0 // pred_fallthru
    _

// kernel: bottleneck_forward.7
$region0: #{bottleneck_forward.7}
  #allocation0 [shape = 'u32[]', space=smem, size = 0x4, offset = 0x4, fixed_abs, tag = 'smem constant byte address 0x4 - core index']
  #allocation1 [shape = 'u32[144,128]{1,0:T(1,128)}', space=vmem, size = 0x12000, scoped, tag = 'internal scratch']
  %s0 = inlined_call_operand.vmem [shape: bf16[512,128], index: 0, kind: input, shape index: {}]
  %s1 = inlined_call_operand.vmem [shape: f32[1,128], index: 1, kind: input, shape index: {}]
  %s2 = inlined_call_operand.vmem [shape: f32[1,128], index: 2, kind: input, shape index: {}]
  %s3 = inlined_call_operand.vmem [shape: f32[512,128], index: 3, kind: input, shape index: {}]
  %s4 = inlined_call_operand.vmem [shape: f32[512,128], index: 4, kind: output, shape index: {}]
  %s5 = sld [smem:[#allocation0]]
  $region26: #{bottleneck_forward.7} parent=0
    _
  %s7 = ssub.s32 1, %s5
  %s8 = scalar_select 0, %s7, %s5
  // Predicated region
  $region2: #{bottleneck_forward.7} parent=0 // pred_check
    _
  $region3: #{bottleneck_forward.7} parent=0 // pred_check_branch
    %10 = sbr.rel (0) target = $region5
  $region4: #{bottleneck_forward.7} parent=0 // pred_region
    _
  $region5: #{bottleneck_forward.7} parent=0 // pred_fallthru
    _
  // Predicated region
  $region6: #{bottleneck_forward.7} parent=0 // pred_check
    _
  $region7: #{bottleneck_forward.7} parent=0 // pred_check_branch
    %12 = sbr.rel (0) target = $region9
  $region8: #{bottleneck_forward.7} parent=0 // pred_region
    _
  $region9: #{bottleneck_forward.7} parent=0 // pred_fallthru
    _
  // Predicated region
  $region10: #{bottleneck_forward.7} parent=0 // pred_check
    _
  $region11: #{bottleneck_forward.7} parent=0 // pred_check_branch
    %14 = sbr.rel (0) target = $region13
  $region12: #{bottleneck_forward.7} parent=0 // pred_region
    _
  $region13: #{bottleneck_forward.7} parent=0 // pred_fallthru
    _
  // Predicated region
  $region14: #{bottleneck_forward.7} parent=0 // pred_check
    _
  $region15: #{bottleneck_forward.7} parent=0 // pred_check_branch
    %16 = sbr.rel (0) target = $region17
  $region16: #{bottleneck_forward.7} parent=0 // pred_region
    _
  $region17: #{bottleneck_forward.7} parent=0 // pred_fallthru
    _
  %v17 = vld [vmem:[%s0] sm:$0xf]
  %v18 = vld [vmem:[%s0 + $0x4] sm:$0xf]
  %v19 = vld [vmem:[%s0 + $0x8] sm:$0xf]
  %v20 = vld [vmem:[%s0 + $0xc] sm:$0xf]
  %v21 = vld [vmem:[%s0 + $0x10] sm:$0xf]
  %v22 = vld [vmem:[%s0 + $0x14] sm:$0xf]
  %v23 = vld [vmem:[%s0 + $0x18] sm:$0xf]
  %v24 = vld [vmem:[%s0 + $0x1c] sm:$0xf]
  %v25 = vld [vmem:[%s0 + $0x20] sm:$0xf]
  %v26 = vld [vmem:[%s0 + $0x24] sm:$0xf]
  %v27 = vld [vmem:[%s0 + $0x28] sm:$0xf]
  %v28 = vld [vmem:[%s0 + $0x2c] sm:$0xf]
  %v29 = vld [vmem:[%s0 + $0x30] sm:$0xf]
  %v30 = vld [vmem:[%s0 + $0x34] sm:$0xf]
  %v31 = vld [vmem:[%s0 + $0x38] sm:$0xf]
  %v32 = vld [vmem:[%s0 + $0x3c] sm:$0xf]
  %v33 = vld [vmem:[%s0 + $0x40] sm:$0xf]
  %v34 = vld [vmem:[%s0 + $0x44] sm:$0xf]
  %v35 = vld [vmem:[%s0 + $0x48] sm:$0xf]
  %v36 = vld [vmem:[%s0 + $0x4c] sm:$0xf]
  %v37 = vld [vmem:[%s0 + $0x50] sm:$0xf]
  %v38 = vld [vmem:[%s0 + $0x54] sm:$0xf]
  %v39 = vld [vmem:[%s0 + $0x58] sm:$0xf]
  %v40 = vld [vmem:[%s0 + $0x5c] sm:$0xf]
  %v41 = vld [vmem:[%s0 + $0x60] sm:$0xf]
  %v42 = vld [vmem:[%s0 + $0x64] sm:$0xf]
  %v43 = vld [vmem:[%s0 + $0x68] sm:$0xf]
  %v44 = vld [vmem:[%s0 + $0x6c] sm:$0xf]
  %v45 = vld [vmem:[%s0 + $0x70] sm:$0xf]
  %v46 = vld [vmem:[%s0 + $0x74] sm:$0xf]
  %v47 = vld [vmem:[%s0 + $0x78] sm:$0xf]
  %v48 = vld [vmem:[%s0 + $0x7c] sm:$0xf]
  %v49 = vld [vmem:[%s0 + $0x80] sm:$0xf]
  %v50 = vld [vmem:[%s0 + $0x84] sm:$0xf]
  %v51 = vld [vmem:[%s0 + $0x88] sm:$0xf]
  %v52 = vld [vmem:[%s0 + $0x8c] sm:$0xf]
  %v53 = vld [vmem:[%s0 + $0x90] sm:$0xf]
  %v54 = vld [vmem:[%s0 + $0x94] sm:$0xf]
  %v55 = vld [vmem:[%s0 + $0x98] sm:$0xf]
  %v56 = vld [vmem:[%s0 + $0x9c] sm:$0xf]
  %v57 = vld [vmem:[%s0 + $0xa0] sm:$0xf]
  %v58 = vld [vmem:[%s0 + $0xa4] sm:$0xf]
  %v59 = vld [vmem:[%s0 + $0xa8] sm:$0xf]
  %v60 = vld [vmem:[%s0 + $0xac] sm:$0xf]
  %v61 = vld [vmem:[%s0 + $0xb0] sm:$0xf]
  %v62 = vld [vmem:[%s0 + $0xb4] sm:$0xf]
  %v63 = vld [vmem:[%s0 + $0xb8] sm:$0xf]
  %v64 = vld [vmem:[%s0 + $0xbc] sm:$0xf]
  %v65 = vld [vmem:[%s0 + $0xc0] sm:$0xf]
  %v66 = vld [vmem:[%s0 + $0xc4] sm:$0xf]
  %v67 = vld [vmem:[%s0 + $0xc8] sm:$0xf]
  %v68 = vld [vmem:[%s0 + $0xcc] sm:$0xf]
  %v69 = vld [vmem:[%s0 + $0xd0] sm:$0xf]
  %v70 = vld [vmem:[%s0 + $0xd4] sm:$0xf]
  %v71 = vld [vmem:[%s0 + $0xd8] sm:$0xf]
  %v72 = vld [vmem:[%s0 + $0xdc] sm:$0xf]
  %v73 = vld [vmem:[%s0 + $0xe0] sm:$0xf]
  %v74 = vld [vmem:[%s0 + $0xe4] sm:$0xf]
  %v75 = vld [vmem:[%s0 + $0xe8] sm:$0xf]
  %v76 = vld [vmem:[%s0 + $0xec] sm:$0xf]
  %v77 = vld [vmem:[%s0 + $0xf0] sm:$0xf]
  %v78 = vld [vmem:[%s0 + $0xf4] sm:$0xf]
  %v79 = vld [vmem:[%s0 + $0xf8] sm:$0xf]
  %v80 = vld [vmem:[%s0 + $0xfc] sm:$0xf]
  %v81 = vunpack.c.l.bf16 %v17
  %v82 = vunpack.c.l.bf16 %v18
  %v83 = vunpack.c.l.bf16 %v19
  %v84 = vunpack.c.l.bf16 %v20
  %v85 = vunpack.c.l.bf16 %v21
  %v86 = vunpack.c.l.bf16 %v22
  %v87 = vunpack.c.l.bf16 %v23
  %v88 = vunpack.c.l.bf16 %v24
  %v89 = vunpack.c.l.bf16 %v25
  %v90 = vunpack.c.l.bf16 %v26
  %v91 = vunpack.c.l.bf16 %v27
  %v92 = vunpack.c.l.bf16 %v28
  %v93 = vunpack.c.l.bf16 %v29
  %v94 = vunpack.c.l.bf16 %v30
  %v95 = vunpack.c.l.bf16 %v31
  %v96 = vunpack.c.l.bf16 %v32
  %v97 = vunpack.c.l.bf16 %v33
  %v98 = vunpack.c.l.bf16 %v34
  %v99 = vunpack.c.l.bf16 %v35
  %v100 = vunpack.c.l.bf16 %v36
  %v101 = vunpack.c.l.bf16 %v37
  %v102 = vunpack.c.l.bf16 %v38
  %v103 = vunpack.c.l.bf16 %v39
  %v104 = vunpack.c.l.bf16 %v40
  %v105 = vunpack.c.l.bf16 %v41
  %v106 = vunpack.c.l.bf16 %v42
  %v107 = vunpack.c.l.bf16 %v43
  %v108 = vunpack.c.l.bf16 %v44
  %v109 = vunpack.c.l.bf16 %v45
  %v110 = vunpack.c.l.bf16 %v46
  %v111 = vunpack.c.l.bf16 %v47
  %v112 = vunpack.c.l.bf16 %v48
  %v113 = vunpack.c.l.bf16 %v49
  %v114 = vunpack.c.l.bf16 %v50
  %v115 = vunpack.c.l.bf16 %v51
  %v116 = vunpack.c.l.bf16 %v52
  %v117 = vunpack.c.l.bf16 %v53
  %v118 = vunpack.c.l.bf16 %v54
  %v119 = vunpack.c.l.bf16 %v55
  %v120 = vunpack.c.l.bf16 %v56
  %v121 = vunpack.c.l.bf16 %v57
  %v122 = vunpack.c.l.bf16 %v58
  %v123 = vunpack.c.l.bf16 %v59
  %v124 = vunpack.c.l.bf16 %v60
  %v125 = vunpack.c.l.bf16 %v61
  %v126 = vunpack.c.l.bf16 %v62
  %v127 = vunpack.c.l.bf16 %v63
  %v128 = vunpack.c.l.bf16 %v64
  %v129 = vunpack.c.l.bf16 %v65
  %v130 = vunpack.c.l.bf16 %v66
  %v131 = vunpack.c.l.bf16 %v67
  %v132 = vunpack.c.l.bf16 %v68
  %v133 = vunpack.c.l.bf16 %v69
  %v134 = vunpack.c.l.bf16 %v70
  %v135 = vunpack.c.l.bf16 %v71
  %v136 = vunpack.c.l.bf16 %v72
  %v137 = vunpack.c.l.bf16 %v73
  %v138 = vunpack.c.l.bf16 %v74
  %v139 = vunpack.c.l.bf16 %v75
  %v140 = vunpack.c.l.bf16 %v76
  %v141 = vunpack.c.l.bf16 %v77
  %v142 = vunpack.c.l.bf16 %v78
  %v143 = vunpack.c.l.bf16 %v79
  %v144 = vunpack.c.l.bf16 %v80
  %v145 = vld [vmem:[%s1] sm:$0x1]
  %v147 = vlaneseq
  %v148 = vshrl.u32 %v147, 7
  %v149 = vsub.s32 0, %v148
  %v150 = vrot.slane %v145, %v149
  %v152 = vmul.f32 %v81, %v150
  %v153 = vmul.f32 %v82, %v150
  %v154 = vmul.f32 %v83, %v150
  %v155 = vmul.f32 %v84, %v150
  %v156 = vmul.f32 %v85, %v150
  %v157 = vmul.f32 %v86, %v150
  %v158 = vmul.f32 %v87, %v150
  %v159 = vmul.f32 %v88, %v150
  %v160 = vmul.f32 %v89, %v150
  %v161 = vmul.f32 %v90, %v150
  %v162 = vmul.f32 %v91, %v150
  %v163 = vmul.f32 %v92, %v150
  %v164 = vmul.f32 %v93, %v150
  %v165 = vmul.f32 %v94, %v150
  %v166 = vmul.f32 %v95, %v150
  %v167 = vmul.f32 %v96, %v150
  %v168 = vmul.f32 %v97, %v150
  %v169 = vmul.f32 %v98, %v150
  %v170 = vmul.f32 %v99, %v150
  %v171 = vmul.f32 %v100, %v150
  %v172 = vmul.f32 %v101, %v150
  %v173 = vmul.f32 %v102, %v150
  %v174 = vmul.f32 %v103, %v150
  %v175 = vmul.f32 %v104, %v150
  %v176 = vmul.f32 %v105, %v150
  %v177 = vmul.f32 %v106, %v150
  %v178 = vmul.f32 %v107, %v150
  %v179 = vmul.f32 %v108, %v150
  %v180 = vmul.f32 %v109, %v150
  %v181 = vmul.f32 %v110, %v150
  %v182 = vmul.f32 %v111, %v150
  %v183 = vmul.f32 %v112, %v150
  %v184 = vmul.f32 %v113, %v150
  %v185 = vmul.f32 %v114, %v150
  %v186 = vmul.f32 %v115, %v150
  %v187 = vmul.f32 %v116, %v150
  %v188 = vmul.f32 %v117, %v150
  %v189 = vmul.f32 %v118, %v150
  %v190 = vmul.f32 %v119, %v150
  %v191 = vmul.f32 %v120, %v150
  %v192 = vmul.f32 %v121, %v150
  %v193 = vmul.f32 %v122, %v150
  %v194 = vmul.f32 %v123, %v150
  %v195 = vmul.f32 %v124, %v150
  %v196 = vmul.f32 %v125, %v150
  %v197 = vmul.f32 %v126, %v150
  %v198 = vmul.f32 %v127, %v150
  %v199 = vmul.f32 %v128, %v150
  %v200 = vmul.f32 %v129, %v150
  %v201 = vmul.f32 %v130, %v150
  %v202 = vmul.f32 %v131, %v150
  %v203 = vmul.f32 %v132, %v150
  %v204 = vmul.f32 %v133, %v150
  %v205 = vmul.f32 %v134, %v150
  %v206 = vmul.f32 %v135, %v150
  %v207 = vmul.f32 %v136, %v150
  %v208 = vmul.f32 %v137, %v150
  %v209 = vmul.f32 %v138, %v150
  %v210 = vmul.f32 %v139, %v150
  %v211 = vmul.f32 %v140, %v150
  %v212 = vmul.f32 %v141, %v150
  %v213 = vmul.f32 %v142, %v150
  %v214 = vmul.f32 %v143, %v150
  %v215 = vmul.f32 %v144, %v150
  %v216 = vld [vmem:[%s2] sm:$0x1]
  %v218 = vlaneseq
  %v219 = vshrl.u32 %v218, 7
  %v220 = vsub.s32 0, %v219
  %v221 = vrot.slane %v216, %v220
  %v223 = vadd.f32 %v152, %v221
  %v224 = vadd.f32 %v153, %v221
  %v225 = vadd.f32 %v154, %v221
  %v226 = vadd.f32 %v155, %v221
  %v227 = vadd.f32 %v156, %v221
  %v228 = vadd.f32 %v157, %v221
  %v229 = vadd.f32 %v158, %v221
  %v230 = vadd.f32 %v159, %v221
  %v231 = vadd.f32 %v160, %v221
  %v232 = vadd.f32 %v161, %v221
  %v233 = vadd.f32 %v162, %v221
  %v234 = vadd.f32 %v163, %v221
  %v235 = vadd.f32 %v164, %v221
  %v236 = vadd.f32 %v165, %v221
  %v237 = vadd.f32 %v166, %v221
  %v238 = vadd.f32 %v167, %v221
  %v239 = vadd.f32 %v168, %v221
  %v240 = vadd.f32 %v169, %v221
  %v241 = vadd.f32 %v170, %v221
  %v242 = vadd.f32 %v171, %v221
  %v243 = vadd.f32 %v172, %v221
  %v244 = vadd.f32 %v173, %v221
  %v245 = vadd.f32 %v174, %v221
  %v246 = vadd.f32 %v175, %v221
  %v247 = vadd.f32 %v176, %v221
  %v248 = vadd.f32 %v177, %v221
  %v249 = vadd.f32 %v178, %v221
  %v250 = vadd.f32 %v179, %v221
  %v251 = vadd.f32 %v180, %v221
  %v252 = vadd.f32 %v181, %v221
  %v253 = vadd.f32 %v182, %v221
  %v254 = vadd.f32 %v183, %v221
  %v255 = vadd.f32 %v184, %v221
  %v256 = vadd.f32 %v185, %v221
  %v257 = vadd.f32 %v186, %v221
  %v258 = vadd.f32 %v187, %v221
  %v259 = vadd.f32 %v188, %v221
  %v260 = vadd.f32 %v189, %v221
  %v261 = vadd.f32 %v190, %v221
  %v262 = vadd.f32 %v191, %v221
  %v263 = vadd.f32 %v192, %v221
  %v264 = vadd.f32 %v193, %v221
  %v265 = vadd.f32 %v194, %v221
  %v266 = vadd.f32 %v195, %v221
  %v267 = vadd.f32 %v196, %v221
  %v268 = vadd.f32 %v197, %v221
  %v269 = vadd.f32 %v198, %v221
  %v270 = vadd.f32 %v199, %v221
  %v271 = vadd.f32 %v200, %v221
  %v272 = vadd.f32 %v201, %v221
  %v273 = vadd.f32 %v202, %v221
  %v274 = vadd.f32 %v203, %v221
  %v275 = vadd.f32 %v204, %v221
  %v276 = vadd.f32 %v205, %v221
  %v277 = vadd.f32 %v206, %v221
  %v278 = vadd.f32 %v207, %v221
  %v279 = vadd.f32 %v208, %v221
  %v280 = vadd.f32 %v209, %v221
  %v281 = vadd.f32 %v210, %v221
  %v282 = vadd.f32 %v211, %v221
  %v283 = vadd.f32 %v212, %v221
  %v284 = vadd.f32 %v213, %v221
  %v285 = vadd.f32 %v214, %v221
  %v286 = vadd.f32 %v215, %v221
  %v287 = vld [vmem:[%s3] sm:$0xff]
  %v288 = vld [vmem:[%s3 + $0x8] sm:$0xff]
  %v289 = vld [vmem:[%s3 + $0x10] sm:$0xff]
  %v290 = vld [vmem:[%s3 + $0x18] sm:$0xff]
  %v291 = vld [vmem:[%s3 + $0x20] sm:$0xff]
  %v292 = vld [vmem:[%s3 + $0x28] sm:$0xff]
  %v293 = vld [vmem:[%s3 + $0x30] sm:$0xff]
  %v294 = vld [vmem:[%s3 + $0x38] sm:$0xff]
  %v295 = vld [vmem:[%s3 + $0x40] sm:$0xff]
  %v296 = vld [vmem:[%s3 + $0x48] sm:$0xff]
  %v297 = vld [vmem:[%s3 + $0x50] sm:$0xff]
  %v298 = vld [vmem:[%s3 + $0x58] sm:$0xff]
  %v299 = vld [vmem:[%s3 + $0x60] sm:$0xff]
  %v300 = vld [vmem:[%s3 + $0x68] sm:$0xff]
  %v301 = vld [vmem:[%s3 + $0x70] sm:$0xff]
  %v302 = vld [vmem:[%s3 + $0x78] sm:$0xff]
  %v303 = vld [vmem:[%s3 + $0x80] sm:$0xff]
  %v304 = vld [vmem:[%s3 + $0x88] sm:$0xff]
  %v305 = vld [vmem:[%s3 + $0x90] sm:$0xff]
  %v306 = vld [vmem:[%s3 + $0x98] sm:$0xff]
  %v307 = vld [vmem:[%s3 + $0xa0] sm:$0xff]
  %v308 = vld [vmem:[%s3 + $0xa8] sm:$0xff]
  %v309 = vld [vmem:[%s3 + $0xb0] sm:$0xff]
  %v310 = vld [vmem:[%s3 + $0xb8] sm:$0xff]
  %v311 = vld [vmem:[%s3 + $0xc0] sm:$0xff]
  %v312 = vld [vmem:[%s3 + $0xc8] sm:$0xff]
  %v313 = vld [vmem:[%s3 + $0xd0] sm:$0xff]
  %v314 = vld [vmem:[%s3 + $0xd8] sm:$0xff]
  %v315 = vld [vmem:[%s3 + $0xe0] sm:$0xff]
  %v316 = vld [vmem:[%s3 + $0xe8] sm:$0xff]
  %v317 = vld [vmem:[%s3 + $0xf0] sm:$0xff]
  %v318 = vld [vmem:[%s3 + $0xf8] sm:$0xff]
  %v319 = vld [vmem:[%s3 + $0x100] sm:$0xff]
  %v320 = vld [vmem:[%s3 + $0x108] sm:$0xff]
  %v321 = vld [vmem:[%s3 + $0x110] sm:$0xff]
  %v322 = vld [vmem:[%s3 + $0x118] sm:$0xff]
  %v323 = vld [vmem:[%s3 + $0x120] sm:$0xff]
  %v324 = vld [vmem:[%s3 + $0x128] sm:$0xff]
  %v325 = vld [vmem:[%s3 + $0x130] sm:$0xff]
  %v326 = vld [vmem:[%s3 + $0x138] sm:$0xff]
  %v327 = vld [vmem:[%s3 + $0x140] sm:$0xff]
  %v328 = vld [vmem:[%s3 + $0x148] sm:$0xff]
  %v329 = vld [vmem:[%s3 + $0x150] sm:$0xff]
  %v330 = vld [vmem:[%s3 + $0x158] sm:$0xff]
  %v331 = vld [vmem:[%s3 + $0x160] sm:$0xff]
  %v332 = vld [vmem:[%s3 + $0x168] sm:$0xff]
  %v333 = vld [vmem:[%s3 + $0x170] sm:$0xff]
  %v334 = vld [vmem:[%s3 + $0x178] sm:$0xff]
  %v335 = vld [vmem:[%s3 + $0x180] sm:$0xff]
  %v336 = vld [vmem:[%s3 + $0x188] sm:$0xff]
  %v337 = vld [vmem:[%s3 + $0x190] sm:$0xff]
  %v338 = vld [vmem:[%s3 + $0x198] sm:$0xff]
  %v339 = vld [vmem:[%s3 + $0x1a0] sm:$0xff]
  %v340 = vld [vmem:[%s3 + $0x1a8] sm:$0xff]
  %v341 = vld [vmem:[%s3 + $0x1b0] sm:$0xff]
  %v342 = vld [vmem:[%s3 + $0x1b8] sm:$0xff]
  %v343 = vld [vmem:[%s3 + $0x1c0] sm:$0xff]
  %v344 = vld [vmem:[%s3 + $0x1c8] sm:$0xff]
  %v345 = vld [vmem:[%s3 + $0x1d0] sm:$0xff]
  %v346 = vld [vmem:[%s3 + $0x1d8] sm:$0xff]
  %v347 = vld [vmem:[%s3 + $0x1e0] sm:$0xff]
  %v348 = vld [vmem:[%s3 + $0x1e8] sm:$0xff]
  %v349 = vld [vmem:[%s3 + $0x1f0] sm:$0xff]
  %v350 = vld [vmem:[%s3 + $0x1f8] sm:$0xff]
  %v351 = vadd.f32 %v223, %v287
  %v352 = vadd.f32 %v224, %v288
  %v353 = vadd.f32 %v225, %v289
  %v354 = vadd.f32 %v226, %v290
  %v355 = vadd.f32 %v227, %v291
  %v356 = vadd.f32 %v228, %v292
  %v357 = vadd.f32 %v229, %v293
  %v358 = vadd.f32 %v230, %v294
  %v359 = vadd.f32 %v231, %v295
  %v360 = vadd.f32 %v232, %v296
  %v361 = vadd.f32 %v233, %v297
  %v362 = vadd.f32 %v234, %v298
  %v363 = vadd.f32 %v235, %v299
  %v364 = vadd.f32 %v236, %v300
  %v365 = vadd.f32 %v237, %v301
  %v366 = vadd.f32 %v238, %v302
  %v367 = vadd.f32 %v239, %v303
  %v368 = vadd.f32 %v240, %v304
  %v369 = vadd.f32 %v241, %v305
  %v370 = vadd.f32 %v242, %v306
  %v371 = vadd.f32 %v243, %v307
  %v372 = vadd.f32 %v244, %v308
  %v373 = vadd.f32 %v245, %v309
  %v374 = vadd.f32 %v246, %v310
  %v375 = vadd.f32 %v247, %v311
  %v376 = vadd.f32 %v248, %v312
  %v377 = vadd.f32 %v249, %v313
  %v378 = vadd.f32 %v250, %v314
  %v379 = vadd.f32 %v251, %v315
  %v380 = vadd.f32 %v252, %v316
  %v381 = vadd.f32 %v253, %v317
  %v382 = vadd.f32 %v254, %v318
  %v383 = vadd.f32 %v255, %v319
  %v384 = vadd.f32 %v256, %v320
  %v385 = vadd.f32 %v257, %v321
  %v386 = vadd.f32 %v258, %v322
  %v387 = vadd.f32 %v259, %v323
  %v388 = vadd.f32 %v260, %v324
  %v389 = vadd.f32 %v261, %v325
  %v390 = vadd.f32 %v262, %v326
  %v391 = vadd.f32 %v263, %v327
  %v392 = vadd.f32 %v264, %v328
  %v393 = vadd.f32 %v265, %v329
  %v394 = vadd.f32 %v266, %v330
  %v395 = vadd.f32 %v267, %v331
  %v396 = vadd.f32 %v268, %v332
  %v397 = vadd.f32 %v269, %v333
  %v398 = vadd.f32 %v270, %v334
  %v399 = vadd.f32 %v271, %v335
  %v400 = vadd.f32 %v272, %v336
  %v401 = vadd.f32 %v273, %v337
  %v402 = vadd.f32 %v274, %v338
  %v403 = vadd.f32 %v275, %v339
  %v404 = vadd.f32 %v276, %v340
  %v405 = vadd.f32 %v277, %v341
  %v406 = vadd.f32 %v278, %v342
  %v407 = vadd.f32 %v279, %v343
  %v408 = vadd.f32 %v280, %v344
  %v409 = vadd.f32 %v281, %v345
  %v410 = vadd.f32 %v282, %v346
  %v411 = vadd.f32 %v283, %v347
  %v412 = vadd.f32 %v284, %v348
  %v413 = vadd.f32 %v285, %v349
  %v414 = vadd.f32 %v286, %v350
  %v415 = vmax.f32 %v351, 0.0
  %v416 = vmax.f32 %v352, 0.0
  %v417 = vmax.f32 %v353, 0.0
  %v418 = vmax.f32 %v354, 0.0
  %v419 = vmax.f32 %v355, 0.0
  %v420 = vmax.f32 %v356, 0.0
  %v421 = vmax.f32 %v357, 0.0
  %v422 = vmax.f32 %v358, 0.0
  %v423 = vmax.f32 %v359, 0.0
  %v424 = vmax.f32 %v360, 0.0
  %v425 = vmax.f32 %v361, 0.0
  %v426 = vmax.f32 %v362, 0.0
  %v427 = vmax.f32 %v363, 0.0
  %v428 = vmax.f32 %v364, 0.0
  %v429 = vmax.f32 %v365, 0.0
  %v430 = vmax.f32 %v366, 0.0
  %v431 = vmax.f32 %v367, 0.0
  %v432 = vmax.f32 %v368, 0.0
  %v433 = vmax.f32 %v369, 0.0
  %v434 = vmax.f32 %v370, 0.0
  %v435 = vmax.f32 %v371, 0.0
  %v436 = vmax.f32 %v372, 0.0
  %v437 = vmax.f32 %v373, 0.0
  %v438 = vmax.f32 %v374, 0.0
  %v439 = vmax.f32 %v375, 0.0
  %v440 = vmax.f32 %v376, 0.0
  %v441 = vmax.f32 %v377, 0.0
  %v442 = vmax.f32 %v378, 0.0
  %v443 = vmax.f32 %v379, 0.0
  %v444 = vmax.f32 %v380, 0.0
  %v445 = vmax.f32 %v381, 0.0
  %v446 = vmax.f32 %v382, 0.0
  %v447 = vmax.f32 %v383, 0.0
  %v448 = vmax.f32 %v384, 0.0
  %v449 = vmax.f32 %v385, 0.0
  %v450 = vmax.f32 %v386, 0.0
  %v451 = vmax.f32 %v387, 0.0
  %v452 = vmax.f32 %v388, 0.0
  %v453 = vmax.f32 %v389, 0.0
  %v454 = vmax.f32 %v390, 0.0
  %v455 = vmax.f32 %v391, 0.0
  %v456 = vmax.f32 %v392, 0.0
  %v457 = vmax.f32 %v393, 0.0
  %v458 = vmax.f32 %v394, 0.0
  %v459 = vmax.f32 %v395, 0.0
  %v460 = vmax.f32 %v396, 0.0
  %v461 = vmax.f32 %v397, 0.0
  %v462 = vmax.f32 %v398, 0.0
  %v463 = vmax.f32 %v399, 0.0
  %v464 = vmax.f32 %v400, 0.0
  %v465 = vmax.f32 %v401, 0.0
  %v466 = vmax.f32 %v402, 0.0
  %v467 = vmax.f32 %v403, 0.0
  %v468 = vmax.f32 %v404, 0.0
  %v469 = vmax.f32 %v405, 0.0
  %v470 = vmax.f32 %v406, 0.0
  %v471 = vmax.f32 %v407, 0.0
  %v472 = vmax.f32 %v408, 0.0
  %v473 = vmax.f32 %v409, 0.0
  %v474 = vmax.f32 %v410, 0.0
  %v475 = vmax.f32 %v411, 0.0
  %v476 = vmax.f32 %v412, 0.0
  %v477 = vmax.f32 %v413, 0.0
  %v478 = vmax.f32 %v414, 0.0
  %479 = vst [vmem:[%s4] sm:$0xff] %v415
  %480 = vst [vmem:[%s4 + $0x8] sm:$0xff] %v416
  %481 = vst [vmem:[%s4 + $0x10] sm:$0xff] %v417
  %482 = vst [vmem:[%s4 + $0x18] sm:$0xff] %v418
  %483 = vst [vmem:[%s4 + $0x20] sm:$0xff] %v419
  %484 = vst [vmem:[%s4 + $0x28] sm:$0xff] %v420
  %485 = vst [vmem:[%s4 + $0x30] sm:$0xff] %v421
  %486 = vst [vmem:[%s4 + $0x38] sm:$0xff] %v422
  %487 = vst [vmem:[%s4 + $0x40] sm:$0xff] %v423
  %488 = vst [vmem:[%s4 + $0x48] sm:$0xff] %v424
  %489 = vst [vmem:[%s4 + $0x50] sm:$0xff] %v425
  %490 = vst [vmem:[%s4 + $0x58] sm:$0xff] %v426
  %491 = vst [vmem:[%s4 + $0x60] sm:$0xff] %v427
  %492 = vst [vmem:[%s4 + $0x68] sm:$0xff] %v428
  %493 = vst [vmem:[%s4 + $0x70] sm:$0xff] %v429
  %494 = vst [vmem:[%s4 + $0x78] sm:$0xff] %v430
  %495 = vst [vmem:[%s4 + $0x80] sm:$0xff] %v431
  %496 = vst [vmem:[%s4 + $0x88] sm:$0xff] %v432
  %497 = vst [vmem:[%s4 + $0x90] sm:$0xff] %v433
  %498 = vst [vmem:[%s4 + $0x98] sm:$0xff] %v434
  %499 = vst [vmem:[%s4 + $0xa0] sm:$0xff] %v435
  %500 = vst [vmem:[%s4 + $0xa8] sm:$0xff] %v436
  %501 = vst [vmem:[%s4 + $0xb0] sm:$0xff] %v437
  %502 = vst [vmem:[%s4 + $0xb8] sm:$0xff] %v438
  %503 = vst [vmem:[%s4 + $0xc0] sm:$0xff] %v439
  %504 = vst [vmem:[%s4 + $0xc8] sm:$0xff] %v440
  %505 = vst [vmem:[%s4 + $0xd0] sm:$0xff] %v441
  %506 = vst [vmem:[%s4 + $0xd8] sm:$0xff] %v442
  %507 = vst [vmem:[%s4 + $0xe0] sm:$0xff] %v443
  %508 = vst [vmem:[%s4 + $0xe8] sm:$0xff] %v444
  %509 = vst [vmem:[%s4 + $0xf0] sm:$0xff] %v445
  %510 = vst [vmem:[%s4 + $0xf8] sm:$0xff] %v446
  %511 = vst [vmem:[%s4 + $0x100] sm:$0xff] %v447
  %512 = vst [vmem:[%s4 + $0x108] sm:$0xff] %v448
  %513 = vst [vmem:[%s4 + $0x110] sm:$0xff] %v449
  %514 = vst [vmem:[%s4 + $0x118] sm:$0xff] %v450
  %515 = vst [vmem:[%s4 + $0x120] sm:$0xff] %v451
  %516 = vst [vmem:[%s4 + $0x128] sm:$0xff] %v452
  %517 = vst [vmem:[%s4 + $0x130] sm:$0xff] %v453
  %518 = vst [vmem:[%s4 + $0x138] sm:$0xff] %v454
  %519 = vst [vmem:[%s4 + $0x140] sm:$0xff] %v455
  %520 = vst [vmem:[%s4 + $0x148] sm:$0xff] %v456
  %521 = vst [vmem:[%s4 + $0x150] sm:$0xff] %v457
  %522 = vst [vmem:[%s4 + $0x158] sm:$0xff] %v458
  %523 = vst [vmem:[%s4 + $0x160] sm:$0xff] %v459
  %524 = vst [vmem:[%s4 + $0x168] sm:$0xff] %v460
  %525 = vst [vmem:[%s4 + $0x170] sm:$0xff] %v461
  %526 = vst [vmem:[%s4 + $0x178] sm:$0xff] %v462
  %527 = vst [vmem:[%s4 + $0x180] sm:$0xff] %v463
  %528 = vst [vmem:[%s4 + $0x188] sm:$0xff] %v464
  %529 = vst [vmem:[%s4 + $0x190] sm:$0xff] %v465
  %530 = vst [vmem:[%s4 + $0x198] sm:$0xff] %v466
  %531 = vst [vmem:[%s4 + $0x1a0] sm:$0xff] %v467
  %532 = vst [vmem:[%s4 + $0x1a8] sm:$0xff] %v468
  %533 = vst [vmem:[%s4 + $0x1b0] sm:$0xff] %v469
  %534 = vst [vmem:[%s4 + $0x1b8] sm:$0xff] %v470
  %535 = vst [vmem:[%s4 + $0x1c0] sm:$0xff] %v471
  %536 = vst [vmem:[%s4 + $0x1c8] sm:$0xff] %v472
  %537 = vst [vmem:[%s4 + $0x1d0] sm:$0xff] %v473
  %538 = vst [vmem:[%s4 + $0x1d8] sm:$0xff] %v474
  %539 = vst [vmem:[%s4 + $0x1e0] sm:$0xff] %v475
  %540 = vst [vmem:[%s4 + $0x1e8] sm:$0xff] %v476
  %541 = vst [vmem:[%s4 + $0x1f0] sm:$0xff] %v477
  %542 = vst [vmem:[%s4 + $0x1f8] sm:$0xff] %v478
  // Predicated region
  $region18: #{bottleneck_forward.7} parent=0 // pred_check
    _
  $region19: #{bottleneck_forward.7} parent=0 // pred_check_branch
    %544 = sbr.rel (0) target = $region21
  $region20: #{bottleneck_forward.7} parent=0 // pred_region
    _
  $region21: #{bottleneck_forward.7} parent=0 // pred_fallthru
    _
  // Predicated region
  $region22: #{bottleneck_forward.7} parent=0 // pred_check
    _
  $region23: #{bottleneck_forward.7} parent=0 // pred_check_branch
    %546 = sbr.rel (0) target = $region25
  $region24: #{bottleneck_forward.7} parent=0 // pred_region
    _
  $region25: #{bottleneck_forward.7} parent=0 // pred_fallthru
    _

// kernel: bottleneck_forward.5
$region0: #{bottleneck_forward.5}
  #allocation0 [shape = 'u32[]', space=smem, size = 0x4, offset = 0x4, fixed_abs, tag = 'smem constant byte address 0x4 - core index']
  #allocation1 [shape = 'u32[144,128]{1,0:T(1,128)}', space=vmem, size = 0x12000, scoped, tag = 'internal scratch']
  %s0 = inlined_call_operand.vmem [shape: bf16[512,128], index: 0, kind: input, shape index: {}]
  %s1 = inlined_call_operand.vmem [shape: f32[1,128], index: 1, kind: input, shape index: {}]
  %s2 = inlined_call_operand.vmem [shape: f32[1,128], index: 2, kind: input, shape index: {}]
  %s3 = inlined_call_operand.vmem [shape: bf16[1152,128], index: 3, kind: input, shape index: {}]
  %s4 = inlined_call_operand.vmem [shape: bf16[512,128], index: 4, kind: output, shape index: {0}]
  %s5 = inlined_call_operand.vmem [shape: f32[1,128], index: 5, kind: output, shape index: {1}]
  %s6 = inlined_call_operand.vmem [shape: f32[1,128], index: 6, kind: output, shape index: {2}]
  %7 = xla_tuple %s4, %s5, %s6
  %s8 = sld [smem:[#allocation0]]
  $region69: #{bottleneck_forward.5} parent=0
    _
  %s10 = ssub.s32 1, %s8
  %s11 = scalar_select 0, %s10, %s8
  loop: start=0, step=1, limit=4
  $region2: #{bottleneck_forward.5} parent=0 // loop_pre_header
    _
  $region3: #{bottleneck_forward.5} parent=0 // loop_header
    %s13 = sphi 0, %s17
    %p14 = scmp.ge.s32.totalorder %s13, 4
    %s23 = sphi 0, %s25
    %s26 = sphi 0, %s23
    %s27 = sphi 0, %s26
    %s43 = sphi 0, %s27
    %s47 = sphi 0, %s47
    %s49 = sphi 0, %s47
    %s50 = sphi 0, %s49
    %s64 = sphi 0, %s50
    %s68 = sphi 0, %s68
    %s70 = sphi 0, %s68
    %s71 = sphi 0, %s70
    %s85 = sphi 0, %s71
    %s89 = sphi 0, %s89
    %s91 = sphi 0, %s89
    %s92 = sphi 0, %s91
    %s106 = sphi 0, %s92
    %s112 = sphi 0, %s114
    %s115 = sphi 0, %s112
    %s116 = sphi 0, %s115
    %s132 = sphi 0, %s116
    %s136 = sphi 0, %s136
    %s138 = sphi 0, %s136
    %s139 = sphi 0, %s138
    %s153 = sphi 0, %s139
    %s157 = sphi 0, %s157
    %s159 = sphi 0, %s157
    %s160 = sphi 0, %s159
    %s174 = sphi 0, %s160
  $region4: #{bottleneck_forward.5} parent=0 // loop_header_branch
    %16 = sbr.rel (%p14) target = $region8
  $region5: #{bottleneck_forward.5} parent=0 // loop_body
    %s18 = ssub.s32 %s13, 1
    %s19 = ssub.s32 %s13, 2
    %s20 = sadd.s32 %s13, 1
    %s21 = ssub.s32 %s13, %s20
    %p22 = scmp.eq.s32.totalorder %s21, 0
    %s24 = sadd.s32 %s23, 1
    %s25 = scalar_select %p22, %s23, %s24
    %p28 = pneg %p22
    %p29 = scmp.eq.s32.totalorder %s13, 1
    %p30 = por %p28, %p29
    %p31 = scmp.ne.s32.totalorder %s23, %s26
    %p32 = scmp.eq.s32.totalorder %s13, 0
    %p33 = por %p31, %p32
    %p34 = scmp.ne.s32.totalorder %s23, %s26
    %p35 = scmp.eq.s32.totalorder %s18, 1
    %p36 = por %p34, %p35
    %p37 = scmp.ne.s32.totalorder %s26, %s27
    %p38 = scmp.eq.s32.totalorder %s18, 0
    %p39 = por %p37, %p38
    %p40 = scmp.ne.s32.totalorder %s26, %s27
    %p41 = scmp.eq.s32.totalorder %s19, 1
    %p42 = por %p40, %p41
    %p44 = scmp.ne.s32.totalorder %s27, %s43
    %p45 = scmp.eq.s32.totalorder %s19, 0
    %p46 = por %p44, %p45
    %s48 = sadd.s32 %s47, 1
    %p51 = scmp.eq.s32.totalorder %s13, 1
    %p52 = scmp.ne.s32.totalorder %s47, %s49
    %p53 = scmp.eq.s32.totalorder %s13, 0
    %p54 = por %p52, %p53
    %p55 = scmp.ne.s32.totalorder %s47, %s49
    %p56 = scmp.eq.s32.totalorder %s18, 1
    %p57 = por %p55, %p56
    %p58 = scmp.ne.s32.totalorder %s49, %s50
    %p59 = scmp.eq.s32.totalorder %s18, 0
    %p60 = por %p58, %p59
    %p61 = scmp.ne.s32.totalorder %s49, %s50
    %p62 = scmp.eq.s32.totalorder %s19, 1
    %p63 = por %p61, %p62
    %p65 = scmp.ne.s32.totalorder %s50, %s64
    %p66 = scmp.eq.s32.totalorder %s19, 0
    %p67 = por %p65, %p66
    %s69 = sadd.s32 %s68, 1
    %p72 = scmp.eq.s32.totalorder %s13, 1
    %p73 = scmp.ne.s32.totalorder %s68, %s70
    %p74 = scmp.eq.s32.totalorder %s13, 0
    %p75 = por %p73, %p74
    %p76 = scmp.ne.s32.totalorder %s68, %s70
    %p77 = scmp.eq.s32.totalorder %s18, 1
    %p78 = por %p76, %p77
    %p79 = scmp.ne.s32.totalorder %s70, %s71
    %p80 = scmp.eq.s32.totalorder %s18, 0
    %p81 = por %p79, %p80
    %p82 = scmp.ne.s32.totalorder %s70, %s71
    %p83 = scmp.eq.s32.totalorder %s19, 1
    %p84 = por %p82, %p83
    %p86 = scmp.ne.s32.totalorder %s71, %s85
    %p87 = scmp.eq.s32.totalorder %s19, 0
    %p88 = por %p86, %p87
    %s90 = sadd.s32 %s89, 1
    %p93 = scmp.eq.s32.totalorder %s13, 1
    %p94 = scmp.ne.s32.totalorder %s89, %s91
    %p95 = scmp.eq.s32.totalorder %s13, 0
    %p96 = por %p94, %p95
    %p97 = scmp.ne.s32.totalorder %s89, %s91
    %p98 = scmp.eq.s32.totalorder %s18, 1
    %p99 = por %p97, %p98
    %p100 = scmp.ne.s32.totalorder %s91, %s92
    %p101 = scmp.eq.s32.totalorder %s18, 0
    %p102 = por %p100, %p101
    %p103 = scmp.ne.s32.totalorder %s91, %s92
    %p104 = scmp.eq.s32.totalorder %s19, 1
    %p105 = por %p103, %p104
    %p107 = scmp.ne.s32.totalorder %s92, %s106
    %p108 = scmp.eq.s32.totalorder %s19, 0
    %p109 = por %p107, %p108
    %s110 = ssub.s32 %s13, %s20
    %p111 = scmp.eq.s32.totalorder %s110, 0
    %s113 = sadd.s32 %s112, 1
    %s114 = scalar_select %p111, %s112, %s113
    %p117 = pneg %p111
    %p118 = scmp.eq.s32.totalorder %s13, 1
    %p119 = por %p117, %p118
    %p120 = scmp.ne.s32.totalorder %s112, %s115
    %p121 = scmp.eq.s32.totalorder %s13, 0
    %p122 = por %p120, %p121
    %p123 = scmp.ne.s32.totalorder %s112, %s115
    %p124 = scmp.eq.s32.totalorder %s18, 1
    %p125 = por %p123, %p124
    %p126 = scmp.ne.s32.totalorder %s115, %s116
    %p127 = scmp.eq.s32.totalorder %s18, 0
    %p128 = por %p126, %p127
    %p129 = scmp.ne.s32.totalorder %s115, %s116
    %p130 = scmp.eq.s32.totalorder %s19, 1
    %p131 = por %p129, %p130
    %p133 = scmp.ne.s32.totalorder %s116, %s132
    %p134 = scmp.eq.s32.totalorder %s19, 0
    %p135 = por %p133, %p134
    %s137 = sadd.s32 %s136, 1
    %p140 = scmp.eq.s32.totalorder %s13, 1
    %p141 = scmp.ne.s32.totalorder %s136, %s138
    %p142 = scmp.eq.s32.totalorder %s13, 0
    %p143 = por %p141, %p142
    %p144 = scmp.ne.s32.totalorder %s136, %s138
    %p145 = scmp.eq.s32.totalorder %s18, 1
    %p146 = por %p144, %p145
    %p147 = scmp.ne.s32.totalorder %s138, %s139
    %p148 = scmp.eq.s32.totalorder %s18, 0
    %p149 = por %p147, %p148
    %p150 = scmp.ne.s32.totalorder %s138, %s139
    %p151 = scmp.eq.s32.totalorder %s19, 1
    %p152 = por %p150, %p151
    %p154 = scmp.ne.s32.totalorder %s139, %s153
    %p155 = scmp.eq.s32.totalorder %s19, 0
    %p156 = por %p154, %p155
    %s158 = sadd.s32 %s157, 1
    %p161 = scmp.eq.s32.totalorder %s13, 1
    %p162 = scmp.ne.s32.totalorder %s157, %s159
    %p163 = scmp.eq.s32.totalorder %s13, 0
    %p164 = por %p162, %p163
    %p165 = scmp.ne.s32.totalorder %s157, %s159
    %p166 = scmp.eq.s32.totalorder %s18, 1
    %p167 = por %p165, %p166
    %p168 = scmp.ne.s32.totalorder %s159, %s160
    %p169 = scmp.eq.s32.totalorder %s18, 0
    %p170 = por %p168, %p169
    %p171 = scmp.ne.s32.totalorder %s159, %s160
    %p172 = scmp.eq.s32.totalorder %s19, 1
    %p173 = por %p171, %p172
    %p175 = scmp.ne.s32.totalorder %s160, %s174
    %p176 = scmp.eq.s32.totalorder %s19, 0
    %p177 = por %p175, %p176
    %p178 = scmp.le.s32.totalorder 1, %s13
    %p179 = scmp.lt.s32.totalorder %s13, 3
    %p180 = pnand %p178, %p179
    %p181 = pneg %p180
    // Predicated region
    $region9: #{bottleneck_forward.5} parent=5 // pred_check
      _
    $region10: #{bottleneck_forward.5} parent=5 // pred_check_branch
      %183 = sbr.rel (%p180) target = $region12
    $region11: #{bottleneck_forward.5} parent=5 // pred_region
      %s184 = ssub.s32 %s13, 1
      // Predicated region
      $region13: #{bottleneck_forward.5} parent=11 // pred_check
        %p185 = pneg %p60
      $region14: #{bottleneck_forward.5} parent=11 // pred_check_branch
        %187 = sbr.rel (%p185) target = $region16
      $region15: #{bottleneck_forward.5} parent=11 // pred_region
        _
      $region16: #{bottleneck_forward.5} parent=11 // pred_fallthru
        _
      // Predicated region
      $region17: #{bottleneck_forward.5} parent=11 // pred_check
        %p188 = pneg %p81
      $region18: #{bottleneck_forward.5} parent=11 // pred_check_branch
        %190 = sbr.rel (%p188) target = $region20
      $region19: #{bottleneck_forward.5} parent=11 // pred_region
        _
      $region20: #{bottleneck_forward.5} parent=11 // pred_fallthru
        _
      // Predicated region
      $region21: #{bottleneck_forward.5} parent=11 // pred_check
        %p191 = pneg %p102
      $region22: #{bottleneck_forward.5} parent=11 // pred_check_branch
        %193 = sbr.rel (%p191) target = $region24
      $region23: #{bottleneck_forward.5} parent=11 // pred_region
        _
      $region24: #{bottleneck_forward.5} parent=11 // pred_fallthru
        _
    $region12: #{bottleneck_forward.5} parent=5 // pred_fallthru
      _
    %p194 = scmp.lt.s32.totalorder %s13, 2
    // Predicated region
    $region25: #{bottleneck_forward.5} parent=5 // pred_check
      %p195 = pneg %p194
    $region26: #{bottleneck_forward.5} parent=5 // pred_check_branch
      %197 = sbr.rel (%p195) target = $region28
    $region27: #{bottleneck_forward.5} parent=5 // pred_region
      // Predicated region
      $region29: #{bottleneck_forward.5} parent=27 // pred_check
        %p198 = pneg %p33
      $region30: #{bottleneck_forward.5} parent=27 // pred_check_branch
        %200 = sbr.rel (%p198) target = $region32
      $region31: #{bottleneck_forward.5} parent=27 // pred_region
        %s201 = smul.u32 32, %s13
        %p202 = scmp.lt.s32.totalorder %s201, 63
        %s203 = scalar_select %p202, %s201, 63
        %s204 = smul.addr %s203, 4
        %s205 = scalar_lea.vmem %s0, %s204
        %s206 = smul.u32 32, %s13
      $region32: #{bottleneck_forward.5} parent=27 // pred_fallthru
        _
    $region28: #{bottleneck_forward.5} parent=5 // pred_fallthru
      _
    %p207 = scmp.le.s32.totalorder 1, %s13
    %p208 = scmp.lt.s32.totalorder %s13, 3
    %p209 = pnand %p207, %p208
    %p210 = pneg %p209
    // Predicated region
    $region33: #{bottleneck_forward.5} parent=5 // pred_check
      _
    $region34: #{bottleneck_forward.5} parent=5 // pred_check_branch
      %212 = sbr.rel (%p209) target = $region36
    $region35: #{bottleneck_forward.5} parent=5 // pred_region
      %s213 = ssub.s32 %s13, 1
      %s214 = smul.u32 32, %s18
      %p215 = scmp.lt.s32.totalorder %s214, 63
      %s216 = scalar_select %p215, %s214, 63
      %s217 = smul.addr %s216, 4
      %s218 = scalar_lea.vmem %s0, %s217
      %p219 = pneg %p39
      %p220 = pneg %p36
      %p221 = pneg %p60
      %p222 = pneg %p57
      %p223 = pneg %p81
      %p224 = pneg %p78
      %p225 = pneg %p102
      %p226 = pneg %p99
      %p227 = pneg %p128
      %p228 = pneg %p125
      %s229 = smul.u32 32, %s18
      %p230 = scmp.lt.s32.totalorder %s229, 63
      %s231 = scalar_select %p230, %s229, 63
      %s232 = smul.addr %s231, 4
      %s233 = scalar_lea.vmem %s4, %s232
      %p234 = pneg %p149
      %p235 = pneg %p146
      %p236 = pneg %p170
      %p237 = pneg %p167
      %s238 = smul.u32 32, %s18
      %p239 = scmp.lt.s32.totalorder %s238, 63
      %s240 = scalar_select %p239, %s238, 63
      %s241 = smul.addr %s240, 4
      %s242 = scalar_lea.vmem %s0, %s241
      %s243 = smul.u32 32, %s18
      %s244 = smul.u32 32, %s18
      %p245 = scmp.lt.s32.totalorder %s244, 63
      %s246 = scalar_select %p245, %s244, 63
      %s247 = smul.addr %s246, 4
      %s248 = scalar_lea.vmem %s4, %s247
      %s249 = smul.u32 32, %s18
      %v251 = vld [vmem:[%s242] sm:$0xf]
      %v252 = vld [vmem:[%s242 + $0x4] sm:$0xf]
      %v253 = vld [vmem:[%s242 + $0x8] sm:$0xf]
      %v254 = vld [vmem:[%s242 + $0xc] sm:$0xf]
      %v255 = vld [vmem:[%s242 + $0x10] sm:$0xf]
      %v256 = vld [vmem:[%s242 + $0x14] sm:$0xf]
      %v257 = vld [vmem:[%s242 + $0x18] sm:$0xf]
      %v258 = vld [vmem:[%s242 + $0x1c] sm:$0xf]
      %v259 = vld [vmem:[%s242 + $0x20] sm:$0xf]
      %v260 = vld [vmem:[%s242 + $0x24] sm:$0xf]
      %v261 = vld [vmem:[%s242 + $0x28] sm:$0xf]
      %v262 = vld [vmem:[%s242 + $0x2c] sm:$0xf]
      %v263 = vld [vmem:[%s242 + $0x30] sm:$0xf]
      %v264 = vld [vmem:[%s242 + $0x34] sm:$0xf]
      %v265 = vld [vmem:[%s242 + $0x38] sm:$0xf]
      %v266 = vld [vmem:[%s242 + $0x3c] sm:$0xf]
      %v267 = vld [vmem:[%s242 + $0x40] sm:$0xf]
      %v268 = vld [vmem:[%s242 + $0x44] sm:$0xf]
      %v269 = vld [vmem:[%s242 + $0x48] sm:$0xf]
      %v270 = vld [vmem:[%s242 + $0x4c] sm:$0xf]
      %v271 = vld [vmem:[%s242 + $0x50] sm:$0xf]
      %v272 = vld [vmem:[%s242 + $0x54] sm:$0xf]
      %v273 = vld [vmem:[%s242 + $0x58] sm:$0xf]
      %v274 = vld [vmem:[%s242 + $0x5c] sm:$0xf]
      %v275 = vld [vmem:[%s242 + $0x60] sm:$0xf]
      %v276 = vld [vmem:[%s242 + $0x64] sm:$0xf]
      %v277 = vld [vmem:[%s242 + $0x68] sm:$0xf]
      %v278 = vld [vmem:[%s242 + $0x6c] sm:$0xf]
      %v279 = vld [vmem:[%s242 + $0x70] sm:$0xf]
      %v280 = vld [vmem:[%s242 + $0x74] sm:$0xf]
      %v281 = vld [vmem:[%s242 + $0x78] sm:$0xf]
      %v282 = vld [vmem:[%s242 + $0x7c] sm:$0xf]
      %v283 = vunpack.c.l.bf16 %v251
      %v284 = vunpack.c.l.bf16 %v252
      %v285 = vunpack.c.l.bf16 %v253
      %v286 = vunpack.c.l.bf16 %v254
      %v287 = vunpack.c.l.bf16 %v255
      %v288 = vunpack.c.l.bf16 %v256
      %v289 = vunpack.c.l.bf16 %v257
      %v290 = vunpack.c.l.bf16 %v258
      %v291 = vunpack.c.l.bf16 %v259
      %v292 = vunpack.c.l.bf16 %v260
      %v293 = vunpack.c.l.bf16 %v261
      %v294 = vunpack.c.l.bf16 %v262
      %v295 = vunpack.c.l.bf16 %v263
      %v296 = vunpack.c.l.bf16 %v264
      %v297 = vunpack.c.l.bf16 %v265
      %v298 = vunpack.c.l.bf16 %v266
      %v299 = vunpack.c.l.bf16 %v267
      %v300 = vunpack.c.l.bf16 %v268
      %v301 = vunpack.c.l.bf16 %v269
      %v302 = vunpack.c.l.bf16 %v270
      %v303 = vunpack.c.l.bf16 %v271
      %v304 = vunpack.c.l.bf16 %v272
      %v305 = vunpack.c.l.bf16 %v273
      %v306 = vunpack.c.l.bf16 %v274
      %v307 = vunpack.c.l.bf16 %v275
      %v308 = vunpack.c.l.bf16 %v276
      %v309 = vunpack.c.l.bf16 %v277
      %v310 = vunpack.c.l.bf16 %v278
      %v311 = vunpack.c.l.bf16 %v279
      %v312 = vunpack.c.l.bf16 %v280
      %v313 = vunpack.c.l.bf16 %v281
      %v314 = vunpack.c.l.bf16 %v282
      %v315 = vld [vmem:[%s1] sm:$0x1]
      %v317 = vlaneseq
      %v318 = vshrl.u32 %v317, 7
      %v319 = vsub.s32 0, %v318
      %v320 = vrot.slane %v315, %v319
      %v322 = vmul.f32 %v283, %v320
      %v323 = vmul.f32 %v284, %v320
      %v324 = vmul.f32 %v285, %v320
      %v325 = vmul.f32 %v286, %v320
      %v326 = vmul.f32 %v287, %v320
      %v327 = vmul.f32 %v288, %v320
      %v328 = vmul.f32 %v289, %v320
      %v329 = vmul.f32 %v290, %v320
      %v330 = vmul.f32 %v291, %v320
      %v331 = vmul.f32 %v292, %v320
      %v332 = vmul.f32 %v293, %v320
      %v333 = vmul.f32 %v294, %v320
      %v334 = vmul.f32 %v295, %v320
      %v335 = vmul.f32 %v296, %v320
      %v336 = vmul.f32 %v297, %v320
      %v337 = vmul.f32 %v298, %v320
      %v338 = vmul.f32 %v299, %v320
      %v339 = vmul.f32 %v300, %v320
      %v340 = vmul.f32 %v301, %v320
      %v341 = vmul.f32 %v302, %v320
      %v342 = vmul.f32 %v303, %v320
      %v343 = vmul.f32 %v304, %v320
      %v344 = vmul.f32 %v305, %v320
      %v345 = vmul.f32 %v306, %v320
      %v346 = vmul.f32 %v307, %v320
      %v347 = vmul.f32 %v308, %v320
      %v348 = vmul.f32 %v309, %v320
      %v349 = vmul.f32 %v310, %v320
      %v350 = vmul.f32 %v311, %v320
      %v351 = vmul.f32 %v312, %v320
      %v352 = vmul.f32 %v313, %v320
      %v353 = vmul.f32 %v314, %v320
      %v354 = vld [vmem:[%s2] sm:$0x1]
      %v356 = vlaneseq
      %v357 = vshrl.u32 %v356, 7
      %v358 = vsub.s32 0, %v357
      %v359 = vrot.slane %v354, %v358
      %v361 = vadd.f32 %v322, %v359
      %v362 = vadd.f32 %v323, %v359
      %v363 = vadd.f32 %v324, %v359
      %v364 = vadd.f32 %v325, %v359
      %v365 = vadd.f32 %v326, %v359
      %v366 = vadd.f32 %v327, %v359
      %v367 = vadd.f32 %v328, %v359
      %v368 = vadd.f32 %v329, %v359
      %v369 = vadd.f32 %v330, %v359
      %v370 = vadd.f32 %v331, %v359
      %v371 = vadd.f32 %v332, %v359
      %v372 = vadd.f32 %v333, %v359
      %v373 = vadd.f32 %v334, %v359
      %v374 = vadd.f32 %v335, %v359
      %v375 = vadd.f32 %v336, %v359
      %v376 = vadd.f32 %v337, %v359
      %v377 = vadd.f32 %v338, %v359
      %v378 = vadd.f32 %v339, %v359
      %v379 = vadd.f32 %v340, %v359
      %v380 = vadd.f32 %v341, %v359
      %v381 = vadd.f32 %v342, %v359
      %v382 = vadd.f32 %v343, %v359
      %v383 = vadd.f32 %v344, %v359
      %v384 = vadd.f32 %v345, %v359
      %v385 = vadd.f32 %v346, %v359
      %v386 = vadd.f32 %v347, %v359
      %v387 = vadd.f32 %v348, %v359
      %v388 = vadd.f32 %v349, %v359
      %v389 = vadd.f32 %v350, %v359
      %v390 = vadd.f32 %v351, %v359
      %v391 = vadd.f32 %v352, %v359
      %v392 = vadd.f32 %v353, %v359
      %v393 = vmax.f32 %v361, 0.0
      %v394 = vmax.f32 %v362, 0.0
      %v395 = vmax.f32 %v363, 0.0
      %v396 = vmax.f32 %v364, 0.0
      %v397 = vmax.f32 %v365, 0.0
      %v398 = vmax.f32 %v366, 0.0
      %v399 = vmax.f32 %v367, 0.0
      %v400 = vmax.f32 %v368, 0.0
      %v401 = vmax.f32 %v369, 0.0
      %v402 = vmax.f32 %v370, 0.0
      %v403 = vmax.f32 %v371, 0.0
      %v404 = vmax.f32 %v372, 0.0
      %v405 = vmax.f32 %v373, 0.0
      %v406 = vmax.f32 %v374, 0.0
      %v407 = vmax.f32 %v375, 0.0
      %v408 = vmax.f32 %v376, 0.0
      %v409 = vmax.f32 %v377, 0.0
      %v410 = vmax.f32 %v378, 0.0
      %v411 = vmax.f32 %v379, 0.0
      %v412 = vmax.f32 %v380, 0.0
      %v413 = vmax.f32 %v381, 0.0
      %v414 = vmax.f32 %v382, 0.0
      %v415 = vmax.f32 %v383, 0.0
      %v416 = vmax.f32 %v384, 0.0
      %v417 = vmax.f32 %v385, 0.0
      %v418 = vmax.f32 %v386, 0.0
      %v419 = vmax.f32 %v387, 0.0
      %v420 = vmax.f32 %v388, 0.0
      %v421 = vmax.f32 %v389, 0.0
      %v422 = vmax.f32 %v390, 0.0
      %v423 = vmax.f32 %v391, 0.0
      %v424 = vmax.f32 %v392, 0.0
      %v425 = vlaneseq
      %v426 = vshrl.u32 %v425, 7
      %v427 = vadd.s32 %v426, 8
      %v428 = vadd.s32 %v426, 16
      %v429 = vadd.s32 %v426, 24
      %v430 = vadd.s32 %v426, 32
      %v431 = vadd.s32 %v426, 40
      %v432 = vadd.s32 %v426, 48
      %v433 = vadd.s32 %v426, 56
      %v434 = vadd.s32 %v426, 64
      %v435 = vadd.s32 %v426, 72
      %v436 = vadd.s32 %v426, 80
      %v437 = vadd.s32 %v426, 88
      %v438 = vadd.s32 %v426, 96
      %v439 = vadd.s32 %v426, 104
      %v440 = vadd.s32 %v426, 112
      %v441 = vadd.s32 %v426, 120
      %v442 = vadd.s32 %v426, 128
      %v443 = vadd.s32 %v426, 136
      %v444 = vadd.s32 %v426, 144
      %v445 = vadd.s32 %v426, 152
      %v446 = vadd.s32 %v426, 160
      %v447 = vadd.s32 %v426, 168
      %v448 = vadd.s32 %v426, 176
      %v449 = vadd.s32 %v426, 184
      %v450 = vadd.s32 %v426, 192
      %v451 = vadd.s32 %v426, 200
      %v452 = vadd.s32 %v426, 208
      %v453 = vadd.s32 %v426, 216
      %v454 = vadd.s32 %v426, 224
      %v455 = vadd.s32 %v426, 232
      %v456 = vadd.s32 %v426, 240
      %v457 = vadd.s32 %v426, 248
      %vm458 = vcmp.lt.s32.totalorder %v426, 0
      %v459 = vsub.s32 0, %v426
      %v460 = vsel %vm458, %v459, %v426
      %v461 = vshrl.u32 %v460, 4
      %v462 = vand.u32 %v460, 15
      %v463 = vsub.s32 0, %v462
      %v464 = vsel %vm458, %v463, %v462
      %vm465 = vcmp.lt.s32.totalorder %v427, 0
      %v466 = vsub.s32 0, %v427
      %v467 = vsel %vm465, %v466, %v427
      %v468 = vshrl.u32 %v467, 4
      %v469 = vand.u32 %v467, 15
      %v470 = vsub.s32 0, %v469
      %v471 = vsel %vm465, %v470, %v469
      %vm472 = vcmp.lt.s32.totalorder %v428, 0
      %v473 = vsub.s32 0, %v428
      %v474 = vsel %vm472, %v473, %v428
      %v475 = vshrl.u32 %v474, 4
      %v476 = vand.u32 %v474, 15
      %v477 = vsub.s32 0, %v476
      %v478 = vsel %vm472, %v477, %v476
      %vm479 = vcmp.lt.s32.totalorder %v429, 0
      %v480 = vsub.s32 0, %v429
      %v481 = vsel %vm479, %v480, %v429
      %v482 = vshrl.u32 %v481, 4
      %v483 = vand.u32 %v481, 15
      %v484 = vsub.s32 0, %v483
      %v485 = vsel %vm479, %v484, %v483
      %vm486 = vcmp.lt.s32.totalorder %v430, 0
      %v487 = vsub.s32 0, %v430
      %v488 = vsel %vm486, %v487, %v430
      %v489 = vshrl.u32 %v488, 4
      %v490 = vand.u32 %v488, 15
      %v491 = vsub.s32 0, %v490
      %v492 = vsel %vm486, %v491, %v490
      %vm493 = vcmp.lt.s32.totalorder %v431, 0
      %v494 = vsub.s32 0, %v431
      %v495 = vsel %vm493, %v494, %v431
      %v496 = vshrl.u32 %v495, 4
      %v497 = vand.u32 %v495, 15
      %v498 = vsub.s32 0, %v497
      %v499 = vsel %vm493, %v498, %v497
      %vm500 = vcmp.lt.s32.totalorder %v432, 0
      %v501 = vsub.s32 0, %v432
      %v502 = vsel %vm500, %v501, %v432
      %v503 = vshrl.u32 %v502, 4
      %v504 = vand.u32 %v502, 15
      %v505 = vsub.s32 0, %v504
      %v506 = vsel %vm500, %v505, %v504
      %vm507 = vcmp.lt.s32.totalorder %v433, 0
      %v508 = vsub.s32 0, %v433
      %v509 = vsel %vm507, %v508, %v433
      %v510 = vshrl.u32 %v509, 4
      %v511 = vand.u32 %v509, 15
      %v512 = vsub.s32 0, %v511
      %v513 = vsel %vm507, %v512, %v511
      %vm514 = vcmp.lt.s32.totalorder %v434, 0
      %v515 = vsub.s32 0, %v434
      %v516 = vsel %vm514, %v515, %v434
      %v517 = vshrl.u32 %v516, 4
      %v518 = vand.u32 %v516, 15
      %v519 = vsub.s32 0, %v518
      %v520 = vsel %vm514, %v519, %v518
      %vm521 = vcmp.lt.s32.totalorder %v435, 0
      %v522 = vsub.s32 0, %v435
      %v523 = vsel %vm521, %v522, %v435
      %v524 = vshrl.u32 %v523, 4
      %v525 = vand.u32 %v523, 15
      %v526 = vsub.s32 0, %v525
      %v527 = vsel %vm521, %v526, %v525
      %vm528 = vcmp.lt.s32.totalorder %v436, 0
      %v529 = vsub.s32 0, %v436
      %v530 = vsel %vm528, %v529, %v436
      %v531 = vshrl.u32 %v530, 4
      %v532 = vand.u32 %v530, 15
      %v533 = vsub.s32 0, %v532
      %v534 = vsel %vm528, %v533, %v532
      %vm535 = vcmp.lt.s32.totalorder %v437, 0
      %v536 = vsub.s32 0, %v437
      %v537 = vsel %vm535, %v536, %v437
      %v538 = vshrl.u32 %v537, 4
      %v539 = vand.u32 %v537, 15
      %v540 = vsub.s32 0, %v539
      %v541 = vsel %vm535, %v540, %v539
      %vm542 = vcmp.lt.s32.totalorder %v438, 0
      %v543 = vsub.s32 0, %v438
      %v544 = vsel %vm542, %v543, %v438
      %v545 = vshrl.u32 %v544, 4
      %v546 = vand.u32 %v544, 15
      %v547 = vsub.s32 0, %v546
      %v548 = vsel %vm542, %v547, %v546
      %vm549 = vcmp.lt.s32.totalorder %v439, 0
      %v550 = vsub.s32 0, %v439
      %v551 = vsel %vm549, %v550, %v439
      %v552 = vshrl.u32 %v551, 4
      %v553 = vand.u32 %v551, 15
      %v554 = vsub.s32 0, %v553
      %v555 = vsel %vm549, %v554, %v553
      %vm556 = vcmp.lt.s32.totalorder %v440, 0
      %v557 = vsub.s32 0, %v440
      %v558 = vsel %vm556, %v557, %v440
      %v559 = vshrl.u32 %v558, 4
      %v560 = vand.u32 %v558, 15
      %v561 = vsub.s32 0, %v560
      %v562 = vsel %vm556, %v561, %v560
      %vm563 = vcmp.lt.s32.totalorder %v441, 0
      %v564 = vsub.s32 0, %v441
      %v565 = vsel %vm563, %v564, %v441
      %v566 = vshrl.u32 %v565, 4
      %v567 = vand.u32 %v565, 15
      %v568 = vsub.s32 0, %v567
      %v569 = vsel %vm563, %v568, %v567
      %vm570 = vcmp.lt.s32.totalorder %v442, 0
      %v571 = vsub.s32 0, %v442
      %v572 = vsel %vm570, %v571, %v442
      %v573 = vshrl.u32 %v572, 4
      %v574 = vand.u32 %v572, 15
      %v575 = vsub.s32 0, %v574
      %v576 = vsel %vm570, %v575, %v574
      %vm577 = vcmp.lt.s32.totalorder %v443, 0
      %v578 = vsub.s32 0, %v443
      %v579 = vsel %vm577, %v578, %v443
      %v580 = vshrl.u32 %v579, 4
      %v581 = vand.u32 %v579, 15
      %v582 = vsub.s32 0, %v581
      %v583 = vsel %vm577, %v582, %v581
      %vm584 = vcmp.lt.s32.totalorder %v444, 0
      %v585 = vsub.s32 0, %v444
      %v586 = vsel %vm584, %v585, %v444
      %v587 = vshrl.u32 %v586, 4
      %v588 = vand.u32 %v586, 15
      %v589 = vsub.s32 0, %v588
      %v590 = vsel %vm584, %v589, %v588
      %vm591 = vcmp.lt.s32.totalorder %v445, 0
      %v592 = vsub.s32 0, %v445
      %v593 = vsel %vm591, %v592, %v445
      %v594 = vshrl.u32 %v593, 4
      %v595 = vand.u32 %v593, 15
      %v596 = vsub.s32 0, %v595
      %v597 = vsel %vm591, %v596, %v595
      %vm598 = vcmp.lt.s32.totalorder %v446, 0
      %v599 = vsub.s32 0, %v446
      %v600 = vsel %vm598, %v599, %v446
      %v601 = vshrl.u32 %v600, 4
      %v602 = vand.u32 %v600, 15
      %v603 = vsub.s32 0, %v602
      %v604 = vsel %vm598, %v603, %v602
      %vm605 = vcmp.lt.s32.totalorder %v447, 0
      %v606 = vsub.s32 0, %v447
      %v607 = vsel %vm605, %v606, %v447
      %v608 = vshrl.u32 %v607, 4
      %v609 = vand.u32 %v607, 15
      %v610 = vsub.s32 0, %v609
      %v611 = vsel %vm605, %v610, %v609
      %vm612 = vcmp.lt.s32.totalorder %v448, 0
      %v613 = vsub.s32 0, %v448
      %v614 = vsel %vm612, %v613, %v448
      %v615 = vshrl.u32 %v614, 4
      %v616 = vand.u32 %v614, 15
      %v617 = vsub.s32 0, %v616
      %v618 = vsel %vm612, %v617, %v616
      %vm619 = vcmp.lt.s32.totalorder %v449, 0
      %v620 = vsub.s32 0, %v449
      %v621 = vsel %vm619, %v620, %v449
      %v622 = vshrl.u32 %v621, 4
      %v623 = vand.u32 %v621, 15
      %v624 = vsub.s32 0, %v623
      %v625 = vsel %vm619, %v624, %v623
      %vm626 = vcmp.lt.s32.totalorder %v450, 0
      %v627 = vsub.s32 0, %v450
      %v628 = vsel %vm626, %v627, %v450
      %v629 = vshrl.u32 %v628, 4
      %v630 = vand.u32 %v628, 15
      %v631 = vsub.s32 0, %v630
      %v632 = vsel %vm626, %v631, %v630
      %vm633 = vcmp.lt.s32.totalorder %v451, 0
      %v634 = vsub.s32 0, %v451
      %v635 = vsel %vm633, %v634, %v451
      %v636 = vshrl.u32 %v635, 4
      %v637 = vand.u32 %v635, 15
      %v638 = vsub.s32 0, %v637
      %v639 = vsel %vm633, %v638, %v637
      %vm640 = vcmp.lt.s32.totalorder %v452, 0
      %v641 = vsub.s32 0, %v452
      %v642 = vsel %vm640, %v641, %v452
      %v643 = vshrl.u32 %v642, 4
      %v644 = vand.u32 %v642, 15
      %v645 = vsub.s32 0, %v644
      %v646 = vsel %vm640, %v645, %v644
      %vm647 = vcmp.lt.s32.totalorder %v453, 0
      %v648 = vsub.s32 0, %v453
      %v649 = vsel %vm647, %v648, %v453
      %v650 = vshrl.u32 %v649, 4
      %v651 = vand.u32 %v649, 15
      %v652 = vsub.s32 0, %v651
      %v653 = vsel %vm647, %v652, %v651
      %vm654 = vcmp.lt.s32.totalorder %v454, 0
      %v655 = vsub.s32 0, %v454
      %v656 = vsel %vm654, %v655, %v454
      %v657 = vshrl.u32 %v656, 4
      %v658 = vand.u32 %v656, 15
      %v659 = vsub.s32 0, %v658
      %v660 = vsel %vm654, %v659, %v658
      %vm661 = vcmp.lt.s32.totalorder %v455, 0
      %v662 = vsub.s32 0, %v455
      %v663 = vsel %vm661, %v662, %v455
      %v664 = vshrl.u32 %v663, 4
      %v665 = vand.u32 %v663, 15
      %v666 = vsub.s32 0, %v665
      %v667 = vsel %vm661, %v666, %v665
      %vm668 = vcmp.lt.s32.totalorder %v456, 0
      %v669 = vsub.s32 0, %v456
      %v670 = vsel %vm668, %v669, %v456
      %v671 = vshrl.u32 %v670, 4
      %v672 = vand.u32 %v670, 15
      %v673 = vsub.s32 0, %v672
      %v674 = vsel %vm668, %v673, %v672
      %vm675 = vcmp.lt.s32.totalorder %v457, 0
      %v676 = vsub.s32 0, %v457
      %v677 = vsel %vm675, %v676, %v457
      %v678 = vshrl.u32 %v677, 4
      %v679 = vand.u32 %v677, 15
      %v680 = vsub.s32 0, %v679
      %v681 = vsel %vm675, %v680, %v679
      %vm682 = vcmp.ne.s32.totalorder %v464, 0
      %vm683 = vcmp.ne.s32.totalorder %v471, 0
      %vm684 = vcmp.ne.s32.totalorder %v478, 0
      %vm685 = vcmp.ne.s32.totalorder %v485, 0
      %vm686 = vcmp.ne.s32.totalorder %v492, 0
      %vm687 = vcmp.ne.s32.totalorder %v499, 0
      %vm688 = vcmp.ne.s32.totalorder %v506, 0
      %vm689 = vcmp.ne.s32.totalorder %v513, 0
      %vm690 = vcmp.ne.s32.totalorder %v520, 0
      %vm691 = vcmp.ne.s32.totalorder %v527, 0
      %vm692 = vcmp.ne.s32.totalorder %v534, 0
      %vm693 = vcmp.ne.s32.totalorder %v541, 0
      %vm694 = vcmp.ne.s32.totalorder %v548, 0
      %vm695 = vcmp.ne.s32.totalorder %v555, 0
      %vm696 = vcmp.ne.s32.totalorder %v562, 0
      %vm697 = vcmp.ne.s32.totalorder %v569, 0
      %vm698 = vcmp.ne.s32.totalorder %v576, 0
      %vm699 = vcmp.ne.s32.totalorder %v583, 0
      %vm700 = vcmp.ne.s32.totalorder %v590, 0
      %vm701 = vcmp.ne.s32.totalorder %v597, 0
      %vm702 = vcmp.ne.s32.totalorder %v604, 0
      %vm703 = vcmp.ne.s32.totalorder %v611, 0
      %vm704 = vcmp.ne.s32.totalorder %v618, 0
      %vm705 = vcmp.ne.s32.totalorder %v625, 0
      %vm706 = vcmp.ne.s32.totalorder %v632, 0
      %vm707 = vcmp.ne.s32.totalorder %v639, 0
      %vm708 = vcmp.ne.s32.totalorder %v646, 0
      %vm709 = vcmp.ne.s32.totalorder %v653, 0
      %vm710 = vcmp.ne.s32.totalorder %v660, 0
      %vm711 = vcmp.ne.s32.totalorder %v667, 0
      %vm712 = vcmp.ne.s32.totalorder %v674, 0
      %vm713 = vcmp.ne.s32.totalorder %v681, 0
      %vm714 = vcmp.lt.s32.totalorder %v464, 0
      %vm715 = vcmp.lt.s32.totalorder %v471, 0
      %vm716 = vcmp.lt.s32.totalorder %v478, 0
      %vm717 = vcmp.lt.s32.totalorder %v485, 0
      %vm718 = vcmp.lt.s32.totalorder %v492, 0
      %vm719 = vcmp.lt.s32.totalorder %v499, 0
      %vm720 = vcmp.lt.s32.totalorder %v506, 0
      %vm721 = vcmp.lt.s32.totalorder %v513, 0
      %vm722 = vcmp.lt.s32.totalorder %v520, 0
      %vm723 = vcmp.lt.s32.totalorder %v527, 0
      %vm724 = vcmp.lt.s32.totalorder %v534, 0
      %vm725 = vcmp.lt.s32.totalorder %v541, 0
      %vm726 = vcmp.lt.s32.totalorder %v548, 0
      %vm727 = vcmp.lt.s32.totalorder %v555, 0
      %vm728 = vcmp.lt.s32.totalorder %v562, 0
      %vm729 = vcmp.lt.s32.totalorder %v569, 0
      %vm730 = vcmp.lt.s32.totalorder %v576, 0
      %vm731 = vcmp.lt.s32.totalorder %v583, 0
      %vm732 = vcmp.lt.s32.totalorder %v590, 0
      %vm733 = vcmp.lt.s32.totalorder %v597, 0
      %vm734 = vcmp.lt.s32.totalorder %v604, 0
      %vm735 = vcmp.lt.s32.totalorder %v611, 0
      %vm736 = vcmp.lt.s32.totalorder %v618, 0
      %vm737 = vcmp.lt.s32.totalorder %v625, 0
      %vm738 = vcmp.lt.s32.totalorder %v632, 0
      %vm739 = vcmp.lt.s32.totalorder %v639, 0
      %vm740 = vcmp.lt.s32.totalorder %v646, 0
      %vm741 = vcmp.lt.s32.totalorder %v653, 0
      %vm742 = vcmp.lt.s32.totalorder %v660, 0
      %vm743 = vcmp.lt.s32.totalorder %v667, 0
      %vm744 = vcmp.lt.s32.totalorder %v674, 0
      %vm745 = vcmp.lt.s32.totalorder %v681, 0
      %vm746 = vmand %vm714, %vm682
      %vm747 = vmand %vm715, %vm683
      %vm748 = vmand %vm716, %vm684
      %vm749 = vmand %vm717, %vm685
      %vm750 = vmand %vm718, %vm686
      %vm751 = vmand %vm719, %vm687
      %vm752 = vmand %vm720, %vm688
      %vm753 = vmand %vm721, %vm689
      %vm754 = vmand %vm722, %vm690
      %vm755 = vmand %vm723, %vm691
      %vm756 = vmand %vm724, %vm692
      %vm757 = vmand %vm725, %vm693
      %vm758 = vmand %vm726, %vm694
      %vm759 = vmand %vm727, %vm695
      %vm760 = vmand %vm728, %vm696
      %vm761 = vmand %vm729, %vm697
      %vm762 = vmand %vm730, %vm698
      %vm763 = vmand %vm731, %vm699
      %vm764 = vmand %vm732, %vm700
      %vm765 = vmand %vm733, %vm701
      %vm766 = vmand %vm734, %vm702
      %vm767 = vmand %vm735, %vm703
      %vm768 = vmand %vm736, %vm704
      %vm769 = vmand %vm737, %vm705
      %vm770 = vmand %vm738, %vm706
      %vm771 = vmand %vm739, %vm707
      %vm772 = vmand %vm740, %vm708
      %vm773 = vmand %vm741, %vm709
      %vm774 = vmand %vm742, %vm710
      %vm775 = vmand %vm743, %vm711
      %vm776 = vmand %vm744, %vm712
      %vm777 = vmand %vm745, %vm713
      %v778 = vadd.s32 %v464, 16
      %v779 = vadd.s32 %v471, 16
      %v780 = vadd.s32 %v478, 16
      %v781 = vadd.s32 %v485, 16
      %v782 = vadd.s32 %v492, 16
      %v783 = vadd.s32 %v499, 16
      %v784 = vadd.s32 %v506, 16
      %v785 = vadd.s32 %v513, 16
      %v786 = vadd.s32 %v520, 16
      %v787 = vadd.s32 %v527, 16
      %v788 = vadd.s32 %v534, 16
      %v789 = vadd.s32 %v541, 16
      %v790 = vadd.s32 %v548, 16
      %v791 = vadd.s32 %v555, 16
      %v792 = vadd.s32 %v562, 16
      %v793 = vadd.s32 %v569, 16
      %v794 = vadd.s32 %v576, 16
      %v795 = vadd.s32 %v583, 16
      %v796 = vadd.s32 %v590, 16
      %v797 = vadd.s32 %v597, 16
      %v798 = vadd.s32 %v604, 16
      %v799 = vadd.s32 %v611, 16
      %v800 = vadd.s32 %v618, 16
      %v801 = vadd.s32 %v625, 16
      %v802 = vadd.s32 %v632, 16
      %v803 = vadd.s32 %v639, 16
      %v804 = vadd.s32 %v646, 16
      %v805 = vadd.s32 %v653, 16
      %v806 = vadd.s32 %v660, 16
      %v807 = vadd.s32 %v667, 16
      %v808 = vadd.s32 %v674, 16
      %v809 = vadd.s32 %v681, 16
      %v810 = vsel %vm746, %v778, %v464
      %v811 = vsel %vm747, %v779, %v471
      %v812 = vsel %vm748, %v780, %v478
      %v813 = vsel %vm749, %v781, %v485
      %v814 = vsel %vm750, %v782, %v492
      %v815 = vsel %vm751, %v783, %v499
      %v816 = vsel %vm752, %v784, %v506
      %v817 = vsel %vm753, %v785, %v513
      %v818 = vsel %vm754, %v786, %v520
      %v819 = vsel %vm755, %v787, %v527
      %v820 = vsel %vm756, %v788, %v534
      %v821 = vsel %vm757, %v789, %v541
      %v822 = vsel %vm758, %v790, %v548
      %v823 = vsel %vm759, %v791, %v555
      %v824 = vsel %vm760, %v792, %v562
      %v825 = vsel %vm761, %v793, %v569
      %v826 = vsel %vm762, %v794, %v576
      %v827 = vsel %vm763, %v795, %v583
      %v828 = vsel %vm764, %v796, %v590
      %v829 = vsel %vm765, %v797, %v597
      %v830 = vsel %vm766, %v798, %v604
      %v831 = vsel %vm767, %v799, %v611
      %v832 = vsel %vm768, %v800, %v618
      %v833 = vsel %vm769, %v801, %v625
      %v834 = vsel %vm770, %v802, %v632
      %v835 = vsel %vm771, %v803, %v639
      %v836 = vsel %vm772, %v804, %v646
      %v837 = vsel %vm773, %v805, %v653
      %v838 = vsel %vm774, %v806, %v660
      %v839 = vsel %vm775, %v807, %v667
      %v840 = vsel %vm776, %v808, %v674
      %v841 = vsel %vm777, %v809, %v681
      %vm842 = vcmp.ge.s32.totalorder %v426, 16
      %vm843 = vcmp.ge.s32.totalorder %v427, 16
      %vm844 = vcmp.ge.s32.totalorder %v428, 16
      %vm845 = vcmp.ge.s32.totalorder %v429, 16
      %vm846 = vcmp.ge.s32.totalorder %v430, 16
      %vm847 = vcmp.ge.s32.totalorder %v431, 16
      %vm848 = vcmp.ge.s32.totalorder %v432, 16
      %vm849 = vcmp.ge.s32.totalorder %v433, 16
      %vm850 = vcmp.ge.s32.totalorder %v434, 16
      %vm851 = vcmp.ge.s32.totalorder %v435, 16
      %vm852 = vcmp.ge.s32.totalorder %v436, 16
      %vm853 = vcmp.ge.s32.totalorder %v437, 16
      %vm854 = vcmp.ge.s32.totalorder %v438, 16
      %vm855 = vcmp.ge.s32.totalorder %v439, 16
      %vm856 = vcmp.ge.s32.totalorder %v440, 16
      %vm857 = vcmp.ge.s32.totalorder %v441, 16
      %vm858 = vcmp.ge.s32.totalorder %v442, 16
      %vm859 = vcmp.ge.s32.totalorder %v443, 16
      %vm860 = vcmp.ge.s32.totalorder %v444, 16
      %vm861 = vcmp.ge.s32.totalorder %v445, 16
      %vm862 = vcmp.ge.s32.totalorder %v446, 16
      %vm863 = vcmp.ge.s32.totalorder %v447, 16
      %vm864 = vcmp.ge.s32.totalorder %v448, 16
      %vm865 = vcmp.ge.s32.totalorder %v449, 16
      %vm866 = vcmp.ge.s32.totalorder %v450, 16
      %vm867 = vcmp.ge.s32.totalorder %v451, 16
      %vm868 = vcmp.ge.s32.totalorder %v452, 16
      %vm869 = vcmp.ge.s32.totalorder %v453, 16
      %vm870 = vcmp.ge.s32.totalorder %v454, 16
      %vm871 = vcmp.ge.s32.totalorder %v455, 16
      %vm872 = vcmp.ge.s32.totalorder %v456, 16
      %vm873 = vcmp.ge.s32.totalorder %v457, 16
      %vm874 = vcmp.lt.s32.totalorder %v426, 240
      %vm875 = vcmp.lt.s32.totalorder %v427, 240
      %vm876 = vcmp.lt.s32.totalorder %v428, 240
      %vm877 = vcmp.lt.s32.totalorder %v429, 240
      %vm878 = vcmp.lt.s32.totalorder %v430, 240
      %vm879 = vcmp.lt.s32.totalorder %v431, 240
      %vm880 = vcmp.lt.s32.totalorder %v432, 240
      %vm881 = vcmp.lt.s32.totalorder %v433, 240
      %vm882 = vcmp.lt.s32.totalorder %v434, 240
      %vm883 = vcmp.lt.s32.totalorder %v435, 240
      %vm884 = vcmp.lt.s32.totalorder %v436, 240
      %vm885 = vcmp.lt.s32.totalorder %v437, 240
      %vm886 = vcmp.lt.s32.totalorder %v438, 240
      %vm887 = vcmp.lt.s32.totalorder %v439, 240
      %vm888 = vcmp.lt.s32.totalorder %v440, 240
      %vm889 = vcmp.lt.s32.totalorder %v441, 240
      %vm890 = vcmp.lt.s32.totalorder %v442, 240
      %vm891 = vcmp.lt.s32.totalorder %v443, 240
      %vm892 = vcmp.lt.s32.totalorder %v444, 240
      %vm893 = vcmp.lt.s32.totalorder %v445, 240
      %vm894 = vcmp.lt.s32.totalorder %v446, 240
      %vm895 = vcmp.lt.s32.totalorder %v447, 240
      %vm896 = vcmp.lt.s32.totalorder %v448, 240
      %vm897 = vcmp.lt.s32.totalorder %v449, 240
      %vm898 = vcmp.lt.s32.totalorder %v450, 240
      %vm899 = vcmp.lt.s32.totalorder %v451, 240
      %vm900 = vcmp.lt.s32.totalorder %v452, 240
      %vm901 = vcmp.lt.s32.totalorder %v453, 240
      %vm902 = vcmp.lt.s32.totalorder %v454, 240
      %vm903 = vcmp.lt.s32.totalorder %v455, 240
      %vm904 = vcmp.lt.s32.totalorder %v456, 240
      %vm905 = vcmp.lt.s32.totalorder %v457, 240
      %vm906 = vcmp.ne.s32.totalorder %v810, 0
      %vm907 = vcmp.ne.s32.totalorder %v811, 0
      %vm908 = vcmp.ne.s32.totalorder %v812, 0
      %vm909 = vcmp.ne.s32.totalorder %v813, 0
      %vm910 = vcmp.ne.s32.totalorder %v814, 0
      %vm911 = vcmp.ne.s32.totalorder %v815, 0
      %vm912 = vcmp.ne.s32.totalorder %v816, 0
      %vm913 = vcmp.ne.s32.totalorder %v817, 0
      %vm914 = vcmp.ne.s32.totalorder %v818, 0
      %vm915 = vcmp.ne.s32.totalorder %v819, 0
      %vm916 = vcmp.ne.s32.totalorder %v820, 0
      %vm917 = vcmp.ne.s32.totalorder %v821, 0
      %vm918 = vcmp.ne.s32.totalorder %v822, 0
      %vm919 = vcmp.ne.s32.totalorder %v823, 0
      %vm920 = vcmp.ne.s32.totalorder %v824, 0
      %vm921 = vcmp.ne.s32.totalorder %v825, 0
      %vm922 = vcmp.ne.s32.totalorder %v826, 0
      %vm923 = vcmp.ne.s32.totalorder %v827, 0
      %vm924 = vcmp.ne.s32.totalorder %v828, 0
      %vm925 = vcmp.ne.s32.totalorder %v829, 0
      %vm926 = vcmp.ne.s32.totalorder %v830, 0
      %vm927 = vcmp.ne.s32.totalorder %v831, 0
      %vm928 = vcmp.ne.s32.totalorder %v832, 0
      %vm929 = vcmp.ne.s32.totalorder %v833, 0
      %vm930 = vcmp.ne.s32.totalorder %v834, 0
      %vm931 = vcmp.ne.s32.totalorder %v835, 0
      %vm932 = vcmp.ne.s32.totalorder %v836, 0
      %vm933 = vcmp.ne.s32.totalorder %v837, 0
      %vm934 = vcmp.ne.s32.totalorder %v838, 0
      %vm935 = vcmp.ne.s32.totalorder %v839, 0
      %vm936 = vcmp.ne.s32.totalorder %v840, 0
      %vm937 = vcmp.ne.s32.totalorder %v841, 0
      %vm938 = vcmp.ne.s32.totalorder %v810, 15
      %vm939 = vcmp.ne.s32.totalorder %v811, 15
      %vm940 = vcmp.ne.s32.totalorder %v812, 15
      %vm941 = vcmp.ne.s32.totalorder %v813, 15
      %vm942 = vcmp.ne.s32.totalorder %v814, 15
      %vm943 = vcmp.ne.s32.totalorder %v815, 15
      %vm944 = vcmp.ne.s32.totalorder %v816, 15
      %vm945 = vcmp.ne.s32.totalorder %v817, 15
      %vm946 = vcmp.ne.s32.totalorder %v818, 15
      %vm947 = vcmp.ne.s32.totalorder %v819, 15
      %vm948 = vcmp.ne.s32.totalorder %v820, 15
      %vm949 = vcmp.ne.s32.totalorder %v821, 15
      %vm950 = vcmp.ne.s32.totalorder %v822, 15
      %vm951 = vcmp.ne.s32.totalorder %v823, 15
      %vm952 = vcmp.ne.s32.totalorder %v824, 15
      %vm953 = vcmp.ne.s32.totalorder %v825, 15
      %vm954 = vcmp.ne.s32.totalorder %v826, 15
      %vm955 = vcmp.ne.s32.totalorder %v827, 15
      %vm956 = vcmp.ne.s32.totalorder %v828, 15
      %vm957 = vcmp.ne.s32.totalorder %v829, 15
      %vm958 = vcmp.ne.s32.totalorder %v830, 15
      %vm959 = vcmp.ne.s32.totalorder %v831, 15
      %vm960 = vcmp.ne.s32.totalorder %v832, 15
      %vm961 = vcmp.ne.s32.totalorder %v833, 15
      %vm962 = vcmp.ne.s32.totalorder %v834, 15
      %vm963 = vcmp.ne.s32.totalorder %v835, 15
      %vm964 = vcmp.ne.s32.totalorder %v836, 15
      %vm965 = vcmp.ne.s32.totalorder %v837, 15
      %vm966 = vcmp.ne.s32.totalorder %v838, 15
      %vm967 = vcmp.ne.s32.totalorder %v839, 15
      %vm968 = vcmp.ne.s32.totalorder %v840, 15
      %vm969 = vcmp.ne.s32.totalorder %v841, 15
      %v970 = vrot.slane %v393, 7
      %v971 = vrot.slane %v394, 7
      %v972 = vrot.slane %v395, 7
      %v973 = vrot.slane %v396, 7
      %v974 = vrot.slane %v397, 7
      %v975 = vrot.slane %v398, 7
      %v976 = vrot.slane %v399, 7
      %v977 = vrot.slane %v400, 7
      %v978 = vrot.slane %v401, 7
      %v979 = vrot.slane %v402, 7
      %v980 = vrot.slane %v403, 7
      %v981 = vrot.slane %v404, 7
      %v982 = vrot.slane %v405, 7
      %v983 = vrot.slane %v406, 7
      %v984 = vrot.slane %v407, 7
      %v985 = vrot.slane %v408, 7
      %v986 = vrot.slane %v409, 7
      %v987 = vrot.slane %v410, 7
      %v988 = vrot.slane %v411, 7
      %v989 = vrot.slane %v412, 7
      %v990 = vrot.slane %v413, 7
      %v991 = vrot.slane %v414, 7
      %v992 = vrot.slane %v415, 7
      %v993 = vrot.slane %v416, 7
      %v994 = vrot.slane %v417, 7
      %v995 = vrot.slane %v418, 7
      %v996 = vrot.slane %v419, 7
      %v997 = vrot.slane %v420, 7
      %v998 = vrot.slane %v421, 7
      %v999 = vrot.slane %v422, 7
      %v1000 = vrot.slane %v423, 7
      %v1001 = vrot.slane %v424, 7
      %vm1002 = vcmp.lt.s32.totalorder %v426, 1
      %v1003 = vsel %vm1002, %v1000, %v1001
      %v1004 = vsel %vm1002, %v999, %v1000
      %v1005 = vsel %vm1002, %v998, %v999
      %v1006 = vsel %vm1002, %v997, %v998
      %v1007 = vsel %vm1002, %v996, %v997
      %v1008 = vsel %vm1002, %v995, %v996
      %v1009 = vsel %vm1002, %v994, %v995
      %v1010 = vsel %vm1002, %v993, %v994
      %v1011 = vsel %vm1002, %v992, %v993
      %v1012 = vsel %vm1002, %v991, %v992
      %v1013 = vsel %vm1002, %v990, %v991
      %v1014 = vsel %vm1002, %v989, %v990
      %v1015 = vsel %vm1002, %v988, %v989
      %v1016 = vsel %vm1002, %v987, %v988
      %v1017 = vsel %vm1002, %v986, %v987
      %v1018 = vsel %vm1002, %v985, %v986
      %v1019 = vsel %vm1002, %v984, %v985
      %v1020 = vsel %vm1002, %v983, %v984
      %v1021 = vsel %vm1002, %v982, %v983
      %v1022 = vsel %vm1002, %v981, %v982
      %v1023 = vsel %vm1002, %v980, %v981
      %v1024 = vsel %vm1002, %v979, %v980
      %v1025 = vsel %vm1002, %v978, %v979
      %v1026 = vsel %vm1002, %v977, %v978
      %v1027 = vsel %vm1002, %v976, %v977
      %v1028 = vsel %vm1002, %v975, %v976
      %v1029 = vsel %vm1002, %v974, %v975
      %v1030 = vsel %vm1002, %v973, %v974
      %v1031 = vsel %vm1002, %v972, %v973
      %v1032 = vsel %vm1002, %v971, %v972
      %v1033 = vsel %vm1002, %v970, %v971
      %v1034 = vsel %vm1002, %v1001, %v970
      %vm1035 = vmand %vm842, %vm906
      %vm1036 = vmand %vm843, %vm907
      %vm1037 = vmand %vm844, %vm908
      %vm1038 = vmand %vm845, %vm909
      %vm1039 = vmand %vm846, %vm910
      %vm1040 = vmand %vm847, %vm911
      %vm1041 = vmand %vm848, %vm912
      %vm1042 = vmand %vm849, %vm913
      %vm1043 = vmand %vm850, %vm914
      %vm1044 = vmand %vm851, %vm915
      %vm1045 = vmand %vm852, %vm916
      %vm1046 = vmand %vm853, %vm917
      %vm1047 = vmand %vm854, %vm918
      %vm1048 = vmand %vm855, %vm919
      %vm1049 = vmand %vm856, %vm920
      %vm1050 = vmand %vm857, %vm921
      %vm1051 = vmand %vm858, %vm922
      %vm1052 = vmand %vm859, %vm923
      %vm1053 = vmand %vm860, %vm924
      %vm1054 = vmand %vm861, %vm925
      %vm1055 = vmand %vm862, %vm926
      %vm1056 = vmand %vm863, %vm927
      %vm1057 = vmand %vm864, %vm928
      %vm1058 = vmand %vm865, %vm929
      %vm1059 = vmand %vm866, %vm930
      %vm1060 = vmand %vm867, %vm931
      %vm1061 = vmand %vm868, %vm932
      %vm1062 = vmand %vm869, %vm933
      %vm1063 = vmand %vm870, %vm934
      %vm1064 = vmand %vm871, %vm935
      %vm1065 = vmand %vm872, %vm936
      %vm1066 = vmand %vm873, %vm937
      %v1067 = vsel %vm1035, 1, 0
      %v1068 = vsel %vm1036, 1, 0
      %v1069 = vsel %vm1037, 1, 0
      %v1070 = vsel %vm1038, 1, 0
      %v1071 = vsel %vm1039, 1, 0
      %v1072 = vsel %vm1040, 1, 0
      %v1073 = vsel %vm1041, 1, 0
      %v1074 = vsel %vm1042, 1, 0
      %v1075 = vsel %vm1043, 1, 0
      %v1076 = vsel %vm1044, 1, 0
      %v1077 = vsel %vm1045, 1, 0
      %v1078 = vsel %vm1046, 1, 0
      %v1079 = vsel %vm1047, 1, 0
      %v1080 = vsel %vm1048, 1, 0
      %v1081 = vsel %vm1049, 1, 0
      %v1082 = vsel %vm1050, 1, 0
      %v1083 = vsel %vm1051, 1, 0
      %v1084 = vsel %vm1052, 1, 0
      %v1085 = vsel %vm1053, 1, 0
      %v1086 = vsel %vm1054, 1, 0
      %v1087 = vsel %vm1055, 1, 0
      %v1088 = vsel %vm1056, 1, 0
      %v1089 = vsel %vm1057, 1, 0
      %v1090 = vsel %vm1058, 1, 0
      %v1091 = vsel %vm1059, 1, 0
      %v1092 = vsel %vm1060, 1, 0
      %v1093 = vsel %vm1061, 1, 0
      %v1094 = vsel %vm1062, 1, 0
      %v1095 = vsel %vm1063, 1, 0
      %v1096 = vsel %vm1064, 1, 0
      %v1097 = vsel %vm1065, 1, 0
      %v1098 = vsel %vm1066, 1, 0
      %vm1099 = vcmp.eq.s32.totalorder %v1067, 1
      %vm1100 = vcmp.eq.s32.totalorder %v1068, 1
      %vm1101 = vcmp.eq.s32.totalorder %v1069, 1
      %vm1102 = vcmp.eq.s32.totalorder %v1070, 1
      %vm1103 = vcmp.eq.s32.totalorder %v1071, 1
      %vm1104 = vcmp.eq.s32.totalorder %v1072, 1
      %vm1105 = vcmp.eq.s32.totalorder %v1073, 1
      %vm1106 = vcmp.eq.s32.totalorder %v1074, 1
      %vm1107 = vcmp.eq.s32.totalorder %v1075, 1
      %vm1108 = vcmp.eq.s32.totalorder %v1076, 1
      %vm1109 = vcmp.eq.s32.totalorder %v1077, 1
      %vm1110 = vcmp.eq.s32.totalorder %v1078, 1
      %vm1111 = vcmp.eq.s32.totalorder %v1079, 1
      %vm1112 = vcmp.eq.s32.totalorder %v1080, 1
      %vm1113 = vcmp.eq.s32.totalorder %v1081, 1
      %vm1114 = vcmp.eq.s32.totalorder %v1082, 1
      %vm1115 = vcmp.eq.s32.totalorder %v1083, 1
      %vm1116 = vcmp.eq.s32.totalorder %v1084, 1
      %vm1117 = vcmp.eq.s32.totalorder %v1085, 1
      %vm1118 = vcmp.eq.s32.totalorder %v1086, 1
      %vm1119 = vcmp.eq.s32.totalorder %v1087, 1
      %vm1120 = vcmp.eq.s32.totalorder %v1088, 1
      %vm1121 = vcmp.eq.s32.totalorder %v1089, 1
      %vm1122 = vcmp.eq.s32.totalorder %v1090, 1
      %vm1123 = vcmp.eq.s32.totalorder %v1091, 1
      %vm1124 = vcmp.eq.s32.totalorder %v1092, 1
      %vm1125 = vcmp.eq.s32.totalorder %v1093, 1
      %vm1126 = vcmp.eq.s32.totalorder %v1094, 1
      %vm1127 = vcmp.eq.s32.totalorder %v1095, 1
      %vm1128 = vcmp.eq.s32.totalorder %v1096, 1
      %vm1129 = vcmp.eq.s32.totalorder %v1097, 1
      %vm1130 = vcmp.eq.s32.totalorder %v1098, 1
      %v1131 = vsel %vm1099, %v1004, 0.0
      %v1132 = vsel %vm1100, %v1003, 0.0
      %v1133 = vsel %vm1101, %v1034, 0.0
      %v1134 = vsel %vm1102, %v1033, 0.0
      %v1135 = vsel %vm1103, %v1032, 0.0
      %v1136 = vsel %vm1104, %v1031, 0.0
      %v1137 = vsel %vm1105, %v1030, 0.0
      %v1138 = vsel %vm1106, %v1029, 0.0
      %v1139 = vsel %vm1107, %v1028, 0.0
      %v1140 = vsel %vm1108, %v1027, 0.0
      %v1141 = vsel %vm1109, %v1026, 0.0
      %v1142 = vsel %vm1110, %v1025, 0.0
      %v1143 = vsel %vm1111, %v1024, 0.0
      %v1144 = vsel %vm1112, %v1023, 0.0
      %v1145 = vsel %vm1113, %v1022, 0.0
      %v1146 = vsel %vm1114, %v1021, 0.0
      %v1147 = vsel %vm1115, %v1020, 0.0
      %v1148 = vsel %vm1116, %v1019, 0.0
      %v1149 = vsel %vm1117, %v1018, 0.0
      %v1150 = vsel %vm1118, %v1017, 0.0
      %v1151 = vsel %vm1119, %v1016, 0.0
      %v1152 = vsel %vm1120, %v1015, 0.0
      %v1153 = vsel %vm1121, %v1014, 0.0
      %v1154 = vsel %vm1122, %v1013, 0.0
      %v1155 = vsel %vm1123, %v1012, 0.0
      %v1156 = vsel %vm1124, %v1011, 0.0
      %v1157 = vsel %vm1125, %v1010, 0.0
      %v1158 = vsel %vm1126, %v1009, 0.0
      %v1159 = vsel %vm1127, %v1008, 0.0
      %v1160 = vsel %vm1128, %v1007, 0.0
      %v1161 = vsel %vm1129, %v1006, 0.0
      %v1162 = vsel %vm1130, %v1005, 0.0
      %v1163 = vpack.c.bf16 %v1132, %v1131
      %v1164 = vpack.c.bf16 %v1134, %v1133
      %v1165 = vpack.c.bf16 %v1136, %v1135
      %v1166 = vpack.c.bf16 %v1138, %v1137
      %v1167 = vpack.c.bf16 %v1140, %v1139
      %v1168 = vpack.c.bf16 %v1142, %v1141
      %v1169 = vpack.c.bf16 %v1144, %v1143
      %v1170 = vpack.c.bf16 %v1146, %v1145
      %v1171 = vpack.c.bf16 %v1148, %v1147
      %v1172 = vpack.c.bf16 %v1150, %v1149
      %v1173 = vpack.c.bf16 %v1152, %v1151
      %v1174 = vpack.c.bf16 %v1154, %v1153
      %v1175 = vpack.c.bf16 %v1156, %v1155
      %v1176 = vpack.c.bf16 %v1158, %v1157
      %v1177 = vpack.c.bf16 %v1160, %v1159
      %v1178 = vpack.c.bf16 %v1162, %v1161
      %v1179 = vsel %vm842, 1, 0
      %v1180 = vsel %vm843, 1, 0
      %v1181 = vsel %vm844, 1, 0
      %v1182 = vsel %vm845, 1, 0
      %v1183 = vsel %vm846, 1, 0
      %v1184 = vsel %vm847, 1, 0
      %v1185 = vsel %vm848, 1, 0
      %v1186 = vsel %vm849, 1, 0
      %v1187 = vsel %vm850, 1, 0
      %v1188 = vsel %vm851, 1, 0
      %v1189 = vsel %vm852, 1, 0
      %v1190 = vsel %vm853, 1, 0
      %v1191 = vsel %vm854, 1, 0
      %v1192 = vsel %vm855, 1, 0
      %v1193 = vsel %vm856, 1, 0
      %v1194 = vsel %vm857, 1, 0
      %v1195 = vsel %vm858, 1, 0
      %v1196 = vsel %vm859, 1, 0
      %v1197 = vsel %vm860, 1, 0
      %v1198 = vsel %vm861, 1, 0
      %v1199 = vsel %vm862, 1, 0
      %v1200 = vsel %vm863, 1, 0
      %v1201 = vsel %vm864, 1, 0
      %v1202 = vsel %vm865, 1, 0
      %v1203 = vsel %vm866, 1, 0
      %v1204 = vsel %vm867, 1, 0
      %v1205 = vsel %vm868, 1, 0
      %v1206 = vsel %vm869, 1, 0
      %v1207 = vsel %vm870, 1, 0
      %v1208 = vsel %vm871, 1, 0
      %v1209 = vsel %vm872, 1, 0
      %v1210 = vsel %vm873, 1, 0
      %vm1211 = vcmp.eq.s32.totalorder %v1179, 1
      %vm1212 = vcmp.eq.s32.totalorder %v1180, 1
      %vm1213 = vcmp.eq.s32.totalorder %v1181, 1
      %vm1214 = vcmp.eq.s32.totalorder %v1182, 1
      %vm1215 = vcmp.eq.s32.totalorder %v1183, 1
      %vm1216 = vcmp.eq.s32.totalorder %v1184, 1
      %vm1217 = vcmp.eq.s32.totalorder %v1185, 1
      %vm1218 = vcmp.eq.s32.totalorder %v1186, 1
      %vm1219 = vcmp.eq.s32.totalorder %v1187, 1
      %vm1220 = vcmp.eq.s32.totalorder %v1188, 1
      %vm1221 = vcmp.eq.s32.totalorder %v1189, 1
      %vm1222 = vcmp.eq.s32.totalorder %v1190, 1
      %vm1223 = vcmp.eq.s32.totalorder %v1191, 1
      %vm1224 = vcmp.eq.s32.totalorder %v1192, 1
      %vm1225 = vcmp.eq.s32.totalorder %v1193, 1
      %vm1226 = vcmp.eq.s32.totalorder %v1194, 1
      %vm1227 = vcmp.eq.s32.totalorder %v1195, 1
      %vm1228 = vcmp.eq.s32.totalorder %v1196, 1
      %vm1229 = vcmp.eq.s32.totalorder %v1197, 1
      %vm1230 = vcmp.eq.s32.totalorder %v1198, 1
      %vm1231 = vcmp.eq.s32.totalorder %v1199, 1
      %vm1232 = vcmp.eq.s32.totalorder %v1200, 1
      %vm1233 = vcmp.eq.s32.totalorder %v1201, 1
      %vm1234 = vcmp.eq.s32.totalorder %v1202, 1
      %vm1235 = vcmp.eq.s32.totalorder %v1203, 1
      %vm1236 = vcmp.eq.s32.totalorder %v1204, 1
      %vm1237 = vcmp.eq.s32.totalorder %v1205, 1
      %vm1238 = vcmp.eq.s32.totalorder %v1206, 1
      %vm1239 = vcmp.eq.s32.totalorder %v1207, 1
      %vm1240 = vcmp.eq.s32.totalorder %v1208, 1
      %vm1241 = vcmp.eq.s32.totalorder %v1209, 1
      %vm1242 = vcmp.eq.s32.totalorder %v1210, 1
      %v1243 = vsel %vm1211, %v423, 0.0
      %v1244 = vsel %vm1212, %v424, 0.0
      %v1245 = vsel %vm1213, %v393, 0.0
      %v1246 = vsel %vm1214, %v394, 0.0
      %v1247 = vsel %vm1215, %v395, 0.0
      %v1248 = vsel %vm1216, %v396, 0.0
      %v1249 = vsel %vm1217, %v397, 0.0
      %v1250 = vsel %vm1218, %v398, 0.0
      %v1251 = vsel %vm1219, %v399, 0.0
      %v1252 = vsel %vm1220, %v400, 0.0
      %v1253 = vsel %vm1221, %v401, 0.0
      %v1254 = vsel %vm1222, %v402, 0.0
      %v1255 = vsel %vm1223, %v403, 0.0
      %v1256 = vsel %vm1224, %v404, 0.0
      %v1257 = vsel %vm1225, %v405, 0.0
      %v1258 = vsel %vm1226, %v406, 0.0
      %v1259 = vsel %vm1227, %v407, 0.0
      %v1260 = vsel %vm1228, %v408, 0.0
      %v1261 = vsel %vm1229, %v409, 0.0
      %v1262 = vsel %vm1230, %v410, 0.0
      %v1263 = vsel %vm1231, %v411, 0.0
      %v1264 = vsel %vm1232, %v412, 0.0
      %v1265 = vsel %vm1233, %v413, 0.0
      %v1266 = vsel %vm1234, %v414, 0.0
      %v1267 = vsel %vm1235, %v415, 0.0
      %v1268 = vsel %vm1236, %v416, 0.0
      %v1269 = vsel %vm1237, %v417, 0.0
      %v1270 = vsel %vm1238, %v418, 0.0
      %v1271 = vsel %vm1239, %v419, 0.0
      %v1272 = vsel %vm1240, %v420, 0.0
      %v1273 = vsel %vm1241, %v421, 0.0
      %v1274 = vsel %vm1242, %v422, 0.0
      %v1275 = vpack.c.bf16 %v1244, %v1243
      %v1276 = vpack.c.bf16 %v1246, %v1245
      %v1277 = vpack.c.bf16 %v1248, %v1247
      %v1278 = vpack.c.bf16 %v1250, %v1249
      %v1279 = vpack.c.bf16 %v1252, %v1251
      %v1280 = vpack.c.bf16 %v1254, %v1253
      %v1281 = vpack.c.bf16 %v1256, %v1255
      %v1282 = vpack.c.bf16 %v1258, %v1257
      %v1283 = vpack.c.bf16 %v1260, %v1259
      %v1284 = vpack.c.bf16 %v1262, %v1261
      %v1285 = vpack.c.bf16 %v1264, %v1263
      %v1286 = vpack.c.bf16 %v1266, %v1265
      %v1287 = vpack.c.bf16 %v1268, %v1267
      %v1288 = vpack.c.bf16 %v1270, %v1269
      %v1289 = vpack.c.bf16 %v1272, %v1271
      %v1290 = vpack.c.bf16 %v1274, %v1273
      %v1291 = vrot.slane %v393, 1
      %v1292 = vrot.slane %v394, 1
      %v1293 = vrot.slane %v395, 1
      %v1294 = vrot.slane %v396, 1
      %v1295 = vrot.slane %v397, 1
      %v1296 = vrot.slane %v398, 1
      %v1297 = vrot.slane %v399, 1
      %v1298 = vrot.slane %v400, 1
      %v1299 = vrot.slane %v401, 1
      %v1300 = vrot.slane %v402, 1
      %v1301 = vrot.slane %v403, 1
      %v1302 = vrot.slane %v404, 1
      %v1303 = vrot.slane %v405, 1
      %v1304 = vrot.slane %v406, 1
      %v1305 = vrot.slane %v407, 1
      %v1306 = vrot.slane %v408, 1
      %v1307 = vrot.slane %v409, 1
      %v1308 = vrot.slane %v410, 1
      %v1309 = vrot.slane %v411, 1
      %v1310 = vrot.slane %v412, 1
      %v1311 = vrot.slane %v413, 1
      %v1312 = vrot.slane %v414, 1
      %v1313 = vrot.slane %v415, 1
      %v1314 = vrot.slane %v416, 1
      %v1315 = vrot.slane %v417, 1
      %v1316 = vrot.slane %v418, 1
      %v1317 = vrot.slane %v419, 1
      %v1318 = vrot.slane %v420, 1
      %v1319 = vrot.slane %v421, 1
      %v1320 = vrot.slane %v422, 1
      %v1321 = vrot.slane %v423, 1
      %v1322 = vrot.slane %v424, 1
      %vm1323 = vcmp.lt.s32.totalorder %v426, 7
      %v1324 = vsel %vm1323, %v1321, %v1322
      %v1325 = vsel %vm1323, %v1320, %v1321
      %v1326 = vsel %vm1323, %v1319, %v1320
      %v1327 = vsel %vm1323, %v1318, %v1319
      %v1328 = vsel %vm1323, %v1317, %v1318
      %v1329 = vsel %vm1323, %v1316, %v1317
      %v1330 = vsel %vm1323, %v1315, %v1316
      %v1331 = vsel %vm1323, %v1314, %v1315
      %v1332 = vsel %vm1323, %v1313, %v1314
      %v1333 = vsel %vm1323, %v1312, %v1313
      %v1334 = vsel %vm1323, %v1311, %v1312
      %v1335 = vsel %vm1323, %v1310, %v1311
      %v1336 = vsel %vm1323, %v1309, %v1310
      %v1337 = vsel %vm1323, %v1308, %v1309
      %v1338 = vsel %vm1323, %v1307, %v1308
      %v1339 = vsel %vm1323, %v1306, %v1307
      %v1340 = vsel %vm1323, %v1305, %v1306
      %v1341 = vsel %vm1323, %v1304, %v1305
      %v1342 = vsel %vm1323, %v1303, %v1304
      %v1343 = vsel %vm1323, %v1302, %v1303
      %v1344 = vsel %vm1323, %v1301, %v1302
      %v1345 = vsel %vm1323, %v1300, %v1301
      %v1346 = vsel %vm1323, %v1299, %v1300
      %v1347 = vsel %vm1323, %v1298, %v1299
      %v1348 = vsel %vm1323, %v1297, %v1298
      %v1349 = vsel %vm1323, %v1296, %v1297
      %v1350 = vsel %vm1323, %v1295, %v1296
      %v1351 = vsel %vm1323, %v1294, %v1295
      %v1352 = vsel %vm1323, %v1293, %v1294
      %v1353 = vsel %vm1323, %v1292, %v1293
      %v1354 = vsel %vm1323, %v1291, %v1292
      %v1355 = vsel %vm1323, %v1322, %v1291
      %vm1356 = vmand %vm842, %vm938
      %vm1357 = vmand %vm843, %vm939
      %vm1358 = vmand %vm844, %vm940
      %vm1359 = vmand %vm845, %vm941
      %vm1360 = vmand %vm846, %vm942
      %vm1361 = vmand %vm847, %vm943
      %vm1362 = vmand %vm848, %vm944
      %vm1363 = vmand %vm849, %vm945
      %vm1364 = vmand %vm850, %vm946
      %vm1365 = vmand %vm851, %vm947
      %vm1366 = vmand %vm852, %vm948
      %vm1367 = vmand %vm853, %vm949
      %vm1368 = vmand %vm854, %vm950
      %vm1369 = vmand %vm855, %vm951
      %vm1370 = vmand %vm856, %vm952
      %vm1371 = vmand %vm857, %vm953
      %vm1372 = vmand %vm858, %vm954
      %vm1373 = vmand %vm859, %vm955
      %vm1374 = vmand %vm860, %vm956
      %vm1375 = vmand %vm861, %vm957
      %vm1376 = vmand %vm862, %vm958
      %vm1377 = vmand %vm863, %vm959
      %vm1378 = vmand %vm864, %vm960
      %vm1379 = vmand %vm865, %vm961
      %vm1380 = vmand %vm866, %vm962
      %vm1381 = vmand %vm867, %vm963
      %vm1382 = vmand %vm868, %vm964
      %vm1383 = vmand %vm869, %vm965
      %vm1384 = vmand %vm870, %vm966
      %vm1385 = vmand %vm871, %vm967
      %vm1386 = vmand %vm872, %vm968
      %vm1387 = vmand %vm873, %vm969
      %v1388 = vsel %vm1356, 1, 0
      %v1389 = vsel %vm1357, 1, 0
      %v1390 = vsel %vm1358, 1, 0
      %v1391 = vsel %vm1359, 1, 0
      %v1392 = vsel %vm1360, 1, 0
      %v1393 = vsel %vm1361, 1, 0
      %v1394 = vsel %vm1362, 1, 0
      %v1395 = vsel %vm1363, 1, 0
      %v1396 = vsel %vm1364, 1, 0
      %v1397 = vsel %vm1365, 1, 0
      %v1398 = vsel %vm1366, 1, 0
      %v1399 = vsel %vm1367, 1, 0
      %v1400 = vsel %vm1368, 1, 0
      %v1401 = vsel %vm1369, 1, 0
      %v1402 = vsel %vm1370, 1, 0
      %v1403 = vsel %vm1371, 1, 0
      %v1404 = vsel %vm1372, 1, 0
      %v1405 = vsel %vm1373, 1, 0
      %v1406 = vsel %vm1374, 1, 0
      %v1407 = vsel %vm1375, 1, 0
      %v1408 = vsel %vm1376, 1, 0
      %v1409 = vsel %vm1377, 1, 0
      %v1410 = vsel %vm1378, 1, 0
      %v1411 = vsel %vm1379, 1, 0
      %v1412 = vsel %vm1380, 1, 0
      %v1413 = vsel %vm1381, 1, 0
      %v1414 = vsel %vm1382, 1, 0
      %v1415 = vsel %vm1383, 1, 0
      %v1416 = vsel %vm1384, 1, 0
      %v1417 = vsel %vm1385, 1, 0
      %v1418 = vsel %vm1386, 1, 0
      %v1419 = vsel %vm1387, 1, 0
      %vm1420 = vcmp.eq.s32.totalorder %v1388, 1
      %vm1421 = vcmp.eq.s32.totalorder %v1389, 1
      %vm1422 = vcmp.eq.s32.totalorder %v1390, 1
      %vm1423 = vcmp.eq.s32.totalorder %v1391, 1
      %vm1424 = vcmp.eq.s32.totalorder %v1392, 1
      %vm1425 = vcmp.eq.s32.totalorder %v1393, 1
      %vm1426 = vcmp.eq.s32.totalorder %v1394, 1
      %vm1427 = vcmp.eq.s32.totalorder %v1395, 1
      %vm1428 = vcmp.eq.s32.totalorder %v1396, 1
      %vm1429 = vcmp.eq.s32.totalorder %v1397, 1
      %vm1430 = vcmp.eq.s32.totalorder %v1398, 1
      %vm1431 = vcmp.eq.s32.totalorder %v1399, 1
      %vm1432 = vcmp.eq.s32.totalorder %v1400, 1
      %vm1433 = vcmp.eq.s32.totalorder %v1401, 1
      %vm1434 = vcmp.eq.s32.totalorder %v1402, 1
      %vm1435 = vcmp.eq.s32.totalorder %v1403, 1
      %vm1436 = vcmp.eq.s32.totalorder %v1404, 1
      %vm1437 = vcmp.eq.s32.totalorder %v1405, 1
      %vm1438 = vcmp.eq.s32.totalorder %v1406, 1
      %vm1439 = vcmp.eq.s32.totalorder %v1407, 1
      %vm1440 = vcmp.eq.s32.totalorder %v1408, 1
      %vm1441 = vcmp.eq.s32.totalorder %v1409, 1
      %vm1442 = vcmp.eq.s32.totalorder %v1410, 1
      %vm1443 = vcmp.eq.s32.totalorder %v1411, 1
      %vm1444 = vcmp.eq.s32.totalorder %v1412, 1
      %vm1445 = vcmp.eq.s32.totalorder %v1413, 1
      %vm1446 = vcmp.eq.s32.totalorder %v1414, 1
      %vm1447 = vcmp.eq.s32.totalorder %v1415, 1
      %vm1448 = vcmp.eq.s32.totalorder %v1416, 1
      %vm1449 = vcmp.eq.s32.totalorder %v1417, 1
      %vm1450 = vcmp.eq.s32.totalorder %v1418, 1
      %vm1451 = vcmp.eq.s32.totalorder %v1419, 1
      %v1452 = vsel %vm1420, %v1324, 0.0
      %v1453 = vsel %vm1421, %v1355, 0.0
      %v1454 = vsel %vm1422, %v1354, 0.0
      %v1455 = vsel %vm1423, %v1353, 0.0
      %v1456 = vsel %vm1424, %v1352, 0.0
      %v1457 = vsel %vm1425, %v1351, 0.0
      %v1458 = vsel %vm1426, %v1350, 0.0
      %v1459 = vsel %vm1427, %v1349, 0.0
      %v1460 = vsel %vm1428, %v1348, 0.0
      %v1461 = vsel %vm1429, %v1347, 0.0
      %v1462 = vsel %vm1430, %v1346, 0.0
      %v1463 = vsel %vm1431, %v1345, 0.0
      %v1464 = vsel %vm1432, %v1344, 0.0
      %v1465 = vsel %vm1433, %v1343, 0.0
      %v1466 = vsel %vm1434, %v1342, 0.0
      %v1467 = vsel %vm1435, %v1341, 0.0
      %v1468 = vsel %vm1436, %v1340, 0.0
      %v1469 = vsel %vm1437, %v1339, 0.0
      %v1470 = vsel %vm1438, %v1338, 0.0
      %v1471 = vsel %vm1439, %v1337, 0.0
      %v1472 = vsel %vm1440, %v1336, 0.0
      %v1473 = vsel %vm1441, %v1335, 0.0
      %v1474 = vsel %vm1442, %v1334, 0.0
      %v1475 = vsel %vm1443, %v1333, 0.0
      %v1476 = vsel %vm1444, %v1332, 0.0
      %v1477 = vsel %vm1445, %v1331, 0.0
      %v1478 = vsel %vm1446, %v1330, 0.0
      %v1479 = vsel %vm1447, %v1329, 0.0
      %v1480 = vsel %vm1448, %v1328, 0.0
      %v1481 = vsel %vm1449, %v1327, 0.0
      %v1482 = vsel %vm1450, %v1326, 0.0
      %v1483 = vsel %vm1451, %v1325, 0.0
      %v1484 = vpack.c.bf16 %v1453, %v1452
      %v1485 = vpack.c.bf16 %v1455, %v1454
      %v1486 = vpack.c.bf16 %v1457, %v1456
      %v1487 = vpack.c.bf16 %v1459, %v1458
      %v1488 = vpack.c.bf16 %v1461, %v1460
      %v1489 = vpack.c.bf16 %v1463, %v1462
      %v1490 = vpack.c.bf16 %v1465, %v1464
      %v1491 = vpack.c.bf16 %v1467, %v1466
      %v1492 = vpack.c.bf16 %v1469, %v1468
      %v1493 = vpack.c.bf16 %v1471, %v1470
      %v1494 = vpack.c.bf16 %v1473, %v1472
      %v1495 = vpack.c.bf16 %v1475, %v1474
      %v1496 = vpack.c.bf16 %v1477, %v1476
      %v1497 = vpack.c.bf16 %v1479, %v1478
      %v1498 = vpack.c.bf16 %v1481, %v1480
      %v1499 = vpack.c.bf16 %v1483, %v1482
      %v1500 = vsel %vm906, 1, 0
      %v1501 = vsel %vm907, 1, 0
      %v1502 = vsel %vm908, 1, 0
      %v1503 = vsel %vm909, 1, 0
      %v1504 = vsel %vm910, 1, 0
      %v1505 = vsel %vm911, 1, 0
      %v1506 = vsel %vm912, 1, 0
      %v1507 = vsel %vm913, 1, 0
      %v1508 = vsel %vm914, 1, 0
      %v1509 = vsel %vm915, 1, 0
      %v1510 = vsel %vm916, 1, 0
      %v1511 = vsel %vm917, 1, 0
      %v1512 = vsel %vm918, 1, 0
      %v1513 = vsel %vm919, 1, 0
      %v1514 = vsel %vm920, 1, 0
      %v1515 = vsel %vm921, 1, 0
      %v1516 = vsel %vm922, 1, 0
      %v1517 = vsel %vm923, 1, 0
      %v1518 = vsel %vm924, 1, 0
      %v1519 = vsel %vm925, 1, 0
      %v1520 = vsel %vm926, 1, 0
      %v1521 = vsel %vm927, 1, 0
      %v1522 = vsel %vm928, 1, 0
      %v1523 = vsel %vm929, 1, 0
      %v1524 = vsel %vm930, 1, 0
      %v1525 = vsel %vm931, 1, 0
      %v1526 = vsel %vm932, 1, 0
      %v1527 = vsel %vm933, 1, 0
      %v1528 = vsel %vm934, 1, 0
      %v1529 = vsel %vm935, 1, 0
      %v1530 = vsel %vm936, 1, 0
      %v1531 = vsel %vm937, 1, 0
      %vm1532 = vcmp.eq.s32.totalorder %v1500, 1
      %vm1533 = vcmp.eq.s32.totalorder %v1501, 1
      %vm1534 = vcmp.eq.s32.totalorder %v1502, 1
      %vm1535 = vcmp.eq.s32.totalorder %v1503, 1
      %vm1536 = vcmp.eq.s32.totalorder %v1504, 1
      %vm1537 = vcmp.eq.s32.totalorder %v1505, 1
      %vm1538 = vcmp.eq.s32.totalorder %v1506, 1
      %vm1539 = vcmp.eq.s32.totalorder %v1507, 1
      %vm1540 = vcmp.eq.s32.totalorder %v1508, 1
      %vm1541 = vcmp.eq.s32.totalorder %v1509, 1
      %vm1542 = vcmp.eq.s32.totalorder %v1510, 1
      %vm1543 = vcmp.eq.s32.totalorder %v1511, 1
      %vm1544 = vcmp.eq.s32.totalorder %v1512, 1
      %vm1545 = vcmp.eq.s32.totalorder %v1513, 1
      %vm1546 = vcmp.eq.s32.totalorder %v1514, 1
      %vm1547 = vcmp.eq.s32.totalorder %v1515, 1
      %vm1548 = vcmp.eq.s32.totalorder %v1516, 1
      %vm1549 = vcmp.eq.s32.totalorder %v1517, 1
      %vm1550 = vcmp.eq.s32.totalorder %v1518, 1
      %vm1551 = vcmp.eq.s32.totalorder %v1519, 1
      %vm1552 = vcmp.eq.s32.totalorder %v1520, 1
      %vm1553 = vcmp.eq.s32.totalorder %v1521, 1
      %vm1554 = vcmp.eq.s32.totalorder %v1522, 1
      %vm1555 = vcmp.eq.s32.totalorder %v1523, 1
      %vm1556 = vcmp.eq.s32.totalorder %v1524, 1
      %vm1557 = vcmp.eq.s32.totalorder %v1525, 1
      %vm1558 = vcmp.eq.s32.totalorder %v1526, 1
      %vm1559 = vcmp.eq.s32.totalorder %v1527, 1
      %vm1560 = vcmp.eq.s32.totalorder %v1528, 1
      %vm1561 = vcmp.eq.s32.totalorder %v1529, 1
      %vm1562 = vcmp.eq.s32.totalorder %v1530, 1
      %vm1563 = vcmp.eq.s32.totalorder %v1531, 1
      %v1564 = vsel %vm1532, %v1034, 0.0
      %v1565 = vsel %vm1533, %v1033, 0.0
      %v1566 = vsel %vm1534, %v1032, 0.0
      %v1567 = vsel %vm1535, %v1031, 0.0
      %v1568 = vsel %vm1536, %v1030, 0.0
      %v1569 = vsel %vm1537, %v1029, 0.0
      %v1570 = vsel %vm1538, %v1028, 0.0
      %v1571 = vsel %vm1539, %v1027, 0.0
      %v1572 = vsel %vm1540, %v1026, 0.0
      %v1573 = vsel %vm1541, %v1025, 0.0
      %v1574 = vsel %vm1542, %v1024, 0.0
      %v1575 = vsel %vm1543, %v1023, 0.0
      %v1576 = vsel %vm1544, %v1022, 0.0
      %v1577 = vsel %vm1545, %v1021, 0.0
      %v1578 = vsel %vm1546, %v1020, 0.0
      %v1579 = vsel %vm1547, %v1019, 0.0
      %v1580 = vsel %vm1548, %v1018, 0.0
      %v1581 = vsel %vm1549, %v1017, 0.0
      %v1582 = vsel %vm1550, %v1016, 0.0
      %v1583 = vsel %vm1551, %v1015, 0.0
      %v1584 = vsel %vm1552, %v1014, 0.0
      %v1585 = vsel %vm1553, %v1013, 0.0
      %v1586 = vsel %vm1554, %v1012, 0.0
      %v1587 = vsel %vm1555, %v1011, 0.0
      %v1588 = vsel %vm1556, %v1010, 0.0
      %v1589 = vsel %vm1557, %v1009, 0.0
      %v1590 = vsel %vm1558, %v1008, 0.0
      %v1591 = vsel %vm1559, %v1007, 0.0
      %v1592 = vsel %vm1560, %v1006, 0.0
      %v1593 = vsel %vm1561, %v1005, 0.0
      %v1594 = vsel %vm1562, %v1004, 0.0
      %v1595 = vsel %vm1563, %v1003, 0.0
      %v1596 = vpack.c.bf16 %v1565, %v1564
      %v1597 = vpack.c.bf16 %v1567, %v1566
      %v1598 = vpack.c.bf16 %v1569, %v1568
      %v1599 = vpack.c.bf16 %v1571, %v1570
      %v1600 = vpack.c.bf16 %v1573, %v1572
      %v1601 = vpack.c.bf16 %v1575, %v1574
      %v1602 = vpack.c.bf16 %v1577, %v1576
      %v1603 = vpack.c.bf16 %v1579, %v1578
      %v1604 = vpack.c.bf16 %v1581, %v1580
      %v1605 = vpack.c.bf16 %v1583, %v1582
      %v1606 = vpack.c.bf16 %v1585, %v1584
      %v1607 = vpack.c.bf16 %v1587, %v1586
      %v1608 = vpack.c.bf16 %v1589, %v1588
      %v1609 = vpack.c.bf16 %v1591, %v1590
      %v1610 = vpack.c.bf16 %v1593, %v1592
      %v1611 = vpack.c.bf16 %v1595, %v1594
      %v1612 = vpack.c.bf16 %v394, %v393
      %v1613 = vpack.c.bf16 %v396, %v395
      %v1614 = vpack.c.bf16 %v398, %v397
      %v1615 = vpack.c.bf16 %v400, %v399
      %v1616 = vpack.c.bf16 %v402, %v401
      %v1617 = vpack.c.bf16 %v404, %v403
      %v1618 = vpack.c.bf16 %v406, %v405
      %v1619 = vpack.c.bf16 %v408, %v407
      %v1620 = vpack.c.bf16 %v410, %v409
      %v1621 = vpack.c.bf16 %v412, %v411
      %v1622 = vpack.c.bf16 %v414, %v413
      %v1623 = vpack.c.bf16 %v416, %v415
      %v1624 = vpack.c.bf16 %v418, %v417
      %v1625 = vpack.c.bf16 %v420, %v419
      %v1626 = vpack.c.bf16 %v422, %v421
      %v1627 = vpack.c.bf16 %v424, %v423
      %v1628 = vsel %vm938, 1, 0
      %v1629 = vsel %vm939, 1, 0
      %v1630 = vsel %vm940, 1, 0
      %v1631 = vsel %vm941, 1, 0
      %v1632 = vsel %vm942, 1, 0
      %v1633 = vsel %vm943, 1, 0
      %v1634 = vsel %vm944, 1, 0
      %v1635 = vsel %vm945, 1, 0
      %v1636 = vsel %vm946, 1, 0
      %v1637 = vsel %vm947, 1, 0
      %v1638 = vsel %vm948, 1, 0
      %v1639 = vsel %vm949, 1, 0
      %v1640 = vsel %vm950, 1, 0
      %v1641 = vsel %vm951, 1, 0
      %v1642 = vsel %vm952, 1, 0
      %v1643 = vsel %vm953, 1, 0
      %v1644 = vsel %vm954, 1, 0
      %v1645 = vsel %vm955, 1, 0
      %v1646 = vsel %vm956, 1, 0
      %v1647 = vsel %vm957, 1, 0
      %v1648 = vsel %vm958, 1, 0
      %v1649 = vsel %vm959, 1, 0
      %v1650 = vsel %vm960, 1, 0
      %v1651 = vsel %vm961, 1, 0
      %v1652 = vsel %vm962, 1, 0
      %v1653 = vsel %vm963, 1, 0
      %v1654 = vsel %vm964, 1, 0
      %v1655 = vsel %vm965, 1, 0
      %v1656 = vsel %vm966, 1, 0
      %v1657 = vsel %vm967, 1, 0
      %v1658 = vsel %vm968, 1, 0
      %v1659 = vsel %vm969, 1, 0
      %vm1660 = vcmp.eq.s32.totalorder %v1628, 1
      %vm1661 = vcmp.eq.s32.totalorder %v1629, 1
      %vm1662 = vcmp.eq.s32.totalorder %v1630, 1
      %vm1663 = vcmp.eq.s32.totalorder %v1631, 1
      %vm1664 = vcmp.eq.s32.totalorder %v1632, 1
      %vm1665 = vcmp.eq.s32.totalorder %v1633, 1
      %vm1666 = vcmp.eq.s32.totalorder %v1634, 1
      %vm1667 = vcmp.eq.s32.totalorder %v1635, 1
      %vm1668 = vcmp.eq.s32.totalorder %v1636, 1
      %vm1669 = vcmp.eq.s32.totalorder %v1637, 1
      %vm1670 = vcmp.eq.s32.totalorder %v1638, 1
      %vm1671 = vcmp.eq.s32.totalorder %v1639, 1
      %vm1672 = vcmp.eq.s32.totalorder %v1640, 1
      %vm1673 = vcmp.eq.s32.totalorder %v1641, 1
      %vm1674 = vcmp.eq.s32.totalorder %v1642, 1
      %vm1675 = vcmp.eq.s32.totalorder %v1643, 1
      %vm1676 = vcmp.eq.s32.totalorder %v1644, 1
      %vm1677 = vcmp.eq.s32.totalorder %v1645, 1
      %vm1678 = vcmp.eq.s32.totalorder %v1646, 1
      %vm1679 = vcmp.eq.s32.totalorder %v1647, 1
      %vm1680 = vcmp.eq.s32.totalorder %v1648, 1
      %vm1681 = vcmp.eq.s32.totalorder %v1649, 1
      %vm1682 = vcmp.eq.s32.totalorder %v1650, 1
      %vm1683 = vcmp.eq.s32.totalorder %v1651, 1
      %vm1684 = vcmp.eq.s32.totalorder %v1652, 1
      %vm1685 = vcmp.eq.s32.totalorder %v1653, 1
      %vm1686 = vcmp.eq.s32.totalorder %v1654, 1
      %vm1687 = vcmp.eq.s32.totalorder %v1655, 1
      %vm1688 = vcmp.eq.s32.totalorder %v1656, 1
      %vm1689 = vcmp.eq.s32.totalorder %v1657, 1
      %vm1690 = vcmp.eq.s32.totalorder %v1658, 1
      %vm1691 = vcmp.eq.s32.totalorder %v1659, 1
      %v1692 = vsel %vm1660, %v1354, 0.0
      %v1693 = vsel %vm1661, %v1353, 0.0
      %v1694 = vsel %vm1662, %v1352, 0.0
      %v1695 = vsel %vm1663, %v1351, 0.0
      %v1696 = vsel %vm1664, %v1350, 0.0
      %v1697 = vsel %vm1665, %v1349, 0.0
      %v1698 = vsel %vm1666, %v1348, 0.0
      %v1699 = vsel %vm1667, %v1347, 0.0
      %v1700 = vsel %vm1668, %v1346, 0.0
      %v1701 = vsel %vm1669, %v1345, 0.0
      %v1702 = vsel %vm1670, %v1344, 0.0
      %v1703 = vsel %vm1671, %v1343, 0.0
      %v1704 = vsel %vm1672, %v1342, 0.0
      %v1705 = vsel %vm1673, %v1341, 0.0
      %v1706 = vsel %vm1674, %v1340, 0.0
      %v1707 = vsel %vm1675, %v1339, 0.0
      %v1708 = vsel %vm1676, %v1338, 0.0
      %v1709 = vsel %vm1677, %v1337, 0.0
      %v1710 = vsel %vm1678, %v1336, 0.0
      %v1711 = vsel %vm1679, %v1335, 0.0
      %v1712 = vsel %vm1680, %v1334, 0.0
      %v1713 = vsel %vm1681, %v1333, 0.0
      %v1714 = vsel %vm1682, %v1332, 0.0
      %v1715 = vsel %vm1683, %v1331, 0.0
      %v1716 = vsel %vm1684, %v1330, 0.0
      %v1717 = vsel %vm1685, %v1329, 0.0
      %v1718 = vsel %vm1686, %v1328, 0.0
      %v1719 = vsel %vm1687, %v1327, 0.0
      %v1720 = vsel %vm1688, %v1326, 0.0
      %v1721 = vsel %vm1689, %v1325, 0.0
      %v1722 = vsel %vm1690, %v1324, 0.0
      %v1723 = vsel %vm1691, %v1355, 0.0
      %v1724 = vpack.c.bf16 %v1693, %v1692
      %v1725 = vpack.c.bf16 %v1695, %v1694
      %v1726 = vpack.c.bf16 %v1697, %v1696
      %v1727 = vpack.c.bf16 %v1699, %v1698
      %v1728 = vpack.c.bf16 %v1701, %v1700
      %v1729 = vpack.c.bf16 %v1703, %v1702
      %v1730 = vpack.c.bf16 %v1705, %v1704
      %v1731 = vpack.c.bf16 %v1707, %v1706
      %v1732 = vpack.c.bf16 %v1709, %v1708
      %v1733 = vpack.c.bf16 %v1711, %v1710
      %v1734 = vpack.c.bf16 %v1713, %v1712
      %v1735 = vpack.c.bf16 %v1715, %v1714
      %v1736 = vpack.c.bf16 %v1717, %v1716
      %v1737 = vpack.c.bf16 %v1719, %v1718
      %v1738 = vpack.c.bf16 %v1721, %v1720
      %v1739 = vpack.c.bf16 %v1723, %v1722
      %vm1740 = vmand %vm874, %vm906
      %vm1741 = vmand %vm875, %vm907
      %vm1742 = vmand %vm876, %vm908
      %vm1743 = vmand %vm877, %vm909
      %vm1744 = vmand %vm878, %vm910
      %vm1745 = vmand %vm879, %vm911
      %vm1746 = vmand %vm880, %vm912
      %vm1747 = vmand %vm881, %vm913
      %vm1748 = vmand %vm882, %vm914
      %vm1749 = vmand %vm883, %vm915
      %vm1750 = vmand %vm884, %vm916
      %vm1751 = vmand %vm885, %vm917
      %vm1752 = vmand %vm886, %vm918
      %vm1753 = vmand %vm887, %vm919
      %vm1754 = vmand %vm888, %vm920
      %vm1755 = vmand %vm889, %vm921
      %vm1756 = vmand %vm890, %vm922
      %vm1757 = vmand %vm891, %vm923
      %vm1758 = vmand %vm892, %vm924
      %vm1759 = vmand %vm893, %vm925
      %vm1760 = vmand %vm894, %vm926
      %vm1761 = vmand %vm895, %vm927
      %vm1762 = vmand %vm896, %vm928
      %vm1763 = vmand %vm897, %vm929
      %vm1764 = vmand %vm898, %vm930
      %vm1765 = vmand %vm899, %vm931
      %vm1766 = vmand %vm900, %vm932
      %vm1767 = vmand %vm901, %vm933
      %vm1768 = vmand %vm902, %vm934
      %vm1769 = vmand %vm903, %vm935
      %vm1770 = vmand %vm904, %vm936
      %vm1771 = vmand %vm905, %vm937
      %v1772 = vsel %vm1740, 1, 0
      %v1773 = vsel %vm1741, 1, 0
      %v1774 = vsel %vm1742, 1, 0
      %v1775 = vsel %vm1743, 1, 0
      %v1776 = vsel %vm1744, 1, 0
      %v1777 = vsel %vm1745, 1, 0
      %v1778 = vsel %vm1746, 1, 0
      %v1779 = vsel %vm1747, 1, 0
      %v1780 = vsel %vm1748, 1, 0
      %v1781 = vsel %vm1749, 1, 0
      %v1782 = vsel %vm1750, 1, 0
      %v1783 = vsel %vm1751, 1, 0
      %v1784 = vsel %vm1752, 1, 0
      %v1785 = vsel %vm1753, 1, 0
      %v1786 = vsel %vm1754, 1, 0
      %v1787 = vsel %vm1755, 1, 0
      %v1788 = vsel %vm1756, 1, 0
      %v1789 = vsel %vm1757, 1, 0
      %v1790 = vsel %vm1758, 1, 0
      %v1791 = vsel %vm1759, 1, 0
      %v1792 = vsel %vm1760, 1, 0
      %v1793 = vsel %vm1761, 1, 0
      %v1794 = vsel %vm1762, 1, 0
      %v1795 = vsel %vm1763, 1, 0
      %v1796 = vsel %vm1764, 1, 0
      %v1797 = vsel %vm1765, 1, 0
      %v1798 = vsel %vm1766, 1, 0
      %v1799 = vsel %vm1767, 1, 0
      %v1800 = vsel %vm1768, 1, 0
      %v1801 = vsel %vm1769, 1, 0
      %v1802 = vsel %vm1770, 1, 0
      %v1803 = vsel %vm1771, 1, 0
      %vm1804 = vcmp.eq.s32.totalorder %v1772, 1
      %vm1805 = vcmp.eq.s32.totalorder %v1773, 1
      %vm1806 = vcmp.eq.s32.totalorder %v1774, 1
      %vm1807 = vcmp.eq.s32.totalorder %v1775, 1
      %vm1808 = vcmp.eq.s32.totalorder %v1776, 1
      %vm1809 = vcmp.eq.s32.totalorder %v1777, 1
      %vm1810 = vcmp.eq.s32.totalorder %v1778, 1
      %vm1811 = vcmp.eq.s32.totalorder %v1779, 1
      %vm1812 = vcmp.eq.s32.totalorder %v1780, 1
      %vm1813 = vcmp.eq.s32.totalorder %v1781, 1
      %vm1814 = vcmp.eq.s32.totalorder %v1782, 1
      %vm1815 = vcmp.eq.s32.totalorder %v1783, 1
      %vm1816 = vcmp.eq.s32.totalorder %v1784, 1
      %vm1817 = vcmp.eq.s32.totalorder %v1785, 1
      %vm1818 = vcmp.eq.s32.totalorder %v1786, 1
      %vm1819 = vcmp.eq.s32.totalorder %v1787, 1
      %vm1820 = vcmp.eq.s32.totalorder %v1788, 1
      %vm1821 = vcmp.eq.s32.totalorder %v1789, 1
      %vm1822 = vcmp.eq.s32.totalorder %v1790, 1
      %vm1823 = vcmp.eq.s32.totalorder %v1791, 1
      %vm1824 = vcmp.eq.s32.totalorder %v1792, 1
      %vm1825 = vcmp.eq.s32.totalorder %v1793, 1
      %vm1826 = vcmp.eq.s32.totalorder %v1794, 1
      %vm1827 = vcmp.eq.s32.totalorder %v1795, 1
      %vm1828 = vcmp.eq.s32.totalorder %v1796, 1
      %vm1829 = vcmp.eq.s32.totalorder %v1797, 1
      %vm1830 = vcmp.eq.s32.totalorder %v1798, 1
      %vm1831 = vcmp.eq.s32.totalorder %v1799, 1
      %vm1832 = vcmp.eq.s32.totalorder %v1800, 1
      %vm1833 = vcmp.eq.s32.totalorder %v1801, 1
      %vm1834 = vcmp.eq.s32.totalorder %v1802, 1
      %vm1835 = vcmp.eq.s32.totalorder %v1803, 1
      %v1836 = vsel %vm1804, %v1032, 0.0
      %v1837 = vsel %vm1805, %v1031, 0.0
      %v1838 = vsel %vm1806, %v1030, 0.0
      %v1839 = vsel %vm1807, %v1029, 0.0
      %v1840 = vsel %vm1808, %v1028, 0.0
      %v1841 = vsel %vm1809, %v1027, 0.0
      %v1842 = vsel %vm1810, %v1026, 0.0
      %v1843 = vsel %vm1811, %v1025, 0.0
      %v1844 = vsel %vm1812, %v1024, 0.0
      %v1845 = vsel %vm1813, %v1023, 0.0
      %v1846 = vsel %vm1814, %v1022, 0.0
      %v1847 = vsel %vm1815, %v1021, 0.0
      %v1848 = vsel %vm1816, %v1020, 0.0
      %v1849 = vsel %vm1817, %v1019, 0.0
      %v1850 = vsel %vm1818, %v1018, 0.0
      %v1851 = vsel %vm1819, %v1017, 0.0
      %v1852 = vsel %vm1820, %v1016, 0.0
      %v1853 = vsel %vm1821, %v1015, 0.0
      %v1854 = vsel %vm1822, %v1014, 0.0
      %v1855 = vsel %vm1823, %v1013, 0.0
      %v1856 = vsel %vm1824, %v1012, 0.0
      %v1857 = vsel %vm1825, %v1011, 0.0
      %v1858 = vsel %vm1826, %v1010, 0.0
      %v1859 = vsel %vm1827, %v1009, 0.0
      %v1860 = vsel %vm1828, %v1008, 0.0
      %v1861 = vsel %vm1829, %v1007, 0.0
      %v1862 = vsel %vm1830, %v1006, 0.0
      %v1863 = vsel %vm1831, %v1005, 0.0
      %v1864 = vsel %vm1832, %v1004, 0.0
      %v1865 = vsel %vm1833, %v1003, 0.0
      %v1866 = vsel %vm1834, %v1034, 0.0
      %v1867 = vsel %vm1835, %v1033, 0.0
      %v1868 = vpack.c.bf16 %v1837, %v1836
      %v1869 = vpack.c.bf16 %v1839, %v1838
      %v1870 = vpack.c.bf16 %v1841, %v1840
      %v1871 = vpack.c.bf16 %v1843, %v1842
      %v1872 = vpack.c.bf16 %v1845, %v1844
      %v1873 = vpack.c.bf16 %v1847, %v1846
      %v1874 = vpack.c.bf16 %v1849, %v1848
      %v1875 = vpack.c.bf16 %v1851, %v1850
      %v1876 = vpack.c.bf16 %v1853, %v1852
      %v1877 = vpack.c.bf16 %v1855, %v1854
      %v1878 = vpack.c.bf16 %v1857, %v1856
      %v1879 = vpack.c.bf16 %v1859, %v1858
      %v1880 = vpack.c.bf16 %v1861, %v1860
      %v1881 = vpack.c.bf16 %v1863, %v1862
      %v1882 = vpack.c.bf16 %v1865, %v1864
      %v1883 = vpack.c.bf16 %v1867, %v1866
      %v1884 = vsel %vm874, 1, 0
      %v1885 = vsel %vm875, 1, 0
      %v1886 = vsel %vm876, 1, 0
      %v1887 = vsel %vm877, 1, 0
      %v1888 = vsel %vm878, 1, 0
      %v1889 = vsel %vm879, 1, 0
      %v1890 = vsel %vm880, 1, 0
      %v1891 = vsel %vm881, 1, 0
      %v1892 = vsel %vm882, 1, 0
      %v1893 = vsel %vm883, 1, 0
      %v1894 = vsel %vm884, 1, 0
      %v1895 = vsel %vm885, 1, 0
      %v1896 = vsel %vm886, 1, 0
      %v1897 = vsel %vm887, 1, 0
      %v1898 = vsel %vm888, 1, 0
      %v1899 = vsel %vm889, 1, 0
      %v1900 = vsel %vm890, 1, 0
      %v1901 = vsel %vm891, 1, 0
      %v1902 = vsel %vm892, 1, 0
      %v1903 = vsel %vm893, 1, 0
      %v1904 = vsel %vm894, 1, 0
      %v1905 = vsel %vm895, 1, 0
      %v1906 = vsel %vm896, 1, 0
      %v1907 = vsel %vm897, 1, 0
      %v1908 = vsel %vm898, 1, 0
      %v1909 = vsel %vm899, 1, 0
      %v1910 = vsel %vm900, 1, 0
      %v1911 = vsel %vm901, 1, 0
      %v1912 = vsel %vm902, 1, 0
      %v1913 = vsel %vm903, 1, 0
      %v1914 = vsel %vm904, 1, 0
      %v1915 = vsel %vm905, 1, 0
      %vm1916 = vcmp.eq.s32.totalorder %v1884, 1
      %vm1917 = vcmp.eq.s32.totalorder %v1885, 1
      %vm1918 = vcmp.eq.s32.totalorder %v1886, 1
      %vm1919 = vcmp.eq.s32.totalorder %v1887, 1
      %vm1920 = vcmp.eq.s32.totalorder %v1888, 1
      %vm1921 = vcmp.eq.s32.totalorder %v1889, 1
      %vm1922 = vcmp.eq.s32.totalorder %v1890, 1
      %vm1923 = vcmp.eq.s32.totalorder %v1891, 1
      %vm1924 = vcmp.eq.s32.totalorder %v1892, 1
      %vm1925 = vcmp.eq.s32.totalorder %v1893, 1
      %vm1926 = vcmp.eq.s32.totalorder %v1894, 1
      %vm1927 = vcmp.eq.s32.totalorder %v1895, 1
      %vm1928 = vcmp.eq.s32.totalorder %v1896, 1
      %vm1929 = vcmp.eq.s32.totalorder %v1897, 1
      %vm1930 = vcmp.eq.s32.totalorder %v1898, 1
      %vm1931 = vcmp.eq.s32.totalorder %v1899, 1
      %vm1932 = vcmp.eq.s32.totalorder %v1900, 1
      %vm1933 = vcmp.eq.s32.totalorder %v1901, 1
      %vm1934 = vcmp.eq.s32.totalorder %v1902, 1
      %vm1935 = vcmp.eq.s32.totalorder %v1903, 1
      %vm1936 = vcmp.eq.s32.totalorder %v1904, 1
      %vm1937 = vcmp.eq.s32.totalorder %v1905, 1
      %vm1938 = vcmp.eq.s32.totalorder %v1906, 1
      %vm1939 = vcmp.eq.s32.totalorder %v1907, 1
      %vm1940 = vcmp.eq.s32.totalorder %v1908, 1
      %vm1941 = vcmp.eq.s32.totalorder %v1909, 1
      %vm1942 = vcmp.eq.s32.totalorder %v1910, 1
      %vm1943 = vcmp.eq.s32.totalorder %v1911, 1
      %vm1944 = vcmp.eq.s32.totalorder %v1912, 1
      %vm1945 = vcmp.eq.s32.totalorder %v1913, 1
      %vm1946 = vcmp.eq.s32.totalorder %v1914, 1
      %vm1947 = vcmp.eq.s32.totalorder %v1915, 1
      %v1948 = vsel %vm1916, %v395, 0.0
      %v1949 = vsel %vm1917, %v396, 0.0
      %v1950 = vsel %vm1918, %v397, 0.0
      %v1951 = vsel %vm1919, %v398, 0.0
      %v1952 = vsel %vm1920, %v399, 0.0
      %v1953 = vsel %vm1921, %v400, 0.0
      %v1954 = vsel %vm1922, %v401, 0.0
      %v1955 = vsel %vm1923, %v402, 0.0
      %v1956 = vsel %vm1924, %v403, 0.0
      %v1957 = vsel %vm1925, %v404, 0.0
      %v1958 = vsel %vm1926, %v405, 0.0
      %v1959 = vsel %vm1927, %v406, 0.0
      %v1960 = vsel %vm1928, %v407, 0.0
      %v1961 = vsel %vm1929, %v408, 0.0
      %v1962 = vsel %vm1930, %v409, 0.0
      %v1963 = vsel %vm1931, %v410, 0.0
      %v1964 = vsel %vm1932, %v411, 0.0
      %v1965 = vsel %vm1933, %v412, 0.0
      %v1966 = vsel %vm1934, %v413, 0.0
      %v1967 = vsel %vm1935, %v414, 0.0
      %v1968 = vsel %vm1936, %v415, 0.0
      %v1969 = vsel %vm1937, %v416, 0.0
      %v1970 = vsel %vm1938, %v417, 0.0
      %v1971 = vsel %vm1939, %v418, 0.0
      %v1972 = vsel %vm1940, %v419, 0.0
      %v1973 = vsel %vm1941, %v420, 0.0
      %v1974 = vsel %vm1942, %v421, 0.0
      %v1975 = vsel %vm1943, %v422, 0.0
      %v1976 = vsel %vm1944, %v423, 0.0
      %v1977 = vsel %vm1945, %v424, 0.0
      %v1978 = vsel %vm1946, %v393, 0.0
      %v1979 = vsel %vm1947, %v394, 0.0
      %v1980 = vpack.c.bf16 %v1949, %v1948
      %v1981 = vpack.c.bf16 %v1951, %v1950
      %v1982 = vpack.c.bf16 %v1953, %v1952
      %v1983 = vpack.c.bf16 %v1955, %v1954
      %v1984 = vpack.c.bf16 %v1957, %v1956
      %v1985 = vpack.c.bf16 %v1959, %v1958
      %v1986 = vpack.c.bf16 %v1961, %v1960
      %v1987 = vpack.c.bf16 %v1963, %v1962
      %v1988 = vpack.c.bf16 %v1965, %v1964
      %v1989 = vpack.c.bf16 %v1967, %v1966
      %v1990 = vpack.c.bf16 %v1969, %v1968
      %v1991 = vpack.c.bf16 %v1971, %v1970
      %v1992 = vpack.c.bf16 %v1973, %v1972
      %v1993 = vpack.c.bf16 %v1975, %v1974
      %v1994 = vpack.c.bf16 %v1977, %v1976
      %v1995 = vpack.c.bf16 %v1979, %v1978
      %vm1996 = vmand %vm874, %vm938
      %vm1997 = vmand %vm875, %vm939
      %vm1998 = vmand %vm876, %vm940
      %vm1999 = vmand %vm877, %vm941
      %vm2000 = vmand %vm878, %vm942
      %vm2001 = vmand %vm879, %vm943
      %vm2002 = vmand %vm880, %vm944
      %vm2003 = vmand %vm881, %vm945
      %vm2004 = vmand %vm882, %vm946
      %vm2005 = vmand %vm883, %vm947
      %vm2006 = vmand %vm884, %vm948
      %vm2007 = vmand %vm885, %vm949
      %vm2008 = vmand %vm886, %vm950
      %vm2009 = vmand %vm887, %vm951
      %vm2010 = vmand %vm888, %vm952
      %vm2011 = vmand %vm889, %vm953
      %vm2012 = vmand %vm890, %vm954
      %vm2013 = vmand %vm891, %vm955
      %vm2014 = vmand %vm892, %vm956
      %vm2015 = vmand %vm893, %vm957
      %vm2016 = vmand %vm894, %vm958
      %vm2017 = vmand %vm895, %vm959
      %vm2018 = vmand %vm896, %vm960
      %vm2019 = vmand %vm897, %vm961
      %vm2020 = vmand %vm898, %vm962
      %vm2021 = vmand %vm899, %vm963
      %vm2022 = vmand %vm900, %vm964
      %vm2023 = vmand %vm901, %vm965
      %vm2024 = vmand %vm902, %vm966
      %vm2025 = vmand %vm903, %vm967
      %vm2026 = vmand %vm904, %vm968
      %vm2027 = vmand %vm905, %vm969
      %v2028 = vsel %vm1996, 1, 0
      %v2029 = vsel %vm1997, 1, 0
      %v2030 = vsel %vm1998, 1, 0
      %v2031 = vsel %vm1999, 1, 0
      %v2032 = vsel %vm2000, 1, 0
      %v2033 = vsel %vm2001, 1, 0
      %v2034 = vsel %vm2002, 1, 0
      %v2035 = vsel %vm2003, 1, 0
      %v2036 = vsel %vm2004, 1, 0
      %v2037 = vsel %vm2005, 1, 0
      %v2038 = vsel %vm2006, 1, 0
      %v2039 = vsel %vm2007, 1, 0
      %v2040 = vsel %vm2008, 1, 0
      %v2041 = vsel %vm2009, 1, 0
      %v2042 = vsel %vm2010, 1, 0
      %v2043 = vsel %vm2011, 1, 0
      %v2044 = vsel %vm2012, 1, 0
      %v2045 = vsel %vm2013, 1, 0
      %v2046 = vsel %vm2014, 1, 0
      %v2047 = vsel %vm2015, 1, 0
      %v2048 = vsel %vm2016, 1, 0
      %v2049 = vsel %vm2017, 1, 0
      %v2050 = vsel %vm2018, 1, 0
      %v2051 = vsel %vm2019, 1, 0
      %v2052 = vsel %vm2020, 1, 0
      %v2053 = vsel %vm2021, 1, 0
      %v2054 = vsel %vm2022, 1, 0
      %v2055 = vsel %vm2023, 1, 0
      %v2056 = vsel %vm2024, 1, 0
      %v2057 = vsel %vm2025, 1, 0
      %v2058 = vsel %vm2026, 1, 0
      %v2059 = vsel %vm2027, 1, 0
      %vm2060 = vcmp.eq.s32.totalorder %v2028, 1
      %vm2061 = vcmp.eq.s32.totalorder %v2029, 1
      %vm2062 = vcmp.eq.s32.totalorder %v2030, 1
      %vm2063 = vcmp.eq.s32.totalorder %v2031, 1
      %vm2064 = vcmp.eq.s32.totalorder %v2032, 1
      %vm2065 = vcmp.eq.s32.totalorder %v2033, 1
      %vm2066 = vcmp.eq.s32.totalorder %v2034, 1
      %vm2067 = vcmp.eq.s32.totalorder %v2035, 1
      %vm2068 = vcmp.eq.s32.totalorder %v2036, 1
      %vm2069 = vcmp.eq.s32.totalorder %v2037, 1
      %vm2070 = vcmp.eq.s32.totalorder %v2038, 1
      %vm2071 = vcmp.eq.s32.totalorder %v2039, 1
      %vm2072 = vcmp.eq.s32.totalorder %v2040, 1
      %vm2073 = vcmp.eq.s32.totalorder %v2041, 1
      %vm2074 = vcmp.eq.s32.totalorder %v2042, 1
      %vm2075 = vcmp.eq.s32.totalorder %v2043, 1
      %vm2076 = vcmp.eq.s32.totalorder %v2044, 1
      %vm2077 = vcmp.eq.s32.totalorder %v2045, 1
      %vm2078 = vcmp.eq.s32.totalorder %v2046, 1
      %vm2079 = vcmp.eq.s32.totalorder %v2047, 1
      %vm2080 = vcmp.eq.s32.totalorder %v2048, 1
      %vm2081 = vcmp.eq.s32.totalorder %v2049, 1
      %vm2082 = vcmp.eq.s32.totalorder %v2050, 1
      %vm2083 = vcmp.eq.s32.totalorder %v2051, 1
      %vm2084 = vcmp.eq.s32.totalorder %v2052, 1
      %vm2085 = vcmp.eq.s32.totalorder %v2053, 1
      %vm2086 = vcmp.eq.s32.totalorder %v2054, 1
      %vm2087 = vcmp.eq.s32.totalorder %v2055, 1
      %vm2088 = vcmp.eq.s32.totalorder %v2056, 1
      %vm2089 = vcmp.eq.s32.totalorder %v2057, 1
      %vm2090 = vcmp.eq.s32.totalorder %v2058, 1
      %vm2091 = vcmp.eq.s32.totalorder %v2059, 1
      %v2092 = vsel %vm2060, %v1352, 0.0
      %v2093 = vsel %vm2061, %v1351, 0.0
      %v2094 = vsel %vm2062, %v1350, 0.0
      %v2095 = vsel %vm2063, %v1349, 0.0
      %v2096 = vsel %vm2064, %v1348, 0.0
      %v2097 = vsel %vm2065, %v1347, 0.0
      %v2098 = vsel %vm2066, %v1346, 0.0
      %v2099 = vsel %vm2067, %v1345, 0.0
      %v2100 = vsel %vm2068, %v1344, 0.0
      %v2101 = vsel %vm2069, %v1343, 0.0
      %v2102 = vsel %vm2070, %v1342, 0.0
      %v2103 = vsel %vm2071, %v1341, 0.0
      %v2104 = vsel %vm2072, %v1340, 0.0
      %v2105 = vsel %vm2073, %v1339, 0.0
      %v2106 = vsel %vm2074, %v1338, 0.0
      %v2107 = vsel %vm2075, %v1337, 0.0
      %v2108 = vsel %vm2076, %v1336, 0.0
      %v2109 = vsel %vm2077, %v1335, 0.0
      %v2110 = vsel %vm2078, %v1334, 0.0
      %v2111 = vsel %vm2079, %v1333, 0.0
      %v2112 = vsel %vm2080, %v1332, 0.0
      %v2113 = vsel %vm2081, %v1331, 0.0
      %v2114 = vsel %vm2082, %v1330, 0.0
      %v2115 = vsel %vm2083, %v1329, 0.0
      %v2116 = vsel %vm2084, %v1328, 0.0
      %v2117 = vsel %vm2085, %v1327, 0.0
      %v2118 = vsel %vm2086, %v1326, 0.0
      %v2119 = vsel %vm2087, %v1325, 0.0
      %v2120 = vsel %vm2088, %v1324, 0.0
      %v2121 = vsel %vm2089, %v1355, 0.0
      %v2122 = vsel %vm2090, %v1354, 0.0
      %v2123 = vsel %vm2091, %v1353, 0.0
      %v2124 = vpack.c.bf16 %v2093, %v2092
      %v2125 = vpack.c.bf16 %v2095, %v2094
      %v2126 = vpack.c.bf16 %v2097, %v2096
      %v2127 = vpack.c.bf16 %v2099, %v2098
      %v2128 = vpack.c.bf16 %v2101, %v2100
      %v2129 = vpack.c.bf16 %v2103, %v2102
      %v2130 = vpack.c.bf16 %v2105, %v2104
      %v2131 = vpack.c.bf16 %v2107, %v2106
      %v2132 = vpack.c.bf16 %v2109, %v2108
      %v2133 = vpack.c.bf16 %v2111, %v2110
      %v2134 = vpack.c.bf16 %v2113, %v2112
      %v2135 = vpack.c.bf16 %v2115, %v2114
      %v2136 = vpack.c.bf16 %v2117, %v2116
      %v2137 = vpack.c.bf16 %v2119, %v2118
      %v2138 = vpack.c.bf16 %v2121, %v2120
      %v2139 = vpack.c.bf16 %v2123, %v2122
      %v2140 = vld [vmem:[%s3] sm:$0xf]
      %v2141 = vld [vmem:[%s3 + $0x4] sm:$0xf]
      %v2142 = vld [vmem:[%s3 + $0x8] sm:$0xf]
      %v2143 = vld [vmem:[%s3 + $0xc] sm:$0xf]
      %v2144 = vld [vmem:[%s3 + $0x10] sm:$0xf]
      %v2145 = vld [vmem:[%s3 + $0x14] sm:$0xf]
      %v2146 = vld [vmem:[%s3 + $0x18] sm:$0xf]
      %v2147 = vld [vmem:[%s3 + $0x1c] sm:$0xf]
      %v2148 = vld [vmem:[%s3 + $0x20] sm:$0xf]
      %v2149 = vld [vmem:[%s3 + $0x24] sm:$0xf]
      %v2150 = vld [vmem:[%s3 + $0x28] sm:$0xf]
      %v2151 = vld [vmem:[%s3 + $0x2c] sm:$0xf]
      %v2152 = vld [vmem:[%s3 + $0x30] sm:$0xf]
      %v2153 = vld [vmem:[%s3 + $0x34] sm:$0xf]
      %v2154 = vld [vmem:[%s3 + $0x38] sm:$0xf]
      %v2155 = vld [vmem:[%s3 + $0x3c] sm:$0xf]
      %v2156 = vld [vmem:[%s3 + $0x40] sm:$0xf]
      %v2157 = vld [vmem:[%s3 + $0x44] sm:$0xf]
      %v2158 = vld [vmem:[%s3 + $0x48] sm:$0xf]
      %v2159 = vld [vmem:[%s3 + $0x4c] sm:$0xf]
      %v2160 = vld [vmem:[%s3 + $0x50] sm:$0xf]
      %v2161 = vld [vmem:[%s3 + $0x54] sm:$0xf]
      %v2162 = vld [vmem:[%s3 + $0x58] sm:$0xf]
      %v2163 = vld [vmem:[%s3 + $0x5c] sm:$0xf]
      %v2164 = vld [vmem:[%s3 + $0x60] sm:$0xf]
      %v2165 = vld [vmem:[%s3 + $0x64] sm:$0xf]
      %v2166 = vld [vmem:[%s3 + $0x68] sm:$0xf]
      %v2167 = vld [vmem:[%s3 + $0x6c] sm:$0xf]
      %v2168 = vld [vmem:[%s3 + $0x70] sm:$0xf]
      %v2169 = vld [vmem:[%s3 + $0x74] sm:$0xf]
      %v2170 = vld [vmem:[%s3 + $0x78] sm:$0xf]
      %v2171 = vld [vmem:[%s3 + $0x7c] sm:$0xf]
      %v2172 = vld [vmem:[%s3 + $0x80] sm:$0xf]
      %v2173 = vld [vmem:[%s3 + $0x84] sm:$0xf]
      %v2174 = vld [vmem:[%s3 + $0x88] sm:$0xf]
      %v2175 = vld [vmem:[%s3 + $0x8c] sm:$0xf]
      %v2176 = vld [vmem:[%s3 + $0x90] sm:$0xf]
      %v2177 = vld [vmem:[%s3 + $0x94] sm:$0xf]
      %v2178 = vld [vmem:[%s3 + $0x98] sm:$0xf]
      %v2179 = vld [vmem:[%s3 + $0x9c] sm:$0xf]
      %v2180 = vld [vmem:[%s3 + $0xa0] sm:$0xf]
      %v2181 = vld [vmem:[%s3 + $0xa4] sm:$0xf]
      %v2182 = vld [vmem:[%s3 + $0xa8] sm:$0xf]
      %v2183 = vld [vmem:[%s3 + $0xac] sm:$0xf]
      %v2184 = vld [vmem:[%s3 + $0xb0] sm:$0xf]
      %v2185 = vld [vmem:[%s3 + $0xb4] sm:$0xf]
      %v2186 = vld [vmem:[%s3 + $0xb8] sm:$0xf]
      %v2187 = vld [vmem:[%s3 + $0xbc] sm:$0xf]
      %v2188 = vld [vmem:[%s3 + $0xc0] sm:$0xf]
      %v2189 = vld [vmem:[%s3 + $0xc4] sm:$0xf]
      %v2190 = vld [vmem:[%s3 + $0xc8] sm:$0xf]
      %v2191 = vld [vmem:[%s3 + $0xcc] sm:$0xf]
      %v2192 = vld [vmem:[%s3 + $0xd0] sm:$0xf]
      %v2193 = vld [vmem:[%s3 + $0xd4] sm:$0xf]
      %v2194 = vld [vmem:[%s3 + $0xd8] sm:$0xf]
      %v2195 = vld [vmem:[%s3 + $0xdc] sm:$0xf]
      %v2196 = vld [vmem:[%s3 + $0xe0] sm:$0xf]
      %v2197 = vld [vmem:[%s3 + $0xe4] sm:$0xf]
      %v2198 = vld [vmem:[%s3 + $0xe8] sm:$0xf]
      %v2199 = vld [vmem:[%s3 + $0xec] sm:$0xf]
      %v2200 = vld [vmem:[%s3 + $0xf0] sm:$0xf]
      %v2201 = vld [vmem:[%s3 + $0xf4] sm:$0xf]
      %v2202 = vld [vmem:[%s3 + $0xf8] sm:$0xf]
      %v2203 = vld [vmem:[%s3 + $0xfc] sm:$0xf]
      %v2204 = vld [vmem:[%s3 + $0x100] sm:$0xf]
      %v2205 = vld [vmem:[%s3 + $0x104] sm:$0xf]
      %v2206 = vld [vmem:[%s3 + $0x108] sm:$0xf]
      %v2207 = vld [vmem:[%s3 + $0x10c] sm:$0xf]
      %v2208 = vld [vmem:[%s3 + $0x110] sm:$0xf]
      %v2209 = vld [vmem:[%s3 + $0x114] sm:$0xf]
      %v2210 = vld [vmem:[%s3 + $0x118] sm:$0xf]
      %v2211 = vld [vmem:[%s3 + $0x11c] sm:$0xf]
      %v2212 = vld [vmem:[%s3 + $0x120] sm:$0xf]
      %v2213 = vld [vmem:[%s3 + $0x124] sm:$0xf]
      %v2214 = vld [vmem:[%s3 + $0x128] sm:$0xf]
      %v2215 = vld [vmem:[%s3 + $0x12c] sm:$0xf]
      %v2216 = vld [vmem:[%s3 + $0x130] sm:$0xf]
      %v2217 = vld [vmem:[%s3 + $0x134] sm:$0xf]
      %v2218 = vld [vmem:[%s3 + $0x138] sm:$0xf]
      %v2219 = vld [vmem:[%s3 + $0x13c] sm:$0xf]
      %v2220 = vld [vmem:[%s3 + $0x140] sm:$0xf]
      %v2221 = vld [vmem:[%s3 + $0x144] sm:$0xf]
      %v2222 = vld [vmem:[%s3 + $0x148] sm:$0xf]
      %v2223 = vld [vmem:[%s3 + $0x14c] sm:$0xf]
      %v2224 = vld [vmem:[%s3 + $0x150] sm:$0xf]
      %v2225 = vld [vmem:[%s3 + $0x154] sm:$0xf]
      %v2226 = vld [vmem:[%s3 + $0x158] sm:$0xf]
      %v2227 = vld [vmem:[%s3 + $0x15c] sm:$0xf]
      %v2228 = vld [vmem:[%s3 + $0x160] sm:$0xf]
      %v2229 = vld [vmem:[%s3 + $0x164] sm:$0xf]
      %v2230 = vld [vmem:[%s3 + $0x168] sm:$0xf]
      %v2231 = vld [vmem:[%s3 + $0x16c] sm:$0xf]
      %v2232 = vld [vmem:[%s3 + $0x170] sm:$0xf]
      %v2233 = vld [vmem:[%s3 + $0x174] sm:$0xf]
      %v2234 = vld [vmem:[%s3 + $0x178] sm:$0xf]
      %v2235 = vld [vmem:[%s3 + $0x17c] sm:$0xf]
      %v2236 = vld [vmem:[%s3 + $0x180] sm:$0xf]
      %v2237 = vld [vmem:[%s3 + $0x184] sm:$0xf]
      %v2238 = vld [vmem:[%s3 + $0x188] sm:$0xf]
      %v2239 = vld [vmem:[%s3 + $0x18c] sm:$0xf]
      %v2240 = vld [vmem:[%s3 + $0x190] sm:$0xf]
      %v2241 = vld [vmem:[%s3 + $0x194] sm:$0xf]
      %v2242 = vld [vmem:[%s3 + $0x198] sm:$0xf]
      %v2243 = vld [vmem:[%s3 + $0x19c] sm:$0xf]
      %v2244 = vld [vmem:[%s3 + $0x1a0] sm:$0xf]
      %v2245 = vld [vmem:[%s3 + $0x1a4] sm:$0xf]
      %v2246 = vld [vmem:[%s3 + $0x1a8] sm:$0xf]
      %v2247 = vld [vmem:[%s3 + $0x1ac] sm:$0xf]
      %v2248 = vld [vmem:[%s3 + $0x1b0] sm:$0xf]
      %v2249 = vld [vmem:[%s3 + $0x1b4] sm:$0xf]
      %v2250 = vld [vmem:[%s3 + $0x1b8] sm:$0xf]
      %v2251 = vld [vmem:[%s3 + $0x1bc] sm:$0xf]
      %v2252 = vld [vmem:[%s3 + $0x1c0] sm:$0xf]
      %v2253 = vld [vmem:[%s3 + $0x1c4] sm:$0xf]
      %v2254 = vld [vmem:[%s3 + $0x1c8] sm:$0xf]
      %v2255 = vld [vmem:[%s3 + $0x1cc] sm:$0xf]
      %v2256 = vld [vmem:[%s3 + $0x1d0] sm:$0xf]
      %v2257 = vld [vmem:[%s3 + $0x1d4] sm:$0xf]
      %v2258 = vld [vmem:[%s3 + $0x1d8] sm:$0xf]
      %v2259 = vld [vmem:[%s3 + $0x1dc] sm:$0xf]
      %v2260 = vld [vmem:[%s3 + $0x1e0] sm:$0xf]
      %v2261 = vld [vmem:[%s3 + $0x1e4] sm:$0xf]
      %v2262 = vld [vmem:[%s3 + $0x1e8] sm:$0xf]
      %v2263 = vld [vmem:[%s3 + $0x1ec] sm:$0xf]
      %v2264 = vld [vmem:[%s3 + $0x1f0] sm:$0xf]
      %v2265 = vld [vmem:[%s3 + $0x1f4] sm:$0xf]
      %v2266 = vld [vmem:[%s3 + $0x1f8] sm:$0xf]
      %v2267 = vld [vmem:[%s3 + $0x1fc] sm:$0xf]
      %v2268 = vld [vmem:[%s3 + $0x200] sm:$0xf]
      %v2269 = vld [vmem:[%s3 + $0x204] sm:$0xf]
      %v2270 = vld [vmem:[%s3 + $0x208] sm:$0xf]
      %v2271 = vld [vmem:[%s3 + $0x20c] sm:$0xf]
      %v2272 = vld [vmem:[%s3 + $0x210] sm:$0xf]
      %v2273 = vld [vmem:[%s3 + $0x214] sm:$0xf]
      %v2274 = vld [vmem:[%s3 + $0x218] sm:$0xf]
      %v2275 = vld [vmem:[%s3 + $0x21c] sm:$0xf]
      %v2276 = vld [vmem:[%s3 + $0x220] sm:$0xf]
      %v2277 = vld [vmem:[%s3 + $0x224] sm:$0xf]
      %v2278 = vld [vmem:[%s3 + $0x228] sm:$0xf]
      %v2279 = vld [vmem:[%s3 + $0x22c] sm:$0xf]
      %v2280 = vld [vmem:[%s3 + $0x230] sm:$0xf]
      %v2281 = vld [vmem:[%s3 + $0x234] sm:$0xf]
      %v2282 = vld [vmem:[%s3 + $0x238] sm:$0xf]
      %v2283 = vld [vmem:[%s3 + $0x23c] sm:$0xf]
      %v2428 = vunpack.c.l.b16 %v2140
      %v2429 = vunpack.c.l.b16 %v2141
      %v2430 = vunpack.c.l.b16 %v2142
      %v2431 = vunpack.c.l.b16 %v2143
      %v2432 = vunpack.c.l.b16 %v2144
      %v2433 = vunpack.c.l.b16 %v2145
      %v2434 = vunpack.c.l.b16 %v2146
      %v2435 = vunpack.c.l.b16 %v2147
      %v2436 = vunpack.c.l.b16 %v2148
      %v2437 = vunpack.c.l.b16 %v2149
      %v2438 = vunpack.c.l.b16 %v2150
      %v2439 = vunpack.c.l.b16 %v2151
      %v2440 = vunpack.c.l.b16 %v2152
      %v2441 = vunpack.c.l.b16 %v2153
      %v2442 = vunpack.c.l.b16 %v2154
      %v2443 = vunpack.c.l.b16 %v2155
      %v2444 = vunpack.c.l.b16 %v2156
      %v2445 = vunpack.c.l.b16 %v2157
      %v2446 = vunpack.c.l.b16 %v2158
      %v2447 = vunpack.c.l.b16 %v2159
      %v2448 = vunpack.c.l.b16 %v2160
      %v2449 = vunpack.c.l.b16 %v2161
      %v2450 = vunpack.c.l.b16 %v2162
      %v2451 = vunpack.c.l.b16 %v2163
      %v2452 = vunpack.c.l.b16 %v2164
      %v2453 = vunpack.c.l.b16 %v2165
      %v2454 = vunpack.c.l.b16 %v2166
      %v2455 = vunpack.c.l.b16 %v2167
      %v2456 = vunpack.c.l.b16 %v2168
      %v2457 = vunpack.c.l.b16 %v2169
      %v2458 = vunpack.c.l.b16 %v2170
      %v2459 = vunpack.c.l.b16 %v2171
      %v2460 = vunpack.c.l.b16 %v2172
      %v2461 = vunpack.c.l.b16 %v2173
      %v2462 = vunpack.c.l.b16 %v2174
      %v2463 = vunpack.c.l.b16 %v2175
      %v2464 = vunpack.c.l.b16 %v2176
      %v2465 = vunpack.c.l.b16 %v2177
      %v2466 = vunpack.c.l.b16 %v2178
      %v2467 = vunpack.c.l.b16 %v2179
      %v2468 = vunpack.c.l.b16 %v2180
      %v2469 = vunpack.c.l.b16 %v2181
      %v2470 = vunpack.c.l.b16 %v2182
      %v2471 = vunpack.c.l.b16 %v2183
      %v2472 = vunpack.c.l.b16 %v2184
      %v2473 = vunpack.c.l.b16 %v2185
      %v2474 = vunpack.c.l.b16 %v2186
      %v2475 = vunpack.c.l.b16 %v2187
      %v2476 = vunpack.c.l.b16 %v2188
      %v2477 = vunpack.c.l.b16 %v2189
      %v2478 = vunpack.c.l.b16 %v2190
      %v2479 = vunpack.c.l.b16 %v2191
      %v2480 = vunpack.c.l.b16 %v2192
      %v2481 = vunpack.c.l.b16 %v2193
      %v2482 = vunpack.c.l.b16 %v2194
      %v2483 = vunpack.c.l.b16 %v2195
      %v2484 = vunpack.c.l.b16 %v2196
      %v2485 = vunpack.c.l.b16 %v2197
      %v2486 = vunpack.c.l.b16 %v2198
      %v2487 = vunpack.c.l.b16 %v2199
      %v2488 = vunpack.c.l.b16 %v2200
      %v2489 = vunpack.c.l.b16 %v2201
      %v2490 = vunpack.c.l.b16 %v2202
      %v2491 = vunpack.c.l.b16 %v2203
      %v2492 = vunpack.c.l.b16 %v2204
      %v2493 = vunpack.c.l.b16 %v2205
      %v2494 = vunpack.c.l.b16 %v2206
      %v2495 = vunpack.c.l.b16 %v2207
      %v2496 = vunpack.c.l.b16 %v2208
      %v2497 = vunpack.c.l.b16 %v2209
      %v2498 = vunpack.c.l.b16 %v2210
      %v2499 = vunpack.c.l.b16 %v2211
      %v2500 = vunpack.c.l.b16 %v2212
      %v2501 = vunpack.c.l.b16 %v2213
      %v2502 = vunpack.c.l.b16 %v2214
      %v2503 = vunpack.c.l.b16 %v2215
      %v2504 = vunpack.c.l.b16 %v2216
      %v2505 = vunpack.c.l.b16 %v2217
      %v2506 = vunpack.c.l.b16 %v2218
      %v2507 = vunpack.c.l.b16 %v2219
      %v2508 = vunpack.c.l.b16 %v2220
      %v2509 = vunpack.c.l.b16 %v2221
      %v2510 = vunpack.c.l.b16 %v2222
      %v2511 = vunpack.c.l.b16 %v2223
      %v2512 = vunpack.c.l.b16 %v2224
      %v2513 = vunpack.c.l.b16 %v2225
      %v2514 = vunpack.c.l.b16 %v2226
      %v2515 = vunpack.c.l.b16 %v2227
      %v2516 = vunpack.c.l.b16 %v2228
      %v2517 = vunpack.c.l.b16 %v2229
      %v2518 = vunpack.c.l.b16 %v2230
      %v2519 = vunpack.c.l.b16 %v2231
      %v2520 = vunpack.c.l.b16 %v2232
      %v2521 = vunpack.c.l.b16 %v2233
      %v2522 = vunpack.c.l.b16 %v2234
      %v2523 = vunpack.c.l.b16 %v2235
      %v2524 = vunpack.c.l.b16 %v2236
      %v2525 = vunpack.c.l.b16 %v2237
      %v2526 = vunpack.c.l.b16 %v2238
      %v2527 = vunpack.c.l.b16 %v2239
      %v2528 = vunpack.c.l.b16 %v2240
      %v2529 = vunpack.c.l.b16 %v2241
      %v2530 = vunpack.c.l.b16 %v2242
      %v2531 = vunpack.c.l.b16 %v2243
      %v2532 = vunpack.c.l.b16 %v2244
      %v2533 = vunpack.c.l.b16 %v2245
      %v2534 = vunpack.c.l.b16 %v2246
      %v2535 = vunpack.c.l.b16 %v2247
      %v2536 = vunpack.c.l.b16 %v2248
      %v2537 = vunpack.c.l.b16 %v2249
      %v2538 = vunpack.c.l.b16 %v2250
      %v2539 = vunpack.c.l.b16 %v2251
      %v2540 = vunpack.c.l.b16 %v2252
      %v2541 = vunpack.c.l.b16 %v2253
      %v2542 = vunpack.c.l.b16 %v2254
      %v2543 = vunpack.c.l.b16 %v2255
      %v2544 = vunpack.c.l.b16 %v2256
      %v2545 = vunpack.c.l.b16 %v2257
      %v2546 = vunpack.c.l.b16 %v2258
      %v2547 = vunpack.c.l.b16 %v2259
      %v2548 = vunpack.c.l.b16 %v2260
      %v2549 = vunpack.c.l.b16 %v2261
      %v2550 = vunpack.c.l.b16 %v2262
      %v2551 = vunpack.c.l.b16 %v2263
      %v2552 = vunpack.c.l.b16 %v2264
      %v2553 = vunpack.c.l.b16 %v2265
      %v2554 = vunpack.c.l.b16 %v2266
      %v2555 = vunpack.c.l.b16 %v2267
      %v2556 = vunpack.c.l.b16 %v2268
      %v2557 = vunpack.c.l.b16 %v2269
      %v2558 = vunpack.c.l.b16 %v2270
      %v2559 = vunpack.c.l.b16 %v2271
      %v2560 = vunpack.c.l.b16 %v2272
      %v2561 = vunpack.c.l.b16 %v2273
      %v2562 = vunpack.c.l.b16 %v2274
      %v2563 = vunpack.c.l.b16 %v2275
      %v2564 = vunpack.c.l.b16 %v2276
      %v2565 = vunpack.c.l.b16 %v2277
      %v2566 = vunpack.c.l.b16 %v2278
      %v2567 = vunpack.c.l.b16 %v2279
      %v2568 = vunpack.c.l.b16 %v2280
      %v2569 = vunpack.c.l.b16 %v2281
      %v2570 = vunpack.c.l.b16 %v2282
      %v2571 = vunpack.c.l.b16 %v2283
      %v2572 = vpack.c.b16 %v2429, %v2428
      %v2573 = vpack.c.b16 %v2431, %v2430
      %v2574 = vpack.c.b16 %v2433, %v2432
      %v2575 = vpack.c.b16 %v2435, %v2434
      %v2576 = vpack.c.b16 %v2437, %v2436
      %v2577 = vpack.c.b16 %v2439, %v2438
      %v2578 = vpack.c.b16 %v2441, %v2440
      %v2579 = vpack.c.b16 %v2443, %v2442
      %v2580 = vpack.c.b16 %v2445, %v2444
      %v2581 = vpack.c.b16 %v2447, %v2446
      %v2582 = vpack.c.b16 %v2449, %v2448
      %v2583 = vpack.c.b16 %v2451, %v2450
      %v2584 = vpack.c.b16 %v2453, %v2452
      %v2585 = vpack.c.b16 %v2455, %v2454
      %v2586 = vpack.c.b16 %v2457, %v2456
      %v2587 = vpack.c.b16 %v2459, %v2458
      %v2588 = vpack.c.b16 %v2461, %v2460
      %v2589 = vpack.c.b16 %v2463, %v2462
      %v2590 = vpack.c.b16 %v2465, %v2464
      %v2591 = vpack.c.b16 %v2467, %v2466
      %v2592 = vpack.c.b16 %v2469, %v2468
      %v2593 = vpack.c.b16 %v2471, %v2470
      %v2594 = vpack.c.b16 %v2473, %v2472
      %v2595 = vpack.c.b16 %v2475, %v2474
      %v2596 = vpack.c.b16 %v2477, %v2476
      %v2597 = vpack.c.b16 %v2479, %v2478
      %v2598 = vpack.c.b16 %v2481, %v2480
      %v2599 = vpack.c.b16 %v2483, %v2482
      %v2600 = vpack.c.b16 %v2485, %v2484
      %v2601 = vpack.c.b16 %v2487, %v2486
      %v2602 = vpack.c.b16 %v2489, %v2488
      %v2603 = vpack.c.b16 %v2491, %v2490
      %v2604 = vpack.c.b16 %v2493, %v2492
      %v2605 = vpack.c.b16 %v2495, %v2494
      %v2606 = vpack.c.b16 %v2497, %v2496
      %v2607 = vpack.c.b16 %v2499, %v2498
      %v2608 = vpack.c.b16 %v2501, %v2500
      %v2609 = vpack.c.b16 %v2503, %v2502
      %v2610 = vpack.c.b16 %v2505, %v2504
      %v2611 = vpack.c.b16 %v2507, %v2506
      %v2612 = vpack.c.b16 %v2509, %v2508
      %v2613 = vpack.c.b16 %v2511, %v2510
      %v2614 = vpack.c.b16 %v2513, %v2512
      %v2615 = vpack.c.b16 %v2515, %v2514
      %v2616 = vpack.c.b16 %v2517, %v2516
      %v2617 = vpack.c.b16 %v2519, %v2518
      %v2618 = vpack.c.b16 %v2521, %v2520
      %v2619 = vpack.c.b16 %v2523, %v2522
      %v2620 = vpack.c.b16 %v2525, %v2524
      %v2621 = vpack.c.b16 %v2527, %v2526
      %v2622 = vpack.c.b16 %v2529, %v2528
      %v2623 = vpack.c.b16 %v2531, %v2530
      %v2624 = vpack.c.b16 %v2533, %v2532
      %v2625 = vpack.c.b16 %v2535, %v2534
      %v2626 = vpack.c.b16 %v2537, %v2536
      %v2627 = vpack.c.b16 %v2539, %v2538
      %v2628 = vpack.c.b16 %v2541, %v2540
      %v2629 = vpack.c.b16 %v2543, %v2542
      %v2630 = vpack.c.b16 %v2545, %v2544
      %v2631 = vpack.c.b16 %v2547, %v2546
      %v2632 = vpack.c.b16 %v2549, %v2548
      %v2633 = vpack.c.b16 %v2551, %v2550
      %v2634 = vpack.c.b16 %v2553, %v2552
      %v2635 = vpack.c.b16 %v2555, %v2554
      %v2636 = vpack.c.b16 %v2557, %v2556
      %v2637 = vpack.c.b16 %v2559, %v2558
      %v2638 = vpack.c.b16 %v2561, %v2560
      %v2639 = vpack.c.b16 %v2563, %v2562
      %v2640 = vpack.c.b16 %v2565, %v2564
      %v2641 = vpack.c.b16 %v2567, %v2566
      %v2642 = vpack.c.b16 %v2569, %v2568
      %v2643 = vpack.c.b16 %v2571, %v2570
      %2716 = vmatprep.subr.bf16.mxu0 0
      %2717 = vmatpush1.bf16.msra.mxu0 %v2572
      %2718 = vmatprep.subr.bf16.mxu0 0
      %2719 = vmatpush1.bf16.msra.mxu0 %v2573
      %2720 = vmatprep.subr.bf16.mxu0 0
      %2721 = vmatpush1.bf16.msra.mxu0 %v2574
      %2722 = vmatprep.subr.bf16.mxu0 0
      %2723 = vmatpush1.bf16.msra.mxu0 %v2575
      %2724 = vmatprep.subr.bf16.mxu0 0
      %2725 = vmatpush1.bf16.msra.mxu0 %v2576
      %2726 = vmatprep.subr.bf16.mxu0 0
      %2727 = vmatpush1.bf16.msra.mxu0 %v2577
      %2728 = vmatprep.subr.bf16.mxu0 0
      %2729 = vmatpush1.bf16.msra.mxu0 %v2578
      %2730 = vmatprep.subr.bf16.mxu0 0
      %2731 = vmatpush1.bf16.msra.mxu0 %v2579
      %2732 = vmatprep.subr.bf16.mxu0 0
      %2733 = vmatpush1.bf16.msra.mxu0 %v2580
      %2734 = vmatprep.subr.bf16.mxu0 0
      %2735 = vmatpush1.bf16.msra.mxu0 %v2581
      %2736 = vmatprep.subr.bf16.mxu0 0
      %2737 = vmatpush1.bf16.msra.mxu0 %v2582
      %2738 = vmatprep.subr.bf16.mxu0 0
      %2739 = vmatpush1.bf16.msra.mxu0 %v2583
      %2740 = vmatprep.subr.bf16.mxu0 0
      %2741 = vmatpush1.bf16.msra.mxu0 %v2584
      %2742 = vmatprep.subr.bf16.mxu0 0
      %2743 = vmatpush1.bf16.msra.mxu0 %v2585
      %2744 = vmatprep.subr.bf16.mxu0 0
      %2745 = vmatpush1.bf16.msra.mxu0 %v2586
      %2746 = vmatprep.subr.bf16.mxu0 0
      %2747 = vmatpush1.bf16.msra.mxu0 %v2587
      %2748 = vmatprep.mubr.bf16.mxu0 %v1275
      %2749 = vmatmul.mubr.bf16.gmra.mrb[0].mxu0 %v1163
      %v2750 = vpop.f32.mrb[0].mxu0
      %v2751 = vadd.f32 0.0, %v2750
      %v2752 = vpop.f32.mrb[0].mxu0
      %v2753 = vpop.f32.mrb[0].mxu0
      %v2754 = vadd.f32 0.0, %v2753
      %v2755 = vpop.f32.mrb[0].mxu0
      %2756 = vmatprep.mubr.bf16.mxu0 %v1276
      %2757 = vmatmul.mubr.bf16.gmra.mrb[0].mxu0 %v1164
      %v2758 = vpop.f32.mrb[0].mxu0
      %v2759 = vadd.f32 0.0, %v2758
      %v2760 = vpop.f32.mrb[0].mxu0
      %v2761 = vpop.f32.mrb[0].mxu0
      %v2762 = vadd.f32 0.0, %v2761
      %v2763 = vpop.f32.mrb[0].mxu0
      %2764 = vmatprep.mubr.bf16.mxu0 %v1277
      %2765 = vmatmul.mubr.bf16.gmra.mrb[0].mxu0 %v1165
      %v2766 = vpop.f32.mrb[0].mxu0
      %v2767 = vadd.f32 0.0, %v2766
      %v2768 = vpop.f32.mrb[0].mxu0
      %v2769 = vpop.f32.mrb[0].mxu0
      %v2770 = vadd.f32 0.0, %v2769
      %v2771 = vpop.f32.mrb[0].mxu0
      %2772 = vmatprep.mubr.bf16.mxu0 %v1278
      %2773 = vmatmul.mubr.bf16.gmra.mrb[0].mxu0 %v1166
      %v2774 = vpop.f32.mrb[0].mxu0
      %v2775 = vadd.f32 0.0, %v2774
      %v2776 = vpop.f32.mrb[0].mxu0
      %v2777 = vpop.f32.mrb[0].mxu0
      %v2778 = vadd.f32 0.0, %v2777
      %v2779 = vpop.f32.mrb[0].mxu0
      %2780 = vmatprep.mubr.bf16.mxu0 %v1279
      %2781 = vmatmul.mubr.bf16.gmra.mrb[0].mxu0 %v1167
      %v2782 = vpop.f32.mrb[0].mxu0
      %v2783 = vadd.f32 0.0, %v2782
      %v2784 = vpop.f32.mrb[0].mxu0
      %v2785 = vpop.f32.mrb[0].mxu0
      %v2786 = vadd.f32 0.0, %v2785
      %v2787 = vpop.f32.mrb[0].mxu0
      %2788 = vmatprep.mubr.bf16.mxu0 %v1280
      %2789 = vmatmul.mubr.bf16.gmra.mrb[0].mxu0 %v1168
      %v2790 = vpop.f32.mrb[0].mxu0
      %v2791 = vadd.f32 0.0, %v2790
      %v2792 = vpop.f32.mrb[0].mxu0
      %v2793 = vpop.f32.mrb[0].mxu0
      %v2794 = vadd.f32 0.0, %v2793
      %v2795 = vpop.f32.mrb[0].mxu0
      %2796 = vmatprep.mubr.bf16.mxu0 %v1281
      %2797 = vmatmul.mubr.bf16.gmra.mrb[0].mxu0 %v1169
      %v2798 = vpop.f32.mrb[0].mxu0
      %v2799 = vadd.f32 0.0, %v2798
      %v2800 = vpop.f32.mrb[0].mxu0
      %v2801 = vpop.f32.mrb[0].mxu0
      %v2802 = vadd.f32 0.0, %v2801
      %v2803 = vpop.f32.mrb[0].mxu0
      %2804 = vmatprep.mubr.bf16.mxu0 %v1282
      %2805 = vmatmul.mubr.bf16.gmra.mrb[0].mxu0 %v1170
      %v2806 = vpop.f32.mrb[0].mxu0
      %v2807 = vadd.f32 0.0, %v2806
      %v2808 = vpop.f32.mrb[0].mxu0
      %v2809 = vpop.f32.mrb[0].mxu0
      %v2810 = vadd.f32 0.0, %v2809
      %v2811 = vpop.f32.mrb[0].mxu0
      %2812 = vmatprep.mubr.bf16.mxu0 %v1283
      %2813 = vmatmul.mubr.bf16.gmra.mrb[0].mxu0 %v1171
      %v2814 = vpop.f32.mrb[0].mxu0
      %v2815 = vadd.f32 0.0, %v2814
      %v2816 = vpop.f32.mrb[0].mxu0
      %v2817 = vpop.f32.mrb[0].mxu0
      %v2818 = vadd.f32 0.0, %v2817
      %v2819 = vpop.f32.mrb[0].mxu0
      %2820 = vmatprep.mubr.bf16.mxu0 %v1284
      %2821 = vmatmul.mubr.bf16.gmra.mrb[0].mxu0 %v1172
      %v2822 = vpop.f32.mrb[0].mxu0
      %v2823 = vadd.f32 0.0, %v2822
      %v2824 = vpop.f32.mrb[0].mxu0
      %v2825 = vpop.f32.mrb[0].mxu0
      %v2826 = vadd.f32 0.0, %v2825
      %v2827 = vpop.f32.mrb[0].mxu0
      %2828 = vmatprep.mubr.bf16.mxu0 %v1285
      %2829 = vmatmul.mubr.bf16.gmra.mrb[0].mxu0 %v1173
      %v2830 = vpop.f32.mrb[0].mxu0
      %v2831 = vadd.f32 0.0, %v2830
      %v2832 = vpop.f32.mrb[0].mxu0
      %v2833 = vpop.f32.mrb[0].mxu0
      %v2834 = vadd.f32 0.0, %v2833
      %v2835 = vpop.f32.mrb[0].mxu0
      %2836 = vmatprep.mubr.bf16.mxu0 %v1286
      %2837 = vmatmul.mubr.bf16.gmra.mrb[0].mxu0 %v1174
      %v2838 = vpop.f32.mrb[0].mxu0
      %v2839 = vadd.f32 0.0, %v2838
      %v2840 = vpop.f32.mrb[0].mxu0
      %v2841 = vpop.f32.mrb[0].mxu0
      %v2842 = vadd.f32 0.0, %v2841
      %v2843 = vpop.f32.mrb[0].mxu0
      %2844 = vmatprep.mubr.bf16.mxu0 %v1287
      %2845 = vmatmul.mubr.bf16.gmra.mrb[0].mxu0 %v1175
      %v2846 = vpop.f32.mrb[0].mxu0
      %v2847 = vadd.f32 0.0, %v2846
      %v2848 = vpop.f32.mrb[0].mxu0
      %v2849 = vpop.f32.mrb[0].mxu0
      %v2850 = vadd.f32 0.0, %v2849
      %v2851 = vpop.f32.mrb[0].mxu0
      %2852 = vmatprep.mubr.bf16.mxu0 %v1288
      %2853 = vmatmul.mubr.bf16.gmra.mrb[0].mxu0 %v1176
      %v2854 = vpop.f32.mrb[0].mxu0
      %v2855 = vadd.f32 0.0, %v2854
      %v2856 = vpop.f32.mrb[0].mxu0
      %v2857 = vpop.f32.mrb[0].mxu0
      %v2858 = vadd.f32 0.0, %v2857
      %v2859 = vpop.f32.mrb[0].mxu0
      %2860 = vmatprep.mubr.bf16.mxu0 %v1289
      %2861 = vmatmul.mubr.bf16.gmra.mrb[0].mxu0 %v1177
      %v2862 = vpop.f32.mrb[0].mxu0
      %v2863 = vadd.f32 0.0, %v2862
      %v2864 = vpop.f32.mrb[0].mxu0
      %v2865 = vpop.f32.mrb[0].mxu0
      %v2866 = vadd.f32 0.0, %v2865
      %v2867 = vpop.f32.mrb[0].mxu0
      %2868 = vmatprep.mubr.bf16.mxu0 %v1290
      %2869 = vmatmul.mubr.bf16.gmra.mrb[0].mxu0 %v1178
      %v2870 = vpop.f32.mrb[0].mxu0
      %v2871 = vadd.f32 0.0, %v2870
      %v2872 = vpop.f32.mrb[0].mxu0
      %v2873 = vpop.f32.mrb[0].mxu0
      %v2874 = vadd.f32 0.0, %v2873
      %v2875 = vpop.f32.mrb[0].mxu0
      %2876 = vdwg.mxu0
      %2877 = vmatprep.subr.bf16.mxu0 0
      %2878 = vmatpush1.bf16.msra.mxu0 %v2588
      %2879 = vmatprep.subr.bf16.mxu0 0
      %2880 = vmatpush1.bf16.msra.mxu0 %v2589
      %2881 = vmatprep.subr.bf16.mxu0 0
      %2882 = vmatpush1.bf16.msra.mxu0 %v2590
      %2883 = vmatprep.subr.bf16.mxu0 0
      %2884 = vmatpush1.bf16.msra.mxu0 %v2591
      %2885 = vmatprep.subr.bf16.mxu0 0
      %2886 = vmatpush1.bf16.msra.mxu0 %v2592
      %2887 = vmatprep.subr.bf16.mxu0 0
      %2888 = vmatpush1.bf16.msra.mxu0 %v2593
      %2889 = vmatprep.subr.bf16.mxu0 0
      %2890 = vmatpush1.bf16.msra.mxu0 %v2594
      %2891 = vmatprep.subr.bf16.mxu0 0
      %2892 = vmatpush1.bf16.msra.mxu0 %v2595
      %2893 = vmatprep.subr.bf16.mxu0 0
      %2894 = vmatpush1.bf16.msra.mxu0 %v2596
      %2895 = vmatprep.subr.bf16.mxu0 0
      %2896 = vmatpush1.bf16.msra.mxu0 %v2597
      %2897 = vmatprep.subr.bf16.mxu0 0
      %2898 = vmatpush1.bf16.msra.mxu0 %v2598
      %2899 = vmatprep.subr.bf16.mxu0 0
      %2900 = vmatpush1.bf16.msra.mxu0 %v2599
      %2901 = vmatprep.subr.bf16.mxu0 0
      %2902 = vmatpush1.bf16.msra.mxu0 %v2600
      %2903 = vmatprep.subr.bf16.mxu0 0
      %2904 = vmatpush1.bf16.msra.mxu0 %v2601
      %2905 = vmatprep.subr.bf16.mxu0 0
      %2906 = vmatpush1.bf16.msra.mxu0 %v2602
      %2907 = vmatprep.subr.bf16.mxu0 0
      %2908 = vmatpush1.bf16.msra.mxu0 %v2603
      %2909 = vmatprep.mubr.bf16.mxu0 %v1596
      %2910 = vmatmul.mubr.bf16.gmra.mrb[0].mxu0 %v1484
      %v2911 = vpop.f32.mrb[0].mxu0
      %v2912 = vadd.f32 %v2751, %v2911
      %v2913 = vpop.f32.mrb[0].mxu0
      %v2914 = vpop.f32.mrb[0].mxu0
      %v2915 = vadd.f32 %v2754, %v2914
      %v2916 = vpop.f32.mrb[0].mxu0
      %2917 = vmatprep.mubr.bf16.mxu0 %v1597
      %2918 = vmatmul.mubr.bf16.gmra.mrb[0].mxu0 %v1485
      %v2919 = vpop.f32.mrb[0].mxu0
      %v2920 = vadd.f32 %v2759, %v2919
      %v2921 = vpop.f32.mrb[0].mxu0
      %v2922 = vpop.f32.mrb[0].mxu0
      %v2923 = vadd.f32 %v2762, %v2922
      %v2924 = vpop.f32.mrb[0].mxu0
      %2925 = vmatprep.mubr.bf16.mxu0 %v1598
      %2926 = vmatmul.mubr.bf16.gmra.mrb[0].mxu0 %v1486
      %v2927 = vpop.f32.mrb[0].mxu0
      %v2928 = vadd.f32 %v2767, %v2927
      %v2929 = vpop.f32.mrb[0].mxu0
      %v2930 = vpop.f32.mrb[0].mxu0
      %v2931 = vadd.f32 %v2770, %v2930
      %v2932 = vpop.f32.mrb[0].mxu0
      %2933 = vmatprep.mubr.bf16.mxu0 %v1599
      %2934 = vmatmul.mubr.bf16.gmra.mrb[0].mxu0 %v1487
      %v2935 = vpop.f32.mrb[0].mxu0
      %v2936 = vadd.f32 %v2775, %v2935
      %v2937 = vpop.f32.mrb[0].mxu0
      %v2938 = vpop.f32.mrb[0].mxu0
      %v2939 = vadd.f32 %v2778, %v2938
      %v2940 = vpop.f32.mrb[0].mxu0
      %2941 = vmatprep.mubr.bf16.mxu0 %v1600
      %2942 = vmatmul.mubr.bf16.gmra.mrb[0].mxu0 %v1488
      %v2943 = vpop.f32.mrb[0].mxu0
      %v2944 = vadd.f32 %v2783, %v2943
      %v2945 = vpop.f32.mrb[0].mxu0
      %v2946 = vpop.f32.mrb[0].mxu0
      %v2947 = vadd.f32 %v2786, %v2946
      %v2948 = vpop.f32.mrb[0].mxu0
      %2949 = vmatprep.mubr.bf16.mxu0 %v1601
      %2950 = vmatmul.mubr.bf16.gmra.mrb[0].mxu0 %v1489
      %v2951 = vpop.f32.mrb[0].mxu0
      %v2952 = vadd.f32 %v2791, %v2951
      %v2953 = vpop.f32.mrb[0].mxu0
      %v2954 = vpop.f32.mrb[0].mxu0
      %v2955 = vadd.f32 %v2794, %v2954
      %v2956 = vpop.f32.mrb[0].mxu0
      %2957 = vmatprep.mubr.bf16.mxu0 %v1602
      %2958 = vmatmul.mubr.bf16.gmra.mrb[0].mxu0 %v1490
      %v2959 = vpop.f32.mrb[0].mxu0
      %v2960 = vadd.f32 %v2799, %v2959
      %v2961 = vpop.f32.mrb[0].mxu0
      %v2962 = vpop.f32.mrb[0].mxu0
      %v2963 = vadd.f32 %v2802, %v2962
      %v2964 = vpop.f32.mrb[0].mxu0
      %2965 = vmatprep.mubr.bf16.mxu0 %v1603
      %2966 = vmatmul.mubr.bf16.gmra.mrb[0].mxu0 %v1491
      %v2967 = vpop.f32.mrb[0].mxu0
      %v2968 = vadd.f32 %v2807, %v2967
      %v2969 = vpop.f32.mrb[0].mxu0
      %v2970 = vpop.f32.mrb[0].mxu0
      %v2971 = vadd.f32 %v2810, %v2970
      %v2972 = vpop.f32.mrb[0].mxu0
      %2973 = vmatprep.mubr.bf16.mxu0 %v1604
      %2974 = vmatmul.mubr.bf16.gmra.mrb[0].mxu0 %v1492
      %v2975 = vpop.f32.mrb[0].mxu0
      %v2976 = vadd.f32 %v2815, %v2975
      %v2977 = vpop.f32.mrb[0].mxu0
      %v2978 = vpop.f32.mrb[0].mxu0
      %v2979 = vadd.f32 %v2818, %v2978
      %v2980 = vpop.f32.mrb[0].mxu0
      %2981 = vmatprep.mubr.bf16.mxu0 %v1605
      %2982 = vmatmul.mubr.bf16.gmra.mrb[0].mxu0 %v1493
      %v2983 = vpop.f32.mrb[0].mxu0
      %v2984 = vadd.f32 %v2823, %v2983
      %v2985 = vpop.f32.mrb[0].mxu0
      %v2986 = vpop.f32.mrb[0].mxu0
      %v2987 = vadd.f32 %v2826, %v2986
      %v2988 = vpop.f32.mrb[0].mxu0
      %2989 = vmatprep.mubr.bf16.mxu0 %v1606
      %2990 = vmatmul.mubr.bf16.gmra.mrb[0].mxu0 %v1494
      %v2991 = vpop.f32.mrb[0].mxu0
      %v2992 = vadd.f32 %v2831, %v2991
      %v2993 = vpop.f32.mrb[0].mxu0
      %v2994 = vpop.f32.mrb[0].mxu0
      %v2995 = vadd.f32 %v2834, %v2994
      %v2996 = vpop.f32.mrb[0].mxu0
      %2997 = vmatprep.mubr.bf16.mxu0 %v1607
      %2998 = vmatmul.mubr.bf16.gmra.mrb[0].mxu0 %v1495
      %v2999 = vpop.f32.mrb[0].mxu0
      %v3000 = vadd.f32 %v2839, %v2999
      %v3001 = vpop.f32.mrb[0].mxu0
      %v3002 = vpop.f32.mrb[0].mxu0
      %v3003 = vadd.f32 %v2842, %v3002
      %v3004 = vpop.f32.mrb[0].mxu0
      %3005 = vmatprep.mubr.bf16.mxu0 %v1608
      %3006 = vmatmul.mubr.bf16.gmra.mrb[0].mxu0 %v1496
      %v3007 = vpop.f32.mrb[0].mxu0
      %v3008 = vadd.f32 %v2847, %v3007
      %v3009 = vpop.f32.mrb[0].mxu0
      %v3010 = vpop.f32.mrb[0].mxu0
      %v3011 = vadd.f32 %v2850, %v3010
      %v3012 = vpop.f32.mrb[0].mxu0
      %3013 = vmatprep.mubr.bf16.mxu0 %v1609
      %3014 = vmatmul.mubr.bf16.gmra.mrb[0].mxu0 %v1497
      %v3015 = vpop.f32.mrb[0].mxu0
      %v3016 = vadd.f32 %v2855, %v3015
      %v3017 = vpop.f32.mrb[0].mxu0
      %v3018 = vpop.f32.mrb[0].mxu0
      %v3019 = vadd.f32 %v2858, %v3018
      %v3020 = vpop.f32.mrb[0].mxu0
      %3021 = vmatprep.mubr.bf16.mxu0 %v1610
      %3022 = vmatmul.mubr.bf16.gmra.mrb[0].mxu0 %v1498
      %v3023 = vpop.f32.mrb[0].mxu0
      %v3024 = vadd.f32 %v2863, %v3023
      %v3025 = vpop.f32.mrb[0].mxu0
      %v3026 = vpop.f32.mrb[0].mxu0
      %v3027 = vadd.f32 %v2866, %v3026
      %v3028 = vpop.f32.mrb[0].mxu0
      %3029 = vmatprep.mubr.bf16.mxu0 %v1611
      %3030 = vmatmul.mubr.bf16.gmra.mrb[0].mxu0 %v1499
      %v3031 = vpop.f32.mrb[0].mxu0
      %v3032 = vadd.f32 %v2871, %v3031
      %v3033 = vpop.f32.mrb[0].mxu0
      %v3034 = vpop.f32.mrb[0].mxu0
      %v3035 = vadd.f32 %v2874, %v3034
      %v3036 = vpop.f32.mrb[0].mxu0
      %3037 = vdwg.mxu0
      %3038 = vmatprep.subr.bf16.mxu0 0
      %3039 = vmatpush1.bf16.msra.mxu0 %v2604
      %3040 = vmatprep.subr.bf16.mxu0 0
      %3041 = vmatpush1.bf16.msra.mxu0 %v2605
      %3042 = vmatprep.subr.bf16.mxu0 0
      %3043 = vmatpush1.bf16.msra.mxu0 %v2606
      %3044 = vmatprep.subr.bf16.mxu0 0
      %3045 = vmatpush1.bf16.msra.mxu0 %v2607
      %3046 = vmatprep.subr.bf16.mxu0 0
      %3047 = vmatpush1.bf16.msra.mxu0 %v2608
      %3048 = vmatprep.subr.bf16.mxu0 0
      %3049 = vmatpush1.bf16.msra.mxu0 %v2609
      %3050 = vmatprep.subr.bf16.mxu0 0
      %3051 = vmatpush1.bf16.msra.mxu0 %v2610
      %3052 = vmatprep.subr.bf16.mxu0 0
      %3053 = vmatpush1.bf16.msra.mxu0 %v2611
      %3054 = vmatprep.subr.bf16.mxu0 0
      %3055 = vmatpush1.bf16.msra.mxu0 %v2612
      %3056 = vmatprep.subr.bf16.mxu0 0
      %3057 = vmatpush1.bf16.msra.mxu0 %v2613
      %3058 = vmatprep.subr.bf16.mxu0 0
      %3059 = vmatpush1.bf16.msra.mxu0 %v2614
      %3060 = vmatprep.subr.bf16.mxu0 0
      %3061 = vmatpush1.bf16.msra.mxu0 %v2615
      %3062 = vmatprep.subr.bf16.mxu0 0
      %3063 = vmatpush1.bf16.msra.mxu0 %v2616
      %3064 = vmatprep.subr.bf16.mxu0 0
      %3065 = vmatpush1.bf16.msra.mxu0 %v2617
      %3066 = vmatprep.subr.bf16.mxu0 0
      %3067 = vmatpush1.bf16.msra.mxu0 %v2618
      %3068 = vmatprep.subr.bf16.mxu0 0
      %3069 = vmatpush1.bf16.msra.mxu0 %v2619
      %3070 = vmatprep.mubr.bf16.mxu0 %v1724
      %3071 = vmatmul.mubr.bf16.gmra.mrb[0].mxu0 %v1612
      %v3072 = vpop.f32.mrb[0].mxu0
      %v3073 = vadd.f32 %v2912, %v3072
      %v3074 = vpop.f32.mrb[0].mxu0
      %v3075 = vpop.f32.mrb[0].mxu0
      %v3076 = vadd.f32 %v2915, %v3075
      %v3077 = vpop.f32.mrb[0].mxu0
      %3078 = vmatprep.mubr.bf16.mxu0 %v1725
      %3079 = vmatmul.mubr.bf16.gmra.mrb[0].mxu0 %v1613
      %v3080 = vpop.f32.mrb[0].mxu0
      %v3081 = vadd.f32 %v2920, %v3080
      %v3082 = vpop.f32.mrb[0].mxu0
      %v3083 = vpop.f32.mrb[0].mxu0
      %v3084 = vadd.f32 %v2923, %v3083
      %v3085 = vpop.f32.mrb[0].mxu0
      %3086 = vmatprep.mubr.bf16.mxu0 %v1726
      %3087 = vmatmul.mubr.bf16.gmra.mrb[0].mxu0 %v1614
      %v3088 = vpop.f32.mrb[0].mxu0
      %v3089 = vadd.f32 %v2928, %v3088
      %v3090 = vpop.f32.mrb[0].mxu0
      %v3091 = vpop.f32.mrb[0].mxu0
      %v3092 = vadd.f32 %v2931, %v3091
      %v3093 = vpop.f32.mrb[0].mxu0
      %3094 = vmatprep.mubr.bf16.mxu0 %v1727
      %3095 = vmatmul.mubr.bf16.gmra.mrb[0].mxu0 %v1615
      %v3096 = vpop.f32.mrb[0].mxu0
      %v3097 = vadd.f32 %v2936, %v3096
      %v3098 = vpop.f32.mrb[0].mxu0
      %v3099 = vpop.f32.mrb[0].mxu0
      %v3100 = vadd.f32 %v2939, %v3099
      %v3101 = vpop.f32.mrb[0].mxu0
      %3102 = vmatprep.mubr.bf16.mxu0 %v1728
      %3103 = vmatmul.mubr.bf16.gmra.mrb[0].mxu0 %v1616
      %v3104 = vpop.f32.mrb[0].mxu0
      %v3105 = vadd.f32 %v2944, %v3104
      %v3106 = vpop.f32.mrb[0].mxu0
      %v3107 = vpop.f32.mrb[0].mxu0
      %v3108 = vadd.f32 %v2947, %v3107
      %v3109 = vpop.f32.mrb[0].mxu0
      %3110 = vmatprep.mubr.bf16.mxu0 %v1729
      %3111 = vmatmul.mubr.bf16.gmra.mrb[0].mxu0 %v1617
      %v3112 = vpop.f32.mrb[0].mxu0
      %v3113 = vadd.f32 %v2952, %v3112
      %v3114 = vpop.f32.mrb[0].mxu0
      %v3115 = vpop.f32.mrb[0].mxu0
      %v3116 = vadd.f32 %v2955, %v3115
      %v3117 = vpop.f32.mrb[0].mxu0
      %3118 = vmatprep.mubr.bf16.mxu0 %v1730
      %3119 = vmatmul.mubr.bf16.gmra.mrb[0].mxu0 %v1618
      %v3120 = vpop.f32.mrb[0].mxu0
      %v3121 = vadd.f32 %v2960, %v3120
      %v3122 = vpop.f32.mrb[0].mxu0
      %v3123 = vpop.f32.mrb[0].mxu0
      %v3124 = vadd.f32 %v2963, %v3123
      %v3125 = vpop.f32.mrb[0].mxu0
      %3126 = vmatprep.mubr.bf16.mxu0 %v1731
      %3127 = vmatmul.mubr.bf16.gmra.mrb[0].mxu0 %v1619
      %v3128 = vpop.f32.mrb[0].mxu0
      %v3129 = vadd.f32 %v2968, %v3128
      %v3130 = vpop.f32.mrb[0].mxu0
      %v3131 = vpop.f32.mrb[0].mxu0
      %v3132 = vadd.f32 %v2971, %v3131
      %v3133 = vpop.f32.mrb[0].mxu0
      %3134 = vmatprep.mubr.bf16.mxu0 %v1732
      %3135 = vmatmul.mubr.bf16.gmra.mrb[0].mxu0 %v1620
      %v3136 = vpop.f32.mrb[0].mxu0
      %v3137 = vadd.f32 %v2976, %v3136
      %v3138 = vpop.f32.mrb[0].mxu0
      %v3139 = vpop.f32.mrb[0].mxu0
      %v3140 = vadd.f32 %v2979, %v3139
      %v3141 = vpop.f32.mrb[0].mxu0
      %3142 = vmatprep.mubr.bf16.mxu0 %v1733
      %3143 = vmatmul.mubr.bf16.gmra.mrb[0].mxu0 %v1621
      %v3144 = vpop.f32.mrb[0].mxu0
      %v3145 = vadd.f32 %v2984, %v3144
      %v3146 = vpop.f32.mrb[0].mxu0
      %v3147 = vpop.f32.mrb[0].mxu0
      %v3148 = vadd.f32 %v2987, %v3147
      %v3149 = vpop.f32.mrb[0].mxu0
      %3150 = vmatprep.mubr.bf16.mxu0 %v1734
      %3151 = vmatmul.mubr.bf16.gmra.mrb[0].mxu0 %v1622
      %v3152 = vpop.f32.mrb[0].mxu0
      %v3153 = vadd.f32 %v2992, %v3152
      %v3154 = vpop.f32.mrb[0].mxu0
      %v3155 = vpop.f32.mrb[0].mxu0
      %v3156 = vadd.f32 %v2995, %v3155
      %v3157 = vpop.f32.mrb[0].mxu0
      %3158 = vmatprep.mubr.bf16.mxu0 %v1735
      %3159 = vmatmul.mubr.bf16.gmra.mrb[0].mxu0 %v1623
      %v3160 = vpop.f32.mrb[0].mxu0
      %v3161 = vadd.f32 %v3000, %v3160
      %v3162 = vpop.f32.mrb[0].mxu0
      %v3163 = vpop.f32.mrb[0].mxu0
      %v3164 = vadd.f32 %v3003, %v3163
      %v3165 = vpop.f32.mrb[0].mxu0
      %3166 = vmatprep.mubr.bf16.mxu0 %v1736
      %3167 = vmatmul.mubr.bf16.gmra.mrb[0].mxu0 %v1624
      %v3168 = vpop.f32.mrb[0].mxu0
      %v3169 = vadd.f32 %v3008, %v3168
      %v3170 = vpop.f32.mrb[0].mxu0
      %v3171 = vpop.f32.mrb[0].mxu0
      %v3172 = vadd.f32 %v3011, %v3171
      %v3173 = vpop.f32.mrb[0].mxu0
      %3174 = vmatprep.mubr.bf16.mxu0 %v1737
      %3175 = vmatmul.mubr.bf16.gmra.mrb[0].mxu0 %v1625
      %v3176 = vpop.f32.mrb[0].mxu0
      %v3177 = vadd.f32 %v3016, %v3176
      %v3178 = vpop.f32.mrb[0].mxu0
      %v3179 = vpop.f32.mrb[0].mxu0
      %v3180 = vadd.f32 %v3019, %v3179
      %v3181 = vpop.f32.mrb[0].mxu0
      %3182 = vmatprep.mubr.bf16.mxu0 %v1738
      %3183 = vmatmul.mubr.bf16.gmra.mrb[0].mxu0 %v1626
      %v3184 = vpop.f32.mrb[0].mxu0
      %v3185 = vadd.f32 %v3024, %v3184
      %v3186 = vpop.f32.mrb[0].mxu0
      %v3187 = vpop.f32.mrb[0].mxu0
      %v3188 = vadd.f32 %v3027, %v3187
      %v3189 = vpop.f32.mrb[0].mxu0
      %3190 = vmatprep.mubr.bf16.mxu0 %v1739
      %3191 = vmatmul.mubr.bf16.gmra.mrb[0].mxu0 %v1627
      %v3192 = vpop.f32.mrb[0].mxu0
      %v3193 = vadd.f32 %v3032, %v3192
      %v3194 = vpop.f32.mrb[0].mxu0
      %v3195 = vpop.f32.mrb[0].mxu0
      %v3196 = vadd.f32 %v3035, %v3195
      %v3197 = vpop.f32.mrb[0].mxu0
      %3198 = vdwg.mxu0
      %3199 = vmatprep.subr.bf16.mxu0 0
      %3200 = vmatpush1.bf16.msra.mxu0 %v2620
      %3201 = vmatprep.subr.bf16.mxu0 0
      %3202 = vmatpush1.bf16.msra.mxu0 %v2621
      %3203 = vmatprep.subr.bf16.mxu0 0
      %3204 = vmatpush1.bf16.msra.mxu0 %v2622
      %3205 = vmatprep.subr.bf16.mxu0 0
      %3206 = vmatpush1.bf16.msra.mxu0 %v2623
      %3207 = vmatprep.subr.bf16.mxu0 0
      %3208 = vmatpush1.bf16.msra.mxu0 %v2624
      %3209 = vmatprep.subr.bf16.mxu0 0
      %3210 = vmatpush1.bf16.msra.mxu0 %v2625
      %3211 = vmatprep.subr.bf16.mxu0 0
      %3212 = vmatpush1.bf16.msra.mxu0 %v2626
      %3213 = vmatprep.subr.bf16.mxu0 0
      %3214 = vmatpush1.bf16.msra.mxu0 %v2627
      %3215 = vmatprep.subr.bf16.mxu0 0
      %3216 = vmatpush1.bf16.msra.mxu0 %v2628
      %3217 = vmatprep.subr.bf16.mxu0 0
      %3218 = vmatpush1.bf16.msra.mxu0 %v2629
      %3219 = vmatprep.subr.bf16.mxu0 0
      %3220 = vmatpush1.bf16.msra.mxu0 %v2630
      %3221 = vmatprep.subr.bf16.mxu0 0
      %3222 = vmatpush1.bf16.msra.mxu0 %v2631
      %3223 = vmatprep.subr.bf16.mxu0 0
      %3224 = vmatpush1.bf16.msra.mxu0 %v2632
      %3225 = vmatprep.subr.bf16.mxu0 0
      %3226 = vmatpush1.bf16.msra.mxu0 %v2633
      %3227 = vmatprep.subr.bf16.mxu0 0
      %3228 = vmatpush1.bf16.msra.mxu0 %v2634
      %3229 = vmatprep.subr.bf16.mxu0 0
      %3230 = vmatpush1.bf16.msra.mxu0 %v2635
      %3231 = vmatprep.mubr.bf16.mxu0 %v1980
      %3232 = vmatmul.mubr.bf16.gmra.mrb[0].mxu0 %v1868
      %v3233 = vpop.f32.mrb[0].mxu0
      %v3234 = vadd.f32 %v3073, %v3233
      %v3235 = vpop.f32.mrb[0].mxu0
      %v3236 = vpop.f32.mrb[0].mxu0
      %v3237 = vadd.f32 %v3076, %v3236
      %v3238 = vpop.f32.mrb[0].mxu0
      %3239 = vmatprep.mubr.bf16.mxu0 %v1981
      %3240 = vmatmul.mubr.bf16.gmra.mrb[0].mxu0 %v1869
      %v3241 = vpop.f32.mrb[0].mxu0
      %v3242 = vadd.f32 %v3081, %v3241
      %v3243 = vpop.f32.mrb[0].mxu0
      %v3244 = vpop.f32.mrb[0].mxu0
      %v3245 = vadd.f32 %v3084, %v3244
      %v3246 = vpop.f32.mrb[0].mxu0
      %3247 = vmatprep.mubr.bf16.mxu0 %v1982
      %3248 = vmatmul.mubr.bf16.gmra.mrb[0].mxu0 %v1870
      %v3249 = vpop.f32.mrb[0].mxu0
      %v3250 = vadd.f32 %v3089, %v3249
      %v3251 = vpop.f32.mrb[0].mxu0
      %v3252 = vpop.f32.mrb[0].mxu0
      %v3253 = vadd.f32 %v3092, %v3252
      %v3254 = vpop.f32.mrb[0].mxu0
      %3255 = vmatprep.mubr.bf16.mxu0 %v1983
      %3256 = vmatmul.mubr.bf16.gmra.mrb[0].mxu0 %v1871
      %v3257 = vpop.f32.mrb[0].mxu0
      %v3258 = vadd.f32 %v3097, %v3257
      %v3259 = vpop.f32.mrb[0].mxu0
      %v3260 = vpop.f32.mrb[0].mxu0
      %v3261 = vadd.f32 %v3100, %v3260
      %v3262 = vpop.f32.mrb[0].mxu0
      %3263 = vmatprep.mubr.bf16.mxu0 %v1984
      %3264 = vmatmul.mubr.bf16.gmra.mrb[0].mxu0 %v1872
      %v3265 = vpop.f32.mrb[0].mxu0
      %v3266 = vadd.f32 %v3105, %v3265
      %v3267 = vpop.f32.mrb[0].mxu0
      %v3268 = vpop.f32.mrb[0].mxu0
      %v3269 = vadd.f32 %v3108, %v3268
      %v3270 = vpop.f32.mrb[0].mxu0
      %3271 = vmatprep.mubr.bf16.mxu0 %v1985
      %3272 = vmatmul.mubr.bf16.gmra.mrb[0].mxu0 %v1873
      %v3273 = vpop.f32.mrb[0].mxu0
      %v3274 = vadd.f32 %v3113, %v3273
      %v3275 = vpop.f32.mrb[0].mxu0
      %v3276 = vpop.f32.mrb[0].mxu0
      %v3277 = vadd.f32 %v3116, %v3276
      %v3278 = vpop.f32.mrb[0].mxu0
      %3279 = vmatprep.mubr.bf16.mxu0 %v1986
      %3280 = vmatmul.mubr.bf16.gmra.mrb[0].mxu0 %v1874
      %v3281 = vpop.f32.mrb[0].mxu0
      %v3282 = vadd.f32 %v3121, %v3281
      %v3283 = vpop.f32.mrb[0].mxu0
      %v3284 = vpop.f32.mrb[0].mxu0
      %v3285 = vadd.f32 %v3124, %v3284
      %v3286 = vpop.f32.mrb[0].mxu0
      %3287 = vmatprep.mubr.bf16.mxu0 %v1987
      %3288 = vmatmul.mubr.bf16.gmra.mrb[0].mxu0 %v1875
      %v3289 = vpop.f32.mrb[0].mxu0
      %v3290 = vadd.f32 %v3129, %v3289
      %v3291 = vpop.f32.mrb[0].mxu0
      %v3292 = vpop.f32.mrb[0].mxu0
      %v3293 = vadd.f32 %v3132, %v3292
      %v3294 = vpop.f32.mrb[0].mxu0
      %3295 = vmatprep.mubr.bf16.mxu0 %v1988
      %3296 = vmatmul.mubr.bf16.gmra.mrb[0].mxu0 %v1876
      %v3297 = vpop.f32.mrb[0].mxu0
      %v3298 = vadd.f32 %v3137, %v3297
      %v3299 = vpop.f32.mrb[0].mxu0
      %v3300 = vpop.f32.mrb[0].mxu0
      %v3301 = vadd.f32 %v3140, %v3300
      %v3302 = vpop.f32.mrb[0].mxu0
      %3303 = vmatprep.mubr.bf16.mxu0 %v1989
      %3304 = vmatmul.mubr.bf16.gmra.mrb[0].mxu0 %v1877
      %v3305 = vpop.f32.mrb[0].mxu0
      %v3306 = vadd.f32 %v3145, %v3305
      %v3307 = vpop.f32.mrb[0].mxu0
      %v3308 = vpop.f32.mrb[0].mxu0
      %v3309 = vadd.f32 %v3148, %v3308
      %v3310 = vpop.f32.mrb[0].mxu0
      %3311 = vmatprep.mubr.bf16.mxu0 %v1990
      %3312 = vmatmul.mubr.bf16.gmra.mrb[0].mxu0 %v1878
      %v3313 = vpop.f32.mrb[0].mxu0
      %v3314 = vadd.f32 %v3153, %v3313
      %v3315 = vpop.f32.mrb[0].mxu0
      %v3316 = vpop.f32.mrb[0].mxu0
      %v3317 = vadd.f32 %v3156, %v3316
      %v3318 = vpop.f32.mrb[0].mxu0
      %3319 = vmatprep.mubr.bf16.mxu0 %v1991
      %3320 = vmatmul.mubr.bf16.gmra.mrb[0].mxu0 %v1879
      %v3321 = vpop.f32.mrb[0].mxu0
      %v3322 = vadd.f32 %v3161, %v3321
      %v3323 = vpop.f32.mrb[0].mxu0
      %v3324 = vpop.f32.mrb[0].mxu0
      %v3325 = vadd.f32 %v3164, %v3324
      %v3326 = vpop.f32.mrb[0].mxu0
      %3327 = vmatprep.mubr.bf16.mxu0 %v1992
      %3328 = vmatmul.mubr.bf16.gmra.mrb[0].mxu0 %v1880
      %v3329 = vpop.f32.mrb[0].mxu0
      %v3330 = vadd.f32 %v3169, %v3329
      %v3331 = vpop.f32.mrb[0].mxu0
      %v3332 = vpop.f32.mrb[0].mxu0
      %v3333 = vadd.f32 %v3172, %v3332
      %v3334 = vpop.f32.mrb[0].mxu0
      %3335 = vmatprep.mubr.bf16.mxu0 %v1993
      %3336 = vmatmul.mubr.bf16.gmra.mrb[0].mxu0 %v1881
      %v3337 = vpop.f32.mrb[0].mxu0
      %v3338 = vadd.f32 %v3177, %v3337
      %v3339 = vpop.f32.mrb[0].mxu0
      %v3340 = vpop.f32.mrb[0].mxu0
      %v3341 = vadd.f32 %v3180, %v3340
      %v3342 = vpop.f32.mrb[0].mxu0
      %3343 = vmatprep.mubr.bf16.mxu0 %v1994
      %3344 = vmatmul.mubr.bf16.gmra.mrb[0].mxu0 %v1882
      %v3345 = vpop.f32.mrb[0].mxu0
      %v3346 = vadd.f32 %v3185, %v3345
      %v3347 = vpop.f32.mrb[0].mxu0
      %v3348 = vpop.f32.mrb[0].mxu0
      %v3349 = vadd.f32 %v3188, %v3348
      %v3350 = vpop.f32.mrb[0].mxu0
      %3351 = vmatprep.mubr.bf16.mxu0 %v1995
      %3352 = vmatmul.mubr.bf16.gmra.mrb[0].mxu0 %v1883
      %v3353 = vpop.f32.mrb[0].mxu0
      %v3354 = vadd.f32 %v3193, %v3353
      %v3355 = vpop.f32.mrb[0].mxu0
      %v3356 = vpop.f32.mrb[0].mxu0
      %v3357 = vadd.f32 %v3196, %v3356
      %v3358 = vpop.f32.mrb[0].mxu0
      %3359 = vdwg.mxu0
      %3360 = vmatprep.subr.bf16.mxu0 0
      %3361 = vmatpush1.bf16.msra.mxu0 %v2636
      %3362 = vmatprep.subr.bf16.mxu0 0
      %3363 = vmatpush1.bf16.msra.mxu0 %v2637
      %3364 = vmatprep.subr.bf16.mxu0 0
      %3365 = vmatpush1.bf16.msra.mxu0 %v2638
      %3366 = vmatprep.subr.bf16.mxu0 0
      %3367 = vmatpush1.bf16.msra.mxu0 %v2639
      %3368 = vmatprep.subr.bf16.mxu0 0
      %3369 = vmatpush1.bf16.msra.mxu0 %v2640
      %3370 = vmatprep.subr.bf16.mxu0 0
      %3371 = vmatpush1.bf16.msra.mxu0 %v2641
      %3372 = vmatprep.subr.bf16.mxu0 0
      %3373 = vmatpush1.bf16.msra.mxu0 %v2642
      %3374 = vmatprep.subr.bf16.mxu0 0
      %3375 = vmatpush1.bf16.msra.mxu0 %v2643
      %3376 = vmatprep.subr.bf16.mxu0 0
      %3377 = vmatpush1.bf16.msra.mxu0 0
      %3378 = vmatprep.subr.bf16.mxu0 0
      %3379 = vmatpush1.bf16.msra.mxu0 0
      %3380 = vmatprep.subr.bf16.mxu0 0
      %3381 = vmatpush1.bf16.msra.mxu0 0
      %3382 = vmatprep.subr.bf16.mxu0 0
      %3383 = vmatpush1.bf16.msra.mxu0 0
      %3384 = vmatprep.subr.bf16.mxu0 0
      %3385 = vmatpush1.bf16.msra.mxu0 0
      %3386 = vmatprep.subr.bf16.mxu0 0
      %3387 = vmatpush1.bf16.msra.mxu0 0
      %3388 = vmatprep.subr.bf16.mxu0 0
      %3389 = vmatpush1.bf16.msra.mxu0 0
      %3390 = vmatprep.subr.bf16.mxu0 0
      %3391 = vmatpush1.bf16.msra.mxu0 0
      %3392 = vmatprep.mubr.bf16.mxu0 0
      %3393 = vmatmul.mubr.bf16.gmra.mrb[0].mxu0 %v2124
      %v3394 = vpop.f32.mrb[0].mxu0
      %v3395 = vadd.f32 %v3234, %v3394
      %v3396 = vpop.f32.mrb[0].mxu0
      %v3397 = vpop.f32.mrb[0].mxu0
      %v3398 = vadd.f32 %v3237, %v3397
      %v3399 = vpop.f32.mrb[0].mxu0
      %3400 = vmatprep.mubr.bf16.mxu0 0
      %3401 = vmatmul.mubr.bf16.gmra.mrb[0].mxu0 %v2125
      %v3402 = vpop.f32.mrb[0].mxu0
      %v3403 = vadd.f32 %v3242, %v3402
      %v3404 = vpop.f32.mrb[0].mxu0
      %v3405 = vpop.f32.mrb[0].mxu0
      %v3406 = vadd.f32 %v3245, %v3405
      %v3407 = vpop.f32.mrb[0].mxu0
      %3408 = vmatprep.mubr.bf16.mxu0 0
      %3409 = vmatmul.mubr.bf16.gmra.mrb[0].mxu0 %v2126
      %v3410 = vpop.f32.mrb[0].mxu0
      %v3411 = vadd.f32 %v3250, %v3410
      %v3412 = vpop.f32.mrb[0].mxu0
      %v3413 = vpop.f32.mrb[0].mxu0
      %v3414 = vadd.f32 %v3253, %v3413
      %v3415 = vpop.f32.mrb[0].mxu0
      %3416 = vmatprep.mubr.bf16.mxu0 0
      %3417 = vmatmul.mubr.bf16.gmra.mrb[0].mxu0 %v2127
      %v3418 = vpop.f32.mrb[0].mxu0
      %v3419 = vadd.f32 %v3258, %v3418
      %v3420 = vpop.f32.mrb[0].mxu0
      %v3421 = vpop.f32.mrb[0].mxu0
      %v3422 = vadd.f32 %v3261, %v3421
      %v3423 = vpop.f32.mrb[0].mxu0
      %3424 = vmatprep.mubr.bf16.mxu0 0
      %3425 = vmatmul.mubr.bf16.gmra.mrb[0].mxu0 %v2128
      %v3426 = vpop.f32.mrb[0].mxu0
      %v3427 = vadd.f32 %v3266, %v3426
      %v3428 = vpop.f32.mrb[0].mxu0
      %v3429 = vpop.f32.mrb[0].mxu0
      %v3430 = vadd.f32 %v3269, %v3429
      %v3431 = vpop.f32.mrb[0].mxu0
      %3432 = vmatprep.mubr.bf16.mxu0 0
      %3433 = vmatmul.mubr.bf16.gmra.mrb[0].mxu0 %v2129
      %v3434 = vpop.f32.mrb[0].mxu0
      %v3435 = vadd.f32 %v3274, %v3434
      %v3436 = vpop.f32.mrb[0].mxu0
      %v3437 = vpop.f32.mrb[0].mxu0
      %v3438 = vadd.f32 %v3277, %v3437
      %v3439 = vpop.f32.mrb[0].mxu0
      %3440 = vmatprep.mubr.bf16.mxu0 0
      %3441 = vmatmul.mubr.bf16.gmra.mrb[0].mxu0 %v2130
      %v3442 = vpop.f32.mrb[0].mxu0
      %v3443 = vadd.f32 %v3282, %v3442
      %v3444 = vpop.f32.mrb[0].mxu0
      %v3445 = vpop.f32.mrb[0].mxu0
      %v3446 = vadd.f32 %v3285, %v3445
      %v3447 = vpop.f32.mrb[0].mxu0
      %3448 = vmatprep.mubr.bf16.mxu0 0
      %3449 = vmatmul.mubr.bf16.gmra.mrb[0].mxu0 %v2131
      %v3450 = vpop.f32.mrb[0].mxu0
      %v3451 = vadd.f32 %v3290, %v3450
      %v3452 = vpop.f32.mrb[0].mxu0
      %v3453 = vpop.f32.mrb[0].mxu0
      %v3454 = vadd.f32 %v3293, %v3453
      %v3455 = vpop.f32.mrb[0].mxu0
      %3456 = vmatprep.mubr.bf16.mxu0 0
      %3457 = vmatmul.mubr.bf16.gmra.mrb[0].mxu0 %v2132
      %v3458 = vpop.f32.mrb[0].mxu0
      %v3459 = vadd.f32 %v3298, %v3458
      %v3460 = vpop.f32.mrb[0].mxu0
      %v3461 = vpop.f32.mrb[0].mxu0
      %v3462 = vadd.f32 %v3301, %v3461
      %v3463 = vpop.f32.mrb[0].mxu0
      %3464 = vmatprep.mubr.bf16.mxu0 0
      %3465 = vmatmul.mubr.bf16.gmra.mrb[0].mxu0 %v2133
      %v3466 = vpop.f32.mrb[0].mxu0
      %v3467 = vadd.f32 %v3306, %v3466
      %v3468 = vpop.f32.mrb[0].mxu0
      %v3469 = vpop.f32.mrb[0].mxu0
      %v3470 = vadd.f32 %v3309, %v3469
      %v3471 = vpop.f32.mrb[0].mxu0
      %3472 = vmatprep.mubr.bf16.mxu0 0
      %3473 = vmatmul.mubr.bf16.gmra.mrb[0].mxu0 %v2134
      %v3474 = vpop.f32.mrb[0].mxu0
      %v3475 = vadd.f32 %v3314, %v3474
      %v3476 = vpop.f32.mrb[0].mxu0
      %v3477 = vpop.f32.mrb[0].mxu0
      %v3478 = vadd.f32 %v3317, %v3477
      %v3479 = vpop.f32.mrb[0].mxu0
      %3480 = vmatprep.mubr.bf16.mxu0 0
      %3481 = vmatmul.mubr.bf16.gmra.mrb[0].mxu0 %v2135
      %v3482 = vpop.f32.mrb[0].mxu0
      %v3483 = vadd.f32 %v3322, %v3482
      %v3484 = vpop.f32.mrb[0].mxu0
      %v3485 = vpop.f32.mrb[0].mxu0
      %v3486 = vadd.f32 %v3325, %v3485
      %v3487 = vpop.f32.mrb[0].mxu0
      %3488 = vmatprep.mubr.bf16.mxu0 0
      %3489 = vmatmul.mubr.bf16.gmra.mrb[0].mxu0 %v2136
      %v3490 = vpop.f32.mrb[0].mxu0
      %v3491 = vadd.f32 %v3330, %v3490
      %v3492 = vpop.f32.mrb[0].mxu0
      %v3493 = vpop.f32.mrb[0].mxu0
      %v3494 = vadd.f32 %v3333, %v3493
      %v3495 = vpop.f32.mrb[0].mxu0
      %3496 = vmatprep.mubr.bf16.mxu0 0
      %3497 = vmatmul.mubr.bf16.gmra.mrb[0].mxu0 %v2137
      %v3498 = vpop.f32.mrb[0].mxu0
      %v3499 = vadd.f32 %v3338, %v3498
      %v3500 = vpop.f32.mrb[0].mxu0
      %v3501 = vpop.f32.mrb[0].mxu0
      %v3502 = vadd.f32 %v3341, %v3501
      %v3503 = vpop.f32.mrb[0].mxu0
      %3504 = vmatprep.mubr.bf16.mxu0 0
      %3505 = vmatmul.mubr.bf16.gmra.mrb[0].mxu0 %v2138
      %v3506 = vpop.f32.mrb[0].mxu0
      %v3507 = vadd.f32 %v3346, %v3506
      %v3508 = vpop.f32.mrb[0].mxu0
      %v3509 = vpop.f32.mrb[0].mxu0
      %v3510 = vadd.f32 %v3349, %v3509
      %v3511 = vpop.f32.mrb[0].mxu0
      %3512 = vmatprep.mubr.bf16.mxu0 0
      %3513 = vmatmul.mubr.bf16.gmra.mrb[0].mxu0 %v2139
      %v3514 = vpop.f32.mrb[0].mxu0
      %v3515 = vadd.f32 %v3354, %v3514
      %v3516 = vpop.f32.mrb[0].mxu0
      %v3517 = vpop.f32.mrb[0].mxu0
      %v3518 = vadd.f32 %v3357, %v3517
      %v3519 = vpop.f32.mrb[0].mxu0
      %3520 = vdwg.mxu0
      %v3521 = vpack.c.bf16 %v3398, %v3395
      %v3522 = vpack.c.bf16 %v3406, %v3403
      %v3523 = vpack.c.bf16 %v3414, %v3411
      %v3524 = vpack.c.bf16 %v3422, %v3419
      %v3525 = vpack.c.bf16 %v3430, %v3427
      %v3526 = vpack.c.bf16 %v3438, %v3435
      %v3527 = vpack.c.bf16 %v3446, %v3443
      %v3528 = vpack.c.bf16 %v3454, %v3451
      %v3529 = vpack.c.bf16 %v3462, %v3459
      %v3530 = vpack.c.bf16 %v3470, %v3467
      %v3531 = vpack.c.bf16 %v3478, %v3475
      %v3532 = vpack.c.bf16 %v3486, %v3483
      %v3533 = vpack.c.bf16 %v3494, %v3491
      %v3534 = vpack.c.bf16 %v3502, %v3499
      %v3535 = vpack.c.bf16 %v3510, %v3507
      %v3536 = vpack.c.bf16 %v3518, %v3515
      %v3553 = vunpack.c.l.b16 %v3521
      %v3554 = vunpack.c.h.b16 %v3521
      %v3555 = vunpack.c.l.b16 %v3522
      %v3556 = vunpack.c.h.b16 %v3522
      %v3557 = vunpack.c.l.b16 %v3523
      %v3558 = vunpack.c.h.b16 %v3523
      %v3559 = vunpack.c.l.b16 %v3524
      %v3560 = vunpack.c.h.b16 %v3524
      %v3561 = vunpack.c.l.b16 %v3525
      %v3562 = vunpack.c.h.b16 %v3525
      %v3563 = vunpack.c.l.b16 %v3526
      %v3564 = vunpack.c.h.b16 %v3526
      %v3565 = vunpack.c.l.b16 %v3527
      %v3566 = vunpack.c.h.b16 %v3527
      %v3567 = vunpack.c.l.b16 %v3528
      %v3568 = vunpack.c.h.b16 %v3528
      %v3569 = vunpack.c.l.b16 %v3529
      %v3570 = vunpack.c.h.b16 %v3529
      %v3571 = vunpack.c.l.b16 %v3530
      %v3572 = vunpack.c.h.b16 %v3530
      %v3573 = vunpack.c.l.b16 %v3531
      %v3574 = vunpack.c.h.b16 %v3531
      %v3575 = vunpack.c.l.b16 %v3532
      %v3576 = vunpack.c.h.b16 %v3532
      %v3577 = vunpack.c.l.b16 %v3533
      %v3578 = vunpack.c.h.b16 %v3533
      %v3579 = vunpack.c.l.b16 %v3534
      %v3580 = vunpack.c.h.b16 %v3534
      %v3581 = vunpack.c.l.b16 %v3535
      %v3582 = vunpack.c.h.b16 %v3535
      %v3583 = vunpack.c.l.b16 %v3536
      %v3584 = vunpack.c.h.b16 %v3536
      %v3585 = vpack.c.b16 %v3553, %v3553
      %v3586 = vpack.c.b16 %v3554, %v3554
      %v3587 = vpack.c.b16 %v3555, %v3555
      %v3588 = vpack.c.b16 %v3556, %v3556
      %v3589 = vpack.c.b16 %v3557, %v3557
      %v3590 = vpack.c.b16 %v3558, %v3558
      %v3591 = vpack.c.b16 %v3559, %v3559
      %v3592 = vpack.c.b16 %v3560, %v3560
      %v3593 = vpack.c.b16 %v3561, %v3561
      %v3594 = vpack.c.b16 %v3562, %v3562
      %v3595 = vpack.c.b16 %v3563, %v3563
      %v3596 = vpack.c.b16 %v3564, %v3564
      %v3597 = vpack.c.b16 %v3565, %v3565
      %v3598 = vpack.c.b16 %v3566, %v3566
      %v3599 = vpack.c.b16 %v3567, %v3567
      %v3600 = vpack.c.b16 %v3568, %v3568
      %v3601 = vpack.c.b16 %v3569, %v3569
      %v3602 = vpack.c.b16 %v3570, %v3570
      %v3603 = vpack.c.b16 %v3571, %v3571
      %v3604 = vpack.c.b16 %v3572, %v3572
      %v3605 = vpack.c.b16 %v3573, %v3573
      %v3606 = vpack.c.b16 %v3574, %v3574
      %v3607 = vpack.c.b16 %v3575, %v3575
      %v3608 = vpack.c.b16 %v3576, %v3576
      %v3609 = vpack.c.b16 %v3577, %v3577
      %v3610 = vpack.c.b16 %v3578, %v3578
      %v3611 = vpack.c.b16 %v3579, %v3579
      %v3612 = vpack.c.b16 %v3580, %v3580
      %v3613 = vpack.c.b16 %v3581, %v3581
      %v3614 = vpack.c.b16 %v3582, %v3582
      %v3615 = vpack.c.b16 %v3583, %v3583
      %v3616 = vpack.c.b16 %v3584, %v3584
      %3649 = vst [vmem:[%s248] sm:$0xf] %v3585
      %3650 = vst [vmem:[%s248 + $0x4] sm:$0xf] %v3586
      %3651 = vst [vmem:[%s248 + $0x8] sm:$0xf] %v3587
      %3652 = vst [vmem:[%s248 + $0xc] sm:$0xf] %v3588
      %3653 = vst [vmem:[%s248 + $0x10] sm:$0xf] %v3589
      %3654 = vst [vmem:[%s248 + $0x14] sm:$0xf] %v3590
      %3655 = vst [vmem:[%s248 + $0x18] sm:$0xf] %v3591
      %3656 = vst [vmem:[%s248 + $0x1c] sm:$0xf] %v3592
      %3657 = vst [vmem:[%s248 + $0x20] sm:$0xf] %v3593
      %3658 = vst [vmem:[%s248 + $0x24] sm:$0xf] %v3594
      %3659 = vst [vmem:[%s248 + $0x28] sm:$0xf] %v3595
      %3660 = vst [vmem:[%s248 + $0x2c] sm:$0xf] %v3596
      %3661 = vst [vmem:[%s248 + $0x30] sm:$0xf] %v3597
      %3662 = vst [vmem:[%s248 + $0x34] sm:$0xf] %v3598
      %3663 = vst [vmem:[%s248 + $0x38] sm:$0xf] %v3599
      %3664 = vst [vmem:[%s248 + $0x3c] sm:$0xf] %v3600
      %3665 = vst [vmem:[%s248 + $0x40] sm:$0xf] %v3601
      %3666 = vst [vmem:[%s248 + $0x44] sm:$0xf] %v3602
      %3667 = vst [vmem:[%s248 + $0x48] sm:$0xf] %v3603
      %3668 = vst [vmem:[%s248 + $0x4c] sm:$0xf] %v3604
      %3669 = vst [vmem:[%s248 + $0x50] sm:$0xf] %v3605
      %3670 = vst [vmem:[%s248 + $0x54] sm:$0xf] %v3606
      %3671 = vst [vmem:[%s248 + $0x58] sm:$0xf] %v3607
      %3672 = vst [vmem:[%s248 + $0x5c] sm:$0xf] %v3608
      %3673 = vst [vmem:[%s248 + $0x60] sm:$0xf] %v3609
      %3674 = vst [vmem:[%s248 + $0x64] sm:$0xf] %v3610
      %3675 = vst [vmem:[%s248 + $0x68] sm:$0xf] %v3611
      %3676 = vst [vmem:[%s248 + $0x6c] sm:$0xf] %v3612
      %3677 = vst [vmem:[%s248 + $0x70] sm:$0xf] %v3613
      %3678 = vst [vmem:[%s248 + $0x74] sm:$0xf] %v3614
      %3679 = vst [vmem:[%s248 + $0x78] sm:$0xf] %v3615
      %3680 = vst [vmem:[%s248 + $0x7c] sm:$0xf] %v3616
      %p3681 = scmp.eq.s32.totalorder %s18, 0
      // Predicated region
      $region37: #{bottleneck_forward.5} parent=35 // pred_check
        %p3682 = pneg %p3681
      $region38: #{bottleneck_forward.5} parent=35 // pred_check_branch
        %3684 = sbr.rel (%p3682) target = $region40
      $region39: #{bottleneck_forward.5} parent=35 // pred_region
        %3685 = vst [vmem:[%s5] sm:$0x1] 0.0
        %3686 = vst [vmem:[%s6] sm:$0x1] 0.0
      $region40: #{bottleneck_forward.5} parent=35 // pred_fallthru
        _
      %v3687 = vld [vmem:[%s5] sm:$0x1]
      %v3688 = vadd.f32 %v3395, %v3398
      %v3689 = vadd.f32 %v3688, %v3403
      %v3690 = vadd.f32 %v3689, %v3406
      %v3691 = vadd.f32 %v3690, %v3411
      %v3692 = vadd.f32 %v3691, %v3414
      %v3693 = vadd.f32 %v3692, %v3419
      %v3694 = vadd.f32 %v3693, %v3422
      %v3695 = vadd.f32 %v3694, %v3427
      %v3696 = vadd.f32 %v3695, %v3430
      %v3697 = vadd.f32 %v3696, %v3435
      %v3698 = vadd.f32 %v3697, %v3438
      %v3699 = vadd.f32 %v3698, %v3443
      %v3700 = vadd.f32 %v3699, %v3446
      %v3701 = vadd.f32 %v3700, %v3451
      %v3702 = vadd.f32 %v3701, %v3454
      %v3703 = vadd.f32 %v3702, %v3459
      %v3704 = vadd.f32 %v3703, %v3462
      %v3705 = vadd.f32 %v3704, %v3467
      %v3706 = vadd.f32 %v3705, %v3470
      %v3707 = vadd.f32 %v3706, %v3475
      %v3708 = vadd.f32 %v3707, %v3478
      %v3709 = vadd.f32 %v3708, %v3483
      %v3710 = vadd.f32 %v3709, %v3486
      %v3711 = vadd.f32 %v3710, %v3491
      %v3712 = vadd.f32 %v3711, %v3494
      %v3713 = vadd.f32 %v3712, %v3499
      %v3714 = vadd.f32 %v3713, %v3502
      %v3715 = vadd.f32 %v3714, %v3507
      %v3716 = vadd.f32 %v3715, %v3510
      %v3717 = vadd.f32 %v3716, %v3515
      %v3718 = vadd.f32 %v3717, %v3518
      %v3719 = vrot.slane %v3718, 4
      %v3720 = vadd.f32 %v3718, %v3719
      %v3721 = vrot.slane %v3720, 2
      %v3722 = vadd.f32 %v3720, %v3721
      %v3723 = vrot.slane %v3722, 1
      %v3724 = vadd.f32 %v3722, %v3723
      %v3725 = vadd.f32 %v3687, %v3724
      %3726 = vst [vmem:[%s5] sm:$0x1] %v3725
      %v3727 = vld [vmem:[%s6] sm:$0x1]
      %v3728 = vmul.f32 %v3395, %v3395
      %v3729 = vmul.f32 %v3398, %v3398
      %v3730 = vmul.f32 %v3403, %v3403
      %v3731 = vmul.f32 %v3406, %v3406
      %v3732 = vmul.f32 %v3411, %v3411
      %v3733 = vmul.f32 %v3414, %v3414
      %v3734 = vmul.f32 %v3419, %v3419
      %v3735 = vmul.f32 %v3422, %v3422
      %v3736 = vmul.f32 %v3427, %v3427
      %v3737 = vmul.f32 %v3430, %v3430
      %v3738 = vmul.f32 %v3435, %v3435
      %v3739 = vmul.f32 %v3438, %v3438
      %v3740 = vmul.f32 %v3443, %v3443
      %v3741 = vmul.f32 %v3446, %v3446
      %v3742 = vmul.f32 %v3451, %v3451
      %v3743 = vmul.f32 %v3454, %v3454
      %v3744 = vmul.f32 %v3459, %v3459
      %v3745 = vmul.f32 %v3462, %v3462
      %v3746 = vmul.f32 %v3467, %v3467
      %v3747 = vmul.f32 %v3470, %v3470
      %v3748 = vmul.f32 %v3475, %v3475
      %v3749 = vmul.f32 %v3478, %v3478
      %v3750 = vmul.f32 %v3483, %v3483
      %v3751 = vmul.f32 %v3486, %v3486
      %v3752 = vmul.f32 %v3491, %v3491
      %v3753 = vmul.f32 %v3494, %v3494
      %v3754 = vmul.f32 %v3499, %v3499
      %v3755 = vmul.f32 %v3502, %v3502
      %v3756 = vmul.f32 %v3507, %v3507
      %v3757 = vmul.f32 %v3510, %v3510
      %v3758 = vmul.f32 %v3515, %v3515
      %v3759 = vmul.f32 %v3518, %v3518
      %v3760 = vadd.f32 %v3728, %v3729
      %v3761 = vadd.f32 %v3760, %v3730
      %v3762 = vadd.f32 %v3761, %v3731
      %v3763 = vadd.f32 %v3762, %v3732
      %v3764 = vadd.f32 %v3763, %v3733
      %v3765 = vadd.f32 %v3764, %v3734
      %v3766 = vadd.f32 %v3765, %v3735
      %v3767 = vadd.f32 %v3766, %v3736
      %v3768 = vadd.f32 %v3767, %v3737
      %v3769 = vadd.f32 %v3768, %v3738
      %v3770 = vadd.f32 %v3769, %v3739
      %v3771 = vadd.f32 %v3770, %v3740
      %v3772 = vadd.f32 %v3771, %v3741
      %v3773 = vadd.f32 %v3772, %v3742
      %v3774 = vadd.f32 %v3773, %v3743
      %v3775 = vadd.f32 %v3774, %v3744
      %v3776 = vadd.f32 %v3775, %v3745
      %v3777 = vadd.f32 %v3776, %v3746
      %v3778 = vadd.f32 %v3777, %v3747
      %v3779 = vadd.f32 %v3778, %v3748
      %v3780 = vadd.f32 %v3779, %v3749
      %v3781 = vadd.f32 %v3780, %v3750
      %v3782 = vadd.f32 %v3781, %v3751
      %v3783 = vadd.f32 %v3782, %v3752
      %v3784 = vadd.f32 %v3783, %v3753
      %v3785 = vadd.f32 %v3784, %v3754
      %v3786 = vadd.f32 %v3785, %v3755
      %v3787 = vadd.f32 %v3786, %v3756
      %v3788 = vadd.f32 %v3787, %v3757
      %v3789 = vadd.f32 %v3788, %v3758
      %v3790 = vadd.f32 %v3789, %v3759
      %v3791 = vrot.slane %v3790, 4
      %v3792 = vadd.f32 %v3790, %v3791
      %v3793 = vrot.slane %v3792, 2
      %v3794 = vadd.f32 %v3792, %v3793
      %v3795 = vrot.slane %v3794, 1
      %v3796 = vadd.f32 %v3794, %v3795
      %v3797 = vadd.f32 %v3727, %v3796
      %3798 = vst [vmem:[%s6] sm:$0x1] %v3797
      %s3799 = smul.u32 32, %s18
      %p3800 = scmp.lt.s32.totalorder %s3799, 63
      %s3801 = scalar_select %p3800, %s3799, 63
      %s3802 = smul.addr %s3801, 4
      %s3803 = scalar_lea.vmem %s4, %s3802
      // Predicated region
      $region41: #{bottleneck_forward.5} parent=35 // pred_check
        %p3804 = pneg %p125
      $region42: #{bottleneck_forward.5} parent=35 // pred_check_branch
        %3806 = sbr.rel (%p3804) target = $region44
      $region43: #{bottleneck_forward.5} parent=35 // pred_region
        %s3807 = smul.u32 32, %s18
      $region44: #{bottleneck_forward.5} parent=35 // pred_fallthru
        _
      // Predicated region
      $region45: #{bottleneck_forward.5} parent=35 // pred_check
        %p3808 = pneg %p146
      $region46: #{bottleneck_forward.5} parent=35 // pred_check_branch
        %3810 = sbr.rel (%p3808) target = $region48
      $region47: #{bottleneck_forward.5} parent=35 // pred_region
        _
      $region48: #{bottleneck_forward.5} parent=35 // pred_fallthru
        _
      // Predicated region
      $region49: #{bottleneck_forward.5} parent=35 // pred_check
        %p3811 = pneg %p167
      $region50: #{bottleneck_forward.5} parent=35 // pred_check_branch
        %3813 = sbr.rel (%p3811) target = $region52
      $region51: #{bottleneck_forward.5} parent=35 // pred_region
        _
      $region52: #{bottleneck_forward.5} parent=35 // pred_fallthru
        _
      // Predicated region
      $region53: #{bottleneck_forward.5} parent=35 // pred_check
        %p3814 = pneg %p146
      $region54: #{bottleneck_forward.5} parent=35 // pred_check_branch
        %3816 = sbr.rel (%p3814) target = $region56
      $region55: #{bottleneck_forward.5} parent=35 // pred_region
        _
      $region56: #{bottleneck_forward.5} parent=35 // pred_fallthru
        _
      // Predicated region
      $region57: #{bottleneck_forward.5} parent=35 // pred_check
        %p3817 = pneg %p167
      $region58: #{bottleneck_forward.5} parent=35 // pred_check_branch
        %3819 = sbr.rel (%p3817) target = $region60
      $region59: #{bottleneck_forward.5} parent=35 // pred_region
        _
      $region60: #{bottleneck_forward.5} parent=35 // pred_fallthru
        _
    $region36: #{bottleneck_forward.5} parent=5 // pred_fallthru
      _
    %p3820 = scmp.le.s32.totalorder 2, %s13
    // Predicated region
    $region61: #{bottleneck_forward.5} parent=5 // pred_check
      %p3821 = pneg %p3820
    $region62: #{bottleneck_forward.5} parent=5 // pred_check_branch
      %3823 = sbr.rel (%p3821) target = $region64
    $region63: #{bottleneck_forward.5} parent=5 // pred_region
      %s3824 = ssub.s32 %s13, 2
      // Predicated region
      $region65: #{bottleneck_forward.5} parent=63 // pred_check
        %p3825 = pneg %p131
      $region66: #{bottleneck_forward.5} parent=63 // pred_check_branch
        %3827 = sbr.rel (%p3825) target = $region68
      $region67: #{bottleneck_forward.5} parent=63 // pred_region
        %s3828 = smul.u32 32, %s19
        %p3829 = scmp.lt.s32.totalorder %s3828, 63
        %s3830 = scalar_select %p3829, %s3828, 63
        %s3831 = smul.addr %s3830, 4
        %s3832 = scalar_lea.vmem %s4, %s3831
      $region68: #{bottleneck_forward.5} parent=63 // pred_fallthru
        _
    $region64: #{bottleneck_forward.5} parent=5 // pred_fallthru
      _
  $region6: #{bottleneck_forward.5} parent=0 // loop_footer
    %s17 = sadd.s32 1, %s13
  $region7: #{bottleneck_forward.5} parent=0 // loop_footer_branch
    %12 = sbr.rel target = $region3
  $region8: #{bottleneck_forward.5} parent=0 // loop_exit
    _

// kernel: bottleneck_forward.6
$region0: #{bottleneck_forward.6}
  #allocation0 [shape = 'u32[]', space=smem, size = 0x4, offset = 0x4, fixed_abs, tag = 'smem constant byte address 0x4 - core index']
  #allocation1 [shape = 'u32[144,128]{1,0:T(1,128)}', space=vmem, size = 0x12000, scoped, tag = 'internal scratch']
  %s0 = inlined_call_operand.vmem [shape: bf16[512,128], index: 0, kind: input, shape index: {}]
  %s1 = inlined_call_operand.vmem [shape: f32[1,128], index: 1, kind: input, shape index: {}]
  %s2 = inlined_call_operand.vmem [shape: f32[1,128], index: 2, kind: input, shape index: {}]
  %s3 = inlined_call_operand.vmem [shape: bf16[128,128], index: 3, kind: input, shape index: {}]
  %s4 = inlined_call_operand.vmem [shape: bf16[512,128], index: 4, kind: output, shape index: {0}]
  %s5 = inlined_call_operand.vmem [shape: f32[1,128], index: 5, kind: output, shape index: {1}]
  %s6 = inlined_call_operand.vmem [shape: f32[1,128], index: 6, kind: output, shape index: {2}]
  %7 = xla_tuple %s4, %s5, %s6
  %s8 = sld [smem:[#allocation0]]
  $region46: #{bottleneck_forward.6} parent=0
    _
  %s10 = ssub.s32 1, %s8
  %s11 = scalar_select 0, %s10, %s8
  // Predicated region
  $region2: #{bottleneck_forward.6} parent=0 // pred_check
    _
  $region3: #{bottleneck_forward.6} parent=0 // pred_check_branch
    %13 = sbr.rel (0) target = $region5
  $region4: #{bottleneck_forward.6} parent=0 // pred_region
    _
  $region5: #{bottleneck_forward.6} parent=0 // pred_fallthru
    _
  // Predicated region
  $region6: #{bottleneck_forward.6} parent=0 // pred_check
    _
  $region7: #{bottleneck_forward.6} parent=0 // pred_check_branch
    %15 = sbr.rel (0) target = $region9
  $region8: #{bottleneck_forward.6} parent=0 // pred_region
    _
  $region9: #{bottleneck_forward.6} parent=0 // pred_fallthru
    _
  // Predicated region
  $region10: #{bottleneck_forward.6} parent=0 // pred_check
    _
  $region11: #{bottleneck_forward.6} parent=0 // pred_check_branch
    %17 = sbr.rel (0) target = $region13
  $region12: #{bottleneck_forward.6} parent=0 // pred_region
    _
  $region13: #{bottleneck_forward.6} parent=0 // pred_fallthru
    _
  // Predicated region
  $region14: #{bottleneck_forward.6} parent=0 // pred_check
    _
  $region15: #{bottleneck_forward.6} parent=0 // pred_check_branch
    %19 = sbr.rel (0) target = $region17
  $region16: #{bottleneck_forward.6} parent=0 // pred_region
    _
  $region17: #{bottleneck_forward.6} parent=0 // pred_fallthru
    _
  %v21 = vld [vmem:[%s0] sm:$0xf]
  %v22 = vld [vmem:[%s0 + $0x4] sm:$0xf]
  %v23 = vld [vmem:[%s0 + $0x8] sm:$0xf]
  %v24 = vld [vmem:[%s0 + $0xc] sm:$0xf]
  %v25 = vld [vmem:[%s0 + $0x10] sm:$0xf]
  %v26 = vld [vmem:[%s0 + $0x14] sm:$0xf]
  %v27 = vld [vmem:[%s0 + $0x18] sm:$0xf]
  %v28 = vld [vmem:[%s0 + $0x1c] sm:$0xf]
  %v29 = vld [vmem:[%s0 + $0x20] sm:$0xf]
  %v30 = vld [vmem:[%s0 + $0x24] sm:$0xf]
  %v31 = vld [vmem:[%s0 + $0x28] sm:$0xf]
  %v32 = vld [vmem:[%s0 + $0x2c] sm:$0xf]
  %v33 = vld [vmem:[%s0 + $0x30] sm:$0xf]
  %v34 = vld [vmem:[%s0 + $0x34] sm:$0xf]
  %v35 = vld [vmem:[%s0 + $0x38] sm:$0xf]
  %v36 = vld [vmem:[%s0 + $0x3c] sm:$0xf]
  %v37 = vld [vmem:[%s0 + $0x40] sm:$0xf]
  %v38 = vld [vmem:[%s0 + $0x44] sm:$0xf]
  %v39 = vld [vmem:[%s0 + $0x48] sm:$0xf]
  %v40 = vld [vmem:[%s0 + $0x4c] sm:$0xf]
  %v41 = vld [vmem:[%s0 + $0x50] sm:$0xf]
  %v42 = vld [vmem:[%s0 + $0x54] sm:$0xf]
  %v43 = vld [vmem:[%s0 + $0x58] sm:$0xf]
  %v44 = vld [vmem:[%s0 + $0x5c] sm:$0xf]
  %v45 = vld [vmem:[%s0 + $0x60] sm:$0xf]
  %v46 = vld [vmem:[%s0 + $0x64] sm:$0xf]
  %v47 = vld [vmem:[%s0 + $0x68] sm:$0xf]
  %v48 = vld [vmem:[%s0 + $0x6c] sm:$0xf]
  %v49 = vld [vmem:[%s0 + $0x70] sm:$0xf]
  %v50 = vld [vmem:[%s0 + $0x74] sm:$0xf]
  %v51 = vld [vmem:[%s0 + $0x78] sm:$0xf]
  %v52 = vld [vmem:[%s0 + $0x7c] sm:$0xf]
  %v53 = vld [vmem:[%s0 + $0x80] sm:$0xf]
  %v54 = vld [vmem:[%s0 + $0x84] sm:$0xf]
  %v55 = vld [vmem:[%s0 + $0x88] sm:$0xf]
  %v56 = vld [vmem:[%s0 + $0x8c] sm:$0xf]
  %v57 = vld [vmem:[%s0 + $0x90] sm:$0xf]
  %v58 = vld [vmem:[%s0 + $0x94] sm:$0xf]
  %v59 = vld [vmem:[%s0 + $0x98] sm:$0xf]
  %v60 = vld [vmem:[%s0 + $0x9c] sm:$0xf]
  %v61 = vld [vmem:[%s0 + $0xa0] sm:$0xf]
  %v62 = vld [vmem:[%s0 + $0xa4] sm:$0xf]
  %v63 = vld [vmem:[%s0 + $0xa8] sm:$0xf]
  %v64 = vld [vmem:[%s0 + $0xac] sm:$0xf]
  %v65 = vld [vmem:[%s0 + $0xb0] sm:$0xf]
  %v66 = vld [vmem:[%s0 + $0xb4] sm:$0xf]
  %v67 = vld [vmem:[%s0 + $0xb8] sm:$0xf]
  %v68 = vld [vmem:[%s0 + $0xbc] sm:$0xf]
  %v69 = vld [vmem:[%s0 + $0xc0] sm:$0xf]
  %v70 = vld [vmem:[%s0 + $0xc4] sm:$0xf]
  %v71 = vld [vmem:[%s0 + $0xc8] sm:$0xf]
  %v72 = vld [vmem:[%s0 + $0xcc] sm:$0xf]
  %v73 = vld [vmem:[%s0 + $0xd0] sm:$0xf]
  %v74 = vld [vmem:[%s0 + $0xd4] sm:$0xf]
  %v75 = vld [vmem:[%s0 + $0xd8] sm:$0xf]
  %v76 = vld [vmem:[%s0 + $0xdc] sm:$0xf]
  %v77 = vld [vmem:[%s0 + $0xe0] sm:$0xf]
  %v78 = vld [vmem:[%s0 + $0xe4] sm:$0xf]
  %v79 = vld [vmem:[%s0 + $0xe8] sm:$0xf]
  %v80 = vld [vmem:[%s0 + $0xec] sm:$0xf]
  %v81 = vld [vmem:[%s0 + $0xf0] sm:$0xf]
  %v82 = vld [vmem:[%s0 + $0xf4] sm:$0xf]
  %v83 = vld [vmem:[%s0 + $0xf8] sm:$0xf]
  %v84 = vld [vmem:[%s0 + $0xfc] sm:$0xf]
  %v85 = vunpack.c.l.bf16 %v21
  %v86 = vunpack.c.l.bf16 %v22
  %v87 = vunpack.c.l.bf16 %v23
  %v88 = vunpack.c.l.bf16 %v24
  %v89 = vunpack.c.l.bf16 %v25
  %v90 = vunpack.c.l.bf16 %v26
  %v91 = vunpack.c.l.bf16 %v27
  %v92 = vunpack.c.l.bf16 %v28
  %v93 = vunpack.c.l.bf16 %v29
  %v94 = vunpack.c.l.bf16 %v30
  %v95 = vunpack.c.l.bf16 %v31
  %v96 = vunpack.c.l.bf16 %v32
  %v97 = vunpack.c.l.bf16 %v33
  %v98 = vunpack.c.l.bf16 %v34
  %v99 = vunpack.c.l.bf16 %v35
  %v100 = vunpack.c.l.bf16 %v36
  %v101 = vunpack.c.l.bf16 %v37
  %v102 = vunpack.c.l.bf16 %v38
  %v103 = vunpack.c.l.bf16 %v39
  %v104 = vunpack.c.l.bf16 %v40
  %v105 = vunpack.c.l.bf16 %v41
  %v106 = vunpack.c.l.bf16 %v42
  %v107 = vunpack.c.l.bf16 %v43
  %v108 = vunpack.c.l.bf16 %v44
  %v109 = vunpack.c.l.bf16 %v45
  %v110 = vunpack.c.l.bf16 %v46
  %v111 = vunpack.c.l.bf16 %v47
  %v112 = vunpack.c.l.bf16 %v48
  %v113 = vunpack.c.l.bf16 %v49
  %v114 = vunpack.c.l.bf16 %v50
  %v115 = vunpack.c.l.bf16 %v51
  %v116 = vunpack.c.l.bf16 %v52
  %v117 = vunpack.c.l.bf16 %v53
  %v118 = vunpack.c.l.bf16 %v54
  %v119 = vunpack.c.l.bf16 %v55
  %v120 = vunpack.c.l.bf16 %v56
  %v121 = vunpack.c.l.bf16 %v57
  %v122 = vunpack.c.l.bf16 %v58
  %v123 = vunpack.c.l.bf16 %v59
  %v124 = vunpack.c.l.bf16 %v60
  %v125 = vunpack.c.l.bf16 %v61
  %v126 = vunpack.c.l.bf16 %v62
  %v127 = vunpack.c.l.bf16 %v63
  %v128 = vunpack.c.l.bf16 %v64
  %v129 = vunpack.c.l.bf16 %v65
  %v130 = vunpack.c.l.bf16 %v66
  %v131 = vunpack.c.l.bf16 %v67
  %v132 = vunpack.c.l.bf16 %v68
  %v133 = vunpack.c.l.bf16 %v69
  %v134 = vunpack.c.l.bf16 %v70
  %v135 = vunpack.c.l.bf16 %v71
  %v136 = vunpack.c.l.bf16 %v72
  %v137 = vunpack.c.l.bf16 %v73
  %v138 = vunpack.c.l.bf16 %v74
  %v139 = vunpack.c.l.bf16 %v75
  %v140 = vunpack.c.l.bf16 %v76
  %v141 = vunpack.c.l.bf16 %v77
  %v142 = vunpack.c.l.bf16 %v78
  %v143 = vunpack.c.l.bf16 %v79
  %v144 = vunpack.c.l.bf16 %v80
  %v145 = vunpack.c.l.bf16 %v81
  %v146 = vunpack.c.l.bf16 %v82
  %v147 = vunpack.c.l.bf16 %v83
  %v148 = vunpack.c.l.bf16 %v84
  %v149 = vld [vmem:[%s1] sm:$0x1]
  %v151 = vlaneseq
  %v152 = vshrl.u32 %v151, 7
  %v153 = vsub.s32 0, %v152
  %v154 = vrot.slane %v149, %v153
  %v156 = vmul.f32 %v85, %v154
  %v157 = vmul.f32 %v86, %v154
  %v158 = vmul.f32 %v87, %v154
  %v159 = vmul.f32 %v88, %v154
  %v160 = vmul.f32 %v89, %v154
  %v161 = vmul.f32 %v90, %v154
  %v162 = vmul.f32 %v91, %v154
  %v163 = vmul.f32 %v92, %v154
  %v164 = vmul.f32 %v93, %v154
  %v165 = vmul.f32 %v94, %v154
  %v166 = vmul.f32 %v95, %v154
  %v167 = vmul.f32 %v96, %v154
  %v168 = vmul.f32 %v97, %v154
  %v169 = vmul.f32 %v98, %v154
  %v170 = vmul.f32 %v99, %v154
  %v171 = vmul.f32 %v100, %v154
  %v172 = vmul.f32 %v101, %v154
  %v173 = vmul.f32 %v102, %v154
  %v174 = vmul.f32 %v103, %v154
  %v175 = vmul.f32 %v104, %v154
  %v176 = vmul.f32 %v105, %v154
  %v177 = vmul.f32 %v106, %v154
  %v178 = vmul.f32 %v107, %v154
  %v179 = vmul.f32 %v108, %v154
  %v180 = vmul.f32 %v109, %v154
  %v181 = vmul.f32 %v110, %v154
  %v182 = vmul.f32 %v111, %v154
  %v183 = vmul.f32 %v112, %v154
  %v184 = vmul.f32 %v113, %v154
  %v185 = vmul.f32 %v114, %v154
  %v186 = vmul.f32 %v115, %v154
  %v187 = vmul.f32 %v116, %v154
  %v188 = vmul.f32 %v117, %v154
  %v189 = vmul.f32 %v118, %v154
  %v190 = vmul.f32 %v119, %v154
  %v191 = vmul.f32 %v120, %v154
  %v192 = vmul.f32 %v121, %v154
  %v193 = vmul.f32 %v122, %v154
  %v194 = vmul.f32 %v123, %v154
  %v195 = vmul.f32 %v124, %v154
  %v196 = vmul.f32 %v125, %v154
  %v197 = vmul.f32 %v126, %v154
  %v198 = vmul.f32 %v127, %v154
  %v199 = vmul.f32 %v128, %v154
  %v200 = vmul.f32 %v129, %v154
  %v201 = vmul.f32 %v130, %v154
  %v202 = vmul.f32 %v131, %v154
  %v203 = vmul.f32 %v132, %v154
  %v204 = vmul.f32 %v133, %v154
  %v205 = vmul.f32 %v134, %v154
  %v206 = vmul.f32 %v135, %v154
  %v207 = vmul.f32 %v136, %v154
  %v208 = vmul.f32 %v137, %v154
  %v209 = vmul.f32 %v138, %v154
  %v210 = vmul.f32 %v139, %v154
  %v211 = vmul.f32 %v140, %v154
  %v212 = vmul.f32 %v141, %v154
  %v213 = vmul.f32 %v142, %v154
  %v214 = vmul.f32 %v143, %v154
  %v215 = vmul.f32 %v144, %v154
  %v216 = vmul.f32 %v145, %v154
  %v217 = vmul.f32 %v146, %v154
  %v218 = vmul.f32 %v147, %v154
  %v219 = vmul.f32 %v148, %v154
  %v220 = vld [vmem:[%s2] sm:$0x1]
  %v222 = vlaneseq
  %v223 = vshrl.u32 %v222, 7
  %v224 = vsub.s32 0, %v223
  %v225 = vrot.slane %v220, %v224
  %v227 = vadd.f32 %v156, %v225
  %v228 = vadd.f32 %v157, %v225
  %v229 = vadd.f32 %v158, %v225
  %v230 = vadd.f32 %v159, %v225
  %v231 = vadd.f32 %v160, %v225
  %v232 = vadd.f32 %v161, %v225
  %v233 = vadd.f32 %v162, %v225
  %v234 = vadd.f32 %v163, %v225
  %v235 = vadd.f32 %v164, %v225
  %v236 = vadd.f32 %v165, %v225
  %v237 = vadd.f32 %v166, %v225
  %v238 = vadd.f32 %v167, %v225
  %v239 = vadd.f32 %v168, %v225
  %v240 = vadd.f32 %v169, %v225
  %v241 = vadd.f32 %v170, %v225
  %v242 = vadd.f32 %v171, %v225
  %v243 = vadd.f32 %v172, %v225
  %v244 = vadd.f32 %v173, %v225
  %v245 = vadd.f32 %v174, %v225
  %v246 = vadd.f32 %v175, %v225
  %v247 = vadd.f32 %v176, %v225
  %v248 = vadd.f32 %v177, %v225
  %v249 = vadd.f32 %v178, %v225
  %v250 = vadd.f32 %v179, %v225
  %v251 = vadd.f32 %v180, %v225
  %v252 = vadd.f32 %v181, %v225
  %v253 = vadd.f32 %v182, %v225
  %v254 = vadd.f32 %v183, %v225
  %v255 = vadd.f32 %v184, %v225
  %v256 = vadd.f32 %v185, %v225
  %v257 = vadd.f32 %v186, %v225
  %v258 = vadd.f32 %v187, %v225
  %v259 = vadd.f32 %v188, %v225
  %v260 = vadd.f32 %v189, %v225
  %v261 = vadd.f32 %v190, %v225
  %v262 = vadd.f32 %v191, %v225
  %v263 = vadd.f32 %v192, %v225
  %v264 = vadd.f32 %v193, %v225
  %v265 = vadd.f32 %v194, %v225
  %v266 = vadd.f32 %v195, %v225
  %v267 = vadd.f32 %v196, %v225
  %v268 = vadd.f32 %v197, %v225
  %v269 = vadd.f32 %v198, %v225
  %v270 = vadd.f32 %v199, %v225
  %v271 = vadd.f32 %v200, %v225
  %v272 = vadd.f32 %v201, %v225
  %v273 = vadd.f32 %v202, %v225
  %v274 = vadd.f32 %v203, %v225
  %v275 = vadd.f32 %v204, %v225
  %v276 = vadd.f32 %v205, %v225
  %v277 = vadd.f32 %v206, %v225
  %v278 = vadd.f32 %v207, %v225
  %v279 = vadd.f32 %v208, %v225
  %v280 = vadd.f32 %v209, %v225
  %v281 = vadd.f32 %v210, %v225
  %v282 = vadd.f32 %v211, %v225
  %v283 = vadd.f32 %v212, %v225
  %v284 = vadd.f32 %v213, %v225
  %v285 = vadd.f32 %v214, %v225
  %v286 = vadd.f32 %v215, %v225
  %v287 = vadd.f32 %v216, %v225
  %v288 = vadd.f32 %v217, %v225
  %v289 = vadd.f32 %v218, %v225
  %v290 = vadd.f32 %v219, %v225
  %v291 = vmax.f32 %v227, 0.0
  %v292 = vmax.f32 %v228, 0.0
  %v293 = vmax.f32 %v229, 0.0
  %v294 = vmax.f32 %v230, 0.0
  %v295 = vmax.f32 %v231, 0.0
  %v296 = vmax.f32 %v232, 0.0
  %v297 = vmax.f32 %v233, 0.0
  %v298 = vmax.f32 %v234, 0.0
  %v299 = vmax.f32 %v235, 0.0
  %v300 = vmax.f32 %v236, 0.0
  %v301 = vmax.f32 %v237, 0.0
  %v302 = vmax.f32 %v238, 0.0
  %v303 = vmax.f32 %v239, 0.0
  %v304 = vmax.f32 %v240, 0.0
  %v305 = vmax.f32 %v241, 0.0
  %v306 = vmax.f32 %v242, 0.0
  %v307 = vmax.f32 %v243, 0.0
  %v308 = vmax.f32 %v244, 0.0
  %v309 = vmax.f32 %v245, 0.0
  %v310 = vmax.f32 %v246, 0.0
  %v311 = vmax.f32 %v247, 0.0
  %v312 = vmax.f32 %v248, 0.0
  %v313 = vmax.f32 %v249, 0.0
  %v314 = vmax.f32 %v250, 0.0
  %v315 = vmax.f32 %v251, 0.0
  %v316 = vmax.f32 %v252, 0.0
  %v317 = vmax.f32 %v253, 0.0
  %v318 = vmax.f32 %v254, 0.0
  %v319 = vmax.f32 %v255, 0.0
  %v320 = vmax.f32 %v256, 0.0
  %v321 = vmax.f32 %v257, 0.0
  %v322 = vmax.f32 %v258, 0.0
  %v323 = vmax.f32 %v259, 0.0
  %v324 = vmax.f32 %v260, 0.0
  %v325 = vmax.f32 %v261, 0.0
  %v326 = vmax.f32 %v262, 0.0
  %v327 = vmax.f32 %v263, 0.0
  %v328 = vmax.f32 %v264, 0.0
  %v329 = vmax.f32 %v265, 0.0
  %v330 = vmax.f32 %v266, 0.0
  %v331 = vmax.f32 %v267, 0.0
  %v332 = vmax.f32 %v268, 0.0
  %v333 = vmax.f32 %v269, 0.0
  %v334 = vmax.f32 %v270, 0.0
  %v335 = vmax.f32 %v271, 0.0
  %v336 = vmax.f32 %v272, 0.0
  %v337 = vmax.f32 %v273, 0.0
  %v338 = vmax.f32 %v274, 0.0
  %v339 = vmax.f32 %v275, 0.0
  %v340 = vmax.f32 %v276, 0.0
  %v341 = vmax.f32 %v277, 0.0
  %v342 = vmax.f32 %v278, 0.0
  %v343 = vmax.f32 %v279, 0.0
  %v344 = vmax.f32 %v280, 0.0
  %v345 = vmax.f32 %v281, 0.0
  %v346 = vmax.f32 %v282, 0.0
  %v347 = vmax.f32 %v283, 0.0
  %v348 = vmax.f32 %v284, 0.0
  %v349 = vmax.f32 %v285, 0.0
  %v350 = vmax.f32 %v286, 0.0
  %v351 = vmax.f32 %v287, 0.0
  %v352 = vmax.f32 %v288, 0.0
  %v353 = vmax.f32 %v289, 0.0
  %v354 = vmax.f32 %v290, 0.0
  %v355 = vpack.c.bf16 %v292, %v291
  %v356 = vpack.c.bf16 %v294, %v293
  %v357 = vpack.c.bf16 %v296, %v295
  %v358 = vpack.c.bf16 %v298, %v297
  %v359 = vpack.c.bf16 %v300, %v299
  %v360 = vpack.c.bf16 %v302, %v301
  %v361 = vpack.c.bf16 %v304, %v303
  %v362 = vpack.c.bf16 %v306, %v305
  %v363 = vpack.c.bf16 %v308, %v307
  %v364 = vpack.c.bf16 %v310, %v309
  %v365 = vpack.c.bf16 %v312, %v311
  %v366 = vpack.c.bf16 %v314, %v313
  %v367 = vpack.c.bf16 %v316, %v315
  %v368 = vpack.c.bf16 %v318, %v317
  %v369 = vpack.c.bf16 %v320, %v319
  %v370 = vpack.c.bf16 %v322, %v321
  %v371 = vpack.c.bf16 %v324, %v323
  %v372 = vpack.c.bf16 %v326, %v325
  %v373 = vpack.c.bf16 %v328, %v327
  %v374 = vpack.c.bf16 %v330, %v329
  %v375 = vpack.c.bf16 %v332, %v331
  %v376 = vpack.c.bf16 %v334, %v333
  %v377 = vpack.c.bf16 %v336, %v335
  %v378 = vpack.c.bf16 %v338, %v337
  %v379 = vpack.c.bf16 %v340, %v339
  %v380 = vpack.c.bf16 %v342, %v341
  %v381 = vpack.c.bf16 %v344, %v343
  %v382 = vpack.c.bf16 %v346, %v345
  %v383 = vpack.c.bf16 %v348, %v347
  %v384 = vpack.c.bf16 %v350, %v349
  %v385 = vpack.c.bf16 %v352, %v351
  %v386 = vpack.c.bf16 %v354, %v353
  %v387 = vld [vmem:[%s3] sm:$0xf]
  %v388 = vld [vmem:[%s3 + $0x4] sm:$0xf]
  %v389 = vld [vmem:[%s3 + $0x8] sm:$0xf]
  %v390 = vld [vmem:[%s3 + $0xc] sm:$0xf]
  %v391 = vld [vmem:[%s3 + $0x10] sm:$0xf]
  %v392 = vld [vmem:[%s3 + $0x14] sm:$0xf]
  %v393 = vld [vmem:[%s3 + $0x18] sm:$0xf]
  %v394 = vld [vmem:[%s3 + $0x1c] sm:$0xf]
  %v395 = vld [vmem:[%s3 + $0x20] sm:$0xf]
  %v396 = vld [vmem:[%s3 + $0x24] sm:$0xf]
  %v397 = vld [vmem:[%s3 + $0x28] sm:$0xf]
  %v398 = vld [vmem:[%s3 + $0x2c] sm:$0xf]
  %v399 = vld [vmem:[%s3 + $0x30] sm:$0xf]
  %v400 = vld [vmem:[%s3 + $0x34] sm:$0xf]
  %v401 = vld [vmem:[%s3 + $0x38] sm:$0xf]
  %v402 = vld [vmem:[%s3 + $0x3c] sm:$0xf]
  %v419 = vunpack.c.l.b16 %v387
  %v420 = vunpack.c.l.b16 %v388
  %v421 = vunpack.c.l.b16 %v389
  %v422 = vunpack.c.l.b16 %v390
  %v423 = vunpack.c.l.b16 %v391
  %v424 = vunpack.c.l.b16 %v392
  %v425 = vunpack.c.l.b16 %v393
  %v426 = vunpack.c.l.b16 %v394
  %v427 = vunpack.c.l.b16 %v395
  %v428 = vunpack.c.l.b16 %v396
  %v429 = vunpack.c.l.b16 %v397
  %v430 = vunpack.c.l.b16 %v398
  %v431 = vunpack.c.l.b16 %v399
  %v432 = vunpack.c.l.b16 %v400
  %v433 = vunpack.c.l.b16 %v401
  %v434 = vunpack.c.l.b16 %v402
  %v435 = vpack.c.b16 %v420, %v419
  %v436 = vpack.c.b16 %v422, %v421
  %v437 = vpack.c.b16 %v424, %v423
  %v438 = vpack.c.b16 %v426, %v425
  %v439 = vpack.c.b16 %v428, %v427
  %v440 = vpack.c.b16 %v430, %v429
  %v441 = vpack.c.b16 %v432, %v431
  %v442 = vpack.c.b16 %v434, %v433
  %451 = vmatprep.subr.bf16.mxu0 0
  %452 = vmatpush1.bf16.msra.mxu0 %v435
  %453 = vmatprep.subr.bf16.mxu0 0
  %454 = vmatpush1.bf16.msra.mxu0 %v436
  %455 = vmatprep.subr.bf16.mxu0 0
  %456 = vmatpush1.bf16.msra.mxu0 %v437
  %457 = vmatprep.subr.bf16.mxu0 0
  %458 = vmatpush1.bf16.msra.mxu0 %v438
  %459 = vmatprep.subr.bf16.mxu0 0
  %460 = vmatpush1.bf16.msra.mxu0 %v439
  %461 = vmatprep.subr.bf16.mxu0 0
  %462 = vmatpush1.bf16.msra.mxu0 %v440
  %463 = vmatprep.subr.bf16.mxu0 0
  %464 = vmatpush1.bf16.msra.mxu0 %v441
  %465 = vmatprep.subr.bf16.mxu0 0
  %466 = vmatpush1.bf16.msra.mxu0 %v442
  %467 = vmatprep.subr.bf16.mxu0 0
  %468 = vmatpush1.bf16.msra.mxu0 0
  %469 = vmatprep.subr.bf16.mxu0 0
  %470 = vmatpush1.bf16.msra.mxu0 0
  %471 = vmatprep.subr.bf16.mxu0 0
  %472 = vmatpush1.bf16.msra.mxu0 0
  %473 = vmatprep.subr.bf16.mxu0 0
  %474 = vmatpush1.bf16.msra.mxu0 0
  %475 = vmatprep.subr.bf16.mxu0 0
  %476 = vmatpush1.bf16.msra.mxu0 0
  %477 = vmatprep.subr.bf16.mxu0 0
  %478 = vmatpush1.bf16.msra.mxu0 0
  %479 = vmatprep.subr.bf16.mxu0 0
  %480 = vmatpush1.bf16.msra.mxu0 0
  %481 = vmatprep.subr.bf16.mxu0 0
  %482 = vmatpush1.bf16.msra.mxu0 0
  %483 = vmatprep.mubr.bf16.mxu0 0
  %484 = vmatmul.mubr.bf16.gmra.mrb[0].mxu0 %v355
  %v485 = vpop.f32.mrb[0].mxu0
  %v486 = vadd.f32 0.0, %v485
  %v487 = vpop.f32.mrb[0].mxu0
  %v488 = vpop.f32.mrb[0].mxu0
  %v489 = vadd.f32 0.0, %v488
  %v490 = vpop.f32.mrb[0].mxu0
  %491 = vmatprep.mubr.bf16.mxu0 0
  %492 = vmatmul.mubr.bf16.gmra.mrb[0].mxu0 %v356
  %v493 = vpop.f32.mrb[0].mxu0
  %v494 = vadd.f32 0.0, %v493
  %v495 = vpop.f32.mrb[0].mxu0
  %v496 = vpop.f32.mrb[0].mxu0
  %v497 = vadd.f32 0.0, %v496
  %v498 = vpop.f32.mrb[0].mxu0
  %499 = vmatprep.mubr.bf16.mxu0 0
  %500 = vmatmul.mubr.bf16.gmra.mrb[0].mxu0 %v357
  %v501 = vpop.f32.mrb[0].mxu0
  %v502 = vadd.f32 0.0, %v501
  %v503 = vpop.f32.mrb[0].mxu0
  %v504 = vpop.f32.mrb[0].mxu0
  %v505 = vadd.f32 0.0, %v504
  %v506 = vpop.f32.mrb[0].mxu0
  %507 = vmatprep.mubr.bf16.mxu0 0
  %508 = vmatmul.mubr.bf16.gmra.mrb[0].mxu0 %v358
  %v509 = vpop.f32.mrb[0].mxu0
  %v510 = vadd.f32 0.0, %v509
  %v511 = vpop.f32.mrb[0].mxu0
  %v512 = vpop.f32.mrb[0].mxu0
  %v513 = vadd.f32 0.0, %v512
  %v514 = vpop.f32.mrb[0].mxu0
  %515 = vmatprep.mubr.bf16.mxu0 0
  %516 = vmatmul.mubr.bf16.gmra.mrb[0].mxu0 %v359
  %v517 = vpop.f32.mrb[0].mxu0
  %v518 = vadd.f32 0.0, %v517
  %v519 = vpop.f32.mrb[0].mxu0
  %v520 = vpop.f32.mrb[0].mxu0
  %v521 = vadd.f32 0.0, %v520
  %v522 = vpop.f32.mrb[0].mxu0
  %523 = vmatprep.mubr.bf16.mxu0 0
  %524 = vmatmul.mubr.bf16.gmra.mrb[0].mxu0 %v360
  %v525 = vpop.f32.mrb[0].mxu0
  %v526 = vadd.f32 0.0, %v525
  %v527 = vpop.f32.mrb[0].mxu0
  %v528 = vpop.f32.mrb[0].mxu0
  %v529 = vadd.f32 0.0, %v528
  %v530 = vpop.f32.mrb[0].mxu0
  %531 = vmatprep.mubr.bf16.mxu0 0
  %532 = vmatmul.mubr.bf16.gmra.mrb[0].mxu0 %v361
  %v533 = vpop.f32.mrb[0].mxu0
  %v534 = vadd.f32 0.0, %v533
  %v535 = vpop.f32.mrb[0].mxu0
  %v536 = vpop.f32.mrb[0].mxu0
  %v537 = vadd.f32 0.0, %v536
  %v538 = vpop.f32.mrb[0].mxu0
  %539 = vmatprep.mubr.bf16.mxu0 0
  %540 = vmatmul.mubr.bf16.gmra.mrb[0].mxu0 %v362
  %v541 = vpop.f32.mrb[0].mxu0
  %v542 = vadd.f32 0.0, %v541
  %v543 = vpop.f32.mrb[0].mxu0
  %v544 = vpop.f32.mrb[0].mxu0
  %v545 = vadd.f32 0.0, %v544
  %v546 = vpop.f32.mrb[0].mxu0
  %547 = vmatprep.mubr.bf16.mxu0 0
  %548 = vmatmul.mubr.bf16.gmra.mrb[0].mxu0 %v363
  %v549 = vpop.f32.mrb[0].mxu0
  %v550 = vadd.f32 0.0, %v549
  %v551 = vpop.f32.mrb[0].mxu0
  %v552 = vpop.f32.mrb[0].mxu0
  %v553 = vadd.f32 0.0, %v552
  %v554 = vpop.f32.mrb[0].mxu0
  %555 = vmatprep.mubr.bf16.mxu0 0
  %556 = vmatmul.mubr.bf16.gmra.mrb[0].mxu0 %v364
  %v557 = vpop.f32.mrb[0].mxu0
  %v558 = vadd.f32 0.0, %v557
  %v559 = vpop.f32.mrb[0].mxu0
  %v560 = vpop.f32.mrb[0].mxu0
  %v561 = vadd.f32 0.0, %v560
  %v562 = vpop.f32.mrb[0].mxu0
  %563 = vmatprep.mubr.bf16.mxu0 0
  %564 = vmatmul.mubr.bf16.gmra.mrb[0].mxu0 %v365
  %v565 = vpop.f32.mrb[0].mxu0
  %v566 = vadd.f32 0.0, %v565
  %v567 = vpop.f32.mrb[0].mxu0
  %v568 = vpop.f32.mrb[0].mxu0
  %v569 = vadd.f32 0.0, %v568
  %v570 = vpop.f32.mrb[0].mxu0
  %571 = vmatprep.mubr.bf16.mxu0 0
  %572 = vmatmul.mubr.bf16.gmra.mrb[0].mxu0 %v366
  %v573 = vpop.f32.mrb[0].mxu0
  %v574 = vadd.f32 0.0, %v573
  %v575 = vpop.f32.mrb[0].mxu0
  %v576 = vpop.f32.mrb[0].mxu0
  %v577 = vadd.f32 0.0, %v576
  %v578 = vpop.f32.mrb[0].mxu0
  %579 = vmatprep.mubr.bf16.mxu0 0
  %580 = vmatmul.mubr.bf16.gmra.mrb[0].mxu0 %v367
  %v581 = vpop.f32.mrb[0].mxu0
  %v582 = vadd.f32 0.0, %v581
  %v583 = vpop.f32.mrb[0].mxu0
  %v584 = vpop.f32.mrb[0].mxu0
  %v585 = vadd.f32 0.0, %v584
  %v586 = vpop.f32.mrb[0].mxu0
  %587 = vmatprep.mubr.bf16.mxu0 0
  %588 = vmatmul.mubr.bf16.gmra.mrb[0].mxu0 %v368
  %v589 = vpop.f32.mrb[0].mxu0
  %v590 = vadd.f32 0.0, %v589
  %v591 = vpop.f32.mrb[0].mxu0
  %v592 = vpop.f32.mrb[0].mxu0
  %v593 = vadd.f32 0.0, %v592
  %v594 = vpop.f32.mrb[0].mxu0
  %595 = vmatprep.mubr.bf16.mxu0 0
  %596 = vmatmul.mubr.bf16.gmra.mrb[0].mxu0 %v369
  %v597 = vpop.f32.mrb[0].mxu0
  %v598 = vadd.f32 0.0, %v597
  %v599 = vpop.f32.mrb[0].mxu0
  %v600 = vpop.f32.mrb[0].mxu0
  %v601 = vadd.f32 0.0, %v600
  %v602 = vpop.f32.mrb[0].mxu0
  %603 = vmatprep.mubr.bf16.mxu0 0
  %604 = vmatmul.mubr.bf16.gmra.mrb[0].mxu0 %v370
  %v605 = vpop.f32.mrb[0].mxu0
  %v606 = vadd.f32 0.0, %v605
  %v607 = vpop.f32.mrb[0].mxu0
  %v608 = vpop.f32.mrb[0].mxu0
  %v609 = vadd.f32 0.0, %v608
  %v610 = vpop.f32.mrb[0].mxu0
  %611 = vmatprep.mubr.bf16.mxu0 0
  %612 = vmatmul.mubr.bf16.gmra.mrb[0].mxu0 %v371
  %v613 = vpop.f32.mrb[0].mxu0
  %v614 = vadd.f32 0.0, %v613
  %v615 = vpop.f32.mrb[0].mxu0
  %v616 = vpop.f32.mrb[0].mxu0
  %v617 = vadd.f32 0.0, %v616
  %v618 = vpop.f32.mrb[0].mxu0
  %619 = vmatprep.mubr.bf16.mxu0 0
  %620 = vmatmul.mubr.bf16.gmra.mrb[0].mxu0 %v372
  %v621 = vpop.f32.mrb[0].mxu0
  %v622 = vadd.f32 0.0, %v621
  %v623 = vpop.f32.mrb[0].mxu0
  %v624 = vpop.f32.mrb[0].mxu0
  %v625 = vadd.f32 0.0, %v624
  %v626 = vpop.f32.mrb[0].mxu0
  %627 = vmatprep.mubr.bf16.mxu0 0
  %628 = vmatmul.mubr.bf16.gmra.mrb[0].mxu0 %v373
  %v629 = vpop.f32.mrb[0].mxu0
  %v630 = vadd.f32 0.0, %v629
  %v631 = vpop.f32.mrb[0].mxu0
  %v632 = vpop.f32.mrb[0].mxu0
  %v633 = vadd.f32 0.0, %v632
  %v634 = vpop.f32.mrb[0].mxu0
  %635 = vmatprep.mubr.bf16.mxu0 0
  %636 = vmatmul.mubr.bf16.gmra.mrb[0].mxu0 %v374
  %v637 = vpop.f32.mrb[0].mxu0
  %v638 = vadd.f32 0.0, %v637
  %v639 = vpop.f32.mrb[0].mxu0
  %v640 = vpop.f32.mrb[0].mxu0
  %v641 = vadd.f32 0.0, %v640
  %v642 = vpop.f32.mrb[0].mxu0
  %643 = vmatprep.mubr.bf16.mxu0 0
  %644 = vmatmul.mubr.bf16.gmra.mrb[0].mxu0 %v375
  %v645 = vpop.f32.mrb[0].mxu0
  %v646 = vadd.f32 0.0, %v645
  %v647 = vpop.f32.mrb[0].mxu0
  %v648 = vpop.f32.mrb[0].mxu0
  %v649 = vadd.f32 0.0, %v648
  %v650 = vpop.f32.mrb[0].mxu0
  %651 = vmatprep.mubr.bf16.mxu0 0
  %652 = vmatmul.mubr.bf16.gmra.mrb[0].mxu0 %v376
  %v653 = vpop.f32.mrb[0].mxu0
  %v654 = vadd.f32 0.0, %v653
  %v655 = vpop.f32.mrb[0].mxu0
  %v656 = vpop.f32.mrb[0].mxu0
  %v657 = vadd.f32 0.0, %v656
  %v658 = vpop.f32.mrb[0].mxu0
  %659 = vmatprep.mubr.bf16.mxu0 0
  %660 = vmatmul.mubr.bf16.gmra.mrb[0].mxu0 %v377
  %v661 = vpop.f32.mrb[0].mxu0
  %v662 = vadd.f32 0.0, %v661
  %v663 = vpop.f32.mrb[0].mxu0
  %v664 = vpop.f32.mrb[0].mxu0
  %v665 = vadd.f32 0.0, %v664
  %v666 = vpop.f32.mrb[0].mxu0
  %667 = vmatprep.mubr.bf16.mxu0 0
  %668 = vmatmul.mubr.bf16.gmra.mrb[0].mxu0 %v378
  %v669 = vpop.f32.mrb[0].mxu0
  %v670 = vadd.f32 0.0, %v669
  %v671 = vpop.f32.mrb[0].mxu0
  %v672 = vpop.f32.mrb[0].mxu0
  %v673 = vadd.f32 0.0, %v672
  %v674 = vpop.f32.mrb[0].mxu0
  %675 = vmatprep.mubr.bf16.mxu0 0
  %676 = vmatmul.mubr.bf16.gmra.mrb[0].mxu0 %v379
  %v677 = vpop.f32.mrb[0].mxu0
  %v678 = vadd.f32 0.0, %v677
  %v679 = vpop.f32.mrb[0].mxu0
  %v680 = vpop.f32.mrb[0].mxu0
  %v681 = vadd.f32 0.0, %v680
  %v682 = vpop.f32.mrb[0].mxu0
  %683 = vmatprep.mubr.bf16.mxu0 0
  %684 = vmatmul.mubr.bf16.gmra.mrb[0].mxu0 %v380
  %v685 = vpop.f32.mrb[0].mxu0
  %v686 = vadd.f32 0.0, %v685
  %v687 = vpop.f32.mrb[0].mxu0
  %v688 = vpop.f32.mrb[0].mxu0
  %v689 = vadd.f32 0.0, %v688
  %v690 = vpop.f32.mrb[0].mxu0
  %691 = vmatprep.mubr.bf16.mxu0 0
  %692 = vmatmul.mubr.bf16.gmra.mrb[0].mxu0 %v381
  %v693 = vpop.f32.mrb[0].mxu0
  %v694 = vadd.f32 0.0, %v693
  %v695 = vpop.f32.mrb[0].mxu0
  %v696 = vpop.f32.mrb[0].mxu0
  %v697 = vadd.f32 0.0, %v696
  %v698 = vpop.f32.mrb[0].mxu0
  %699 = vmatprep.mubr.bf16.mxu0 0
  %700 = vmatmul.mubr.bf16.gmra.mrb[0].mxu0 %v382
  %v701 = vpop.f32.mrb[0].mxu0
  %v702 = vadd.f32 0.0, %v701
  %v703 = vpop.f32.mrb[0].mxu0
  %v704 = vpop.f32.mrb[0].mxu0
  %v705 = vadd.f32 0.0, %v704
  %v706 = vpop.f32.mrb[0].mxu0
  %707 = vmatprep.mubr.bf16.mxu0 0
  %708 = vmatmul.mubr.bf16.gmra.mrb[0].mxu0 %v383
  %v709 = vpop.f32.mrb[0].mxu0
  %v710 = vadd.f32 0.0, %v709
  %v711 = vpop.f32.mrb[0].mxu0
  %v712 = vpop.f32.mrb[0].mxu0
  %v713 = vadd.f32 0.0, %v712
  %v714 = vpop.f32.mrb[0].mxu0
  %715 = vmatprep.mubr.bf16.mxu0 0
  %716 = vmatmul.mubr.bf16.gmra.mrb[0].mxu0 %v384
  %v717 = vpop.f32.mrb[0].mxu0
  %v718 = vadd.f32 0.0, %v717
  %v719 = vpop.f32.mrb[0].mxu0
  %v720 = vpop.f32.mrb[0].mxu0
  %v721 = vadd.f32 0.0, %v720
  %v722 = vpop.f32.mrb[0].mxu0
  %723 = vmatprep.mubr.bf16.mxu0 0
  %724 = vmatmul.mubr.bf16.gmra.mrb[0].mxu0 %v385
  %v725 = vpop.f32.mrb[0].mxu0
  %v726 = vadd.f32 0.0, %v725
  %v727 = vpop.f32.mrb[0].mxu0
  %v728 = vpop.f32.mrb[0].mxu0
  %v729 = vadd.f32 0.0, %v728
  %v730 = vpop.f32.mrb[0].mxu0
  %731 = vmatprep.mubr.bf16.mxu0 0
  %732 = vmatmul.mubr.bf16.gmra.mrb[0].mxu0 %v386
  %v733 = vpop.f32.mrb[0].mxu0
  %v734 = vadd.f32 0.0, %v733
  %v735 = vpop.f32.mrb[0].mxu0
  %v736 = vpop.f32.mrb[0].mxu0
  %v737 = vadd.f32 0.0, %v736
  %v738 = vpop.f32.mrb[0].mxu0
  %739 = vdwg.mxu0
  %v740 = vpack.c.bf16 %v489, %v486
  %v741 = vpack.c.bf16 %v497, %v494
  %v742 = vpack.c.bf16 %v505, %v502
  %v743 = vpack.c.bf16 %v513, %v510
  %v744 = vpack.c.bf16 %v521, %v518
  %v745 = vpack.c.bf16 %v529, %v526
  %v746 = vpack.c.bf16 %v537, %v534
  %v747 = vpack.c.bf16 %v545, %v542
  %v748 = vpack.c.bf16 %v553, %v550
  %v749 = vpack.c.bf16 %v561, %v558
  %v750 = vpack.c.bf16 %v569, %v566
  %v751 = vpack.c.bf16 %v577, %v574
  %v752 = vpack.c.bf16 %v585, %v582
  %v753 = vpack.c.bf16 %v593, %v590
  %v754 = vpack.c.bf16 %v601, %v598
  %v755 = vpack.c.bf16 %v609, %v606
  %v756 = vpack.c.bf16 %v617, %v614
  %v757 = vpack.c.bf16 %v625, %v622
  %v758 = vpack.c.bf16 %v633, %v630
  %v759 = vpack.c.bf16 %v641, %v638
  %v760 = vpack.c.bf16 %v649, %v646
  %v761 = vpack.c.bf16 %v657, %v654
  %v762 = vpack.c.bf16 %v665, %v662
  %v763 = vpack.c.bf16 %v673, %v670
  %v764 = vpack.c.bf16 %v681, %v678
  %v765 = vpack.c.bf16 %v689, %v686
  %v766 = vpack.c.bf16 %v697, %v694
  %v767 = vpack.c.bf16 %v705, %v702
  %v768 = vpack.c.bf16 %v713, %v710
  %v769 = vpack.c.bf16 %v721, %v718
  %v770 = vpack.c.bf16 %v729, %v726
  %v771 = vpack.c.bf16 %v737, %v734
  %v804 = vunpack.c.l.b16 %v740
  %v805 = vunpack.c.h.b16 %v740
  %v806 = vunpack.c.l.b16 %v741
  %v807 = vunpack.c.h.b16 %v741
  %v808 = vunpack.c.l.b16 %v742
  %v809 = vunpack.c.h.b16 %v742
  %v810 = vunpack.c.l.b16 %v743
  %v811 = vunpack.c.h.b16 %v743
  %v812 = vunpack.c.l.b16 %v744
  %v813 = vunpack.c.h.b16 %v744
  %v814 = vunpack.c.l.b16 %v745
  %v815 = vunpack.c.h.b16 %v745
  %v816 = vunpack.c.l.b16 %v746
  %v817 = vunpack.c.h.b16 %v746
  %v818 = vunpack.c.l.b16 %v747
  %v819 = vunpack.c.h.b16 %v747
  %v820 = vunpack.c.l.b16 %v748
  %v821 = vunpack.c.h.b16 %v748
  %v822 = vunpack.c.l.b16 %v749
  %v823 = vunpack.c.h.b16 %v749
  %v824 = vunpack.c.l.b16 %v750
  %v825 = vunpack.c.h.b16 %v750
  %v826 = vunpack.c.l.b16 %v751
  %v827 = vunpack.c.h.b16 %v751
  %v828 = vunpack.c.l.b16 %v752
  %v829 = vunpack.c.h.b16 %v752
  %v830 = vunpack.c.l.b16 %v753
  %v831 = vunpack.c.h.b16 %v753
  %v832 = vunpack.c.l.b16 %v754
  %v833 = vunpack.c.h.b16 %v754
  %v834 = vunpack.c.l.b16 %v755
  %v835 = vunpack.c.h.b16 %v755
  %v836 = vunpack.c.l.b16 %v756
  %v837 = vunpack.c.h.b16 %v756
  %v838 = vunpack.c.l.b16 %v757
  %v839 = vunpack.c.h.b16 %v757
  %v840 = vunpack.c.l.b16 %v758
  %v841 = vunpack.c.h.b16 %v758
  %v842 = vunpack.c.l.b16 %v759
  %v843 = vunpack.c.h.b16 %v759
  %v844 = vunpack.c.l.b16 %v760
  %v845 = vunpack.c.h.b16 %v760
  %v846 = vunpack.c.l.b16 %v761
  %v847 = vunpack.c.h.b16 %v761
  %v848 = vunpack.c.l.b16 %v762
  %v849 = vunpack.c.h.b16 %v762
  %v850 = vunpack.c.l.b16 %v763
  %v851 = vunpack.c.h.b16 %v763
  %v852 = vunpack.c.l.b16 %v764
  %v853 = vunpack.c.h.b16 %v764
  %v854 = vunpack.c.l.b16 %v765
  %v855 = vunpack.c.h.b16 %v765
  %v856 = vunpack.c.l.b16 %v766
  %v857 = vunpack.c.h.b16 %v766
  %v858 = vunpack.c.l.b16 %v767
  %v859 = vunpack.c.h.b16 %v767
  %v860 = vunpack.c.l.b16 %v768
  %v861 = vunpack.c.h.b16 %v768
  %v862 = vunpack.c.l.b16 %v769
  %v863 = vunpack.c.h.b16 %v769
  %v864 = vunpack.c.l.b16 %v770
  %v865 = vunpack.c.h.b16 %v770
  %v866 = vunpack.c.l.b16 %v771
  %v867 = vunpack.c.h.b16 %v771
  %v868 = vpack.c.b16 %v804, %v804
  %v869 = vpack.c.b16 %v805, %v805
  %v870 = vpack.c.b16 %v806, %v806
  %v871 = vpack.c.b16 %v807, %v807
  %v872 = vpack.c.b16 %v808, %v808
  %v873 = vpack.c.b16 %v809, %v809
  %v874 = vpack.c.b16 %v810, %v810
  %v875 = vpack.c.b16 %v811, %v811
  %v876 = vpack.c.b16 %v812, %v812
  %v877 = vpack.c.b16 %v813, %v813
  %v878 = vpack.c.b16 %v814, %v814
  %v879 = vpack.c.b16 %v815, %v815
  %v880 = vpack.c.b16 %v816, %v816
  %v881 = vpack.c.b16 %v817, %v817
  %v882 = vpack.c.b16 %v818, %v818
  %v883 = vpack.c.b16 %v819, %v819
  %v884 = vpack.c.b16 %v820, %v820
  %v885 = vpack.c.b16 %v821, %v821
  %v886 = vpack.c.b16 %v822, %v822
  %v887 = vpack.c.b16 %v823, %v823
  %v888 = vpack.c.b16 %v824, %v824
  %v889 = vpack.c.b16 %v825, %v825
  %v890 = vpack.c.b16 %v826, %v826
  %v891 = vpack.c.b16 %v827, %v827
  %v892 = vpack.c.b16 %v828, %v828
  %v893 = vpack.c.b16 %v829, %v829
  %v894 = vpack.c.b16 %v830, %v830
  %v895 = vpack.c.b16 %v831, %v831
  %v896 = vpack.c.b16 %v832, %v832
  %v897 = vpack.c.b16 %v833, %v833
  %v898 = vpack.c.b16 %v834, %v834
  %v899 = vpack.c.b16 %v835, %v835
  %v900 = vpack.c.b16 %v836, %v836
  %v901 = vpack.c.b16 %v837, %v837
  %v902 = vpack.c.b16 %v838, %v838
  %v903 = vpack.c.b16 %v839, %v839
  %v904 = vpack.c.b16 %v840, %v840
  %v905 = vpack.c.b16 %v841, %v841
  %v906 = vpack.c.b16 %v842, %v842
  %v907 = vpack.c.b16 %v843, %v843
  %v908 = vpack.c.b16 %v844, %v844
  %v909 = vpack.c.b16 %v845, %v845
  %v910 = vpack.c.b16 %v846, %v846
  %v911 = vpack.c.b16 %v847, %v847
  %v912 = vpack.c.b16 %v848, %v848
  %v913 = vpack.c.b16 %v849, %v849
  %v914 = vpack.c.b16 %v850, %v850
  %v915 = vpack.c.b16 %v851, %v851
  %v916 = vpack.c.b16 %v852, %v852
  %v917 = vpack.c.b16 %v853, %v853
  %v918 = vpack.c.b16 %v854, %v854
  %v919 = vpack.c.b16 %v855, %v855
  %v920 = vpack.c.b16 %v856, %v856
  %v921 = vpack.c.b16 %v857, %v857
  %v922 = vpack.c.b16 %v858, %v858
  %v923 = vpack.c.b16 %v859, %v859
  %v924 = vpack.c.b16 %v860, %v860
  %v925 = vpack.c.b16 %v861, %v861
  %v926 = vpack.c.b16 %v862, %v862
  %v927 = vpack.c.b16 %v863, %v863
  %v928 = vpack.c.b16 %v864, %v864
  %v929 = vpack.c.b16 %v865, %v865
  %v930 = vpack.c.b16 %v866, %v866
  %v931 = vpack.c.b16 %v867, %v867
  %996 = vst [vmem:[%s4] sm:$0xf] %v868
  %997 = vst [vmem:[%s4 + $0x4] sm:$0xf] %v869
  %998 = vst [vmem:[%s4 + $0x8] sm:$0xf] %v870
  %999 = vst [vmem:[%s4 + $0xc] sm:$0xf] %v871
  %1000 = vst [vmem:[%s4 + $0x10] sm:$0xf] %v872
  %1001 = vst [vmem:[%s4 + $0x14] sm:$0xf] %v873
  %1002 = vst [vmem:[%s4 + $0x18] sm:$0xf] %v874
  %1003 = vst [vmem:[%s4 + $0x1c] sm:$0xf] %v875
  %1004 = vst [vmem:[%s4 + $0x20] sm:$0xf] %v876
  %1005 = vst [vmem:[%s4 + $0x24] sm:$0xf] %v877
  %1006 = vst [vmem:[%s4 + $0x28] sm:$0xf] %v878
  %1007 = vst [vmem:[%s4 + $0x2c] sm:$0xf] %v879
  %1008 = vst [vmem:[%s4 + $0x30] sm:$0xf] %v880
  %1009 = vst [vmem:[%s4 + $0x34] sm:$0xf] %v881
  %1010 = vst [vmem:[%s4 + $0x38] sm:$0xf] %v882
  %1011 = vst [vmem:[%s4 + $0x3c] sm:$0xf] %v883
  %1012 = vst [vmem:[%s4 + $0x40] sm:$0xf] %v884
  %1013 = vst [vmem:[%s4 + $0x44] sm:$0xf] %v885
  %1014 = vst [vmem:[%s4 + $0x48] sm:$0xf] %v886
  %1015 = vst [vmem:[%s4 + $0x4c] sm:$0xf] %v887
  %1016 = vst [vmem:[%s4 + $0x50] sm:$0xf] %v888
  %1017 = vst [vmem:[%s4 + $0x54] sm:$0xf] %v889
  %1018 = vst [vmem:[%s4 + $0x58] sm:$0xf] %v890
  %1019 = vst [vmem:[%s4 + $0x5c] sm:$0xf] %v891
  %1020 = vst [vmem:[%s4 + $0x60] sm:$0xf] %v892
  %1021 = vst [vmem:[%s4 + $0x64] sm:$0xf] %v893
  %1022 = vst [vmem:[%s4 + $0x68] sm:$0xf] %v894
  %1023 = vst [vmem:[%s4 + $0x6c] sm:$0xf] %v895
  %1024 = vst [vmem:[%s4 + $0x70] sm:$0xf] %v896
  %1025 = vst [vmem:[%s4 + $0x74] sm:$0xf] %v897
  %1026 = vst [vmem:[%s4 + $0x78] sm:$0xf] %v898
  %1027 = vst [vmem:[%s4 + $0x7c] sm:$0xf] %v899
  %1028 = vst [vmem:[%s4 + $0x80] sm:$0xf] %v900
  %1029 = vst [vmem:[%s4 + $0x84] sm:$0xf] %v901
  %1030 = vst [vmem:[%s4 + $0x88] sm:$0xf] %v902
  %1031 = vst [vmem:[%s4 + $0x8c] sm:$0xf] %v903
  %1032 = vst [vmem:[%s4 + $0x90] sm:$0xf] %v904
  %1033 = vst [vmem:[%s4 + $0x94] sm:$0xf] %v905
  %1034 = vst [vmem:[%s4 + $0x98] sm:$0xf] %v906
  %1035 = vst [vmem:[%s4 + $0x9c] sm:$0xf] %v907
  %1036 = vst [vmem:[%s4 + $0xa0] sm:$0xf] %v908
  %1037 = vst [vmem:[%s4 + $0xa4] sm:$0xf] %v909
  %1038 = vst [vmem:[%s4 + $0xa8] sm:$0xf] %v910
  %1039 = vst [vmem:[%s4 + $0xac] sm:$0xf] %v911
  %1040 = vst [vmem:[%s4 + $0xb0] sm:$0xf] %v912
  %1041 = vst [vmem:[%s4 + $0xb4] sm:$0xf] %v913
  %1042 = vst [vmem:[%s4 + $0xb8] sm:$0xf] %v914
  %1043 = vst [vmem:[%s4 + $0xbc] sm:$0xf] %v915
  %1044 = vst [vmem:[%s4 + $0xc0] sm:$0xf] %v916
  %1045 = vst [vmem:[%s4 + $0xc4] sm:$0xf] %v917
  %1046 = vst [vmem:[%s4 + $0xc8] sm:$0xf] %v918
  %1047 = vst [vmem:[%s4 + $0xcc] sm:$0xf] %v919
  %1048 = vst [vmem:[%s4 + $0xd0] sm:$0xf] %v920
  %1049 = vst [vmem:[%s4 + $0xd4] sm:$0xf] %v921
  %1050 = vst [vmem:[%s4 + $0xd8] sm:$0xf] %v922
  %1051 = vst [vmem:[%s4 + $0xdc] sm:$0xf] %v923
  %1052 = vst [vmem:[%s4 + $0xe0] sm:$0xf] %v924
  %1053 = vst [vmem:[%s4 + $0xe4] sm:$0xf] %v925
  %1054 = vst [vmem:[%s4 + $0xe8] sm:$0xf] %v926
  %1055 = vst [vmem:[%s4 + $0xec] sm:$0xf] %v927
  %1056 = vst [vmem:[%s4 + $0xf0] sm:$0xf] %v928
  %1057 = vst [vmem:[%s4 + $0xf4] sm:$0xf] %v929
  %1058 = vst [vmem:[%s4 + $0xf8] sm:$0xf] %v930
  %1059 = vst [vmem:[%s4 + $0xfc] sm:$0xf] %v931
  %p1060 = scmp.eq.s32.totalorder 0, 0
  // Predicated region
  $region18: #{bottleneck_forward.6} parent=0 // pred_check
    %p1061 = pneg %p1060
  $region19: #{bottleneck_forward.6} parent=0 // pred_check_branch
    %1063 = sbr.rel (%p1061) target = $region21
  $region20: #{bottleneck_forward.6} parent=0 // pred_region
    %1064 = vst [vmem:[%s5] sm:$0x1] 0.0
    %1065 = vst [vmem:[%s6] sm:$0x1] 0.0
  $region21: #{bottleneck_forward.6} parent=0 // pred_fallthru
    _
  %v1066 = vld [vmem:[%s5] sm:$0x1]
  %v1067 = vadd.f32 %v486, %v489
  %v1068 = vadd.f32 %v1067, %v494
  %v1069 = vadd.f32 %v1068, %v497
  %v1070 = vadd.f32 %v1069, %v502
  %v1071 = vadd.f32 %v1070, %v505
  %v1072 = vadd.f32 %v1071, %v510
  %v1073 = vadd.f32 %v1072, %v513
  %v1074 = vadd.f32 %v1073, %v518
  %v1075 = vadd.f32 %v1074, %v521
  %v1076 = vadd.f32 %v1075, %v526
  %v1077 = vadd.f32 %v1076, %v529
  %v1078 = vadd.f32 %v1077, %v534
  %v1079 = vadd.f32 %v1078, %v537
  %v1080 = vadd.f32 %v1079, %v542
  %v1081 = vadd.f32 %v1080, %v545
  %v1082 = vadd.f32 %v1081, %v550
  %v1083 = vadd.f32 %v1082, %v553
  %v1084 = vadd.f32 %v1083, %v558
  %v1085 = vadd.f32 %v1084, %v561
  %v1086 = vadd.f32 %v1085, %v566
  %v1087 = vadd.f32 %v1086, %v569
  %v1088 = vadd.f32 %v1087, %v574
  %v1089 = vadd.f32 %v1088, %v577
  %v1090 = vadd.f32 %v1089, %v582
  %v1091 = vadd.f32 %v1090, %v585
  %v1092 = vadd.f32 %v1091, %v590
  %v1093 = vadd.f32 %v1092, %v593
  %v1094 = vadd.f32 %v1093, %v598
  %v1095 = vadd.f32 %v1094, %v601
  %v1096 = vadd.f32 %v1095, %v606
  %v1097 = vadd.f32 %v1096, %v609
  %v1098 = vadd.f32 %v1097, %v614
  %v1099 = vadd.f32 %v1098, %v617
  %v1100 = vadd.f32 %v1099, %v622
  %v1101 = vadd.f32 %v1100, %v625
  %v1102 = vadd.f32 %v1101, %v630
  %v1103 = vadd.f32 %v1102, %v633
  %v1104 = vadd.f32 %v1103, %v638
  %v1105 = vadd.f32 %v1104, %v641
  %v1106 = vadd.f32 %v1105, %v646
  %v1107 = vadd.f32 %v1106, %v649
  %v1108 = vadd.f32 %v1107, %v654
  %v1109 = vadd.f32 %v1108, %v657
  %v1110 = vadd.f32 %v1109, %v662
  %v1111 = vadd.f32 %v1110, %v665
  %v1112 = vadd.f32 %v1111, %v670
  %v1113 = vadd.f32 %v1112, %v673
  %v1114 = vadd.f32 %v1113, %v678
  %v1115 = vadd.f32 %v1114, %v681
  %v1116 = vadd.f32 %v1115, %v686
  %v1117 = vadd.f32 %v1116, %v689
  %v1118 = vadd.f32 %v1117, %v694
  %v1119 = vadd.f32 %v1118, %v697
  %v1120 = vadd.f32 %v1119, %v702
  %v1121 = vadd.f32 %v1120, %v705
  %v1122 = vadd.f32 %v1121, %v710
  %v1123 = vadd.f32 %v1122, %v713
  %v1124 = vadd.f32 %v1123, %v718
  %v1125 = vadd.f32 %v1124, %v721
  %v1126 = vadd.f32 %v1125, %v726
  %v1127 = vadd.f32 %v1126, %v729
  %v1128 = vadd.f32 %v1127, %v734
  %v1129 = vadd.f32 %v1128, %v737
  %v1130 = vrot.slane %v1129, 4
  %v1131 = vadd.f32 %v1129, %v1130
  %v1132 = vrot.slane %v1131, 2
  %v1133 = vadd.f32 %v1131, %v1132
  %v1134 = vrot.slane %v1133, 1
  %v1135 = vadd.f32 %v1133, %v1134
  %v1136 = vadd.f32 %v1066, %v1135
  %1137 = vst [vmem:[%s5] sm:$0x1] %v1136
  %v1138 = vld [vmem:[%s6] sm:$0x1]
  %v1139 = vmul.f32 %v486, %v486
  %v1140 = vmul.f32 %v489, %v489
  %v1141 = vmul.f32 %v494, %v494
  %v1142 = vmul.f32 %v497, %v497
  %v1143 = vmul.f32 %v502, %v502
  %v1144 = vmul.f32 %v505, %v505
  %v1145 = vmul.f32 %v510, %v510
  %v1146 = vmul.f32 %v513, %v513
  %v1147 = vmul.f32 %v518, %v518
  %v1148 = vmul.f32 %v521, %v521
  %v1149 = vmul.f32 %v526, %v526
  %v1150 = vmul.f32 %v529, %v529
  %v1151 = vmul.f32 %v534, %v534
  %v1152 = vmul.f32 %v537, %v537
  %v1153 = vmul.f32 %v542, %v542
  %v1154 = vmul.f32 %v545, %v545
  %v1155 = vmul.f32 %v550, %v550
  %v1156 = vmul.f32 %v553, %v553
  %v1157 = vmul.f32 %v558, %v558
  %v1158 = vmul.f32 %v561, %v561
  %v1159 = vmul.f32 %v566, %v566
  %v1160 = vmul.f32 %v569, %v569
  %v1161 = vmul.f32 %v574, %v574
  %v1162 = vmul.f32 %v577, %v577
  %v1163 = vmul.f32 %v582, %v582
  %v1164 = vmul.f32 %v585, %v585
  %v1165 = vmul.f32 %v590, %v590
  %v1166 = vmul.f32 %v593, %v593
  %v1167 = vmul.f32 %v598, %v598
  %v1168 = vmul.f32 %v601, %v601
  %v1169 = vmul.f32 %v606, %v606
  %v1170 = vmul.f32 %v609, %v609
  %v1171 = vmul.f32 %v614, %v614
  %v1172 = vmul.f32 %v617, %v617
  %v1173 = vmul.f32 %v622, %v622
  %v1174 = vmul.f32 %v625, %v625
  %v1175 = vmul.f32 %v630, %v630
  %v1176 = vmul.f32 %v633, %v633
  %v1177 = vmul.f32 %v638, %v638
  %v1178 = vmul.f32 %v641, %v641
  %v1179 = vmul.f32 %v646, %v646
  %v1180 = vmul.f32 %v649, %v649
  %v1181 = vmul.f32 %v654, %v654
  %v1182 = vmul.f32 %v657, %v657
  %v1183 = vmul.f32 %v662, %v662
  %v1184 = vmul.f32 %v665, %v665
  %v1185 = vmul.f32 %v670, %v670
  %v1186 = vmul.f32 %v673, %v673
  %v1187 = vmul.f32 %v678, %v678
  %v1188 = vmul.f32 %v681, %v681
  %v1189 = vmul.f32 %v686, %v686
  %v1190 = vmul.f32 %v689, %v689
  %v1191 = vmul.f32 %v694, %v694
  %v1192 = vmul.f32 %v697, %v697
  %v1193 = vmul.f32 %v702, %v702
  %v1194 = vmul.f32 %v705, %v705
  %v1195 = vmul.f32 %v710, %v710
  %v1196 = vmul.f32 %v713, %v713
  %v1197 = vmul.f32 %v718, %v718
  %v1198 = vmul.f32 %v721, %v721
  %v1199 = vmul.f32 %v726, %v726
  %v1200 = vmul.f32 %v729, %v729
  %v1201 = vmul.f32 %v734, %v734
  %v1202 = vmul.f32 %v737, %v737
  %v1203 = vadd.f32 %v1139, %v1140
  %v1204 = vadd.f32 %v1203, %v1141
  %v1205 = vadd.f32 %v1204, %v1142
  %v1206 = vadd.f32 %v1205, %v1143
  %v1207 = vadd.f32 %v1206, %v1144
  %v1208 = vadd.f32 %v1207, %v1145
  %v1209 = vadd.f32 %v1208, %v1146
  %v1210 = vadd.f32 %v1209, %v1147
  %v1211 = vadd.f32 %v1210, %v1148
  %v1212 = vadd.f32 %v1211, %v1149
  %v1213 = vadd.f32 %v1212, %v1150
  %v1214 = vadd.f32 %v1213, %v1151
  %v1215 = vadd.f32 %v1214, %v1152
  %v1216 = vadd.f32 %v1215, %v1153
  %v1217 = vadd.f32 %v1216, %v1154
  %v1218 = vadd.f32 %v1217, %v1155
  %v1219 = vadd.f32 %v1218, %v1156
  %v1220 = vadd.f32 %v1219, %v1157
  %v1221 = vadd.f32 %v1220, %v1158
  %v1222 = vadd.f32 %v1221, %v1159
  %v1223 = vadd.f32 %v1222, %v1160
  %v1224 = vadd.f32 %v1223, %v1161
  %v1225 = vadd.f32 %v1224, %v1162
  %v1226 = vadd.f32 %v1225, %v1163
  %v1227 = vadd.f32 %v1226, %v1164
  %v1228 = vadd.f32 %v1227, %v1165
  %v1229 = vadd.f32 %v1228, %v1166
  %v1230 = vadd.f32 %v1229, %v1167
  %v1231 = vadd.f32 %v1230, %v1168
  %v1232 = vadd.f32 %v1231, %v1169
  %v1233 = vadd.f32 %v1232, %v1170
  %v1234 = vadd.f32 %v1233, %v1171
  %v1235 = vadd.f32 %v1234, %v1172
  %v1236 = vadd.f32 %v1235, %v1173
  %v1237 = vadd.f32 %v1236, %v1174
  %v1238 = vadd.f32 %v1237, %v1175
  %v1239 = vadd.f32 %v1238, %v1176
  %v1240 = vadd.f32 %v1239, %v1177
  %v1241 = vadd.f32 %v1240, %v1178
  %v1242 = vadd.f32 %v1241, %v1179
  %v1243 = vadd.f32 %v1242, %v1180
  %v1244 = vadd.f32 %v1243, %v1181
  %v1245 = vadd.f32 %v1244, %v1182
  %v1246 = vadd.f32 %v1245, %v1183
  %v1247 = vadd.f32 %v1246, %v1184
  %v1248 = vadd.f32 %v1247, %v1185
  %v1249 = vadd.f32 %v1248, %v1186
  %v1250 = vadd.f32 %v1249, %v1187
  %v1251 = vadd.f32 %v1250, %v1188
  %v1252 = vadd.f32 %v1251, %v1189
  %v1253 = vadd.f32 %v1252, %v1190
  %v1254 = vadd.f32 %v1253, %v1191
  %v1255 = vadd.f32 %v1254, %v1192
  %v1256 = vadd.f32 %v1255, %v1193
  %v1257 = vadd.f32 %v1256, %v1194
  %v1258 = vadd.f32 %v1257, %v1195
  %v1259 = vadd.f32 %v1258, %v1196
  %v1260 = vadd.f32 %v1259, %v1197
  %v1261 = vadd.f32 %v1260, %v1198
  %v1262 = vadd.f32 %v1261, %v1199
  %v1263 = vadd.f32 %v1262, %v1200
  %v1264 = vadd.f32 %v1263, %v1201
  %v1265 = vadd.f32 %v1264, %v1202
  %v1266 = vrot.slane %v1265, 4
  %v1267 = vadd.f32 %v1265, %v1266
  %v1268 = vrot.slane %v1267, 2
  %v1269 = vadd.f32 %v1267, %v1268
  %v1270 = vrot.slane %v1269, 1
  %v1271 = vadd.f32 %v1269, %v1270
  %v1272 = vadd.f32 %v1138, %v1271
  %1273 = vst [vmem:[%s6] sm:$0x1] %v1272
  // Predicated region
  $region22: #{bottleneck_forward.6} parent=0 // pred_check
    _
  $region23: #{bottleneck_forward.6} parent=0 // pred_check_branch
    %1275 = sbr.rel (0) target = $region25
  $region24: #{bottleneck_forward.6} parent=0 // pred_region
    _
  $region25: #{bottleneck_forward.6} parent=0 // pred_fallthru
    _
  // Predicated region
  $region26: #{bottleneck_forward.6} parent=0 // pred_check
    _
  $region27: #{bottleneck_forward.6} parent=0 // pred_check_branch
    %1277 = sbr.rel (0) target = $region29
  $region28: #{bottleneck_forward.6} parent=0 // pred_region
    _
  $region29: #{bottleneck_forward.6} parent=0 // pred_fallthru
    _
  // Predicated region
  $region30: #{bottleneck_forward.6} parent=0 // pred_check
    _
  $region31: #{bottleneck_forward.6} parent=0 // pred_check_branch
    %1279 = sbr.rel (0) target = $region33
  $region32: #{bottleneck_forward.6} parent=0 // pred_region
    _
  $region33: #{bottleneck_forward.6} parent=0 // pred_fallthru
    _
  // Predicated region
  $region34: #{bottleneck_forward.6} parent=0 // pred_check
    _
  $region35: #{bottleneck_forward.6} parent=0 // pred_check_branch
    %1281 = sbr.rel (0) target = $region37
  $region36: #{bottleneck_forward.6} parent=0 // pred_region
    _
  $region37: #{bottleneck_forward.6} parent=0 // pred_fallthru
    _
  // Predicated region
  $region38: #{bottleneck_forward.6} parent=0 // pred_check
    _
  $region39: #{bottleneck_forward.6} parent=0 // pred_check_branch
    %1283 = sbr.rel (0) target = $region41
  $region40: #{bottleneck_forward.6} parent=0 // pred_region
    _
  $region41: #{bottleneck_forward.6} parent=0 // pred_fallthru
    _
  // Predicated region
  $region42: #{bottleneck_forward.6} parent=0 // pred_check
    _
  $region43: #{bottleneck_forward.6} parent=0 // pred_check_branch
    %1285 = sbr.rel (0) target = $region45
  $region44: #{bottleneck_forward.6} parent=0 // pred_region
    _
  $region45: #{bottleneck_forward.6} parent=0 // pred_fallthru
    _

</llo_original>
